<compile_context>
chip_gen: v6e
topology: v6e:2x2x1
jax: 0.10.0
libtpu: 0.0.40
codegen_flags: <defaults>
</compile_context>

<pallas_src>
import functools

import jax
import jax.numpy as jnp
from jax.experimental import pallas as pl
from jax.experimental.pallas import tpu as pltpu

# ---------------------------------------------------------------------------
# Model hyper-parameters (small, deterministic, consistent with the module).
# ---------------------------------------------------------------------------
BATCH = 2
SEQ = 4
INPUT_SHAPE = (4, 64, 64)       # (C, H, W)  -- PyTorch self.inputShape
HIDDEN = 32                     # params.hiddenDimensions
NUM_ACTIONS = 6                 # params.numActions
ATOMS = 51                      # params.atoms (unused in forward, as in PyTorch)
QPAD = 128                      # fc2 output padded to one full lane group

_VMEM = pl.BlockSpec(memory_space=pltpu.MemorySpace.VMEM)


# ---------------------------------------------------------------------------
# The single fused kernel: conv1 -> conv2 -> conv3 -> GRU -> fc2.
# Activation layout: (H, W, frames, channels): frames (= B*T = 8, one f32
# sublane tile) on sublanes, channels on lanes, spatial on cheap untiled
# leading dims -> every slice below is an untiled leading-dim slice and every
# leading-dim reshape is layout-preserving (free).
# ---------------------------------------------------------------------------
def _drqn_kernel(sp_ref, h0_ref, w1_ref, b1_ref, w2_ref, b2_ref, w3_ref,
                 b3_ref, wih_ref, whh_ref, bih_ref, bhh_ref, wfc_ref, bfc_ref,
                 q_ref, hn_ref, *, batch, seq_len):
    f32 = jnp.float32
    bf16 = jnp.bfloat16
    nf = batch * seq_len                      # frames, ordered time-major (t, b)

    # ---- conv1: 8x8 / stride 4, 64x64 -> 15x15 -----------------------------
    # sp is the space-to-depth input (16, 16, nf, 16*C); the conv1 patch for
    # output (oh, ow) is the lane-concat of sp[oh+a, ow+b] for a, b in {0,1}.
    sp = sp_ref[...]
    p1 = jnp.concatenate(
        [sp[a:a + 15, b:b + 15] for a in range(2) for b in range(2)],
        axis=-1)                                            # (15, 15, nf, 256)
    p1 = p1.reshape(15 * 15 * nf, 256)
    y1 = jnp.dot(p1, w1_ref[...], preferred_element_type=f32) + b1_ref[...]
    a1 = jnp.maximum(y1, 0.0).reshape(15, 15, nf, 32).astype(bf16)
    # Pad the 15x15 conv1 grid to 16x16 with exact zeros so the parity-split
    # reshape below stays a free leading-dim reshape.
    # Invariant: the conv2 windows only read input rows/cols 0..13 (block
    # index <= 6 in the parity split), so the pad rows never enter the math.
    a1 = jnp.concatenate([a1, jnp.zeros((1, 15, nf, 32), bf16)], axis=0)
    a1 = jnp.concatenate([a1, jnp.zeros((16, 1, nf, 32), bf16)], axis=1)

    # ---- conv2: 4x4 / stride 2, 15x15 -> 6x6, K-folded to ONE matmul -------
    # Parity split: input row 2*oh + kh has parity kh%2 and block oh + kh//2,
    # so every piece is a plain leading-dim slice (no strided slicing).
    a1 = a1.reshape(8, 2, 8, 2, nf, 32)
    planes = [[a1[:, p, :, q] for q in range(2)] for p in range(2)]
    p2 = jnp.concatenate(
        [planes[kh % 2][kw % 2][kh // 2:kh // 2 + 6, kw // 2:kw // 2 + 6]
         for kh in range(4) for kw in range(4)],
        axis=-1)                                            # (6, 6, nf, 512)
    p2 = p2.reshape(36 * nf, 512)
    y2 = jnp.dot(p2, w2_ref[...], preferred_element_type=f32) + b2_ref[...]
    a2 = jnp.maximum(y2, 0.0).reshape(6, 6, nf, 64).astype(bf16)

    # ---- conv3: 3x3 / stride 1, 6x6 -> 4x4, K-folded to ONE matmul ---------
    p3 = jnp.concatenate(
        [a2[kh:kh + 4, kw:kw + 4] for kh in range(3) for kw in range(3)],
        axis=-1)                                            # (4, 4, nf, 576)
    p3 = p3.reshape(16 * nf, 576)
    y3 = jnp.dot(p3, w3_ref[...], preferred_element_type=f32) + b3_ref[...]
    y3 = jnp.maximum(y3, 0.0)                    # (16*nf, 64), rows = (h, w, f)

    # ---- GRU input projection: hoisted out of the time loop; all three
    # gates in one N=96 weight (r | z | n at lane offsets 0 / 32 / 64). ------
    y3b = y3.reshape(16, nf, 64).astype(bf16)
    gi = jnp.sum(
        jax.lax.dot_general(y3b, wih_ref[...], (((2,), (1,)), ((0,), (0,))),
                            preferred_element_type=f32),
        axis=0) + bih_ref[...]                              # (nf, 96)

    whh = whh_ref[...]                                      # (32, 96)  bf16
    bhh = bhh_ref[...]                                      # (1, 96)   f32
    wfc = wfc_ref[...]                                      # (32, 128) bf16
    bfc = bfc_ref[...]                                      # (1, 128)  f32
    hd = h0_ref.shape[-1]

    # ---- GRU recurrence + fused fc2 head.  Gate math in f32; only matmul
    # operands in bf16.  One merged (B,32)@(32,96) matmul per step. ----------
    h = h0_ref[...]                                         # (B, H) f32
    for t in range(seq_len):                                # tiny static unroll
        gi_t = gi[t * batch:(t + 1) * batch]                # rows are (t, b)
        gh = jnp.dot(h.astype(bf16), whh, preferred_element_type=f32) + bhh
        r = jax.nn.sigmoid(gi_t[:, :hd] + gh[:, :hd])
        z = jax.nn.sigmoid(gi_t[:, hd:2 * hd] + gh[:, hd:2 * hd])
        n = jnp.tanh(gi_t[:, 2 * hd:] + r * gh[:, 2 * hd:])
        h = (1.0 - z) * n + z * h
        # fc2 head fused; q is already the final lane-dense (B, T, 128)
        # layout, so only a tiny :numActions lane slice remains caller-side.
        q_t = jnp.dot(h.astype(bf16), wfc, preferred_element_type=f32) + bfc
        q_ref[:, t, :] = q_t                                # static sublane store
    hn_ref[...] = h


def fused_forward(sp, h0, pp, *, batch, seq_len):
    kernel = functools.partial(_drqn_kernel, batch=batch, seq_len=seq_len)
    return pl.pallas_call(
        kernel,
        out_shape=(jax.ShapeDtypeStruct((batch, seq_len, QPAD), jnp.float32),
                   jax.ShapeDtypeStruct((batch, HIDDEN), jnp.float32)),
        in_specs=[_VMEM] * 14,
        out_specs=(_VMEM, _VMEM),
    )(sp, h0, pp["w1"], pp["b1"], pp["w2"], pp["b2"], pp["w3"], pp["b3"],
      pp["wih"], pp["whh"], pp["b_ih"], pp["b_hh"], pp["wfc"], pp["bfc"])


# ---------------------------------------------------------------------------
# One-time parameter re-layout (pre-transposed, gate-merged, K-folded, bf16
# where fed to the MXU).  Numerics identical to the PyTorch layouts.
# ---------------------------------------------------------------------------
def prepare_params(p):
    bf16 = jnp.bfloat16
    c = INPUT_SHAPE[0]
    hdim = HIDDEN

    # conv1: K ordered (a, b, hr, wr, c) to match the space-to-depth patches
    # (kernel offset i = 4a + hr, j = 4b + wr).
    w1 = p["conv1_w"].transpose(2, 3, 1, 0)                    # (8, 8, C, 32)
    w1 = w1.reshape(2, 4, 2, 4, c, 32).transpose(0, 2, 1, 3, 4, 5)
    w1 = w1.reshape(64 * c, 32)
    # conv2 / conv3: K-folded -- K index = (kh*KW + kw)*Cin + cin.
    w2 = p["conv2_w"].transpose(2, 3, 1, 0).reshape(16 * 32, 64)
    w3 = p["conv3_w"].transpose(2, 3, 1, 0).reshape(9 * 64, 64)

    # GRU input weights: per conv3 spatial position one (64, 3H) block, with
    # the (c, h, w) -> (h, w, c) column permutation folded in so the Pallas
    # flatten order matches PyTorch's x.view(N, -1); gates merged along N.
    def wih_block(g):
        wg = p["gru_w_ih"][g * hdim:(g + 1) * hdim]            # (H, 1024)
        wg = wg.reshape(hdim, 64, 4, 4).transpose(2, 3, 1, 0)  # (h, w, cin, H)
        return wg.reshape(16, 64, hdim)

    wih = jnp.concatenate([wih_block(0), wih_block(1), wih_block(2)], axis=-1)
    whh = jnp.concatenate(
        [p["gru_w_hh"][g * hdim:(g + 1) * hdim].T for g in range(3)], axis=-1)

    wfc = jnp.zeros((hdim, QPAD), jnp.float32).at[:, :NUM_ACTIONS].set(p["fc2_w"].T)
    bfc = jnp.zeros((1, QPAD), jnp.float32).at[0, :NUM_ACTIONS].set(p["fc2_b"])

    return {
        "w1": w1.astype(bf16), "b1": p["conv1_b"].reshape(1, 32),
        "w2": w2.astype(bf16), "b2": p["conv2_b"].reshape(1, 64),
        "w3": w3.astype(bf16), "b3": p["conv3_b"].reshape(1, 64),
        "wih": wih.astype(bf16),                   # (16, 64, 96)
        "whh": whh.astype(bf16),                   # (32, 96)
        "b_ih": p["gru_b_ih"].reshape(1, 3 * hdim),
        "b_hh": p["gru_b_hh"].reshape(1, 3 * hdim),
        "wfc": wfc.astype(bf16), "bfc": bfc,
    }


# ---------------------------------------------------------------------------
# Full forward pass (mirrors CategoricalDRQN.forward).  Wrapper keeps only
# layout plumbing: one space-to-depth relayout (single XLA fusion, 128 KB
# output) feeding the fused kernel, and a tiny lane slice on the way out.
# ---------------------------------------------------------------------------
def categorical_drqn_forward(pp, input_seq, hx=None):
    b, t = input_seq.shape[0], input_seq.shape[1]
    nf = b * t
    c, hgt, wid = INPUT_SHAPE

    # Space-to-depth: frames ordered time-major (t, b) so GRU step t reads a
    # contiguous row block of the hoisted input projection.
    x = jnp.transpose(input_seq, (1, 0, 3, 4, 2)).reshape(nf, hgt, wid, c)
    sp = x.reshape(nf, hgt // 4, 4, wid // 4, 4, c)
    sp = jnp.transpose(sp, (1, 3, 0, 2, 4, 5)).reshape(hgt // 4, wid // 4, nf, 16 * c)
    sp = sp.astype(jnp.bfloat16)                               # (16, 16, nf, 64)

    # hx follows the PyTorch convention (num_layers=1, B, H).
    h0 = (jnp.zeros((b, HIDDEN), jnp.float32) if hx is None
          else hx[0].astype(jnp.float32))
    q_pad, h_n = fused_forward(sp, h0, pp, batch=b, seq_len=t)  # (B,T,128), (B,H)
    return q_pad[:, :, :NUM_ACTIONS], h_n[None]                 # (B,T,A), (1,B,H)


# ---------------------------------------------------------------------------
# Pure-JAX reference (correctness check only) -- raw PyTorch-layout params.
# ---------------------------------------------------------------------------
def reference_forward(p, input_seq):
    b, t = input_seq.shape[0], input_seq.shape[1]
    x = input_seq.reshape((b * t,) + INPUT_SHAPE)

    def conv(x, w, bias, s):
        y = jax.lax.conv_general_dilated(
            x, w, (s, s), "VALID",
            dimension_numbers=("NCHW", "OIHW", "NCHW"),
            precision=jax.lax.Precision.HIGHEST)
        return jax.nn.relu(y + bias[None, :, None, None])

    x = conv(x, p["conv1_w"], p["conv1_b"], 4)
    x = conv(x, p["conv2_w"], p["conv2_b"], 2)
    x = conv(x, p["conv3_w"], p["conv3_b"], 1)
    feats = x.reshape(b, t, -1)

    h0 = jnp.zeros((b, HIDDEN), jnp.float32)

    def step(h, x_t):
        gi = x_t @ p["gru_w_ih"].T + p["gru_b_ih"]
        gh = h @ p["gru_w_hh"].T + p["gru_b_hh"]
        r = jax.nn.sigmoid(gi[:, :HIDDEN] + gh[:, :HIDDEN])
        z = jax.nn.sigmoid(gi[:, HIDDEN:2 * HIDDEN] + gh[:, HIDDEN:2 * HIDDEN])
        n = jnp.tanh(gi[:, 2 * HIDDEN:] + r * gh[:, 2 * HIDDEN:])
        h = (1.0 - z) * n + z * h
        return h, h

    h_n, outs = jax.lax.scan(step, h0, jnp.transpose(feats, (1, 0, 2)))
    out = jnp.transpose(outs, (1, 0, 2))
    q = out @ p["fc2_w"].T + p["fc2_b"]
    return q, h_n[None]


# ---------------------------------------------------------------------------
# Deterministic parameter construction (same shapes as the PyTorch module).
# ---------------------------------------------------------------------------
def init_params(key):
    def unif(k, shape, fan_in):
        bound = 1.0 / jnp.sqrt(fan_in)
        return jax.random.uniform(k, shape, jnp.float32, -bound, bound)

    c, _, _ = INPUT_SHAPE
    feat_size = 64 * 4 * 4      # conv stack output for a 64x64 input
    keys = jax.random.split(key, 12)
    return {
        "conv1_w": unif(keys[0], (32, c, 8, 8), c * 8 * 8),
        "conv1_b": unif(keys[1], (32,), c * 8 * 8),
        "conv2_w": unif(keys[2], (64, 32, 4, 4), 32 * 4 * 4),
        "conv2_b": unif(keys[3], (64,), 32 * 4 * 4),
        "conv3_w": unif(keys[4], (64, 64, 3, 3), 64 * 3 * 3),
        "conv3_b": unif(keys[5], (64,), 64 * 3 * 3),
        "gru_w_ih": unif(keys[6], (3 * HIDDEN, feat_size), HIDDEN),
        "gru_w_hh": unif(keys[7], (3 * HIDDEN, HIDDEN), HIDDEN),
        "gru_b_ih": unif(keys[8], (3 * HIDDEN,), HIDDEN),
        "gru_b_hh": unif(keys[9], (3 * HIDDEN,), HIDDEN),
        "fc2_w": unif(keys[10], (NUM_ACTIONS, HIDDEN), HIDDEN),
        "fc2_b": unif(keys[11], (NUM_ACTIONS,), HIDDEN),
    }


if __name__ == "__main__":
    root = jax.random.PRNGKey(0)
    k_params, k_input = jax.random.split(root)
    params = init_params(k_params)
    prepped = prepare_params(params)     # one-time weight re-layout / bf16 cast

    input_seq = jax.random.normal(
        k_input, (BATCH, SEQ) + INPUT_SHAPE, jnp.float32) * 0.1

    fwd = jax.jit(categorical_drqn_forward)
    q, hidden = fwd(prepped, input_seq)
    q = jax.block_until_ready(q)
    hidden = jax.block_until_ready(hidden)

    assert q.shape == (BATCH, SEQ, NUM_ACTIONS)
    assert hidden.shape == (1, BATCH, HIDDEN)

    q_ref, hidden_ref = jax.jit(reference_forward)(params, input_seq)
    q_ref = jax.block_until_ready(q_ref)
    hidden_ref = jax.block_until_ready(hidden_ref)

    # bf16 matmul operands with f32 accumulation -> slightly looser tolerance.
    assert jnp.allclose(q, q_ref, atol=2e-2, rtol=2e-2), "q mismatch vs reference"
    assert jnp.allclose(hidden, hidden_ref, atol=2e-2, rtol=2e-2), "hidden mismatch"

    # Exercise the hx path ((1, B, H) convention, as in the PyTorch module).
    q2, hidden2 = jax.jit(categorical_drqn_forward)(
        prepped, input_seq, jnp.zeros((1, BATCH, HIDDEN), jnp.float32))
    q2 = jax.block_until_ready(q2)
    hidden2 = jax.block_until_ready(hidden2)
    assert jnp.allclose(q2, q, atol=1e-5, rtol=1e-5), "hx path mismatch"
    assert jnp.allclose(hidden2, hidden, atol=1e-5, rtol=1e-5), "hx hidden mismatch"

    print("KERNEL_OK")
</pallas_src>

<mosaic_0001>
module attributes {stable_mosaic.version = 11 : i64} {
  func.func @_drqn_kernel(%arg0: memref<16x16x8x64xbf16, #tpu.memory_space<vmem>>, %arg1: memref<2x32xf32, #tpu.memory_space<vmem>>, %arg2: memref<256x32xbf16, #tpu.memory_space<vmem>>, %arg3: memref<1x32xf32, #tpu.memory_space<vmem>>, %arg4: memref<512x64xbf16, #tpu.memory_space<vmem>>, %arg5: memref<1x64xf32, #tpu.memory_space<vmem>>, %arg6: memref<576x64xbf16, #tpu.memory_space<vmem>>, %arg7: memref<1x64xf32, #tpu.memory_space<vmem>>, %arg8: memref<16x64x96xbf16, #tpu.memory_space<vmem>>, %arg9: memref<32x96xbf16, #tpu.memory_space<vmem>>, %arg10: memref<1x96xf32, #tpu.memory_space<vmem>>, %arg11: memref<1x96xf32, #tpu.memory_space<vmem>>, %arg12: memref<32x128xbf16, #tpu.memory_space<vmem>>, %arg13: memref<1x128xf32, #tpu.memory_space<vmem>>, %arg14: memref<2x4x128xf32, #tpu.memory_space<vmem>>, %arg15: memref<2x32xf32, #tpu.memory_space<vmem>>) attributes {dimension_semantics = [], scalar_prefetch = 0 : i64, scratch_operands = 0 : i64, tpu.core_type = #tpu.core_type<tc>} {
    %c0 = arith.constant 0 : index
    %c0_0 = arith.constant 0 : index
    %c0_1 = arith.constant 0 : index
    %c0_2 = arith.constant 0 : index
    %0 = vector.load %arg0[%c0, %c0_0, %c0_1, %c0_2] : memref<16x16x8x64xbf16, #tpu.memory_space<vmem>>, vector<16x16x8x64xbf16>
    %1 = vector.extract_strided_slice %0 {offsets = [0, 0, 0, 0], sizes = [15, 15, 8, 64], strides = [1, 1, 1, 1]} : vector<16x16x8x64xbf16> to vector<15x15x8x64xbf16>
    %2 = vector.extract_strided_slice %0 {offsets = [0, 1, 0, 0], sizes = [15, 15, 8, 64], strides = [1, 1, 1, 1]} : vector<16x16x8x64xbf16> to vector<15x15x8x64xbf16>
    %3 = vector.extract_strided_slice %0 {offsets = [1, 0, 0, 0], sizes = [15, 15, 8, 64], strides = [1, 1, 1, 1]} : vector<16x16x8x64xbf16> to vector<15x15x8x64xbf16>
    %4 = vector.extract_strided_slice %0 {offsets = [1, 1, 0, 0], sizes = [15, 15, 8, 64], strides = [1, 1, 1, 1]} : vector<16x16x8x64xbf16> to vector<15x15x8x64xbf16>
    %5 = tpu.concatenate %1, %2, %3, %4 in 3 : vector<15x15x8x64xbf16>, vector<15x15x8x64xbf16>, vector<15x15x8x64xbf16>, vector<15x15x8x64xbf16> -> vector<15x15x8x256xbf16>
    %6 = vector.shape_cast %5 : vector<15x15x8x256xbf16> to vector<1800x256xbf16>
    %c0_3 = arith.constant 0 : index
    %c0_4 = arith.constant 0 : index
    %7 = vector.load %arg2[%c0_3, %c0_4] : memref<256x32xbf16, #tpu.memory_space<vmem>>, vector<256x32xbf16>
    %cst = arith.constant dense<0.000000e+00> : vector<1800x32xf32>
    %8 = tpu.matmul %6, %7, %cst {dimension_numbers = #tpu.dot_dimension_numbers<[1], [0], [0], [1], [0, 0, 1, 1], [], []>} : vector<1800x256xbf16>, vector<256x32xbf16>, vector<1800x32xf32> -> vector<1800x32xf32>
    %c0_5 = arith.constant 0 : index
    %c0_6 = arith.constant 0 : index
    %9 = vector.load %arg3[%c0_5, %c0_6] : memref<1x32xf32, #tpu.memory_space<vmem>>, vector<1x32xf32>
    %10 = vector.broadcast %9 : vector<1x32xf32> to vector<1800x32xf32>
    %11 = arith.addf %8, %10 : vector<1800x32xf32>
    %cst_7 = arith.constant 0.000000e+00 : f32
    %12 = vector.broadcast %cst_7 : f32 to vector<1800x32xf32>
    %13 = arith.maximumf %11, %12 : vector<1800x32xf32>
    %14 = vector.shape_cast %13 : vector<1800x32xf32> to vector<15x15x8x32xf32>
    %15 = arith.truncf %14 : vector<15x15x8x32xf32> to vector<15x15x8x32xbf16>
    %cst_8 = arith.constant 0.000000e+00 : bf16
    %16 = vector.broadcast %cst_8 : bf16 to vector<1x15x8x32xbf16>
    %17 = tpu.concatenate %15, %16 in 0 : vector<15x15x8x32xbf16>, vector<1x15x8x32xbf16> -> vector<16x15x8x32xbf16>
    %cst_9 = arith.constant 0.000000e+00 : bf16
    %18 = vector.broadcast %cst_9 : bf16 to vector<16x1x8x32xbf16>
    %19 = tpu.concatenate %17, %18 in 1 : vector<16x15x8x32xbf16>, vector<16x1x8x32xbf16> -> vector<16x16x8x32xbf16>
    %20 = vector.shape_cast %19 : vector<16x16x8x32xbf16> to vector<8x2x8x2x8x32xbf16>
    %21 = vector.extract_strided_slice %20 {offsets = [0, 0, 0, 0, 0, 0], sizes = [8, 1, 8, 1, 8, 32], strides = [1, 1, 1, 1, 1, 1]} : vector<8x2x8x2x8x32xbf16> to vector<8x1x8x1x8x32xbf16>
    %22 = vector.shape_cast %21 : vector<8x1x8x1x8x32xbf16> to vector<8x8x8x32xbf16>
    %23 = vector.extract_strided_slice %20 {offsets = [0, 0, 0, 1, 0, 0], sizes = [8, 1, 8, 1, 8, 32], strides = [1, 1, 1, 1, 1, 1]} : vector<8x2x8x2x8x32xbf16> to vector<8x1x8x1x8x32xbf16>
    %24 = vector.shape_cast %23 : vector<8x1x8x1x8x32xbf16> to vector<8x8x8x32xbf16>
    %25 = vector.extract_strided_slice %20 {offsets = [0, 1, 0, 0, 0, 0], sizes = [8, 1, 8, 1, 8, 32], strides = [1, 1, 1, 1, 1, 1]} : vector<8x2x8x2x8x32xbf16> to vector<8x1x8x1x8x32xbf16>
    %26 = vector.shape_cast %25 : vector<8x1x8x1x8x32xbf16> to vector<8x8x8x32xbf16>
    %27 = vector.extract_strided_slice %20 {offsets = [0, 1, 0, 1, 0, 0], sizes = [8, 1, 8, 1, 8, 32], strides = [1, 1, 1, 1, 1, 1]} : vector<8x2x8x2x8x32xbf16> to vector<8x1x8x1x8x32xbf16>
    %28 = vector.shape_cast %27 : vector<8x1x8x1x8x32xbf16> to vector<8x8x8x32xbf16>
    %29 = vector.extract_strided_slice %22 {offsets = [0, 0, 0, 0], sizes = [6, 6, 8, 32], strides = [1, 1, 1, 1]} : vector<8x8x8x32xbf16> to vector<6x6x8x32xbf16>
    %30 = vector.extract_strided_slice %24 {offsets = [0, 0, 0, 0], sizes = [6, 6, 8, 32], strides = [1, 1, 1, 1]} : vector<8x8x8x32xbf16> to vector<6x6x8x32xbf16>
    %31 = vector.extract_strided_slice %22 {offsets = [0, 1, 0, 0], sizes = [6, 6, 8, 32], strides = [1, 1, 1, 1]} : vector<8x8x8x32xbf16> to vector<6x6x8x32xbf16>
    %32 = vector.extract_strided_slice %24 {offsets = [0, 1, 0, 0], sizes = [6, 6, 8, 32], strides = [1, 1, 1, 1]} : vector<8x8x8x32xbf16> to vector<6x6x8x32xbf16>
    %33 = vector.extract_strided_slice %26 {offsets = [0, 0, 0, 0], sizes = [6, 6, 8, 32], strides = [1, 1, 1, 1]} : vector<8x8x8x32xbf16> to vector<6x6x8x32xbf16>
    %34 = vector.extract_strided_slice %28 {offsets = [0, 0, 0, 0], sizes = [6, 6, 8, 32], strides = [1, 1, 1, 1]} : vector<8x8x8x32xbf16> to vector<6x6x8x32xbf16>
    %35 = vector.extract_strided_slice %26 {offsets = [0, 1, 0, 0], sizes = [6, 6, 8, 32], strides = [1, 1, 1, 1]} : vector<8x8x8x32xbf16> to vector<6x6x8x32xbf16>
    %36 = vector.extract_strided_slice %28 {offsets = [0, 1, 0, 0], sizes = [6, 6, 8, 32], strides = [1, 1, 1, 1]} : vector<8x8x8x32xbf16> to vector<6x6x8x32xbf16>
    %37 = vector.extract_strided_slice %22 {offsets = [1, 0, 0, 0], sizes = [6, 6, 8, 32], strides = [1, 1, 1, 1]} : vector<8x8x8x32xbf16> to vector<6x6x8x32xbf16>
    %38 = vector.extract_strided_slice %24 {offsets = [1, 0, 0, 0], sizes = [6, 6, 8, 32], strides = [1, 1, 1, 1]} : vector<8x8x8x32xbf16> to vector<6x6x8x32xbf16>
    %39 = vector.extract_strided_slice %22 {offsets = [1, 1, 0, 0], sizes = [6, 6, 8, 32], strides = [1, 1, 1, 1]} : vector<8x8x8x32xbf16> to vector<6x6x8x32xbf16>
    %40 = vector.extract_strided_slice %24 {offsets = [1, 1, 0, 0], sizes = [6, 6, 8, 32], strides = [1, 1, 1, 1]} : vector<8x8x8x32xbf16> to vector<6x6x8x32xbf16>
    %41 = vector.extract_strided_slice %26 {offsets = [1, 0, 0, 0], sizes = [6, 6, 8, 32], strides = [1, 1, 1, 1]} : vector<8x8x8x32xbf16> to vector<6x6x8x32xbf16>
    %42 = vector.extract_strided_slice %28 {offsets = [1, 0, 0, 0], sizes = [6, 6, 8, 32], strides = [1, 1, 1, 1]} : vector<8x8x8x32xbf16> to vector<6x6x8x32xbf16>
    %43 = vector.extract_strided_slice %26 {offsets = [1, 1, 0, 0], sizes = [6, 6, 8, 32], strides = [1, 1, 1, 1]} : vector<8x8x8x32xbf16> to vector<6x6x8x32xbf16>
    %44 = vector.extract_strided_slice %28 {offsets = [1, 1, 0, 0], sizes = [6, 6, 8, 32], strides = [1, 1, 1, 1]} : vector<8x8x8x32xbf16> to vector<6x6x8x32xbf16>
    %45 = tpu.concatenate %29, %30, %31, %32, %33, %34, %35, %36, %37, %38, %39, %40, %41, %42, %43, %44 in 3 : vector<6x6x8x32xbf16>, vector<6x6x8x32xbf16>, vector<6x6x8x32xbf16>, vector<6x6x8x32xbf16>, vector<6x6x8x32xbf16>, vector<6x6x8x32xbf16>, vector<6x6x8x32xbf16>, vector<6x6x8x32xbf16>, vector<6x6x8x32xbf16>, vector<6x6x8x32xbf16>, vector<6x6x8x32xbf16>, vector<6x6x8x32xbf16>, vector<6x6x8x32xbf16>, vector<6x6x8x32xbf16>, vector<6x6x8x32xbf16>, vector<6x6x8x32xbf16> -> vector<6x6x8x512xbf16>
    %46 = vector.shape_cast %45 : vector<6x6x8x512xbf16> to vector<288x512xbf16>
    %c0_10 = arith.constant 0 : index
    %c0_11 = arith.constant 0 : index
    %47 = vector.load %arg4[%c0_10, %c0_11] : memref<512x64xbf16, #tpu.memory_space<vmem>>, vector<512x64xbf16>
    %cst_12 = arith.constant dense<0.000000e+00> : vector<288x64xf32>
    %48 = tpu.matmul %46, %47, %cst_12 {dimension_numbers = #tpu.dot_dimension_numbers<[1], [0], [0], [1], [0, 0, 1, 1], [], []>} : vector<288x512xbf16>, vector<512x64xbf16>, vector<288x64xf32> -> vector<288x64xf32>
    %c0_13 = arith.constant 0 : index
    %c0_14 = arith.constant 0 : index
    %49 = vector.load %arg5[%c0_13, %c0_14] : memref<1x64xf32, #tpu.memory_space<vmem>>, vector<1x64xf32>
    %50 = vector.broadcast %49 : vector<1x64xf32> to vector<288x64xf32>
    %51 = arith.addf %48, %50 : vector<288x64xf32>
    %cst_15 = arith.constant 0.000000e+00 : f32
    %52 = vector.broadcast %cst_15 : f32 to vector<288x64xf32>
    %53 = arith.maximumf %51, %52 : vector<288x64xf32>
    %54 = vector.shape_cast %53 : vector<288x64xf32> to vector<6x6x8x64xf32>
    %55 = arith.truncf %54 : vector<6x6x8x64xf32> to vector<6x6x8x64xbf16>
    %56 = vector.extract_strided_slice %55 {offsets = [0, 0, 0, 0], sizes = [4, 4, 8, 64], strides = [1, 1, 1, 1]} : vector<6x6x8x64xbf16> to vector<4x4x8x64xbf16>
    %57 = vector.extract_strided_slice %55 {offsets = [0, 1, 0, 0], sizes = [4, 4, 8, 64], strides = [1, 1, 1, 1]} : vector<6x6x8x64xbf16> to vector<4x4x8x64xbf16>
    %58 = vector.extract_strided_slice %55 {offsets = [0, 2, 0, 0], sizes = [4, 4, 8, 64], strides = [1, 1, 1, 1]} : vector<6x6x8x64xbf16> to vector<4x4x8x64xbf16>
    %59 = vector.extract_strided_slice %55 {offsets = [1, 0, 0, 0], sizes = [4, 4, 8, 64], strides = [1, 1, 1, 1]} : vector<6x6x8x64xbf16> to vector<4x4x8x64xbf16>
    %60 = vector.extract_strided_slice %55 {offsets = [1, 1, 0, 0], sizes = [4, 4, 8, 64], strides = [1, 1, 1, 1]} : vector<6x6x8x64xbf16> to vector<4x4x8x64xbf16>
    %61 = vector.extract_strided_slice %55 {offsets = [1, 2, 0, 0], sizes = [4, 4, 8, 64], strides = [1, 1, 1, 1]} : vector<6x6x8x64xbf16> to vector<4x4x8x64xbf16>
    %62 = vector.extract_strided_slice %55 {offsets = [2, 0, 0, 0], sizes = [4, 4, 8, 64], strides = [1, 1, 1, 1]} : vector<6x6x8x64xbf16> to vector<4x4x8x64xbf16>
    %63 = vector.extract_strided_slice %55 {offsets = [2, 1, 0, 0], sizes = [4, 4, 8, 64], strides = [1, 1, 1, 1]} : vector<6x6x8x64xbf16> to vector<4x4x8x64xbf16>
    %64 = vector.extract_strided_slice %55 {offsets = [2, 2, 0, 0], sizes = [4, 4, 8, 64], strides = [1, 1, 1, 1]} : vector<6x6x8x64xbf16> to vector<4x4x8x64xbf16>
    %65 = tpu.concatenate %56, %57, %58, %59, %60, %61, %62, %63, %64 in 3 : vector<4x4x8x64xbf16>, vector<4x4x8x64xbf16>, vector<4x4x8x64xbf16>, vector<4x4x8x64xbf16>, vector<4x4x8x64xbf16>, vector<4x4x8x64xbf16>, vector<4x4x8x64xbf16>, vector<4x4x8x64xbf16>, vector<4x4x8x64xbf16> -> vector<4x4x8x576xbf16>
    %66 = vector.shape_cast %65 : vector<4x4x8x576xbf16> to vector<128x576xbf16>
    %c0_16 = arith.constant 0 : index
    %c0_17 = arith.constant 0 : index
    %67 = vector.load %arg6[%c0_16, %c0_17] : memref<576x64xbf16, #tpu.memory_space<vmem>>, vector<576x64xbf16>
    %cst_18 = arith.constant dense<0.000000e+00> : vector<128x64xf32>
    %68 = tpu.matmul %66, %67, %cst_18 {dimension_numbers = #tpu.dot_dimension_numbers<[1], [0], [0], [1], [0, 0, 1, 1], [], []>} : vector<128x576xbf16>, vector<576x64xbf16>, vector<128x64xf32> -> vector<128x64xf32>
    %c0_19 = arith.constant 0 : index
    %c0_20 = arith.constant 0 : index
    %69 = vector.load %arg7[%c0_19, %c0_20] : memref<1x64xf32, #tpu.memory_space<vmem>>, vector<1x64xf32>
    %70 = vector.broadcast %69 : vector<1x64xf32> to vector<128x64xf32>
    %71 = arith.addf %68, %70 : vector<128x64xf32>
    %cst_21 = arith.constant 0.000000e+00 : f32
    %72 = vector.broadcast %cst_21 : f32 to vector<128x64xf32>
    %73 = arith.maximumf %71, %72 : vector<128x64xf32>
    %74 = vector.shape_cast %73 : vector<128x64xf32> to vector<16x8x64xf32>
    %75 = arith.truncf %74 : vector<16x8x64xf32> to vector<16x8x64xbf16>
    %c0_22 = arith.constant 0 : index
    %c0_23 = arith.constant 0 : index
    %c0_24 = arith.constant 0 : index
    %76 = vector.load %arg8[%c0_22, %c0_23, %c0_24] : memref<16x64x96xbf16, #tpu.memory_space<vmem>>, vector<16x64x96xbf16>
    %cst_25 = arith.constant dense<0.000000e+00> : vector<16x8x96xf32>
    %77 = tpu.matmul %75, %76, %cst_25 {dimension_numbers = #tpu.dot_dimension_numbers<[2], [1], [1], [2], [0, 0, 0, 1, 1, 2], [0], [0]>} : vector<16x8x64xbf16>, vector<16x64x96xbf16>, vector<16x8x96xf32> -> vector<16x8x96xf32>
    %cst_26 = arith.constant dense<0.000000e+00> : vector<8x96xf32>
    %78 = vector.multi_reduction <add>, %77, %cst_26 [0] : vector<16x8x96xf32> to vector<8x96xf32>
    %c0_27 = arith.constant 0 : index
    %c0_28 = arith.constant 0 : index
    %79 = vector.load %arg10[%c0_27, %c0_28] : memref<1x96xf32, #tpu.memory_space<vmem>>, vector<1x96xf32>
    %80 = vector.broadcast %79 : vector<1x96xf32> to vector<8x96xf32>
    %81 = arith.addf %78, %80 : vector<8x96xf32>
    %c0_29 = arith.constant 0 : index
    %c0_30 = arith.constant 0 : index
    %82 = vector.load %arg9[%c0_29, %c0_30] : memref<32x96xbf16, #tpu.memory_space<vmem>>, vector<32x96xbf16>
    %c0_31 = arith.constant 0 : index
    %c0_32 = arith.constant 0 : index
    %83 = vector.load %arg11[%c0_31, %c0_32] : memref<1x96xf32, #tpu.memory_space<vmem>>, vector<1x96xf32>
    %c0_33 = arith.constant 0 : index
    %c0_34 = arith.constant 0 : index
    %84 = vector.load %arg12[%c0_33, %c0_34] : memref<32x128xbf16, #tpu.memory_space<vmem>>, vector<32x128xbf16>
    %c0_35 = arith.constant 0 : index
    %c0_36 = arith.constant 0 : index
    %85 = vector.load %arg13[%c0_35, %c0_36] : memref<1x128xf32, #tpu.memory_space<vmem>>, vector<1x128xf32>
    %c0_37 = arith.constant 0 : index
    %c0_38 = arith.constant 0 : index
    %86 = vector.load %arg1[%c0_37, %c0_38] : memref<2x32xf32, #tpu.memory_space<vmem>>, vector<2x32xf32>
    %87 = vector.extract_strided_slice %81 {offsets = [0, 0], sizes = [2, 96], strides = [1, 1]} : vector<8x96xf32> to vector<2x96xf32>
    %88 = arith.truncf %86 : vector<2x32xf32> to vector<2x32xbf16>
    %cst_39 = arith.constant dense<0.000000e+00> : vector<2x96xf32>
    %89 = tpu.matmul %88, %82, %cst_39 {dimension_numbers = #tpu.dot_dimension_numbers<[1], [0], [0], [1], [0, 0, 1, 1], [], []>} : vector<2x32xbf16>, vector<32x96xbf16>, vector<2x96xf32> -> vector<2x96xf32>
    %90 = vector.broadcast %83 : vector<1x96xf32> to vector<2x96xf32>
    %91 = arith.addf %89, %90 : vector<2x96xf32>
    %92 = vector.extract_strided_slice %87 {offsets = [0, 0], sizes = [2, 32], strides = [1, 1]} : vector<2x96xf32> to vector<2x32xf32>
    %93 = vector.extract_strided_slice %91 {offsets = [0, 0], sizes = [2, 32], strides = [1, 1]} : vector<2x96xf32> to vector<2x32xf32>
    %94 = arith.addf %92, %93 : vector<2x32xf32>
    %95 = arith.negf %94 : vector<2x32xf32>
    %96 = math.exp %95 : vector<2x32xf32>
    %cst_40 = arith.constant 1.000000e+00 : f32
    %97 = vector.broadcast %cst_40 : f32 to vector<2x32xf32>
    %98 = arith.addf %97, %96 : vector<2x32xf32>
    %99 = arith.divf %97, %98 : vector<2x32xf32>
    %100 = vector.extract_strided_slice %87 {offsets = [0, 32], sizes = [2, 32], strides = [1, 1]} : vector<2x96xf32> to vector<2x32xf32>
    %101 = vector.extract_strided_slice %91 {offsets = [0, 32], sizes = [2, 32], strides = [1, 1]} : vector<2x96xf32> to vector<2x32xf32>
    %102 = arith.addf %100, %101 : vector<2x32xf32>
    %103 = arith.negf %102 : vector<2x32xf32>
    %104 = math.exp %103 : vector<2x32xf32>
    %cst_41 = arith.constant 1.000000e+00 : f32
    %105 = vector.broadcast %cst_41 : f32 to vector<2x32xf32>
    %106 = arith.addf %105, %104 : vector<2x32xf32>
    %107 = arith.divf %105, %106 : vector<2x32xf32>
    %108 = vector.extract_strided_slice %87 {offsets = [0, 64], sizes = [2, 32], strides = [1, 1]} : vector<2x96xf32> to vector<2x32xf32>
    %109 = vector.extract_strided_slice %91 {offsets = [0, 64], sizes = [2, 32], strides = [1, 1]} : vector<2x96xf32> to vector<2x32xf32>
    %110 = arith.mulf %99, %109 : vector<2x32xf32>
    %111 = arith.addf %108, %110 : vector<2x32xf32>
    %112 = math.tanh %111 : vector<2x32xf32>
    %cst_42 = arith.constant 1.000000e+00 : f32
    %113 = vector.broadcast %cst_42 : f32 to vector<2x32xf32>
    %114 = arith.subf %113, %107 : vector<2x32xf32>
    %115 = arith.mulf %114, %112 : vector<2x32xf32>
    %116 = arith.mulf %107, %86 : vector<2x32xf32>
    %117 = arith.addf %115, %116 : vector<2x32xf32>
    %118 = arith.truncf %117 : vector<2x32xf32> to vector<2x32xbf16>
    %cst_43 = arith.constant dense<0.000000e+00> : vector<2x128xf32>
    %119 = tpu.matmul %118, %84, %cst_43 {dimension_numbers = #tpu.dot_dimension_numbers<[1], [0], [0], [1], [0, 0, 1, 1], [], []>} : vector<2x32xbf16>, vector<32x128xbf16>, vector<2x128xf32> -> vector<2x128xf32>
    %120 = vector.broadcast %85 : vector<1x128xf32> to vector<2x128xf32>
    %121 = arith.addf %119, %120 : vector<2x128xf32>
    %c0_44 = arith.constant 0 : index
    %c0_45 = arith.constant 0 : index
    %c0_46 = arith.constant 0 : index
    %122 = vector.load %arg14[%c0_44, %c0_45, %c0_46] : memref<2x4x128xf32, #tpu.memory_space<vmem>>, vector<2x1x128xf32>
    %123 = vector.shape_cast %122 : vector<2x1x128xf32> to vector<2x128xf32>
    %124 = vector.shape_cast %121 : vector<2x128xf32> to vector<2x1x128xf32>
    tpu.vector_store %arg14[%c0_44, %c0_45, %c0_46], %124 {strides = array<i32>} : memref<2x4x128xf32, #tpu.memory_space<vmem>>, vector<2x1x128xf32>,
    %125 = vector.extract_strided_slice %81 {offsets = [2, 0], sizes = [2, 96], strides = [1, 1]} : vector<8x96xf32> to vector<2x96xf32>
    %126 = arith.truncf %117 : vector<2x32xf32> to vector<2x32xbf16>
    %cst_47 = arith.constant dense<0.000000e+00> : vector<2x96xf32>
    %127 = tpu.matmul %126, %82, %cst_47 {dimension_numbers = #tpu.dot_dimension_numbers<[1], [0], [0], [1], [0, 0, 1, 1], [], []>} : vector<2x32xbf16>, vector<32x96xbf16>, vector<2x96xf32> -> vector<2x96xf32>
    %128 = vector.broadcast %83 : vector<1x96xf32> to vector<2x96xf32>
    %129 = arith.addf %127, %128 : vector<2x96xf32>
    %130 = vector.extract_strided_slice %125 {offsets = [0, 0], sizes = [2, 32], strides = [1, 1]} : vector<2x96xf32> to vector<2x32xf32>
    %131 = vector.extract_strided_slice %129 {offsets = [0, 0], sizes = [2, 32], strides = [1, 1]} : vector<2x96xf32> to vector<2x32xf32>
    %132 = arith.addf %130, %131 : vector<2x32xf32>
    %133 = arith.negf %132 : vector<2x32xf32>
    %134 = math.exp %133 : vector<2x32xf32>
    %cst_48 = arith.constant 1.000000e+00 : f32
    %135 = vector.broadcast %cst_48 : f32 to vector<2x32xf32>
    %136 = arith.addf %135, %134 : vector<2x32xf32>
    %137 = arith.divf %135, %136 : vector<2x32xf32>
    %138 = vector.extract_strided_slice %125 {offsets = [0, 32], sizes = [2, 32], strides = [1, 1]} : vector<2x96xf32> to vector<2x32xf32>
    %139 = vector.extract_strided_slice %129 {offsets = [0, 32], sizes = [2, 32], strides = [1, 1]} : vector<2x96xf32> to vector<2x32xf32>
    %140 = arith.addf %138, %139 : vector<2x32xf32>
    %141 = arith.negf %140 : vector<2x32xf32>
    %142 = math.exp %141 : vector<2x32xf32>
    %cst_49 = arith.constant 1.000000e+00 : f32
    %143 = vector.broadcast %cst_49 : f32 to vector<2x32xf32>
    %144 = arith.addf %143, %142 : vector<2x32xf32>
    %145 = arith.divf %143, %144 : vector<2x32xf32>
    %146 = vector.extract_strided_slice %125 {offsets = [0, 64], sizes = [2, 32], strides = [1, 1]} : vector<2x96xf32> to vector<2x32xf32>
    %147 = vector.extract_strided_slice %129 {offsets = [0, 64], sizes = [2, 32], strides = [1, 1]} : vector<2x96xf32> to vector<2x32xf32>
    %148 = arith.mulf %137, %147 : vector<2x32xf32>
    %149 = arith.addf %146, %148 : vector<2x32xf32>
    %150 = math.tanh %149 : vector<2x32xf32>
    %cst_50 = arith.constant 1.000000e+00 : f32
    %151 = vector.broadcast %cst_50 : f32 to vector<2x32xf32>
    %152 = arith.subf %151, %145 : vector<2x32xf32>
    %153 = arith.mulf %152, %150 : vector<2x32xf32>
    %154 = arith.mulf %145, %117 : vector<2x32xf32>
    %155 = arith.addf %153, %154 : vector<2x32xf32>
    %156 = arith.truncf %155 : vector<2x32xf32> to vector<2x32xbf16>
    %cst_51 = arith.constant dense<0.000000e+00> : vector<2x128xf32>
    %157 = tpu.matmul %156, %84, %cst_51 {dimension_numbers = #tpu.dot_dimension_numbers<[1], [0], [0], [1], [0, 0, 1, 1], [], []>} : vector<2x32xbf16>, vector<32x128xbf16>, vector<2x128xf32> -> vector<2x128xf32>
    %158 = vector.broadcast %85 : vector<1x128xf32> to vector<2x128xf32>
    %159 = arith.addf %157, %158 : vector<2x128xf32>
    %c0_52 = arith.constant 0 : index
    %c1 = arith.constant 1 : index
    %c0_53 = arith.constant 0 : index
    %160 = vector.load %arg14[%c0_52, %c1, %c0_53] : memref<2x4x128xf32, #tpu.memory_space<vmem>>, vector<2x1x128xf32>
    %161 = vector.shape_cast %160 : vector<2x1x128xf32> to vector<2x128xf32>
    %162 = vector.shape_cast %159 : vector<2x128xf32> to vector<2x1x128xf32>
    tpu.vector_store %arg14[%c0_52, %c1, %c0_53], %162 {strides = array<i32>} : memref<2x4x128xf32, #tpu.memory_space<vmem>>, vector<2x1x128xf32>,
    %163 = vector.extract_strided_slice %81 {offsets = [4, 0], sizes = [2, 96], strides = [1, 1]} : vector<8x96xf32> to vector<2x96xf32>
    %164 = arith.truncf %155 : vector<2x32xf32> to vector<2x32xbf16>
    %cst_54 = arith.constant dense<0.000000e+00> : vector<2x96xf32>
    %165 = tpu.matmul %164, %82, %cst_54 {dimension_numbers = #tpu.dot_dimension_numbers<[1], [0], [0], [1], [0, 0, 1, 1], [], []>} : vector<2x32xbf16>, vector<32x96xbf16>, vector<2x96xf32> -> vector<2x96xf32>
    %166 = vector.broadcast %83 : vector<1x96xf32> to vector<2x96xf32>
    %167 = arith.addf %165, %166 : vector<2x96xf32>
    %168 = vector.extract_strided_slice %163 {offsets = [0, 0], sizes = [2, 32], strides = [1, 1]} : vector<2x96xf32> to vector<2x32xf32>
    %169 = vector.extract_strided_slice %167 {offsets = [0, 0], sizes = [2, 32], strides = [1, 1]} : vector<2x96xf32> to vector<2x32xf32>
    %170 = arith.addf %168, %169 : vector<2x32xf32>
    %171 = arith.negf %170 : vector<2x32xf32>
    %172 = math.exp %171 : vector<2x32xf32>
    %cst_55 = arith.constant 1.000000e+00 : f32
    %173 = vector.broadcast %cst_55 : f32 to vector<2x32xf32>
    %174 = arith.addf %173, %172 : vector<2x32xf32>
    %175 = arith.divf %173, %174 : vector<2x32xf32>
    %176 = vector.extract_strided_slice %163 {offsets = [0, 32], sizes = [2, 32], strides = [1, 1]} : vector<2x96xf32> to vector<2x32xf32>
    %177 = vector.extract_strided_slice %167 {offsets = [0, 32], sizes = [2, 32], strides = [1, 1]} : vector<2x96xf32> to vector<2x32xf32>
    %178 = arith.addf %176, %177 : vector<2x32xf32>
    %179 = arith.negf %178 : vector<2x32xf32>
    %180 = math.exp %179 : vector<2x32xf32>
    %cst_56 = arith.constant 1.000000e+00 : f32
    %181 = vector.broadcast %cst_56 : f32 to vector<2x32xf32>
    %182 = arith.addf %181, %180 : vector<2x32xf32>
    %183 = arith.divf %181, %182 : vector<2x32xf32>
    %184 = vector.extract_strided_slice %163 {offsets = [0, 64], sizes = [2, 32], strides = [1, 1]} : vector<2x96xf32> to vector<2x32xf32>
    %185 = vector.extract_strided_slice %167 {offsets = [0, 64], sizes = [2, 32], strides = [1, 1]} : vector<2x96xf32> to vector<2x32xf32>
    %186 = arith.mulf %175, %185 : vector<2x32xf32>
    %187 = arith.addf %184, %186 : vector<2x32xf32>
    %188 = math.tanh %187 : vector<2x32xf32>
    %cst_57 = arith.constant 1.000000e+00 : f32
    %189 = vector.broadcast %cst_57 : f32 to vector<2x32xf32>
    %190 = arith.subf %189, %183 : vector<2x32xf32>
    %191 = arith.mulf %190, %188 : vector<2x32xf32>
    %192 = arith.mulf %183, %155 : vector<2x32xf32>
    %193 = arith.addf %191, %192 : vector<2x32xf32>
    %194 = arith.truncf %193 : vector<2x32xf32> to vector<2x32xbf16>
    %cst_58 = arith.constant dense<0.000000e+00> : vector<2x128xf32>
    %195 = tpu.matmul %194, %84, %cst_58 {dimension_numbers = #tpu.dot_dimension_numbers<[1], [0], [0], [1], [0, 0, 1, 1], [], []>} : vector<2x32xbf16>, vector<32x128xbf16>, vector<2x128xf32> -> vector<2x128xf32>
    %196 = vector.broadcast %85 : vector<1x128xf32> to vector<2x128xf32>
    %197 = arith.addf %195, %196 : vector<2x128xf32>
    %c0_59 = arith.constant 0 : index
    %c2 = arith.constant 2 : index
    %c0_60 = arith.constant 0 : index
    %198 = vector.load %arg14[%c0_59, %c2, %c0_60] : memref<2x4x128xf32, #tpu.memory_space<vmem>>, vector<2x1x128xf32>
    %199 = vector.shape_cast %198 : vector<2x1x128xf32> to vector<2x128xf32>
    %200 = vector.shape_cast %197 : vector<2x128xf32> to vector<2x1x128xf32>
    tpu.vector_store %arg14[%c0_59, %c2, %c0_60], %200 {strides = array<i32>} : memref<2x4x128xf32, #tpu.memory_space<vmem>>, vector<2x1x128xf32>,
    %201 = vector.extract_strided_slice %81 {offsets = [6, 0], sizes = [2, 96], strides = [1, 1]} : vector<8x96xf32> to vector<2x96xf32>
    %202 = arith.truncf %193 : vector<2x32xf32> to vector<2x32xbf16>
    %cst_61 = arith.constant dense<0.000000e+00> : vector<2x96xf32>
    %203 = tpu.matmul %202, %82, %cst_61 {dimension_numbers = #tpu.dot_dimension_numbers<[1], [0], [0], [1], [0, 0, 1, 1], [], []>} : vector<2x32xbf16>, vector<32x96xbf16>, vector<2x96xf32> -> vector<2x96xf32>
    %204 = vector.broadcast %83 : vector<1x96xf32> to vector<2x96xf32>
    %205 = arith.addf %203, %204 : vector<2x96xf32>
    %206 = vector.extract_strided_slice %201 {offsets = [0, 0], sizes = [2, 32], strides = [1, 1]} : vector<2x96xf32> to vector<2x32xf32>
    %207 = vector.extract_strided_slice %205 {offsets = [0, 0], sizes = [2, 32], strides = [1, 1]} : vector<2x96xf32> to vector<2x32xf32>
    %208 = arith.addf %206, %207 : vector<2x32xf32>
    %209 = arith.negf %208 : vector<2x32xf32>
    %210 = math.exp %209 : vector<2x32xf32>
    %cst_62 = arith.constant 1.000000e+00 : f32
    %211 = vector.broadcast %cst_62 : f32 to vector<2x32xf32>
    %212 = arith.addf %211, %210 : vector<2x32xf32>
    %213 = arith.divf %211, %212 : vector<2x32xf32>
    %214 = vector.extract_strided_slice %201 {offsets = [0, 32], sizes = [2, 32], strides = [1, 1]} : vector<2x96xf32> to vector<2x32xf32>
    %215 = vector.extract_strided_slice %205 {offsets = [0, 32], sizes = [2, 32], strides = [1, 1]} : vector<2x96xf32> to vector<2x32xf32>
    %216 = arith.addf %214, %215 : vector<2x32xf32>
    %217 = arith.negf %216 : vector<2x32xf32>
    %218 = math.exp %217 : vector<2x32xf32>
    %cst_63 = arith.constant 1.000000e+00 : f32
    %219 = vector.broadcast %cst_63 : f32 to vector<2x32xf32>
    %220 = arith.addf %219, %218 : vector<2x32xf32>
    %221 = arith.divf %219, %220 : vector<2x32xf32>
    %222 = vector.extract_strided_slice %201 {offsets = [0, 64], sizes = [2, 32], strides = [1, 1]} : vector<2x96xf32> to vector<2x32xf32>
    %223 = vector.extract_strided_slice %205 {offsets = [0, 64], sizes = [2, 32], strides = [1, 1]} : vector<2x96xf32> to vector<2x32xf32>
    %224 = arith.mulf %213, %223 : vector<2x32xf32>
    %225 = arith.addf %222, %224 : vector<2x32xf32>
    %226 = math.tanh %225 : vector<2x32xf32>
    %cst_64 = arith.constant 1.000000e+00 : f32
    %227 = vector.broadcast %cst_64 : f32 to vector<2x32xf32>
    %228 = arith.subf %227, %221 : vector<2x32xf32>
    %229 = arith.mulf %228, %226 : vector<2x32xf32>
    %230 = arith.mulf %221, %193 : vector<2x32xf32>
    %231 = arith.addf %229, %230 : vector<2x32xf32>
    %232 = arith.truncf %231 : vector<2x32xf32> to vector<2x32xbf16>
    %cst_65 = arith.constant dense<0.000000e+00> : vector<2x128xf32>
    %233 = tpu.matmul %232, %84, %cst_65 {dimension_numbers = #tpu.dot_dimension_numbers<[1], [0], [0], [1], [0, 0, 1, 1], [], []>} : vector<2x32xbf16>, vector<32x128xbf16>, vector<2x128xf32> -> vector<2x128xf32>
    %234 = vector.broadcast %85 : vector<1x128xf32> to vector<2x128xf32>
    %235 = arith.addf %233, %234 : vector<2x128xf32>
    %c0_66 = arith.constant 0 : index
    %c3 = arith.constant 3 : index
    %c0_67 = arith.constant 0 : index
    %236 = vector.load %arg14[%c0_66, %c3, %c0_67] : memref<2x4x128xf32, #tpu.memory_space<vmem>>, vector<2x1x128xf32>
    %237 = vector.shape_cast %236 : vector<2x1x128xf32> to vector<2x128xf32>
    %238 = vector.shape_cast %235 : vector<2x128xf32> to vector<2x1x128xf32>
    tpu.vector_store %arg14[%c0_66, %c3, %c0_67], %238 {strides = array<i32>} : memref<2x4x128xf32, #tpu.memory_space<vmem>>, vector<2x1x128xf32>,
    %c0_68 = arith.constant 0 : index
    %c0_69 = arith.constant 0 : index
    %239 = vector.load %arg15[%c0_68, %c0_69] : memref<2x32xf32, #tpu.memory_space<vmem>>, vector<2x32xf32>
    tpu.vector_store %arg15[%c0_68, %c0_69], %231 {strides = array<i32>} : memref<2x32xf32, #tpu.memory_space<vmem>>, vector<2x32xf32>,
    return
  }
}

</mosaic_0001>

<llo_original>
// kernel: categorical_drqn_forward.1
$region0: #{categorical_drqn_forward.1}
  #allocation0 [shape = 'u32[]', space=smem, size = 0x4, offset = 0x4, fixed_abs, tag = 'smem constant byte address 0x4 - core index']
  #allocation1 [shape = 'u32[144,128]{1,0:T(1,128)}', space=vmem, size = 0x12000, scoped, tag = 'internal scratch']
  %s0 = inlined_call_operand.vmem [shape: bf16[16,16,8,64], index: 0, kind: input, shape index: {}]
  %s1 = inlined_call_operand.vmem [shape: f32[2,32], index: 1, kind: input, shape index: {}]
  %s2 = inlined_call_operand.vmem [shape: bf16[256,32], index: 2, kind: input, shape index: {}]
  %s3 = inlined_call_operand.vmem [shape: f32[1,32], index: 3, kind: input, shape index: {}]
  %s4 = inlined_call_operand.vmem [shape: bf16[512,64], index: 4, kind: input, shape index: {}]
  %s5 = inlined_call_operand.vmem [shape: f32[1,64], index: 5, kind: input, shape index: {}]
  %s6 = inlined_call_operand.vmem [shape: bf16[576,64], index: 6, kind: input, shape index: {}]
  %s7 = inlined_call_operand.vmem [shape: f32[1,64], index: 7, kind: input, shape index: {}]
  %s8 = inlined_call_operand.vmem [shape: bf16[16,64,96], index: 8, kind: input, shape index: {}]
  %s9 = inlined_call_operand.vmem [shape: bf16[32,96], index: 9, kind: input, shape index: {}]
  %s10 = inlined_call_operand.vmem [shape: f32[1,96], index: 10, kind: input, shape index: {}]
  %s11 = inlined_call_operand.vmem [shape: f32[1,96], index: 11, kind: input, shape index: {}]
  %s12 = inlined_call_operand.vmem [shape: bf16[32,128], index: 12, kind: input, shape index: {}]
  %s13 = inlined_call_operand.vmem [shape: f32[1,128], index: 13, kind: input, shape index: {}]
  %s14 = inlined_call_operand.hbm [shape: f32[2,4,128], index: 14, kind: output, shape index: {0}]
  %s15 = inlined_call_operand.hbm [shape: f32[2,32], index: 15, kind: output, shape index: {1}]
  %16 = xla_tuple %s14, %s15
  %s17 = sld [smem:[#allocation0]]
  $region74: #{categorical_drqn_forward.1} parent=0
    _
  %s19 = ssub.s32 1, %s17
  %s20 = scalar_select 0, %s19, %s17
  $region1: #{categorical_drqn_forward.1} parent=0
    #allocation2 [shape = 'u8[4096]{0}', space=vmem, size = 0x1000, scoped, tag = 'output window, operand 0, single buffered']
    #allocation3 [shape = 's32[1]{0}', space=sflag, size = 0x4, scoped, tag = 'scoped memory for categorical_drqn_forward.1']
    #allocation4 [shape = 'u8[1024]{0}', space=vmem, size = 0x400, scoped, tag = 'output window, operand 1, single buffered']
    #allocation5 [shape = 's32[1]{0}', space=sflag, size = 0x4, scoped, tag = 'scoped memory for categorical_drqn_forward.1']
    %21 = vsyncpa [#allocation3], 0
    %22 = vsyncpa [#allocation5], 0
    // Predicated region
    $region2: #{categorical_drqn_forward.1} parent=1 // pred_check
      _
    $region3: #{categorical_drqn_forward.1} parent=1 // pred_check_branch
      %24 = sbr.rel (0) target = $region5
    $region4: #{categorical_drqn_forward.1} parent=1 // pred_region
      _
    $region5: #{categorical_drqn_forward.1} parent=1 // pred_fallthru
      _
    // Predicated region
    $region6: #{categorical_drqn_forward.1} parent=1 // pred_check
      _
    $region7: #{categorical_drqn_forward.1} parent=1 // pred_check_branch
      %26 = sbr.rel (0) target = $region9
    $region8: #{categorical_drqn_forward.1} parent=1 // pred_region
      _
    $region9: #{categorical_drqn_forward.1} parent=1 // pred_fallthru
      _
    // Predicated region
    $region10: #{categorical_drqn_forward.1} parent=1 // pred_check
      _
    $region11: #{categorical_drqn_forward.1} parent=1 // pred_check_branch
      %28 = sbr.rel (0) target = $region13
    $region12: #{categorical_drqn_forward.1} parent=1 // pred_region
      _
    $region13: #{categorical_drqn_forward.1} parent=1 // pred_fallthru
      _
    // Predicated region
    $region14: #{categorical_drqn_forward.1} parent=1 // pred_check
      _
    $region15: #{categorical_drqn_forward.1} parent=1 // pred_check_branch
      %30 = sbr.rel (0) target = $region17
    $region16: #{categorical_drqn_forward.1} parent=1 // pred_region
      _
    $region17: #{categorical_drqn_forward.1} parent=1 // pred_fallthru
      _
    // Predicated region
    $region18: #{categorical_drqn_forward.1} parent=1 // pred_check
      _
    $region19: #{categorical_drqn_forward.1} parent=1 // pred_check_branch
      %32 = sbr.rel (0) target = $region21
    $region20: #{categorical_drqn_forward.1} parent=1 // pred_region
      _
    $region21: #{categorical_drqn_forward.1} parent=1 // pred_fallthru
      _
    // Predicated region
    $region22: #{categorical_drqn_forward.1} parent=1 // pred_check
      _
    $region23: #{categorical_drqn_forward.1} parent=1 // pred_check_branch
      %34 = sbr.rel (0) target = $region25
    $region24: #{categorical_drqn_forward.1} parent=1 // pred_region
      _
    $region25: #{categorical_drqn_forward.1} parent=1 // pred_fallthru
      _
    // Predicated region
    $region26: #{categorical_drqn_forward.1} parent=1 // pred_check
      _
    $region27: #{categorical_drqn_forward.1} parent=1 // pred_check_branch
      %36 = sbr.rel (0) target = $region29
    $region28: #{categorical_drqn_forward.1} parent=1 // pred_region
      _
    $region29: #{categorical_drqn_forward.1} parent=1 // pred_fallthru
      _
    // Predicated region
    $region30: #{categorical_drqn_forward.1} parent=1 // pred_check
      _
    $region31: #{categorical_drqn_forward.1} parent=1 // pred_check_branch
      %38 = sbr.rel (0) target = $region33
    $region32: #{categorical_drqn_forward.1} parent=1 // pred_region
      _
    $region33: #{categorical_drqn_forward.1} parent=1 // pred_fallthru
      _
    // Predicated region
    $region34: #{categorical_drqn_forward.1} parent=1 // pred_check
      _
    $region35: #{categorical_drqn_forward.1} parent=1 // pred_check_branch
      %40 = sbr.rel (0) target = $region37
    $region36: #{categorical_drqn_forward.1} parent=1 // pred_region
      _
    $region37: #{categorical_drqn_forward.1} parent=1 // pred_fallthru
      _
    // Predicated region
    $region38: #{categorical_drqn_forward.1} parent=1 // pred_check
      _
    $region39: #{categorical_drqn_forward.1} parent=1 // pred_check_branch
      %42 = sbr.rel (0) target = $region41
    $region40: #{categorical_drqn_forward.1} parent=1 // pred_region
      _
    $region41: #{categorical_drqn_forward.1} parent=1 // pred_fallthru
      _
    // Predicated region
    $region42: #{categorical_drqn_forward.1} parent=1 // pred_check
      _
    $region43: #{categorical_drqn_forward.1} parent=1 // pred_check_branch
      %44 = sbr.rel (0) target = $region45
    $region44: #{categorical_drqn_forward.1} parent=1 // pred_region
      _
    $region45: #{categorical_drqn_forward.1} parent=1 // pred_fallthru
      _
    // Predicated region
    $region46: #{categorical_drqn_forward.1} parent=1 // pred_check
      _
    $region47: #{categorical_drqn_forward.1} parent=1 // pred_check_branch
      %46 = sbr.rel (0) target = $region49
    $region48: #{categorical_drqn_forward.1} parent=1 // pred_region
      _
    $region49: #{categorical_drqn_forward.1} parent=1 // pred_fallthru
      _
    // Predicated region
    $region50: #{categorical_drqn_forward.1} parent=1 // pred_check
      _
    $region51: #{categorical_drqn_forward.1} parent=1 // pred_check_branch
      %48 = sbr.rel (0) target = $region53
    $region52: #{categorical_drqn_forward.1} parent=1 // pred_region
      _
    $region53: #{categorical_drqn_forward.1} parent=1 // pred_fallthru
      _
    // Predicated region
    $region54: #{categorical_drqn_forward.1} parent=1 // pred_check
      _
    $region55: #{categorical_drqn_forward.1} parent=1 // pred_check_branch
      %50 = sbr.rel (0) target = $region57
    $region56: #{categorical_drqn_forward.1} parent=1 // pred_region
      _
    $region57: #{categorical_drqn_forward.1} parent=1 // pred_fallthru
      _
    %v52 = vld [vmem:[%s0] sm:$0xf]
    %v53 = vld [vmem:[%s0 + $0x4] sm:$0xf]
    %v54 = vld [vmem:[%s0 + $0x8] sm:$0xf]
    %v55 = vld [vmem:[%s0 + $0xc] sm:$0xf]
    %v56 = vld [vmem:[%s0 + $0x10] sm:$0xf]
    %v57 = vld [vmem:[%s0 + $0x14] sm:$0xf]
    %v58 = vld [vmem:[%s0 + $0x18] sm:$0xf]
    %v59 = vld [vmem:[%s0 + $0x1c] sm:$0xf]
    %v60 = vld [vmem:[%s0 + $0x20] sm:$0xf]
    %v61 = vld [vmem:[%s0 + $0x24] sm:$0xf]
    %v62 = vld [vmem:[%s0 + $0x28] sm:$0xf]
    %v63 = vld [vmem:[%s0 + $0x2c] sm:$0xf]
    %v64 = vld [vmem:[%s0 + $0x30] sm:$0xf]
    %v65 = vld [vmem:[%s0 + $0x34] sm:$0xf]
    %v66 = vld [vmem:[%s0 + $0x38] sm:$0xf]
    %v67 = vld [vmem:[%s0 + $0x3c] sm:$0xf]
    %v68 = vld [vmem:[%s0 + $0x40] sm:$0xf]
    %v69 = vld [vmem:[%s0 + $0x44] sm:$0xf]
    %v70 = vld [vmem:[%s0 + $0x48] sm:$0xf]
    %v71 = vld [vmem:[%s0 + $0x4c] sm:$0xf]
    %v72 = vld [vmem:[%s0 + $0x50] sm:$0xf]
    %v73 = vld [vmem:[%s0 + $0x54] sm:$0xf]
    %v74 = vld [vmem:[%s0 + $0x58] sm:$0xf]
    %v75 = vld [vmem:[%s0 + $0x5c] sm:$0xf]
    %v76 = vld [vmem:[%s0 + $0x60] sm:$0xf]
    %v77 = vld [vmem:[%s0 + $0x64] sm:$0xf]
    %v78 = vld [vmem:[%s0 + $0x68] sm:$0xf]
    %v79 = vld [vmem:[%s0 + $0x6c] sm:$0xf]
    %v80 = vld [vmem:[%s0 + $0x70] sm:$0xf]
    %v81 = vld [vmem:[%s0 + $0x74] sm:$0xf]
    %v82 = vld [vmem:[%s0 + $0x78] sm:$0xf]
    %v83 = vld [vmem:[%s0 + $0x7c] sm:$0xf]
    %v84 = vld [vmem:[%s0 + $0x80] sm:$0xf]
    %v85 = vld [vmem:[%s0 + $0x84] sm:$0xf]
    %v86 = vld [vmem:[%s0 + $0x88] sm:$0xf]
    %v87 = vld [vmem:[%s0 + $0x8c] sm:$0xf]
    %v88 = vld [vmem:[%s0 + $0x90] sm:$0xf]
    %v89 = vld [vmem:[%s0 + $0x94] sm:$0xf]
    %v90 = vld [vmem:[%s0 + $0x98] sm:$0xf]
    %v91 = vld [vmem:[%s0 + $0x9c] sm:$0xf]
    %v92 = vld [vmem:[%s0 + $0xa0] sm:$0xf]
    %v93 = vld [vmem:[%s0 + $0xa4] sm:$0xf]
    %v94 = vld [vmem:[%s0 + $0xa8] sm:$0xf]
    %v95 = vld [vmem:[%s0 + $0xac] sm:$0xf]
    %v96 = vld [vmem:[%s0 + $0xb0] sm:$0xf]
    %v97 = vld [vmem:[%s0 + $0xb4] sm:$0xf]
    %v98 = vld [vmem:[%s0 + $0xb8] sm:$0xf]
    %v99 = vld [vmem:[%s0 + $0xbc] sm:$0xf]
    %v100 = vld [vmem:[%s0 + $0xc0] sm:$0xf]
    %v101 = vld [vmem:[%s0 + $0xc4] sm:$0xf]
    %v102 = vld [vmem:[%s0 + $0xc8] sm:$0xf]
    %v103 = vld [vmem:[%s0 + $0xcc] sm:$0xf]
    %v104 = vld [vmem:[%s0 + $0xd0] sm:$0xf]
    %v105 = vld [vmem:[%s0 + $0xd4] sm:$0xf]
    %v106 = vld [vmem:[%s0 + $0xd8] sm:$0xf]
    %v107 = vld [vmem:[%s0 + $0xdc] sm:$0xf]
    %v108 = vld [vmem:[%s0 + $0xe0] sm:$0xf]
    %v109 = vld [vmem:[%s0 + $0xe4] sm:$0xf]
    %v110 = vld [vmem:[%s0 + $0xe8] sm:$0xf]
    %v111 = vld [vmem:[%s0 + $0xec] sm:$0xf]
    %v112 = vld [vmem:[%s0 + $0xf0] sm:$0xf]
    %v113 = vld [vmem:[%s0 + $0xf4] sm:$0xf]
    %v114 = vld [vmem:[%s0 + $0xf8] sm:$0xf]
    %v115 = vld [vmem:[%s0 + $0xfc] sm:$0xf]
    %v116 = vld [vmem:[%s0 + $0x100] sm:$0xf]
    %v117 = vld [vmem:[%s0 + $0x104] sm:$0xf]
    %v118 = vld [vmem:[%s0 + $0x108] sm:$0xf]
    %v119 = vld [vmem:[%s0 + $0x10c] sm:$0xf]
    %v120 = vld [vmem:[%s0 + $0x110] sm:$0xf]
    %v121 = vld [vmem:[%s0 + $0x114] sm:$0xf]
    %v122 = vld [vmem:[%s0 + $0x118] sm:$0xf]
    %v123 = vld [vmem:[%s0 + $0x11c] sm:$0xf]
    %v124 = vld [vmem:[%s0 + $0x120] sm:$0xf]
    %v125 = vld [vmem:[%s0 + $0x124] sm:$0xf]
    %v126 = vld [vmem:[%s0 + $0x128] sm:$0xf]
    %v127 = vld [vmem:[%s0 + $0x12c] sm:$0xf]
    %v128 = vld [vmem:[%s0 + $0x130] sm:$0xf]
    %v129 = vld [vmem:[%s0 + $0x134] sm:$0xf]
    %v130 = vld [vmem:[%s0 + $0x138] sm:$0xf]
    %v131 = vld [vmem:[%s0 + $0x13c] sm:$0xf]
    %v132 = vld [vmem:[%s0 + $0x140] sm:$0xf]
    %v133 = vld [vmem:[%s0 + $0x144] sm:$0xf]
    %v134 = vld [vmem:[%s0 + $0x148] sm:$0xf]
    %v135 = vld [vmem:[%s0 + $0x14c] sm:$0xf]
    %v136 = vld [vmem:[%s0 + $0x150] sm:$0xf]
    %v137 = vld [vmem:[%s0 + $0x154] sm:$0xf]
    %v138 = vld [vmem:[%s0 + $0x158] sm:$0xf]
    %v139 = vld [vmem:[%s0 + $0x15c] sm:$0xf]
    %v140 = vld [vmem:[%s0 + $0x160] sm:$0xf]
    %v141 = vld [vmem:[%s0 + $0x164] sm:$0xf]
    %v142 = vld [vmem:[%s0 + $0x168] sm:$0xf]
    %v143 = vld [vmem:[%s0 + $0x16c] sm:$0xf]
    %v144 = vld [vmem:[%s0 + $0x170] sm:$0xf]
    %v145 = vld [vmem:[%s0 + $0x174] sm:$0xf]
    %v146 = vld [vmem:[%s0 + $0x178] sm:$0xf]
    %v147 = vld [vmem:[%s0 + $0x17c] sm:$0xf]
    %v148 = vld [vmem:[%s0 + $0x180] sm:$0xf]
    %v149 = vld [vmem:[%s0 + $0x184] sm:$0xf]
    %v150 = vld [vmem:[%s0 + $0x188] sm:$0xf]
    %v151 = vld [vmem:[%s0 + $0x18c] sm:$0xf]
    %v152 = vld [vmem:[%s0 + $0x190] sm:$0xf]
    %v153 = vld [vmem:[%s0 + $0x194] sm:$0xf]
    %v154 = vld [vmem:[%s0 + $0x198] sm:$0xf]
    %v155 = vld [vmem:[%s0 + $0x19c] sm:$0xf]
    %v156 = vld [vmem:[%s0 + $0x1a0] sm:$0xf]
    %v157 = vld [vmem:[%s0 + $0x1a4] sm:$0xf]
    %v158 = vld [vmem:[%s0 + $0x1a8] sm:$0xf]
    %v159 = vld [vmem:[%s0 + $0x1ac] sm:$0xf]
    %v160 = vld [vmem:[%s0 + $0x1b0] sm:$0xf]
    %v161 = vld [vmem:[%s0 + $0x1b4] sm:$0xf]
    %v162 = vld [vmem:[%s0 + $0x1b8] sm:$0xf]
    %v163 = vld [vmem:[%s0 + $0x1bc] sm:$0xf]
    %v164 = vld [vmem:[%s0 + $0x1c0] sm:$0xf]
    %v165 = vld [vmem:[%s0 + $0x1c4] sm:$0xf]
    %v166 = vld [vmem:[%s0 + $0x1c8] sm:$0xf]
    %v167 = vld [vmem:[%s0 + $0x1cc] sm:$0xf]
    %v168 = vld [vmem:[%s0 + $0x1d0] sm:$0xf]
    %v169 = vld [vmem:[%s0 + $0x1d4] sm:$0xf]
    %v170 = vld [vmem:[%s0 + $0x1d8] sm:$0xf]
    %v171 = vld [vmem:[%s0 + $0x1dc] sm:$0xf]
    %v172 = vld [vmem:[%s0 + $0x1e0] sm:$0xf]
    %v173 = vld [vmem:[%s0 + $0x1e4] sm:$0xf]
    %v174 = vld [vmem:[%s0 + $0x1e8] sm:$0xf]
    %v175 = vld [vmem:[%s0 + $0x1ec] sm:$0xf]
    %v176 = vld [vmem:[%s0 + $0x1f0] sm:$0xf]
    %v177 = vld [vmem:[%s0 + $0x1f4] sm:$0xf]
    %v178 = vld [vmem:[%s0 + $0x1f8] sm:$0xf]
    %v179 = vld [vmem:[%s0 + $0x1fc] sm:$0xf]
    %v180 = vld [vmem:[%s0 + $0x200] sm:$0xf]
    %v181 = vld [vmem:[%s0 + $0x204] sm:$0xf]
    %v182 = vld [vmem:[%s0 + $0x208] sm:$0xf]
    %v183 = vld [vmem:[%s0 + $0x20c] sm:$0xf]
    %v184 = vld [vmem:[%s0 + $0x210] sm:$0xf]
    %v185 = vld [vmem:[%s0 + $0x214] sm:$0xf]
    %v186 = vld [vmem:[%s0 + $0x218] sm:$0xf]
    %v187 = vld [vmem:[%s0 + $0x21c] sm:$0xf]
    %v188 = vld [vmem:[%s0 + $0x220] sm:$0xf]
    %v189 = vld [vmem:[%s0 + $0x224] sm:$0xf]
    %v190 = vld [vmem:[%s0 + $0x228] sm:$0xf]
    %v191 = vld [vmem:[%s0 + $0x22c] sm:$0xf]
    %v192 = vld [vmem:[%s0 + $0x230] sm:$0xf]
    %v193 = vld [vmem:[%s0 + $0x234] sm:$0xf]
    %v194 = vld [vmem:[%s0 + $0x238] sm:$0xf]
    %v195 = vld [vmem:[%s0 + $0x23c] sm:$0xf]
    %v196 = vld [vmem:[%s0 + $0x240] sm:$0xf]
    %v197 = vld [vmem:[%s0 + $0x244] sm:$0xf]
    %v198 = vld [vmem:[%s0 + $0x248] sm:$0xf]
    %v199 = vld [vmem:[%s0 + $0x24c] sm:$0xf]
    %v200 = vld [vmem:[%s0 + $0x250] sm:$0xf]
    %v201 = vld [vmem:[%s0 + $0x254] sm:$0xf]
    %v202 = vld [vmem:[%s0 + $0x258] sm:$0xf]
    %v203 = vld [vmem:[%s0 + $0x25c] sm:$0xf]
    %v204 = vld [vmem:[%s0 + $0x260] sm:$0xf]
    %v205 = vld [vmem:[%s0 + $0x264] sm:$0xf]
    %v206 = vld [vmem:[%s0 + $0x268] sm:$0xf]
    %v207 = vld [vmem:[%s0 + $0x26c] sm:$0xf]
    %v208 = vld [vmem:[%s0 + $0x270] sm:$0xf]
    %v209 = vld [vmem:[%s0 + $0x274] sm:$0xf]
    %v210 = vld [vmem:[%s0 + $0x278] sm:$0xf]
    %v211 = vld [vmem:[%s0 + $0x27c] sm:$0xf]
    %v212 = vld [vmem:[%s0 + $0x280] sm:$0xf]
    %v213 = vld [vmem:[%s0 + $0x284] sm:$0xf]
    %v214 = vld [vmem:[%s0 + $0x288] sm:$0xf]
    %v215 = vld [vmem:[%s0 + $0x28c] sm:$0xf]
    %v216 = vld [vmem:[%s0 + $0x290] sm:$0xf]
    %v217 = vld [vmem:[%s0 + $0x294] sm:$0xf]
    %v218 = vld [vmem:[%s0 + $0x298] sm:$0xf]
    %v219 = vld [vmem:[%s0 + $0x29c] sm:$0xf]
    %v220 = vld [vmem:[%s0 + $0x2a0] sm:$0xf]
    %v221 = vld [vmem:[%s0 + $0x2a4] sm:$0xf]
    %v222 = vld [vmem:[%s0 + $0x2a8] sm:$0xf]
    %v223 = vld [vmem:[%s0 + $0x2ac] sm:$0xf]
    %v224 = vld [vmem:[%s0 + $0x2b0] sm:$0xf]
    %v225 = vld [vmem:[%s0 + $0x2b4] sm:$0xf]
    %v226 = vld [vmem:[%s0 + $0x2b8] sm:$0xf]
    %v227 = vld [vmem:[%s0 + $0x2bc] sm:$0xf]
    %v228 = vld [vmem:[%s0 + $0x2c0] sm:$0xf]
    %v229 = vld [vmem:[%s0 + $0x2c4] sm:$0xf]
    %v230 = vld [vmem:[%s0 + $0x2c8] sm:$0xf]
    %v231 = vld [vmem:[%s0 + $0x2cc] sm:$0xf]
    %v232 = vld [vmem:[%s0 + $0x2d0] sm:$0xf]
    %v233 = vld [vmem:[%s0 + $0x2d4] sm:$0xf]
    %v234 = vld [vmem:[%s0 + $0x2d8] sm:$0xf]
    %v235 = vld [vmem:[%s0 + $0x2dc] sm:$0xf]
    %v236 = vld [vmem:[%s0 + $0x2e0] sm:$0xf]
    %v237 = vld [vmem:[%s0 + $0x2e4] sm:$0xf]
    %v238 = vld [vmem:[%s0 + $0x2e8] sm:$0xf]
    %v239 = vld [vmem:[%s0 + $0x2ec] sm:$0xf]
    %v240 = vld [vmem:[%s0 + $0x2f0] sm:$0xf]
    %v241 = vld [vmem:[%s0 + $0x2f4] sm:$0xf]
    %v242 = vld [vmem:[%s0 + $0x2f8] sm:$0xf]
    %v243 = vld [vmem:[%s0 + $0x2fc] sm:$0xf]
    %v244 = vld [vmem:[%s0 + $0x300] sm:$0xf]
    %v245 = vld [vmem:[%s0 + $0x304] sm:$0xf]
    %v246 = vld [vmem:[%s0 + $0x308] sm:$0xf]
    %v247 = vld [vmem:[%s0 + $0x30c] sm:$0xf]
    %v248 = vld [vmem:[%s0 + $0x310] sm:$0xf]
    %v249 = vld [vmem:[%s0 + $0x314] sm:$0xf]
    %v250 = vld [vmem:[%s0 + $0x318] sm:$0xf]
    %v251 = vld [vmem:[%s0 + $0x31c] sm:$0xf]
    %v252 = vld [vmem:[%s0 + $0x320] sm:$0xf]
    %v253 = vld [vmem:[%s0 + $0x324] sm:$0xf]
    %v254 = vld [vmem:[%s0 + $0x328] sm:$0xf]
    %v255 = vld [vmem:[%s0 + $0x32c] sm:$0xf]
    %v256 = vld [vmem:[%s0 + $0x330] sm:$0xf]
    %v257 = vld [vmem:[%s0 + $0x334] sm:$0xf]
    %v258 = vld [vmem:[%s0 + $0x338] sm:$0xf]
    %v259 = vld [vmem:[%s0 + $0x33c] sm:$0xf]
    %v260 = vld [vmem:[%s0 + $0x340] sm:$0xf]
    %v261 = vld [vmem:[%s0 + $0x344] sm:$0xf]
    %v262 = vld [vmem:[%s0 + $0x348] sm:$0xf]
    %v263 = vld [vmem:[%s0 + $0x34c] sm:$0xf]
    %v264 = vld [vmem:[%s0 + $0x350] sm:$0xf]
    %v265 = vld [vmem:[%s0 + $0x354] sm:$0xf]
    %v266 = vld [vmem:[%s0 + $0x358] sm:$0xf]
    %v267 = vld [vmem:[%s0 + $0x35c] sm:$0xf]
    %v268 = vld [vmem:[%s0 + $0x360] sm:$0xf]
    %v269 = vld [vmem:[%s0 + $0x364] sm:$0xf]
    %v270 = vld [vmem:[%s0 + $0x368] sm:$0xf]
    %v271 = vld [vmem:[%s0 + $0x36c] sm:$0xf]
    %v272 = vld [vmem:[%s0 + $0x370] sm:$0xf]
    %v273 = vld [vmem:[%s0 + $0x374] sm:$0xf]
    %v274 = vld [vmem:[%s0 + $0x378] sm:$0xf]
    %v275 = vld [vmem:[%s0 + $0x37c] sm:$0xf]
    %v276 = vld [vmem:[%s0 + $0x380] sm:$0xf]
    %v277 = vld [vmem:[%s0 + $0x384] sm:$0xf]
    %v278 = vld [vmem:[%s0 + $0x388] sm:$0xf]
    %v279 = vld [vmem:[%s0 + $0x38c] sm:$0xf]
    %v280 = vld [vmem:[%s0 + $0x390] sm:$0xf]
    %v281 = vld [vmem:[%s0 + $0x394] sm:$0xf]
    %v282 = vld [vmem:[%s0 + $0x398] sm:$0xf]
    %v283 = vld [vmem:[%s0 + $0x39c] sm:$0xf]
    %v284 = vld [vmem:[%s0 + $0x3a0] sm:$0xf]
    %v285 = vld [vmem:[%s0 + $0x3a4] sm:$0xf]
    %v286 = vld [vmem:[%s0 + $0x3a8] sm:$0xf]
    %v287 = vld [vmem:[%s0 + $0x3ac] sm:$0xf]
    %v288 = vld [vmem:[%s0 + $0x3b0] sm:$0xf]
    %v289 = vld [vmem:[%s0 + $0x3b4] sm:$0xf]
    %v290 = vld [vmem:[%s0 + $0x3b8] sm:$0xf]
    %v291 = vld [vmem:[%s0 + $0x3bc] sm:$0xf]
    %v292 = vld [vmem:[%s0 + $0x3c0] sm:$0xf]
    %v293 = vld [vmem:[%s0 + $0x3c4] sm:$0xf]
    %v294 = vld [vmem:[%s0 + $0x3c8] sm:$0xf]
    %v295 = vld [vmem:[%s0 + $0x3cc] sm:$0xf]
    %v296 = vld [vmem:[%s0 + $0x3d0] sm:$0xf]
    %v297 = vld [vmem:[%s0 + $0x3d4] sm:$0xf]
    %v298 = vld [vmem:[%s0 + $0x3d8] sm:$0xf]
    %v299 = vld [vmem:[%s0 + $0x3dc] sm:$0xf]
    %v300 = vld [vmem:[%s0 + $0x3e0] sm:$0xf]
    %v301 = vld [vmem:[%s0 + $0x3e4] sm:$0xf]
    %v302 = vld [vmem:[%s0 + $0x3e8] sm:$0xf]
    %v303 = vld [vmem:[%s0 + $0x3ec] sm:$0xf]
    %v304 = vld [vmem:[%s0 + $0x3f0] sm:$0xf]
    %v305 = vld [vmem:[%s0 + $0x3f4] sm:$0xf]
    %v306 = vld [vmem:[%s0 + $0x3f8] sm:$0xf]
    %v307 = vld [vmem:[%s0 + $0x3fc] sm:$0xf]
    %v533 = vunpack.c.l.b16 %v53
    %v534 = vunpack.c.l.b16 %v54
    %v535 = vunpack.c.l.b16 %v55
    %v536 = vunpack.c.l.b16 %v56
    %v537 = vunpack.c.l.b16 %v57
    %v538 = vunpack.c.l.b16 %v58
    %v539 = vunpack.c.l.b16 %v59
    %v540 = vunpack.c.l.b16 %v60
    %v541 = vunpack.c.l.b16 %v61
    %v542 = vunpack.c.l.b16 %v62
    %v543 = vunpack.c.l.b16 %v63
    %v544 = vunpack.c.l.b16 %v64
    %v545 = vunpack.c.l.b16 %v65
    %v546 = vunpack.c.l.b16 %v66
    %v547 = vunpack.c.l.b16 %v67
    %v548 = vunpack.c.l.b16 %v69
    %v549 = vunpack.c.l.b16 %v70
    %v550 = vunpack.c.l.b16 %v71
    %v551 = vunpack.c.l.b16 %v72
    %v552 = vunpack.c.l.b16 %v73
    %v553 = vunpack.c.l.b16 %v74
    %v554 = vunpack.c.l.b16 %v75
    %v555 = vunpack.c.l.b16 %v76
    %v556 = vunpack.c.l.b16 %v77
    %v557 = vunpack.c.l.b16 %v78
    %v558 = vunpack.c.l.b16 %v79
    %v559 = vunpack.c.l.b16 %v80
    %v560 = vunpack.c.l.b16 %v81
    %v561 = vunpack.c.l.b16 %v82
    %v562 = vunpack.c.l.b16 %v83
    %v563 = vunpack.c.l.b16 %v85
    %v564 = vunpack.c.l.b16 %v86
    %v565 = vunpack.c.l.b16 %v87
    %v566 = vunpack.c.l.b16 %v88
    %v567 = vunpack.c.l.b16 %v89
    %v568 = vunpack.c.l.b16 %v90
    %v569 = vunpack.c.l.b16 %v91
    %v570 = vunpack.c.l.b16 %v92
    %v571 = vunpack.c.l.b16 %v93
    %v572 = vunpack.c.l.b16 %v94
    %v573 = vunpack.c.l.b16 %v95
    %v574 = vunpack.c.l.b16 %v96
    %v575 = vunpack.c.l.b16 %v97
    %v576 = vunpack.c.l.b16 %v98
    %v577 = vunpack.c.l.b16 %v99
    %v578 = vunpack.c.l.b16 %v101
    %v579 = vunpack.c.l.b16 %v102
    %v580 = vunpack.c.l.b16 %v103
    %v581 = vunpack.c.l.b16 %v104
    %v582 = vunpack.c.l.b16 %v105
    %v583 = vunpack.c.l.b16 %v106
    %v584 = vunpack.c.l.b16 %v107
    %v585 = vunpack.c.l.b16 %v108
    %v586 = vunpack.c.l.b16 %v109
    %v587 = vunpack.c.l.b16 %v110
    %v588 = vunpack.c.l.b16 %v111
    %v589 = vunpack.c.l.b16 %v112
    %v590 = vunpack.c.l.b16 %v113
    %v591 = vunpack.c.l.b16 %v114
    %v592 = vunpack.c.l.b16 %v115
    %v593 = vunpack.c.l.b16 %v117
    %v594 = vunpack.c.l.b16 %v118
    %v595 = vunpack.c.l.b16 %v119
    %v596 = vunpack.c.l.b16 %v120
    %v597 = vunpack.c.l.b16 %v121
    %v598 = vunpack.c.l.b16 %v122
    %v599 = vunpack.c.l.b16 %v123
    %v600 = vunpack.c.l.b16 %v124
    %v601 = vunpack.c.l.b16 %v125
    %v602 = vunpack.c.l.b16 %v126
    %v603 = vunpack.c.l.b16 %v127
    %v604 = vunpack.c.l.b16 %v128
    %v605 = vunpack.c.l.b16 %v129
    %v606 = vunpack.c.l.b16 %v130
    %v607 = vunpack.c.l.b16 %v131
    %v608 = vunpack.c.l.b16 %v133
    %v609 = vunpack.c.l.b16 %v134
    %v610 = vunpack.c.l.b16 %v135
    %v611 = vunpack.c.l.b16 %v136
    %v612 = vunpack.c.l.b16 %v137
    %v613 = vunpack.c.l.b16 %v138
    %v614 = vunpack.c.l.b16 %v139
    %v615 = vunpack.c.l.b16 %v140
    %v616 = vunpack.c.l.b16 %v141
    %v617 = vunpack.c.l.b16 %v142
    %v618 = vunpack.c.l.b16 %v143
    %v619 = vunpack.c.l.b16 %v144
    %v620 = vunpack.c.l.b16 %v145
    %v621 = vunpack.c.l.b16 %v146
    %v622 = vunpack.c.l.b16 %v147
    %v623 = vunpack.c.l.b16 %v149
    %v624 = vunpack.c.l.b16 %v150
    %v625 = vunpack.c.l.b16 %v151
    %v626 = vunpack.c.l.b16 %v152
    %v627 = vunpack.c.l.b16 %v153
    %v628 = vunpack.c.l.b16 %v154
    %v629 = vunpack.c.l.b16 %v155
    %v630 = vunpack.c.l.b16 %v156
    %v631 = vunpack.c.l.b16 %v157
    %v632 = vunpack.c.l.b16 %v158
    %v633 = vunpack.c.l.b16 %v159
    %v634 = vunpack.c.l.b16 %v160
    %v635 = vunpack.c.l.b16 %v161
    %v636 = vunpack.c.l.b16 %v162
    %v637 = vunpack.c.l.b16 %v163
    %v638 = vunpack.c.l.b16 %v165
    %v639 = vunpack.c.l.b16 %v166
    %v640 = vunpack.c.l.b16 %v167
    %v641 = vunpack.c.l.b16 %v168
    %v642 = vunpack.c.l.b16 %v169
    %v643 = vunpack.c.l.b16 %v170
    %v644 = vunpack.c.l.b16 %v171
    %v645 = vunpack.c.l.b16 %v172
    %v646 = vunpack.c.l.b16 %v173
    %v647 = vunpack.c.l.b16 %v174
    %v648 = vunpack.c.l.b16 %v175
    %v649 = vunpack.c.l.b16 %v176
    %v650 = vunpack.c.l.b16 %v177
    %v651 = vunpack.c.l.b16 %v178
    %v652 = vunpack.c.l.b16 %v179
    %v653 = vunpack.c.l.b16 %v181
    %v654 = vunpack.c.l.b16 %v182
    %v655 = vunpack.c.l.b16 %v183
    %v656 = vunpack.c.l.b16 %v184
    %v657 = vunpack.c.l.b16 %v185
    %v658 = vunpack.c.l.b16 %v186
    %v659 = vunpack.c.l.b16 %v187
    %v660 = vunpack.c.l.b16 %v188
    %v661 = vunpack.c.l.b16 %v189
    %v662 = vunpack.c.l.b16 %v190
    %v663 = vunpack.c.l.b16 %v191
    %v664 = vunpack.c.l.b16 %v192
    %v665 = vunpack.c.l.b16 %v193
    %v666 = vunpack.c.l.b16 %v194
    %v667 = vunpack.c.l.b16 %v195
    %v668 = vunpack.c.l.b16 %v197
    %v669 = vunpack.c.l.b16 %v198
    %v670 = vunpack.c.l.b16 %v199
    %v671 = vunpack.c.l.b16 %v200
    %v672 = vunpack.c.l.b16 %v201
    %v673 = vunpack.c.l.b16 %v202
    %v674 = vunpack.c.l.b16 %v203
    %v675 = vunpack.c.l.b16 %v204
    %v676 = vunpack.c.l.b16 %v205
    %v677 = vunpack.c.l.b16 %v206
    %v678 = vunpack.c.l.b16 %v207
    %v679 = vunpack.c.l.b16 %v208
    %v680 = vunpack.c.l.b16 %v209
    %v681 = vunpack.c.l.b16 %v210
    %v682 = vunpack.c.l.b16 %v211
    %v683 = vunpack.c.l.b16 %v213
    %v684 = vunpack.c.l.b16 %v214
    %v685 = vunpack.c.l.b16 %v215
    %v686 = vunpack.c.l.b16 %v216
    %v687 = vunpack.c.l.b16 %v217
    %v688 = vunpack.c.l.b16 %v218
    %v689 = vunpack.c.l.b16 %v219
    %v690 = vunpack.c.l.b16 %v220
    %v691 = vunpack.c.l.b16 %v221
    %v692 = vunpack.c.l.b16 %v222
    %v693 = vunpack.c.l.b16 %v223
    %v694 = vunpack.c.l.b16 %v224
    %v695 = vunpack.c.l.b16 %v225
    %v696 = vunpack.c.l.b16 %v226
    %v697 = vunpack.c.l.b16 %v227
    %v698 = vunpack.c.l.b16 %v229
    %v699 = vunpack.c.l.b16 %v230
    %v700 = vunpack.c.l.b16 %v231
    %v701 = vunpack.c.l.b16 %v232
    %v702 = vunpack.c.l.b16 %v233
    %v703 = vunpack.c.l.b16 %v234
    %v704 = vunpack.c.l.b16 %v235
    %v705 = vunpack.c.l.b16 %v236
    %v706 = vunpack.c.l.b16 %v237
    %v707 = vunpack.c.l.b16 %v238
    %v708 = vunpack.c.l.b16 %v239
    %v709 = vunpack.c.l.b16 %v240
    %v710 = vunpack.c.l.b16 %v241
    %v711 = vunpack.c.l.b16 %v242
    %v712 = vunpack.c.l.b16 %v243
    %v713 = vunpack.c.l.b16 %v245
    %v714 = vunpack.c.l.b16 %v246
    %v715 = vunpack.c.l.b16 %v247
    %v716 = vunpack.c.l.b16 %v248
    %v717 = vunpack.c.l.b16 %v249
    %v718 = vunpack.c.l.b16 %v250
    %v719 = vunpack.c.l.b16 %v251
    %v720 = vunpack.c.l.b16 %v252
    %v721 = vunpack.c.l.b16 %v253
    %v722 = vunpack.c.l.b16 %v254
    %v723 = vunpack.c.l.b16 %v255
    %v724 = vunpack.c.l.b16 %v256
    %v725 = vunpack.c.l.b16 %v257
    %v726 = vunpack.c.l.b16 %v258
    %v727 = vunpack.c.l.b16 %v259
    %v728 = vunpack.c.l.b16 %v261
    %v729 = vunpack.c.l.b16 %v262
    %v730 = vunpack.c.l.b16 %v263
    %v731 = vunpack.c.l.b16 %v264
    %v732 = vunpack.c.l.b16 %v265
    %v733 = vunpack.c.l.b16 %v266
    %v734 = vunpack.c.l.b16 %v267
    %v735 = vunpack.c.l.b16 %v268
    %v736 = vunpack.c.l.b16 %v269
    %v737 = vunpack.c.l.b16 %v270
    %v738 = vunpack.c.l.b16 %v271
    %v739 = vunpack.c.l.b16 %v272
    %v740 = vunpack.c.l.b16 %v273
    %v741 = vunpack.c.l.b16 %v274
    %v742 = vunpack.c.l.b16 %v275
    %v743 = vunpack.c.l.b16 %v277
    %v744 = vunpack.c.l.b16 %v278
    %v745 = vunpack.c.l.b16 %v279
    %v746 = vunpack.c.l.b16 %v280
    %v747 = vunpack.c.l.b16 %v281
    %v748 = vunpack.c.l.b16 %v282
    %v749 = vunpack.c.l.b16 %v283
    %v750 = vunpack.c.l.b16 %v284
    %v751 = vunpack.c.l.b16 %v285
    %v752 = vunpack.c.l.b16 %v286
    %v753 = vunpack.c.l.b16 %v287
    %v754 = vunpack.c.l.b16 %v288
    %v755 = vunpack.c.l.b16 %v289
    %v756 = vunpack.c.l.b16 %v290
    %v757 = vunpack.c.l.b16 %v291
    %v758 = vpack.c.b16 %v533, %v533
    %v759 = vpack.c.b16 %v534, %v534
    %v760 = vpack.c.b16 %v535, %v535
    %v761 = vpack.c.b16 %v536, %v536
    %v762 = vpack.c.b16 %v537, %v537
    %v763 = vpack.c.b16 %v538, %v538
    %v764 = vpack.c.b16 %v539, %v539
    %v765 = vpack.c.b16 %v540, %v540
    %v766 = vpack.c.b16 %v541, %v541
    %v767 = vpack.c.b16 %v542, %v542
    %v768 = vpack.c.b16 %v543, %v543
    %v769 = vpack.c.b16 %v544, %v544
    %v770 = vpack.c.b16 %v545, %v545
    %v771 = vpack.c.b16 %v546, %v546
    %v772 = vpack.c.b16 %v547, %v547
    %v773 = vpack.c.b16 %v548, %v548
    %v774 = vpack.c.b16 %v549, %v549
    %v775 = vpack.c.b16 %v550, %v550
    %v776 = vpack.c.b16 %v551, %v551
    %v777 = vpack.c.b16 %v552, %v552
    %v778 = vpack.c.b16 %v553, %v553
    %v779 = vpack.c.b16 %v554, %v554
    %v780 = vpack.c.b16 %v555, %v555
    %v781 = vpack.c.b16 %v556, %v556
    %v782 = vpack.c.b16 %v557, %v557
    %v783 = vpack.c.b16 %v558, %v558
    %v784 = vpack.c.b16 %v559, %v559
    %v785 = vpack.c.b16 %v560, %v560
    %v786 = vpack.c.b16 %v561, %v561
    %v787 = vpack.c.b16 %v562, %v562
    %v788 = vpack.c.b16 %v563, %v563
    %v789 = vpack.c.b16 %v564, %v564
    %v790 = vpack.c.b16 %v565, %v565
    %v791 = vpack.c.b16 %v566, %v566
    %v792 = vpack.c.b16 %v567, %v567
    %v793 = vpack.c.b16 %v568, %v568
    %v794 = vpack.c.b16 %v569, %v569
    %v795 = vpack.c.b16 %v570, %v570
    %v796 = vpack.c.b16 %v571, %v571
    %v797 = vpack.c.b16 %v572, %v572
    %v798 = vpack.c.b16 %v573, %v573
    %v799 = vpack.c.b16 %v574, %v574
    %v800 = vpack.c.b16 %v575, %v575
    %v801 = vpack.c.b16 %v576, %v576
    %v802 = vpack.c.b16 %v577, %v577
    %v803 = vpack.c.b16 %v578, %v578
    %v804 = vpack.c.b16 %v579, %v579
    %v805 = vpack.c.b16 %v580, %v580
    %v806 = vpack.c.b16 %v581, %v581
    %v807 = vpack.c.b16 %v582, %v582
    %v808 = vpack.c.b16 %v583, %v583
    %v809 = vpack.c.b16 %v584, %v584
    %v810 = vpack.c.b16 %v585, %v585
    %v811 = vpack.c.b16 %v586, %v586
    %v812 = vpack.c.b16 %v587, %v587
    %v813 = vpack.c.b16 %v588, %v588
    %v814 = vpack.c.b16 %v589, %v589
    %v815 = vpack.c.b16 %v590, %v590
    %v816 = vpack.c.b16 %v591, %v591
    %v817 = vpack.c.b16 %v592, %v592
    %v818 = vpack.c.b16 %v593, %v593
    %v819 = vpack.c.b16 %v594, %v594
    %v820 = vpack.c.b16 %v595, %v595
    %v821 = vpack.c.b16 %v596, %v596
    %v822 = vpack.c.b16 %v597, %v597
    %v823 = vpack.c.b16 %v598, %v598
    %v824 = vpack.c.b16 %v599, %v599
    %v825 = vpack.c.b16 %v600, %v600
    %v826 = vpack.c.b16 %v601, %v601
    %v827 = vpack.c.b16 %v602, %v602
    %v828 = vpack.c.b16 %v603, %v603
    %v829 = vpack.c.b16 %v604, %v604
    %v830 = vpack.c.b16 %v605, %v605
    %v831 = vpack.c.b16 %v606, %v606
    %v832 = vpack.c.b16 %v607, %v607
    %v833 = vpack.c.b16 %v608, %v608
    %v834 = vpack.c.b16 %v609, %v609
    %v835 = vpack.c.b16 %v610, %v610
    %v836 = vpack.c.b16 %v611, %v611
    %v837 = vpack.c.b16 %v612, %v612
    %v838 = vpack.c.b16 %v613, %v613
    %v839 = vpack.c.b16 %v614, %v614
    %v840 = vpack.c.b16 %v615, %v615
    %v841 = vpack.c.b16 %v616, %v616
    %v842 = vpack.c.b16 %v617, %v617
    %v843 = vpack.c.b16 %v618, %v618
    %v844 = vpack.c.b16 %v619, %v619
    %v845 = vpack.c.b16 %v620, %v620
    %v846 = vpack.c.b16 %v621, %v621
    %v847 = vpack.c.b16 %v622, %v622
    %v848 = vpack.c.b16 %v623, %v623
    %v849 = vpack.c.b16 %v624, %v624
    %v850 = vpack.c.b16 %v625, %v625
    %v851 = vpack.c.b16 %v626, %v626
    %v852 = vpack.c.b16 %v627, %v627
    %v853 = vpack.c.b16 %v628, %v628
    %v854 = vpack.c.b16 %v629, %v629
    %v855 = vpack.c.b16 %v630, %v630
    %v856 = vpack.c.b16 %v631, %v631
    %v857 = vpack.c.b16 %v632, %v632
    %v858 = vpack.c.b16 %v633, %v633
    %v859 = vpack.c.b16 %v634, %v634
    %v860 = vpack.c.b16 %v635, %v635
    %v861 = vpack.c.b16 %v636, %v636
    %v862 = vpack.c.b16 %v637, %v637
    %v863 = vpack.c.b16 %v638, %v638
    %v864 = vpack.c.b16 %v639, %v639
    %v865 = vpack.c.b16 %v640, %v640
    %v866 = vpack.c.b16 %v641, %v641
    %v867 = vpack.c.b16 %v642, %v642
    %v868 = vpack.c.b16 %v643, %v643
    %v869 = vpack.c.b16 %v644, %v644
    %v870 = vpack.c.b16 %v645, %v645
    %v871 = vpack.c.b16 %v646, %v646
    %v872 = vpack.c.b16 %v647, %v647
    %v873 = vpack.c.b16 %v648, %v648
    %v874 = vpack.c.b16 %v649, %v649
    %v875 = vpack.c.b16 %v650, %v650
    %v876 = vpack.c.b16 %v651, %v651
    %v877 = vpack.c.b16 %v652, %v652
    %v878 = vpack.c.b16 %v653, %v653
    %v879 = vpack.c.b16 %v654, %v654
    %v880 = vpack.c.b16 %v655, %v655
    %v881 = vpack.c.b16 %v656, %v656
    %v882 = vpack.c.b16 %v657, %v657
    %v883 = vpack.c.b16 %v658, %v658
    %v884 = vpack.c.b16 %v659, %v659
    %v885 = vpack.c.b16 %v660, %v660
    %v886 = vpack.c.b16 %v661, %v661
    %v887 = vpack.c.b16 %v662, %v662
    %v888 = vpack.c.b16 %v663, %v663
    %v889 = vpack.c.b16 %v664, %v664
    %v890 = vpack.c.b16 %v665, %v665
    %v891 = vpack.c.b16 %v666, %v666
    %v892 = vpack.c.b16 %v667, %v667
    %v893 = vpack.c.b16 %v668, %v668
    %v894 = vpack.c.b16 %v669, %v669
    %v895 = vpack.c.b16 %v670, %v670
    %v896 = vpack.c.b16 %v671, %v671
    %v897 = vpack.c.b16 %v672, %v672
    %v898 = vpack.c.b16 %v673, %v673
    %v899 = vpack.c.b16 %v674, %v674
    %v900 = vpack.c.b16 %v675, %v675
    %v901 = vpack.c.b16 %v676, %v676
    %v902 = vpack.c.b16 %v677, %v677
    %v903 = vpack.c.b16 %v678, %v678
    %v904 = vpack.c.b16 %v679, %v679
    %v905 = vpack.c.b16 %v680, %v680
    %v906 = vpack.c.b16 %v681, %v681
    %v907 = vpack.c.b16 %v682, %v682
    %v908 = vpack.c.b16 %v683, %v683
    %v909 = vpack.c.b16 %v684, %v684
    %v910 = vpack.c.b16 %v685, %v685
    %v911 = vpack.c.b16 %v686, %v686
    %v912 = vpack.c.b16 %v687, %v687
    %v913 = vpack.c.b16 %v688, %v688
    %v914 = vpack.c.b16 %v689, %v689
    %v915 = vpack.c.b16 %v690, %v690
    %v916 = vpack.c.b16 %v691, %v691
    %v917 = vpack.c.b16 %v692, %v692
    %v918 = vpack.c.b16 %v693, %v693
    %v919 = vpack.c.b16 %v694, %v694
    %v920 = vpack.c.b16 %v695, %v695
    %v921 = vpack.c.b16 %v696, %v696
    %v922 = vpack.c.b16 %v697, %v697
    %v923 = vpack.c.b16 %v698, %v698
    %v924 = vpack.c.b16 %v699, %v699
    %v925 = vpack.c.b16 %v700, %v700
    %v926 = vpack.c.b16 %v701, %v701
    %v927 = vpack.c.b16 %v702, %v702
    %v928 = vpack.c.b16 %v703, %v703
    %v929 = vpack.c.b16 %v704, %v704
    %v930 = vpack.c.b16 %v705, %v705
    %v931 = vpack.c.b16 %v706, %v706
    %v932 = vpack.c.b16 %v707, %v707
    %v933 = vpack.c.b16 %v708, %v708
    %v934 = vpack.c.b16 %v709, %v709
    %v935 = vpack.c.b16 %v710, %v710
    %v936 = vpack.c.b16 %v711, %v711
    %v937 = vpack.c.b16 %v712, %v712
    %v938 = vpack.c.b16 %v713, %v713
    %v939 = vpack.c.b16 %v714, %v714
    %v940 = vpack.c.b16 %v715, %v715
    %v941 = vpack.c.b16 %v716, %v716
    %v942 = vpack.c.b16 %v717, %v717
    %v943 = vpack.c.b16 %v718, %v718
    %v944 = vpack.c.b16 %v719, %v719
    %v945 = vpack.c.b16 %v720, %v720
    %v946 = vpack.c.b16 %v721, %v721
    %v947 = vpack.c.b16 %v722, %v722
    %v948 = vpack.c.b16 %v723, %v723
    %v949 = vpack.c.b16 %v724, %v724
    %v950 = vpack.c.b16 %v725, %v725
    %v951 = vpack.c.b16 %v726, %v726
    %v952 = vpack.c.b16 %v727, %v727
    %v953 = vpack.c.b16 %v728, %v728
    %v954 = vpack.c.b16 %v729, %v729
    %v955 = vpack.c.b16 %v730, %v730
    %v956 = vpack.c.b16 %v731, %v731
    %v957 = vpack.c.b16 %v732, %v732
    %v958 = vpack.c.b16 %v733, %v733
    %v959 = vpack.c.b16 %v734, %v734
    %v960 = vpack.c.b16 %v735, %v735
    %v961 = vpack.c.b16 %v736, %v736
    %v962 = vpack.c.b16 %v737, %v737
    %v963 = vpack.c.b16 %v738, %v738
    %v964 = vpack.c.b16 %v739, %v739
    %v965 = vpack.c.b16 %v740, %v740
    %v966 = vpack.c.b16 %v741, %v741
    %v967 = vpack.c.b16 %v742, %v742
    %v968 = vpack.c.b16 %v743, %v743
    %v969 = vpack.c.b16 %v744, %v744
    %v970 = vpack.c.b16 %v745, %v745
    %v971 = vpack.c.b16 %v746, %v746
    %v972 = vpack.c.b16 %v747, %v747
    %v973 = vpack.c.b16 %v748, %v748
    %v974 = vpack.c.b16 %v749, %v749
    %v975 = vpack.c.b16 %v750, %v750
    %v976 = vpack.c.b16 %v751, %v751
    %v977 = vpack.c.b16 %v752, %v752
    %v978 = vpack.c.b16 %v753, %v753
    %v979 = vpack.c.b16 %v754, %v754
    %v980 = vpack.c.b16 %v755, %v755
    %v981 = vpack.c.b16 %v756, %v756
    %v982 = vpack.c.b16 %v757, %v757
    %983 = vrot.lane.b32.xlu0 %v758, 64
    %v984 = vpop.permute.xlu0 %983
    %985 = vrot.lane.b32.xlu0 %v759, 64
    %v986 = vpop.permute.xlu0 %985
    %987 = vrot.lane.b32.xlu0 %v760, 64
    %v988 = vpop.permute.xlu0 %987
    %989 = vrot.lane.b32.xlu0 %v761, 64
    %v990 = vpop.permute.xlu0 %989
    %991 = vrot.lane.b32.xlu0 %v762, 64
    %v992 = vpop.permute.xlu0 %991
    %993 = vrot.lane.b32.xlu0 %v763, 64
    %v994 = vpop.permute.xlu0 %993
    %995 = vrot.lane.b32.xlu0 %v764, 64
    %v996 = vpop.permute.xlu0 %995
    %997 = vrot.lane.b32.xlu0 %v765, 64
    %v998 = vpop.permute.xlu0 %997
    %999 = vrot.lane.b32.xlu0 %v766, 64
    %v1000 = vpop.permute.xlu0 %999
    %1001 = vrot.lane.b32.xlu0 %v767, 64
    %v1002 = vpop.permute.xlu0 %1001
    %1003 = vrot.lane.b32.xlu0 %v768, 64
    %v1004 = vpop.permute.xlu0 %1003
    %1005 = vrot.lane.b32.xlu0 %v769, 64
    %v1006 = vpop.permute.xlu0 %1005
    %1007 = vrot.lane.b32.xlu0 %v770, 64
    %v1008 = vpop.permute.xlu0 %1007
    %1009 = vrot.lane.b32.xlu0 %v771, 64
    %v1010 = vpop.permute.xlu0 %1009
    %1011 = vrot.lane.b32.xlu0 %v772, 64
    %v1012 = vpop.permute.xlu0 %1011
    %1013 = vrot.lane.b32.xlu0 %v773, 64
    %v1014 = vpop.permute.xlu0 %1013
    %1015 = vrot.lane.b32.xlu0 %v774, 64
    %v1016 = vpop.permute.xlu0 %1015
    %1017 = vrot.lane.b32.xlu0 %v775, 64
    %v1018 = vpop.permute.xlu0 %1017
    %1019 = vrot.lane.b32.xlu0 %v776, 64
    %v1020 = vpop.permute.xlu0 %1019
    %1021 = vrot.lane.b32.xlu0 %v777, 64
    %v1022 = vpop.permute.xlu0 %1021
    %1023 = vrot.lane.b32.xlu0 %v778, 64
    %v1024 = vpop.permute.xlu0 %1023
    %1025 = vrot.lane.b32.xlu0 %v779, 64
    %v1026 = vpop.permute.xlu0 %1025
    %1027 = vrot.lane.b32.xlu0 %v780, 64
    %v1028 = vpop.permute.xlu0 %1027
    %1029 = vrot.lane.b32.xlu0 %v781, 64
    %v1030 = vpop.permute.xlu0 %1029
    %1031 = vrot.lane.b32.xlu0 %v782, 64
    %v1032 = vpop.permute.xlu0 %1031
    %1033 = vrot.lane.b32.xlu0 %v783, 64
    %v1034 = vpop.permute.xlu0 %1033
    %1035 = vrot.lane.b32.xlu0 %v784, 64
    %v1036 = vpop.permute.xlu0 %1035
    %1037 = vrot.lane.b32.xlu0 %v785, 64
    %v1038 = vpop.permute.xlu0 %1037
    %1039 = vrot.lane.b32.xlu0 %v786, 64
    %v1040 = vpop.permute.xlu0 %1039
    %1041 = vrot.lane.b32.xlu0 %v787, 64
    %v1042 = vpop.permute.xlu0 %1041
    %1043 = vrot.lane.b32.xlu0 %v788, 64
    %v1044 = vpop.permute.xlu0 %1043
    %1045 = vrot.lane.b32.xlu0 %v789, 64
    %v1046 = vpop.permute.xlu0 %1045
    %1047 = vrot.lane.b32.xlu0 %v790, 64
    %v1048 = vpop.permute.xlu0 %1047
    %1049 = vrot.lane.b32.xlu0 %v791, 64
    %v1050 = vpop.permute.xlu0 %1049
    %1051 = vrot.lane.b32.xlu0 %v792, 64
    %v1052 = vpop.permute.xlu0 %1051
    %1053 = vrot.lane.b32.xlu0 %v793, 64
    %v1054 = vpop.permute.xlu0 %1053
    %1055 = vrot.lane.b32.xlu0 %v794, 64
    %v1056 = vpop.permute.xlu0 %1055
    %1057 = vrot.lane.b32.xlu0 %v795, 64
    %v1058 = vpop.permute.xlu0 %1057
    %1059 = vrot.lane.b32.xlu0 %v796, 64
    %v1060 = vpop.permute.xlu0 %1059
    %1061 = vrot.lane.b32.xlu0 %v797, 64
    %v1062 = vpop.permute.xlu0 %1061
    %1063 = vrot.lane.b32.xlu0 %v798, 64
    %v1064 = vpop.permute.xlu0 %1063
    %1065 = vrot.lane.b32.xlu0 %v799, 64
    %v1066 = vpop.permute.xlu0 %1065
    %1067 = vrot.lane.b32.xlu0 %v800, 64
    %v1068 = vpop.permute.xlu0 %1067
    %1069 = vrot.lane.b32.xlu0 %v801, 64
    %v1070 = vpop.permute.xlu0 %1069
    %1071 = vrot.lane.b32.xlu0 %v802, 64
    %v1072 = vpop.permute.xlu0 %1071
    %1073 = vrot.lane.b32.xlu0 %v803, 64
    %v1074 = vpop.permute.xlu0 %1073
    %1075 = vrot.lane.b32.xlu0 %v804, 64
    %v1076 = vpop.permute.xlu0 %1075
    %1077 = vrot.lane.b32.xlu0 %v805, 64
    %v1078 = vpop.permute.xlu0 %1077
    %1079 = vrot.lane.b32.xlu0 %v806, 64
    %v1080 = vpop.permute.xlu0 %1079
    %1081 = vrot.lane.b32.xlu0 %v807, 64
    %v1082 = vpop.permute.xlu0 %1081
    %1083 = vrot.lane.b32.xlu0 %v808, 64
    %v1084 = vpop.permute.xlu0 %1083
    %1085 = vrot.lane.b32.xlu0 %v809, 64
    %v1086 = vpop.permute.xlu0 %1085
    %1087 = vrot.lane.b32.xlu0 %v810, 64
    %v1088 = vpop.permute.xlu0 %1087
    %1089 = vrot.lane.b32.xlu0 %v811, 64
    %v1090 = vpop.permute.xlu0 %1089
    %1091 = vrot.lane.b32.xlu0 %v812, 64
    %v1092 = vpop.permute.xlu0 %1091
    %1093 = vrot.lane.b32.xlu0 %v813, 64
    %v1094 = vpop.permute.xlu0 %1093
    %1095 = vrot.lane.b32.xlu0 %v814, 64
    %v1096 = vpop.permute.xlu0 %1095
    %1097 = vrot.lane.b32.xlu0 %v815, 64
    %v1098 = vpop.permute.xlu0 %1097
    %1099 = vrot.lane.b32.xlu0 %v816, 64
    %v1100 = vpop.permute.xlu0 %1099
    %1101 = vrot.lane.b32.xlu0 %v817, 64
    %v1102 = vpop.permute.xlu0 %1101
    %1103 = vrot.lane.b32.xlu0 %v818, 64
    %v1104 = vpop.permute.xlu0 %1103
    %1105 = vrot.lane.b32.xlu0 %v819, 64
    %v1106 = vpop.permute.xlu0 %1105
    %1107 = vrot.lane.b32.xlu0 %v820, 64
    %v1108 = vpop.permute.xlu0 %1107
    %1109 = vrot.lane.b32.xlu0 %v821, 64
    %v1110 = vpop.permute.xlu0 %1109
    %1111 = vrot.lane.b32.xlu0 %v822, 64
    %v1112 = vpop.permute.xlu0 %1111
    %1113 = vrot.lane.b32.xlu0 %v823, 64
    %v1114 = vpop.permute.xlu0 %1113
    %1115 = vrot.lane.b32.xlu0 %v824, 64
    %v1116 = vpop.permute.xlu0 %1115
    %1117 = vrot.lane.b32.xlu0 %v825, 64
    %v1118 = vpop.permute.xlu0 %1117
    %1119 = vrot.lane.b32.xlu0 %v826, 64
    %v1120 = vpop.permute.xlu0 %1119
    %1121 = vrot.lane.b32.xlu0 %v827, 64
    %v1122 = vpop.permute.xlu0 %1121
    %1123 = vrot.lane.b32.xlu0 %v828, 64
    %v1124 = vpop.permute.xlu0 %1123
    %1125 = vrot.lane.b32.xlu0 %v829, 64
    %v1126 = vpop.permute.xlu0 %1125
    %1127 = vrot.lane.b32.xlu0 %v830, 64
    %v1128 = vpop.permute.xlu0 %1127
    %1129 = vrot.lane.b32.xlu0 %v831, 64
    %v1130 = vpop.permute.xlu0 %1129
    %1131 = vrot.lane.b32.xlu0 %v832, 64
    %v1132 = vpop.permute.xlu0 %1131
    %1133 = vrot.lane.b32.xlu0 %v833, 64
    %v1134 = vpop.permute.xlu0 %1133
    %1135 = vrot.lane.b32.xlu0 %v834, 64
    %v1136 = vpop.permute.xlu0 %1135
    %1137 = vrot.lane.b32.xlu0 %v835, 64
    %v1138 = vpop.permute.xlu0 %1137
    %1139 = vrot.lane.b32.xlu0 %v836, 64
    %v1140 = vpop.permute.xlu0 %1139
    %1141 = vrot.lane.b32.xlu0 %v837, 64
    %v1142 = vpop.permute.xlu0 %1141
    %1143 = vrot.lane.b32.xlu0 %v838, 64
    %v1144 = vpop.permute.xlu0 %1143
    %1145 = vrot.lane.b32.xlu0 %v839, 64
    %v1146 = vpop.permute.xlu0 %1145
    %1147 = vrot.lane.b32.xlu0 %v840, 64
    %v1148 = vpop.permute.xlu0 %1147
    %1149 = vrot.lane.b32.xlu0 %v841, 64
    %v1150 = vpop.permute.xlu0 %1149
    %1151 = vrot.lane.b32.xlu0 %v842, 64
    %v1152 = vpop.permute.xlu0 %1151
    %1153 = vrot.lane.b32.xlu0 %v843, 64
    %v1154 = vpop.permute.xlu0 %1153
    %1155 = vrot.lane.b32.xlu0 %v844, 64
    %v1156 = vpop.permute.xlu0 %1155
    %1157 = vrot.lane.b32.xlu0 %v845, 64
    %v1158 = vpop.permute.xlu0 %1157
    %1159 = vrot.lane.b32.xlu0 %v846, 64
    %v1160 = vpop.permute.xlu0 %1159
    %1161 = vrot.lane.b32.xlu0 %v847, 64
    %v1162 = vpop.permute.xlu0 %1161
    %1163 = vrot.lane.b32.xlu0 %v848, 64
    %v1164 = vpop.permute.xlu0 %1163
    %1165 = vrot.lane.b32.xlu0 %v849, 64
    %v1166 = vpop.permute.xlu0 %1165
    %1167 = vrot.lane.b32.xlu0 %v850, 64
    %v1168 = vpop.permute.xlu0 %1167
    %1169 = vrot.lane.b32.xlu0 %v851, 64
    %v1170 = vpop.permute.xlu0 %1169
    %1171 = vrot.lane.b32.xlu0 %v852, 64
    %v1172 = vpop.permute.xlu0 %1171
    %1173 = vrot.lane.b32.xlu0 %v853, 64
    %v1174 = vpop.permute.xlu0 %1173
    %1175 = vrot.lane.b32.xlu0 %v854, 64
    %v1176 = vpop.permute.xlu0 %1175
    %1177 = vrot.lane.b32.xlu0 %v855, 64
    %v1178 = vpop.permute.xlu0 %1177
    %1179 = vrot.lane.b32.xlu0 %v856, 64
    %v1180 = vpop.permute.xlu0 %1179
    %1181 = vrot.lane.b32.xlu0 %v857, 64
    %v1182 = vpop.permute.xlu0 %1181
    %1183 = vrot.lane.b32.xlu0 %v858, 64
    %v1184 = vpop.permute.xlu0 %1183
    %1185 = vrot.lane.b32.xlu0 %v859, 64
    %v1186 = vpop.permute.xlu0 %1185
    %1187 = vrot.lane.b32.xlu0 %v860, 64
    %v1188 = vpop.permute.xlu0 %1187
    %1189 = vrot.lane.b32.xlu0 %v861, 64
    %v1190 = vpop.permute.xlu0 %1189
    %1191 = vrot.lane.b32.xlu0 %v862, 64
    %v1192 = vpop.permute.xlu0 %1191
    %1193 = vrot.lane.b32.xlu0 %v863, 64
    %v1194 = vpop.permute.xlu0 %1193
    %1195 = vrot.lane.b32.xlu0 %v864, 64
    %v1196 = vpop.permute.xlu0 %1195
    %1197 = vrot.lane.b32.xlu0 %v865, 64
    %v1198 = vpop.permute.xlu0 %1197
    %1199 = vrot.lane.b32.xlu0 %v866, 64
    %v1200 = vpop.permute.xlu0 %1199
    %1201 = vrot.lane.b32.xlu0 %v867, 64
    %v1202 = vpop.permute.xlu0 %1201
    %1203 = vrot.lane.b32.xlu0 %v868, 64
    %v1204 = vpop.permute.xlu0 %1203
    %1205 = vrot.lane.b32.xlu0 %v869, 64
    %v1206 = vpop.permute.xlu0 %1205
    %1207 = vrot.lane.b32.xlu0 %v870, 64
    %v1208 = vpop.permute.xlu0 %1207
    %1209 = vrot.lane.b32.xlu0 %v871, 64
    %v1210 = vpop.permute.xlu0 %1209
    %1211 = vrot.lane.b32.xlu0 %v872, 64
    %v1212 = vpop.permute.xlu0 %1211
    %1213 = vrot.lane.b32.xlu0 %v873, 64
    %v1214 = vpop.permute.xlu0 %1213
    %1215 = vrot.lane.b32.xlu0 %v874, 64
    %v1216 = vpop.permute.xlu0 %1215
    %1217 = vrot.lane.b32.xlu0 %v875, 64
    %v1218 = vpop.permute.xlu0 %1217
    %1219 = vrot.lane.b32.xlu0 %v876, 64
    %v1220 = vpop.permute.xlu0 %1219
    %1221 = vrot.lane.b32.xlu0 %v877, 64
    %v1222 = vpop.permute.xlu0 %1221
    %1223 = vrot.lane.b32.xlu0 %v878, 64
    %v1224 = vpop.permute.xlu0 %1223
    %1225 = vrot.lane.b32.xlu0 %v879, 64
    %v1226 = vpop.permute.xlu0 %1225
    %1227 = vrot.lane.b32.xlu0 %v880, 64
    %v1228 = vpop.permute.xlu0 %1227
    %1229 = vrot.lane.b32.xlu0 %v881, 64
    %v1230 = vpop.permute.xlu0 %1229
    %1231 = vrot.lane.b32.xlu0 %v882, 64
    %v1232 = vpop.permute.xlu0 %1231
    %1233 = vrot.lane.b32.xlu0 %v883, 64
    %v1234 = vpop.permute.xlu0 %1233
    %1235 = vrot.lane.b32.xlu0 %v884, 64
    %v1236 = vpop.permute.xlu0 %1235
    %1237 = vrot.lane.b32.xlu0 %v885, 64
    %v1238 = vpop.permute.xlu0 %1237
    %1239 = vrot.lane.b32.xlu0 %v886, 64
    %v1240 = vpop.permute.xlu0 %1239
    %1241 = vrot.lane.b32.xlu0 %v887, 64
    %v1242 = vpop.permute.xlu0 %1241
    %1243 = vrot.lane.b32.xlu0 %v888, 64
    %v1244 = vpop.permute.xlu0 %1243
    %1245 = vrot.lane.b32.xlu0 %v889, 64
    %v1246 = vpop.permute.xlu0 %1245
    %1247 = vrot.lane.b32.xlu0 %v890, 64
    %v1248 = vpop.permute.xlu0 %1247
    %1249 = vrot.lane.b32.xlu0 %v891, 64
    %v1250 = vpop.permute.xlu0 %1249
    %1251 = vrot.lane.b32.xlu0 %v892, 64
    %v1252 = vpop.permute.xlu0 %1251
    %1253 = vrot.lane.b32.xlu0 %v893, 64
    %v1254 = vpop.permute.xlu0 %1253
    %1255 = vrot.lane.b32.xlu0 %v894, 64
    %v1256 = vpop.permute.xlu0 %1255
    %1257 = vrot.lane.b32.xlu0 %v895, 64
    %v1258 = vpop.permute.xlu0 %1257
    %1259 = vrot.lane.b32.xlu0 %v896, 64
    %v1260 = vpop.permute.xlu0 %1259
    %1261 = vrot.lane.b32.xlu0 %v897, 64
    %v1262 = vpop.permute.xlu0 %1261
    %1263 = vrot.lane.b32.xlu0 %v898, 64
    %v1264 = vpop.permute.xlu0 %1263
    %1265 = vrot.lane.b32.xlu0 %v899, 64
    %v1266 = vpop.permute.xlu0 %1265
    %1267 = vrot.lane.b32.xlu0 %v900, 64
    %v1268 = vpop.permute.xlu0 %1267
    %1269 = vrot.lane.b32.xlu0 %v901, 64
    %v1270 = vpop.permute.xlu0 %1269
    %1271 = vrot.lane.b32.xlu0 %v902, 64
    %v1272 = vpop.permute.xlu0 %1271
    %1273 = vrot.lane.b32.xlu0 %v903, 64
    %v1274 = vpop.permute.xlu0 %1273
    %1275 = vrot.lane.b32.xlu0 %v904, 64
    %v1276 = vpop.permute.xlu0 %1275
    %1277 = vrot.lane.b32.xlu0 %v905, 64
    %v1278 = vpop.permute.xlu0 %1277
    %1279 = vrot.lane.b32.xlu0 %v906, 64
    %v1280 = vpop.permute.xlu0 %1279
    %1281 = vrot.lane.b32.xlu0 %v907, 64
    %v1282 = vpop.permute.xlu0 %1281
    %1283 = vrot.lane.b32.xlu0 %v908, 64
    %v1284 = vpop.permute.xlu0 %1283
    %1285 = vrot.lane.b32.xlu0 %v909, 64
    %v1286 = vpop.permute.xlu0 %1285
    %1287 = vrot.lane.b32.xlu0 %v910, 64
    %v1288 = vpop.permute.xlu0 %1287
    %1289 = vrot.lane.b32.xlu0 %v911, 64
    %v1290 = vpop.permute.xlu0 %1289
    %1291 = vrot.lane.b32.xlu0 %v912, 64
    %v1292 = vpop.permute.xlu0 %1291
    %1293 = vrot.lane.b32.xlu0 %v913, 64
    %v1294 = vpop.permute.xlu0 %1293
    %1295 = vrot.lane.b32.xlu0 %v914, 64
    %v1296 = vpop.permute.xlu0 %1295
    %1297 = vrot.lane.b32.xlu0 %v915, 64
    %v1298 = vpop.permute.xlu0 %1297
    %1299 = vrot.lane.b32.xlu0 %v916, 64
    %v1300 = vpop.permute.xlu0 %1299
    %1301 = vrot.lane.b32.xlu0 %v917, 64
    %v1302 = vpop.permute.xlu0 %1301
    %1303 = vrot.lane.b32.xlu0 %v918, 64
    %v1304 = vpop.permute.xlu0 %1303
    %1305 = vrot.lane.b32.xlu0 %v919, 64
    %v1306 = vpop.permute.xlu0 %1305
    %1307 = vrot.lane.b32.xlu0 %v920, 64
    %v1308 = vpop.permute.xlu0 %1307
    %1309 = vrot.lane.b32.xlu0 %v921, 64
    %v1310 = vpop.permute.xlu0 %1309
    %1311 = vrot.lane.b32.xlu0 %v922, 64
    %v1312 = vpop.permute.xlu0 %1311
    %1313 = vrot.lane.b32.xlu0 %v923, 64
    %v1314 = vpop.permute.xlu0 %1313
    %1315 = vrot.lane.b32.xlu0 %v924, 64
    %v1316 = vpop.permute.xlu0 %1315
    %1317 = vrot.lane.b32.xlu0 %v925, 64
    %v1318 = vpop.permute.xlu0 %1317
    %1319 = vrot.lane.b32.xlu0 %v926, 64
    %v1320 = vpop.permute.xlu0 %1319
    %1321 = vrot.lane.b32.xlu0 %v927, 64
    %v1322 = vpop.permute.xlu0 %1321
    %1323 = vrot.lane.b32.xlu0 %v928, 64
    %v1324 = vpop.permute.xlu0 %1323
    %1325 = vrot.lane.b32.xlu0 %v929, 64
    %v1326 = vpop.permute.xlu0 %1325
    %1327 = vrot.lane.b32.xlu0 %v930, 64
    %v1328 = vpop.permute.xlu0 %1327
    %1329 = vrot.lane.b32.xlu0 %v931, 64
    %v1330 = vpop.permute.xlu0 %1329
    %1331 = vrot.lane.b32.xlu0 %v932, 64
    %v1332 = vpop.permute.xlu0 %1331
    %1333 = vrot.lane.b32.xlu0 %v933, 64
    %v1334 = vpop.permute.xlu0 %1333
    %1335 = vrot.lane.b32.xlu0 %v934, 64
    %v1336 = vpop.permute.xlu0 %1335
    %1337 = vrot.lane.b32.xlu0 %v935, 64
    %v1338 = vpop.permute.xlu0 %1337
    %1339 = vrot.lane.b32.xlu0 %v936, 64
    %v1340 = vpop.permute.xlu0 %1339
    %1341 = vrot.lane.b32.xlu0 %v937, 64
    %v1342 = vpop.permute.xlu0 %1341
    %1343 = vrot.lane.b32.xlu0 %v938, 64
    %v1344 = vpop.permute.xlu0 %1343
    %1345 = vrot.lane.b32.xlu0 %v939, 64
    %v1346 = vpop.permute.xlu0 %1345
    %1347 = vrot.lane.b32.xlu0 %v940, 64
    %v1348 = vpop.permute.xlu0 %1347
    %1349 = vrot.lane.b32.xlu0 %v941, 64
    %v1350 = vpop.permute.xlu0 %1349
    %1351 = vrot.lane.b32.xlu0 %v942, 64
    %v1352 = vpop.permute.xlu0 %1351
    %1353 = vrot.lane.b32.xlu0 %v943, 64
    %v1354 = vpop.permute.xlu0 %1353
    %1355 = vrot.lane.b32.xlu0 %v944, 64
    %v1356 = vpop.permute.xlu0 %1355
    %1357 = vrot.lane.b32.xlu0 %v945, 64
    %v1358 = vpop.permute.xlu0 %1357
    %1359 = vrot.lane.b32.xlu0 %v946, 64
    %v1360 = vpop.permute.xlu0 %1359
    %1361 = vrot.lane.b32.xlu0 %v947, 64
    %v1362 = vpop.permute.xlu0 %1361
    %1363 = vrot.lane.b32.xlu0 %v948, 64
    %v1364 = vpop.permute.xlu0 %1363
    %1365 = vrot.lane.b32.xlu0 %v949, 64
    %v1366 = vpop.permute.xlu0 %1365
    %1367 = vrot.lane.b32.xlu0 %v950, 64
    %v1368 = vpop.permute.xlu0 %1367
    %1369 = vrot.lane.b32.xlu0 %v951, 64
    %v1370 = vpop.permute.xlu0 %1369
    %1371 = vrot.lane.b32.xlu0 %v952, 64
    %v1372 = vpop.permute.xlu0 %1371
    %1373 = vrot.lane.b32.xlu0 %v953, 64
    %v1374 = vpop.permute.xlu0 %1373
    %1375 = vrot.lane.b32.xlu0 %v954, 64
    %v1376 = vpop.permute.xlu0 %1375
    %1377 = vrot.lane.b32.xlu0 %v955, 64
    %v1378 = vpop.permute.xlu0 %1377
    %1379 = vrot.lane.b32.xlu0 %v956, 64
    %v1380 = vpop.permute.xlu0 %1379
    %1381 = vrot.lane.b32.xlu0 %v957, 64
    %v1382 = vpop.permute.xlu0 %1381
    %1383 = vrot.lane.b32.xlu0 %v958, 64
    %v1384 = vpop.permute.xlu0 %1383
    %1385 = vrot.lane.b32.xlu0 %v959, 64
    %v1386 = vpop.permute.xlu0 %1385
    %1387 = vrot.lane.b32.xlu0 %v960, 64
    %v1388 = vpop.permute.xlu0 %1387
    %1389 = vrot.lane.b32.xlu0 %v961, 64
    %v1390 = vpop.permute.xlu0 %1389
    %1391 = vrot.lane.b32.xlu0 %v962, 64
    %v1392 = vpop.permute.xlu0 %1391
    %1393 = vrot.lane.b32.xlu0 %v963, 64
    %v1394 = vpop.permute.xlu0 %1393
    %1395 = vrot.lane.b32.xlu0 %v964, 64
    %v1396 = vpop.permute.xlu0 %1395
    %1397 = vrot.lane.b32.xlu0 %v965, 64
    %v1398 = vpop.permute.xlu0 %1397
    %1399 = vrot.lane.b32.xlu0 %v966, 64
    %v1400 = vpop.permute.xlu0 %1399
    %1401 = vrot.lane.b32.xlu0 %v967, 64
    %v1402 = vpop.permute.xlu0 %1401
    %1403 = vrot.lane.b32.xlu0 %v968, 64
    %v1404 = vpop.permute.xlu0 %1403
    %1405 = vrot.lane.b32.xlu0 %v969, 64
    %v1406 = vpop.permute.xlu0 %1405
    %1407 = vrot.lane.b32.xlu0 %v970, 64
    %v1408 = vpop.permute.xlu0 %1407
    %1409 = vrot.lane.b32.xlu0 %v971, 64
    %v1410 = vpop.permute.xlu0 %1409
    %1411 = vrot.lane.b32.xlu0 %v972, 64
    %v1412 = vpop.permute.xlu0 %1411
    %1413 = vrot.lane.b32.xlu0 %v973, 64
    %v1414 = vpop.permute.xlu0 %1413
    %1415 = vrot.lane.b32.xlu0 %v974, 64
    %v1416 = vpop.permute.xlu0 %1415
    %1417 = vrot.lane.b32.xlu0 %v975, 64
    %v1418 = vpop.permute.xlu0 %1417
    %1419 = vrot.lane.b32.xlu0 %v976, 64
    %v1420 = vpop.permute.xlu0 %1419
    %1421 = vrot.lane.b32.xlu0 %v977, 64
    %v1422 = vpop.permute.xlu0 %1421
    %1423 = vrot.lane.b32.xlu0 %v978, 64
    %v1424 = vpop.permute.xlu0 %1423
    %1425 = vrot.lane.b32.xlu0 %v979, 64
    %v1426 = vpop.permute.xlu0 %1425
    %1427 = vrot.lane.b32.xlu0 %v980, 64
    %v1428 = vpop.permute.xlu0 %1427
    %1429 = vrot.lane.b32.xlu0 %v981, 64
    %v1430 = vpop.permute.xlu0 %1429
    %1431 = vrot.lane.b32.xlu0 %v982, 64
    %v1432 = vpop.permute.xlu0 %1431
    %v1448 = vunpack.c.l.b16 %v293
    %v1449 = vunpack.c.l.b16 %v294
    %v1450 = vunpack.c.l.b16 %v295
    %v1451 = vunpack.c.l.b16 %v296
    %v1452 = vunpack.c.l.b16 %v297
    %v1453 = vunpack.c.l.b16 %v298
    %v1454 = vunpack.c.l.b16 %v299
    %v1455 = vunpack.c.l.b16 %v300
    %v1456 = vunpack.c.l.b16 %v301
    %v1457 = vunpack.c.l.b16 %v302
    %v1458 = vunpack.c.l.b16 %v303
    %v1459 = vunpack.c.l.b16 %v304
    %v1460 = vunpack.c.l.b16 %v305
    %v1461 = vunpack.c.l.b16 %v306
    %v1462 = vunpack.c.l.b16 %v307
    %v1463 = vpack.c.b16 %v1448, %v1448
    %v1464 = vpack.c.b16 %v1449, %v1449
    %v1465 = vpack.c.b16 %v1450, %v1450
    %v1466 = vpack.c.b16 %v1451, %v1451
    %v1467 = vpack.c.b16 %v1452, %v1452
    %v1468 = vpack.c.b16 %v1453, %v1453
    %v1469 = vpack.c.b16 %v1454, %v1454
    %v1470 = vpack.c.b16 %v1455, %v1455
    %v1471 = vpack.c.b16 %v1456, %v1456
    %v1472 = vpack.c.b16 %v1457, %v1457
    %v1473 = vpack.c.b16 %v1458, %v1458
    %v1474 = vpack.c.b16 %v1459, %v1459
    %v1475 = vpack.c.b16 %v1460, %v1460
    %v1476 = vpack.c.b16 %v1461, %v1461
    %v1477 = vpack.c.b16 %v1462, %v1462
    %1478 = vrot.lane.b32.xlu0 %v1463, 64
    %v1479 = vpop.permute.xlu0 %1478
    %1480 = vrot.lane.b32.xlu0 %v1464, 64
    %v1481 = vpop.permute.xlu0 %1480
    %1482 = vrot.lane.b32.xlu0 %v1465, 64
    %v1483 = vpop.permute.xlu0 %1482
    %1484 = vrot.lane.b32.xlu0 %v1466, 64
    %v1485 = vpop.permute.xlu0 %1484
    %1486 = vrot.lane.b32.xlu0 %v1467, 64
    %v1487 = vpop.permute.xlu0 %1486
    %1488 = vrot.lane.b32.xlu0 %v1468, 64
    %v1489 = vpop.permute.xlu0 %1488
    %1490 = vrot.lane.b32.xlu0 %v1469, 64
    %v1491 = vpop.permute.xlu0 %1490
    %1492 = vrot.lane.b32.xlu0 %v1470, 64
    %v1493 = vpop.permute.xlu0 %1492
    %1494 = vrot.lane.b32.xlu0 %v1471, 64
    %v1495 = vpop.permute.xlu0 %1494
    %1496 = vrot.lane.b32.xlu0 %v1472, 64
    %v1497 = vpop.permute.xlu0 %1496
    %1498 = vrot.lane.b32.xlu0 %v1473, 64
    %v1499 = vpop.permute.xlu0 %1498
    %1500 = vrot.lane.b32.xlu0 %v1474, 64
    %v1501 = vpop.permute.xlu0 %1500
    %1502 = vrot.lane.b32.xlu0 %v1475, 64
    %v1503 = vpop.permute.xlu0 %1502
    %1504 = vrot.lane.b32.xlu0 %v1476, 64
    %v1505 = vpop.permute.xlu0 %1504
    %1506 = vrot.lane.b32.xlu0 %v1477, 64
    %v1507 = vpop.permute.xlu0 %1506
    %vm1508 = vcmask 523264
    %v1511 = vsel %vm1508, %v52, %v984
    %v1514 = vsel %vm1508, %v53, %v986
    %v1517 = vsel %vm1508, %v54, %v988
    %v1520 = vsel %vm1508, %v55, %v990
    %v1523 = vsel %vm1508, %v56, %v992
    %v1526 = vsel %vm1508, %v57, %v994
    %v1529 = vsel %vm1508, %v58, %v996
    %v1532 = vsel %vm1508, %v59, %v998
    %v1535 = vsel %vm1508, %v60, %v1000
    %v1538 = vsel %vm1508, %v61, %v1002
    %v1541 = vsel %vm1508, %v62, %v1004
    %v1544 = vsel %vm1508, %v63, %v1006
    %v1547 = vsel %vm1508, %v64, %v1008
    %v1550 = vsel %vm1508, %v65, %v1010
    %v1553 = vsel %vm1508, %v66, %v1012
    %v1556 = vsel %vm1508, %v68, %v1014
    %v1559 = vsel %vm1508, %v69, %v1016
    %v1562 = vsel %vm1508, %v70, %v1018
    %v1565 = vsel %vm1508, %v71, %v1020
    %v1568 = vsel %vm1508, %v72, %v1022
    %v1571 = vsel %vm1508, %v73, %v1024
    %v1574 = vsel %vm1508, %v74, %v1026
    %v1577 = vsel %vm1508, %v75, %v1028
    %v1580 = vsel %vm1508, %v76, %v1030
    %v1583 = vsel %vm1508, %v77, %v1032
    %v1586 = vsel %vm1508, %v78, %v1034
    %v1589 = vsel %vm1508, %v79, %v1036
    %v1592 = vsel %vm1508, %v80, %v1038
    %v1595 = vsel %vm1508, %v81, %v1040
    %v1598 = vsel %vm1508, %v82, %v1042
    %v1601 = vsel %vm1508, %v84, %v1044
    %v1604 = vsel %vm1508, %v85, %v1046
    %v1607 = vsel %vm1508, %v86, %v1048
    %v1610 = vsel %vm1508, %v87, %v1050
    %v1613 = vsel %vm1508, %v88, %v1052
    %v1616 = vsel %vm1508, %v89, %v1054
    %v1619 = vsel %vm1508, %v90, %v1056
    %v1622 = vsel %vm1508, %v91, %v1058
    %v1625 = vsel %vm1508, %v92, %v1060
    %v1628 = vsel %vm1508, %v93, %v1062
    %v1631 = vsel %vm1508, %v94, %v1064
    %v1634 = vsel %vm1508, %v95, %v1066
    %v1637 = vsel %vm1508, %v96, %v1068
    %v1640 = vsel %vm1508, %v97, %v1070
    %v1643 = vsel %vm1508, %v98, %v1072
    %v1646 = vsel %vm1508, %v100, %v1074
    %v1649 = vsel %vm1508, %v101, %v1076
    %v1652 = vsel %vm1508, %v102, %v1078
    %v1655 = vsel %vm1508, %v103, %v1080
    %v1658 = vsel %vm1508, %v104, %v1082
    %v1661 = vsel %vm1508, %v105, %v1084
    %v1664 = vsel %vm1508, %v106, %v1086
    %v1667 = vsel %vm1508, %v107, %v1088
    %v1670 = vsel %vm1508, %v108, %v1090
    %v1673 = vsel %vm1508, %v109, %v1092
    %v1676 = vsel %vm1508, %v110, %v1094
    %v1679 = vsel %vm1508, %v111, %v1096
    %v1682 = vsel %vm1508, %v112, %v1098
    %v1685 = vsel %vm1508, %v113, %v1100
    %v1688 = vsel %vm1508, %v114, %v1102
    %v1691 = vsel %vm1508, %v116, %v1104
    %v1694 = vsel %vm1508, %v117, %v1106
    %v1697 = vsel %vm1508, %v118, %v1108
    %v1700 = vsel %vm1508, %v119, %v1110
    %v1703 = vsel %vm1508, %v120, %v1112
    %v1706 = vsel %vm1508, %v121, %v1114
    %v1709 = vsel %vm1508, %v122, %v1116
    %v1712 = vsel %vm1508, %v123, %v1118
    %v1715 = vsel %vm1508, %v124, %v1120
    %v1718 = vsel %vm1508, %v125, %v1122
    %v1721 = vsel %vm1508, %v126, %v1124
    %v1724 = vsel %vm1508, %v127, %v1126
    %v1727 = vsel %vm1508, %v128, %v1128
    %v1730 = vsel %vm1508, %v129, %v1130
    %v1733 = vsel %vm1508, %v130, %v1132
    %v1736 = vsel %vm1508, %v132, %v1134
    %v1739 = vsel %vm1508, %v133, %v1136
    %v1742 = vsel %vm1508, %v134, %v1138
    %v1745 = vsel %vm1508, %v135, %v1140
    %v1748 = vsel %vm1508, %v136, %v1142
    %v1751 = vsel %vm1508, %v137, %v1144
    %v1754 = vsel %vm1508, %v138, %v1146
    %v1757 = vsel %vm1508, %v139, %v1148
    %v1760 = vsel %vm1508, %v140, %v1150
    %v1763 = vsel %vm1508, %v141, %v1152
    %v1766 = vsel %vm1508, %v142, %v1154
    %v1769 = vsel %vm1508, %v143, %v1156
    %v1772 = vsel %vm1508, %v144, %v1158
    %v1775 = vsel %vm1508, %v145, %v1160
    %v1778 = vsel %vm1508, %v146, %v1162
    %v1781 = vsel %vm1508, %v148, %v1164
    %v1784 = vsel %vm1508, %v149, %v1166
    %v1787 = vsel %vm1508, %v150, %v1168
    %v1790 = vsel %vm1508, %v151, %v1170
    %v1793 = vsel %vm1508, %v152, %v1172
    %v1796 = vsel %vm1508, %v153, %v1174
    %v1799 = vsel %vm1508, %v154, %v1176
    %v1802 = vsel %vm1508, %v155, %v1178
    %v1805 = vsel %vm1508, %v156, %v1180
    %v1808 = vsel %vm1508, %v157, %v1182
    %v1811 = vsel %vm1508, %v158, %v1184
    %v1814 = vsel %vm1508, %v159, %v1186
    %v1817 = vsel %vm1508, %v160, %v1188
    %v1820 = vsel %vm1508, %v161, %v1190
    %v1823 = vsel %vm1508, %v162, %v1192
    %v1826 = vsel %vm1508, %v164, %v1194
    %v1829 = vsel %vm1508, %v165, %v1196
    %v1832 = vsel %vm1508, %v166, %v1198
    %v1835 = vsel %vm1508, %v167, %v1200
    %v1838 = vsel %vm1508, %v168, %v1202
    %v1841 = vsel %vm1508, %v169, %v1204
    %v1844 = vsel %vm1508, %v170, %v1206
    %v1847 = vsel %vm1508, %v171, %v1208
    %v1850 = vsel %vm1508, %v172, %v1210
    %v1853 = vsel %vm1508, %v173, %v1212
    %v1856 = vsel %vm1508, %v174, %v1214
    %v1859 = vsel %vm1508, %v175, %v1216
    %v1862 = vsel %vm1508, %v176, %v1218
    %v1865 = vsel %vm1508, %v177, %v1220
    %v1868 = vsel %vm1508, %v178, %v1222
    %v1871 = vsel %vm1508, %v180, %v1224
    %v1874 = vsel %vm1508, %v181, %v1226
    %v1877 = vsel %vm1508, %v182, %v1228
    %v1880 = vsel %vm1508, %v183, %v1230
    %v1883 = vsel %vm1508, %v184, %v1232
    %v1886 = vsel %vm1508, %v185, %v1234
    %v1889 = vsel %vm1508, %v186, %v1236
    %v1892 = vsel %vm1508, %v187, %v1238
    %v1895 = vsel %vm1508, %v188, %v1240
    %v1898 = vsel %vm1508, %v189, %v1242
    %v1901 = vsel %vm1508, %v190, %v1244
    %v1904 = vsel %vm1508, %v191, %v1246
    %v1907 = vsel %vm1508, %v192, %v1248
    %v1910 = vsel %vm1508, %v193, %v1250
    %v1913 = vsel %vm1508, %v194, %v1252
    %v1916 = vsel %vm1508, %v196, %v1254
    %v1919 = vsel %vm1508, %v197, %v1256
    %v1922 = vsel %vm1508, %v198, %v1258
    %v1925 = vsel %vm1508, %v199, %v1260
    %v1928 = vsel %vm1508, %v200, %v1262
    %v1931 = vsel %vm1508, %v201, %v1264
    %v1934 = vsel %vm1508, %v202, %v1266
    %v1937 = vsel %vm1508, %v203, %v1268
    %v1940 = vsel %vm1508, %v204, %v1270
    %v1943 = vsel %vm1508, %v205, %v1272
    %v1946 = vsel %vm1508, %v206, %v1274
    %v1949 = vsel %vm1508, %v207, %v1276
    %v1952 = vsel %vm1508, %v208, %v1278
    %v1955 = vsel %vm1508, %v209, %v1280
    %v1958 = vsel %vm1508, %v210, %v1282
    %v1961 = vsel %vm1508, %v212, %v1284
    %v1964 = vsel %vm1508, %v213, %v1286
    %v1967 = vsel %vm1508, %v214, %v1288
    %v1970 = vsel %vm1508, %v215, %v1290
    %v1973 = vsel %vm1508, %v216, %v1292
    %v1976 = vsel %vm1508, %v217, %v1294
    %v1979 = vsel %vm1508, %v218, %v1296
    %v1982 = vsel %vm1508, %v219, %v1298
    %v1985 = vsel %vm1508, %v220, %v1300
    %v1988 = vsel %vm1508, %v221, %v1302
    %v1991 = vsel %vm1508, %v222, %v1304
    %v1994 = vsel %vm1508, %v223, %v1306
    %v1997 = vsel %vm1508, %v224, %v1308
    %v2000 = vsel %vm1508, %v225, %v1310
    %v2003 = vsel %vm1508, %v226, %v1312
    %v2006 = vsel %vm1508, %v228, %v1314
    %v2009 = vsel %vm1508, %v229, %v1316
    %v2012 = vsel %vm1508, %v230, %v1318
    %v2015 = vsel %vm1508, %v231, %v1320
    %v2018 = vsel %vm1508, %v232, %v1322
    %v2021 = vsel %vm1508, %v233, %v1324
    %v2024 = vsel %vm1508, %v234, %v1326
    %v2027 = vsel %vm1508, %v235, %v1328
    %v2030 = vsel %vm1508, %v236, %v1330
    %v2033 = vsel %vm1508, %v237, %v1332
    %v2036 = vsel %vm1508, %v238, %v1334
    %v2039 = vsel %vm1508, %v239, %v1336
    %v2042 = vsel %vm1508, %v240, %v1338
    %v2045 = vsel %vm1508, %v241, %v1340
    %v2048 = vsel %vm1508, %v242, %v1342
    %v2051 = vsel %vm1508, %v244, %v1344
    %v2054 = vsel %vm1508, %v245, %v1346
    %v2057 = vsel %vm1508, %v246, %v1348
    %v2060 = vsel %vm1508, %v247, %v1350
    %v2063 = vsel %vm1508, %v248, %v1352
    %v2066 = vsel %vm1508, %v249, %v1354
    %v2069 = vsel %vm1508, %v250, %v1356
    %v2072 = vsel %vm1508, %v251, %v1358
    %v2075 = vsel %vm1508, %v252, %v1360
    %v2078 = vsel %vm1508, %v253, %v1362
    %v2081 = vsel %vm1508, %v254, %v1364
    %v2084 = vsel %vm1508, %v255, %v1366
    %v2087 = vsel %vm1508, %v256, %v1368
    %v2090 = vsel %vm1508, %v257, %v1370
    %v2093 = vsel %vm1508, %v258, %v1372
    %v2096 = vsel %vm1508, %v260, %v1374
    %v2099 = vsel %vm1508, %v261, %v1376
    %v2102 = vsel %vm1508, %v262, %v1378
    %v2105 = vsel %vm1508, %v263, %v1380
    %v2108 = vsel %vm1508, %v264, %v1382
    %v2111 = vsel %vm1508, %v265, %v1384
    %v2114 = vsel %vm1508, %v266, %v1386
    %v2117 = vsel %vm1508, %v267, %v1388
    %v2120 = vsel %vm1508, %v268, %v1390
    %v2123 = vsel %vm1508, %v269, %v1392
    %v2126 = vsel %vm1508, %v270, %v1394
    %v2129 = vsel %vm1508, %v271, %v1396
    %v2132 = vsel %vm1508, %v272, %v1398
    %v2135 = vsel %vm1508, %v273, %v1400
    %v2138 = vsel %vm1508, %v274, %v1402
    %v2141 = vsel %vm1508, %v276, %v1404
    %v2144 = vsel %vm1508, %v277, %v1406
    %v2147 = vsel %vm1508, %v278, %v1408
    %v2150 = vsel %vm1508, %v279, %v1410
    %v2153 = vsel %vm1508, %v280, %v1412
    %v2156 = vsel %vm1508, %v281, %v1414
    %v2159 = vsel %vm1508, %v282, %v1416
    %v2162 = vsel %vm1508, %v283, %v1418
    %v2165 = vsel %vm1508, %v284, %v1420
    %v2168 = vsel %vm1508, %v285, %v1422
    %v2171 = vsel %vm1508, %v286, %v1424
    %v2174 = vsel %vm1508, %v287, %v1426
    %v2177 = vsel %vm1508, %v288, %v1428
    %v2180 = vsel %vm1508, %v289, %v1430
    %v2183 = vsel %vm1508, %v290, %v1432
    %v2186 = vsel %vm1508, %v292, %v1479
    %v2189 = vsel %vm1508, %v293, %v1481
    %v2192 = vsel %vm1508, %v294, %v1483
    %v2195 = vsel %vm1508, %v295, %v1485
    %v2198 = vsel %vm1508, %v296, %v1487
    %v2201 = vsel %vm1508, %v297, %v1489
    %v2204 = vsel %vm1508, %v298, %v1491
    %v2207 = vsel %vm1508, %v299, %v1493
    %v2210 = vsel %vm1508, %v300, %v1495
    %v2213 = vsel %vm1508, %v301, %v1497
    %v2216 = vsel %vm1508, %v302, %v1499
    %v2219 = vsel %vm1508, %v303, %v1501
    %v2222 = vsel %vm1508, %v304, %v1503
    %v2225 = vsel %vm1508, %v305, %v1505
    %v2228 = vsel %vm1508, %v306, %v1507
    %v2469 = vunpack.c.l.b16 %v1511
    %v2470 = vunpack.c.l.b16 %v1556
    %v2471 = vunpack.c.l.b16 %v1514
    %v2472 = vunpack.c.l.b16 %v1559
    %v2473 = vunpack.c.l.b16 %v1517
    %v2474 = vunpack.c.l.b16 %v1562
    %v2475 = vunpack.c.l.b16 %v1520
    %v2476 = vunpack.c.l.b16 %v1565
    %v2477 = vunpack.c.l.b16 %v1523
    %v2478 = vunpack.c.l.b16 %v1568
    %v2479 = vunpack.c.l.b16 %v1526
    %v2480 = vunpack.c.l.b16 %v1571
    %v2481 = vunpack.c.l.b16 %v1529
    %v2482 = vunpack.c.l.b16 %v1574
    %v2483 = vunpack.c.l.b16 %v1532
    %v2484 = vunpack.c.l.b16 %v1577
    %v2485 = vunpack.c.l.b16 %v1535
    %v2486 = vunpack.c.l.b16 %v1580
    %v2487 = vunpack.c.l.b16 %v1538
    %v2488 = vunpack.c.l.b16 %v1583
    %v2489 = vunpack.c.l.b16 %v1541
    %v2490 = vunpack.c.l.b16 %v1586
    %v2491 = vunpack.c.l.b16 %v1544
    %v2492 = vunpack.c.l.b16 %v1589
    %v2493 = vunpack.c.l.b16 %v1547
    %v2494 = vunpack.c.l.b16 %v1592
    %v2495 = vunpack.c.l.b16 %v1550
    %v2496 = vunpack.c.l.b16 %v1595
    %v2497 = vunpack.c.l.b16 %v1553
    %v2498 = vunpack.c.l.b16 %v1598
    %v2499 = vunpack.c.l.b16 %v1601
    %v2500 = vunpack.c.l.b16 %v1604
    %v2501 = vunpack.c.l.b16 %v1607
    %v2502 = vunpack.c.l.b16 %v1610
    %v2503 = vunpack.c.l.b16 %v1613
    %v2504 = vunpack.c.l.b16 %v1616
    %v2505 = vunpack.c.l.b16 %v1619
    %v2506 = vunpack.c.l.b16 %v1622
    %v2507 = vunpack.c.l.b16 %v1625
    %v2508 = vunpack.c.l.b16 %v1628
    %v2509 = vunpack.c.l.b16 %v1631
    %v2510 = vunpack.c.l.b16 %v1634
    %v2511 = vunpack.c.l.b16 %v1637
    %v2512 = vunpack.c.l.b16 %v1640
    %v2513 = vunpack.c.l.b16 %v1643
    %v2514 = vunpack.c.l.b16 %v1646
    %v2515 = vunpack.c.l.b16 %v1649
    %v2516 = vunpack.c.l.b16 %v1652
    %v2517 = vunpack.c.l.b16 %v1655
    %v2518 = vunpack.c.l.b16 %v1658
    %v2519 = vunpack.c.l.b16 %v1661
    %v2520 = vunpack.c.l.b16 %v1664
    %v2521 = vunpack.c.l.b16 %v1667
    %v2522 = vunpack.c.l.b16 %v1670
    %v2523 = vunpack.c.l.b16 %v1673
    %v2524 = vunpack.c.l.b16 %v1676
    %v2525 = vunpack.c.l.b16 %v1679
    %v2526 = vunpack.c.l.b16 %v1682
    %v2527 = vunpack.c.l.b16 %v1685
    %v2528 = vunpack.c.l.b16 %v1688
    %v2529 = vunpack.c.l.b16 %v1691
    %v2530 = vunpack.c.l.b16 %v1694
    %v2531 = vunpack.c.l.b16 %v1697
    %v2532 = vunpack.c.l.b16 %v1700
    %v2533 = vunpack.c.l.b16 %v1703
    %v2534 = vunpack.c.l.b16 %v1706
    %v2535 = vunpack.c.l.b16 %v1709
    %v2536 = vunpack.c.l.b16 %v1712
    %v2537 = vunpack.c.l.b16 %v1715
    %v2538 = vunpack.c.l.b16 %v1718
    %v2539 = vunpack.c.l.b16 %v1721
    %v2540 = vunpack.c.l.b16 %v1724
    %v2541 = vunpack.c.l.b16 %v1727
    %v2542 = vunpack.c.l.b16 %v1730
    %v2543 = vunpack.c.l.b16 %v1733
    %v2544 = vunpack.c.l.b16 %v1736
    %v2545 = vunpack.c.l.b16 %v1739
    %v2546 = vunpack.c.l.b16 %v1742
    %v2547 = vunpack.c.l.b16 %v1745
    %v2548 = vunpack.c.l.b16 %v1748
    %v2549 = vunpack.c.l.b16 %v1751
    %v2550 = vunpack.c.l.b16 %v1754
    %v2551 = vunpack.c.l.b16 %v1757
    %v2552 = vunpack.c.l.b16 %v1760
    %v2553 = vunpack.c.l.b16 %v1763
    %v2554 = vunpack.c.l.b16 %v1766
    %v2555 = vunpack.c.l.b16 %v1769
    %v2556 = vunpack.c.l.b16 %v1772
    %v2557 = vunpack.c.l.b16 %v1775
    %v2558 = vunpack.c.l.b16 %v1778
    %v2559 = vunpack.c.l.b16 %v1781
    %v2560 = vunpack.c.l.b16 %v1784
    %v2561 = vunpack.c.l.b16 %v1787
    %v2562 = vunpack.c.l.b16 %v1790
    %v2563 = vunpack.c.l.b16 %v1793
    %v2564 = vunpack.c.l.b16 %v1796
    %v2565 = vunpack.c.l.b16 %v1799
    %v2566 = vunpack.c.l.b16 %v1802
    %v2567 = vunpack.c.l.b16 %v1805
    %v2568 = vunpack.c.l.b16 %v1808
    %v2569 = vunpack.c.l.b16 %v1811
    %v2570 = vunpack.c.l.b16 %v1814
    %v2571 = vunpack.c.l.b16 %v1817
    %v2572 = vunpack.c.l.b16 %v1820
    %v2573 = vunpack.c.l.b16 %v1823
    %v2574 = vunpack.c.l.b16 %v1826
    %v2575 = vunpack.c.l.b16 %v1829
    %v2576 = vunpack.c.l.b16 %v1832
    %v2577 = vunpack.c.l.b16 %v1835
    %v2578 = vunpack.c.l.b16 %v1838
    %v2579 = vunpack.c.l.b16 %v1841
    %v2580 = vunpack.c.l.b16 %v1844
    %v2581 = vunpack.c.l.b16 %v1847
    %v2582 = vunpack.c.l.b16 %v1850
    %v2583 = vunpack.c.l.b16 %v1853
    %v2584 = vunpack.c.l.b16 %v1856
    %v2585 = vunpack.c.l.b16 %v1859
    %v2586 = vunpack.c.l.b16 %v1862
    %v2587 = vunpack.c.l.b16 %v1865
    %v2588 = vunpack.c.l.b16 %v1868
    %v2589 = vunpack.c.l.b16 %v1871
    %v2590 = vunpack.c.l.b16 %v1874
    %v2591 = vunpack.c.l.b16 %v1877
    %v2592 = vunpack.c.l.b16 %v1880
    %v2593 = vunpack.c.l.b16 %v1883
    %v2594 = vunpack.c.l.b16 %v1886
    %v2595 = vunpack.c.l.b16 %v1889
    %v2596 = vunpack.c.l.b16 %v1892
    %v2597 = vunpack.c.l.b16 %v1895
    %v2598 = vunpack.c.l.b16 %v1898
    %v2599 = vunpack.c.l.b16 %v1901
    %v2600 = vunpack.c.l.b16 %v1904
    %v2601 = vunpack.c.l.b16 %v1907
    %v2602 = vunpack.c.l.b16 %v1910
    %v2603 = vunpack.c.l.b16 %v1913
    %v2604 = vunpack.c.l.b16 %v1916
    %v2605 = vunpack.c.l.b16 %v1919
    %v2606 = vunpack.c.l.b16 %v1922
    %v2607 = vunpack.c.l.b16 %v1925
    %v2608 = vunpack.c.l.b16 %v1928
    %v2609 = vunpack.c.l.b16 %v1931
    %v2610 = vunpack.c.l.b16 %v1934
    %v2611 = vunpack.c.l.b16 %v1937
    %v2612 = vunpack.c.l.b16 %v1940
    %v2613 = vunpack.c.l.b16 %v1943
    %v2614 = vunpack.c.l.b16 %v1946
    %v2615 = vunpack.c.l.b16 %v1949
    %v2616 = vunpack.c.l.b16 %v1952
    %v2617 = vunpack.c.l.b16 %v1955
    %v2618 = vunpack.c.l.b16 %v1958
    %v2619 = vunpack.c.l.b16 %v1961
    %v2620 = vunpack.c.l.b16 %v1964
    %v2621 = vunpack.c.l.b16 %v1967
    %v2622 = vunpack.c.l.b16 %v1970
    %v2623 = vunpack.c.l.b16 %v1973
    %v2624 = vunpack.c.l.b16 %v1976
    %v2625 = vunpack.c.l.b16 %v1979
    %v2626 = vunpack.c.l.b16 %v1982
    %v2627 = vunpack.c.l.b16 %v1985
    %v2628 = vunpack.c.l.b16 %v1988
    %v2629 = vunpack.c.l.b16 %v1991
    %v2630 = vunpack.c.l.b16 %v1994
    %v2631 = vunpack.c.l.b16 %v1997
    %v2632 = vunpack.c.l.b16 %v2000
    %v2633 = vunpack.c.l.b16 %v2003
    %v2634 = vunpack.c.l.b16 %v2006
    %v2635 = vunpack.c.l.b16 %v2009
    %v2636 = vunpack.c.l.b16 %v2012
    %v2637 = vunpack.c.l.b16 %v2015
    %v2638 = vunpack.c.l.b16 %v2018
    %v2639 = vunpack.c.l.b16 %v2021
    %v2640 = vunpack.c.l.b16 %v2024
    %v2641 = vunpack.c.l.b16 %v2027
    %v2642 = vunpack.c.l.b16 %v2030
    %v2643 = vunpack.c.l.b16 %v2033
    %v2644 = vunpack.c.l.b16 %v2036
    %v2645 = vunpack.c.l.b16 %v2039
    %v2646 = vunpack.c.l.b16 %v2042
    %v2647 = vunpack.c.l.b16 %v2045
    %v2648 = vunpack.c.l.b16 %v2048
    %v2649 = vunpack.c.l.b16 %v2051
    %v2650 = vunpack.c.l.b16 %v2054
    %v2651 = vunpack.c.l.b16 %v2057
    %v2652 = vunpack.c.l.b16 %v2060
    %v2653 = vunpack.c.l.b16 %v2063
    %v2654 = vunpack.c.l.b16 %v2066
    %v2655 = vunpack.c.l.b16 %v2069
    %v2656 = vunpack.c.l.b16 %v2072
    %v2657 = vunpack.c.l.b16 %v2075
    %v2658 = vunpack.c.l.b16 %v2078
    %v2659 = vunpack.c.l.b16 %v2081
    %v2660 = vunpack.c.l.b16 %v2084
    %v2661 = vunpack.c.l.b16 %v2087
    %v2662 = vunpack.c.l.b16 %v2090
    %v2663 = vunpack.c.l.b16 %v2093
    %v2664 = vunpack.c.l.b16 %v2096
    %v2665 = vunpack.c.l.b16 %v2099
    %v2666 = vunpack.c.l.b16 %v2102
    %v2667 = vunpack.c.l.b16 %v2105
    %v2668 = vunpack.c.l.b16 %v2108
    %v2669 = vunpack.c.l.b16 %v2111
    %v2670 = vunpack.c.l.b16 %v2114
    %v2671 = vunpack.c.l.b16 %v2117
    %v2672 = vunpack.c.l.b16 %v2120
    %v2673 = vunpack.c.l.b16 %v2123
    %v2674 = vunpack.c.l.b16 %v2126
    %v2675 = vunpack.c.l.b16 %v2129
    %v2676 = vunpack.c.l.b16 %v2132
    %v2677 = vunpack.c.l.b16 %v2135
    %v2678 = vunpack.c.l.b16 %v2138
    %v2679 = vunpack.c.l.b16 %v2141
    %v2680 = vunpack.c.l.b16 %v2144
    %v2681 = vunpack.c.l.b16 %v2147
    %v2682 = vunpack.c.l.b16 %v2150
    %v2683 = vunpack.c.l.b16 %v2153
    %v2684 = vunpack.c.l.b16 %v2156
    %v2685 = vunpack.c.l.b16 %v2159
    %v2686 = vunpack.c.l.b16 %v2162
    %v2687 = vunpack.c.l.b16 %v2165
    %v2688 = vunpack.c.l.b16 %v2168
    %v2689 = vunpack.c.l.b16 %v2171
    %v2690 = vunpack.c.l.b16 %v2174
    %v2691 = vunpack.c.l.b16 %v2177
    %v2692 = vunpack.c.l.b16 %v2180
    %v2693 = vunpack.c.l.b16 %v2183
    %v2694 = vunpack.c.l.b16 %v2186
    %v2695 = vunpack.c.l.b16 %v2189
    %v2696 = vunpack.c.l.b16 %v2192
    %v2697 = vunpack.c.l.b16 %v2195
    %v2698 = vunpack.c.l.b16 %v2198
    %v2699 = vunpack.c.l.b16 %v2201
    %v2700 = vunpack.c.l.b16 %v2204
    %v2701 = vunpack.c.l.b16 %v2207
    %v2702 = vunpack.c.l.b16 %v2210
    %v2703 = vunpack.c.l.b16 %v2213
    %v2704 = vunpack.c.l.b16 %v2216
    %v2705 = vunpack.c.l.b16 %v2219
    %v2706 = vunpack.c.l.b16 %v2222
    %v2707 = vunpack.c.l.b16 %v2225
    %v2708 = vunpack.c.l.b16 %v2228
    %v2709 = vld [vmem:[%s2] sm:$0xf]
    %v2710 = vld [vmem:[%s2 + $0x4] sm:$0xf]
    %v2711 = vld [vmem:[%s2 + $0x8] sm:$0xf]
    %v2712 = vld [vmem:[%s2 + $0xc] sm:$0xf]
    %v2713 = vld [vmem:[%s2 + $0x10] sm:$0xf]
    %v2714 = vld [vmem:[%s2 + $0x14] sm:$0xf]
    %v2715 = vld [vmem:[%s2 + $0x18] sm:$0xf]
    %v2716 = vld [vmem:[%s2 + $0x1c] sm:$0xf]
    %v2717 = vld [vmem:[%s2 + $0x20] sm:$0xf]
    %v2718 = vld [vmem:[%s2 + $0x24] sm:$0xf]
    %v2719 = vld [vmem:[%s2 + $0x28] sm:$0xf]
    %v2720 = vld [vmem:[%s2 + $0x2c] sm:$0xf]
    %v2721 = vld [vmem:[%s2 + $0x30] sm:$0xf]
    %v2722 = vld [vmem:[%s2 + $0x34] sm:$0xf]
    %v2723 = vld [vmem:[%s2 + $0x38] sm:$0xf]
    %v2724 = vld [vmem:[%s2 + $0x3c] sm:$0xf]
    %v2725 = vld [vmem:[%s2 + $0x40] sm:$0xf]
    %v2726 = vld [vmem:[%s2 + $0x44] sm:$0xf]
    %v2727 = vld [vmem:[%s2 + $0x48] sm:$0xf]
    %v2728 = vld [vmem:[%s2 + $0x4c] sm:$0xf]
    %v2729 = vld [vmem:[%s2 + $0x50] sm:$0xf]
    %v2730 = vld [vmem:[%s2 + $0x54] sm:$0xf]
    %v2731 = vld [vmem:[%s2 + $0x58] sm:$0xf]
    %v2732 = vld [vmem:[%s2 + $0x5c] sm:$0xf]
    %v2733 = vld [vmem:[%s2 + $0x60] sm:$0xf]
    %v2734 = vld [vmem:[%s2 + $0x64] sm:$0xf]
    %v2735 = vld [vmem:[%s2 + $0x68] sm:$0xf]
    %v2736 = vld [vmem:[%s2 + $0x6c] sm:$0xf]
    %v2737 = vld [vmem:[%s2 + $0x70] sm:$0xf]
    %v2738 = vld [vmem:[%s2 + $0x74] sm:$0xf]
    %v2739 = vld [vmem:[%s2 + $0x78] sm:$0xf]
    %v2740 = vld [vmem:[%s2 + $0x7c] sm:$0xf]
    %v2741 = vld [vmem:[%s3] sm:$0x1]
    %v2743 = vlaneseq
    %v2744 = vshrl.u32 %v2743, 7
    %v2745 = vsub.s32 0, %v2744
    %v2746 = vrot.slane %v2741, %v2745
    %v2748 = vpack.c.b16 %v2471, %v2469
    %v2749 = vpack.c.b16 %v2472, %v2470
    %v2750 = vpack.c.b16 %v2475, %v2473
    %v2751 = vpack.c.b16 %v2476, %v2474
    %v2752 = vpack.c.b16 %v2479, %v2477
    %v2753 = vpack.c.b16 %v2480, %v2478
    %v2754 = vpack.c.b16 %v2483, %v2481
    %v2755 = vpack.c.b16 %v2484, %v2482
    %v2756 = vpack.c.b16 %v2487, %v2485
    %v2757 = vpack.c.b16 %v2488, %v2486
    %v2758 = vpack.c.b16 %v2491, %v2489
    %v2759 = vpack.c.b16 %v2492, %v2490
    %v2760 = vpack.c.b16 %v2495, %v2493
    %v2761 = vpack.c.b16 %v2496, %v2494
    %v2762 = vpack.c.b16 %v2470, %v2497
    %v2763 = vpack.c.b16 %v2499, %v2498
    %v2764 = vpack.c.b16 %v2474, %v2472
    %v2765 = vpack.c.b16 %v2501, %v2500
    %v2766 = vpack.c.b16 %v2478, %v2476
    %v2767 = vpack.c.b16 %v2503, %v2502
    %v2768 = vpack.c.b16 %v2482, %v2480
    %v2769 = vpack.c.b16 %v2505, %v2504
    %v2770 = vpack.c.b16 %v2486, %v2484
    %v2771 = vpack.c.b16 %v2507, %v2506
    %v2772 = vpack.c.b16 %v2490, %v2488
    %v2773 = vpack.c.b16 %v2509, %v2508
    %v2774 = vpack.c.b16 %v2494, %v2492
    %v2775 = vpack.c.b16 %v2511, %v2510
    %v2776 = vpack.c.b16 %v2498, %v2496
    %v2777 = vpack.c.b16 %v2513, %v2512
    %v2778 = vpack.c.b16 %v2500, %v2499
    %v2779 = vpack.c.b16 %v2515, %v2514
    %v2780 = vpack.c.b16 %v2502, %v2501
    %v2781 = vpack.c.b16 %v2517, %v2516
    %v2782 = vpack.c.b16 %v2504, %v2503
    %v2783 = vpack.c.b16 %v2519, %v2518
    %v2784 = vpack.c.b16 %v2506, %v2505
    %v2785 = vpack.c.b16 %v2521, %v2520
    %v2786 = vpack.c.b16 %v2508, %v2507
    %v2787 = vpack.c.b16 %v2523, %v2522
    %v2788 = vpack.c.b16 %v2510, %v2509
    %v2789 = vpack.c.b16 %v2525, %v2524
    %v2790 = vpack.c.b16 %v2512, %v2511
    %v2791 = vpack.c.b16 %v2527, %v2526
    %v2792 = vpack.c.b16 %v2514, %v2513
    %v2793 = vpack.c.b16 %v2529, %v2528
    %v2794 = vpack.c.b16 %v2516, %v2515
    %v2795 = vpack.c.b16 %v2531, %v2530
    %v2796 = vpack.c.b16 %v2518, %v2517
    %v2797 = vpack.c.b16 %v2533, %v2532
    %v2798 = vpack.c.b16 %v2520, %v2519
    %v2799 = vpack.c.b16 %v2535, %v2534
    %v2800 = vpack.c.b16 %v2522, %v2521
    %v2801 = vpack.c.b16 %v2537, %v2536
    %v2802 = vpack.c.b16 %v2524, %v2523
    %v2803 = vpack.c.b16 %v2539, %v2538
    %v2804 = vpack.c.b16 %v2526, %v2525
    %v2805 = vpack.c.b16 %v2541, %v2540
    %v2806 = vpack.c.b16 %v2528, %v2527
    %v2807 = vpack.c.b16 %v2543, %v2542
    %v2808 = vpack.c.b16 %v2530, %v2529
    %v2809 = vpack.c.b16 %v2545, %v2544
    %v2810 = vpack.c.b16 %v2532, %v2531
    %v2811 = vpack.c.b16 %v2547, %v2546
    %v2812 = vpack.c.b16 %v2534, %v2533
    %v2813 = vpack.c.b16 %v2549, %v2548
    %v2814 = vpack.c.b16 %v2536, %v2535
    %v2815 = vpack.c.b16 %v2551, %v2550
    %v2816 = vpack.c.b16 %v2538, %v2537
    %v2817 = vpack.c.b16 %v2553, %v2552
    %v2818 = vpack.c.b16 %v2540, %v2539
    %v2819 = vpack.c.b16 %v2555, %v2554
    %v2820 = vpack.c.b16 %v2542, %v2541
    %v2821 = vpack.c.b16 %v2557, %v2556
    %v2822 = vpack.c.b16 %v2544, %v2543
    %v2823 = vpack.c.b16 %v2559, %v2558
    %v2824 = vpack.c.b16 %v2546, %v2545
    %v2825 = vpack.c.b16 %v2561, %v2560
    %v2826 = vpack.c.b16 %v2548, %v2547
    %v2827 = vpack.c.b16 %v2563, %v2562
    %v2828 = vpack.c.b16 %v2550, %v2549
    %v2829 = vpack.c.b16 %v2565, %v2564
    %v2830 = vpack.c.b16 %v2552, %v2551
    %v2831 = vpack.c.b16 %v2567, %v2566
    %v2832 = vpack.c.b16 %v2554, %v2553
    %v2833 = vpack.c.b16 %v2569, %v2568
    %v2834 = vpack.c.b16 %v2556, %v2555
    %v2835 = vpack.c.b16 %v2571, %v2570
    %v2836 = vpack.c.b16 %v2558, %v2557
    %v2837 = vpack.c.b16 %v2573, %v2572
    %v2838 = vpack.c.b16 %v2560, %v2559
    %v2839 = vpack.c.b16 %v2575, %v2574
    %v2840 = vpack.c.b16 %v2562, %v2561
    %v2841 = vpack.c.b16 %v2577, %v2576
    %v2842 = vpack.c.b16 %v2564, %v2563
    %v2843 = vpack.c.b16 %v2579, %v2578
    %v2844 = vpack.c.b16 %v2566, %v2565
    %v2845 = vpack.c.b16 %v2581, %v2580
    %v2846 = vpack.c.b16 %v2568, %v2567
    %v2847 = vpack.c.b16 %v2583, %v2582
    %v2848 = vpack.c.b16 %v2570, %v2569
    %v2849 = vpack.c.b16 %v2585, %v2584
    %v2850 = vpack.c.b16 %v2572, %v2571
    %v2851 = vpack.c.b16 %v2587, %v2586
    %v2852 = vpack.c.b16 %v2574, %v2573
    %v2853 = vpack.c.b16 %v2589, %v2588
    %v2854 = vpack.c.b16 %v2576, %v2575
    %v2855 = vpack.c.b16 %v2591, %v2590
    %v2856 = vpack.c.b16 %v2578, %v2577
    %v2857 = vpack.c.b16 %v2593, %v2592
    %v2858 = vpack.c.b16 %v2580, %v2579
    %v2859 = vpack.c.b16 %v2595, %v2594
    %v2860 = vpack.c.b16 %v2582, %v2581
    %v2861 = vpack.c.b16 %v2597, %v2596
    %v2862 = vpack.c.b16 %v2584, %v2583
    %v2863 = vpack.c.b16 %v2599, %v2598
    %v2864 = vpack.c.b16 %v2586, %v2585
    %v2865 = vpack.c.b16 %v2601, %v2600
    %v2866 = vpack.c.b16 %v2588, %v2587
    %v2867 = vpack.c.b16 %v2603, %v2602
    %v2868 = vpack.c.b16 %v2590, %v2589
    %v2869 = vpack.c.b16 %v2605, %v2604
    %v2870 = vpack.c.b16 %v2592, %v2591
    %v2871 = vpack.c.b16 %v2607, %v2606
    %v2872 = vpack.c.b16 %v2594, %v2593
    %v2873 = vpack.c.b16 %v2609, %v2608
    %v2874 = vpack.c.b16 %v2596, %v2595
    %v2875 = vpack.c.b16 %v2611, %v2610
    %v2876 = vpack.c.b16 %v2598, %v2597
    %v2877 = vpack.c.b16 %v2613, %v2612
    %v2878 = vpack.c.b16 %v2600, %v2599
    %v2879 = vpack.c.b16 %v2615, %v2614
    %v2880 = vpack.c.b16 %v2602, %v2601
    %v2881 = vpack.c.b16 %v2617, %v2616
    %v2882 = vpack.c.b16 %v2604, %v2603
    %v2883 = vpack.c.b16 %v2619, %v2618
    %v2884 = vpack.c.b16 %v2606, %v2605
    %v2885 = vpack.c.b16 %v2621, %v2620
    %v2886 = vpack.c.b16 %v2608, %v2607
    %v2887 = vpack.c.b16 %v2623, %v2622
    %v2888 = vpack.c.b16 %v2610, %v2609
    %v2889 = vpack.c.b16 %v2625, %v2624
    %v2890 = vpack.c.b16 %v2612, %v2611
    %v2891 = vpack.c.b16 %v2627, %v2626
    %v2892 = vpack.c.b16 %v2614, %v2613
    %v2893 = vpack.c.b16 %v2629, %v2628
    %v2894 = vpack.c.b16 %v2616, %v2615
    %v2895 = vpack.c.b16 %v2631, %v2630
    %v2896 = vpack.c.b16 %v2618, %v2617
    %v2897 = vpack.c.b16 %v2633, %v2632
    %v2898 = vpack.c.b16 %v2620, %v2619
    %v2899 = vpack.c.b16 %v2635, %v2634
    %v2900 = vpack.c.b16 %v2622, %v2621
    %v2901 = vpack.c.b16 %v2637, %v2636
    %v2902 = vpack.c.b16 %v2624, %v2623
    %v2903 = vpack.c.b16 %v2639, %v2638
    %v2904 = vpack.c.b16 %v2626, %v2625
    %v2905 = vpack.c.b16 %v2641, %v2640
    %v2906 = vpack.c.b16 %v2628, %v2627
    %v2907 = vpack.c.b16 %v2643, %v2642
    %v2908 = vpack.c.b16 %v2630, %v2629
    %v2909 = vpack.c.b16 %v2645, %v2644
    %v2910 = vpack.c.b16 %v2632, %v2631
    %v2911 = vpack.c.b16 %v2647, %v2646
    %v2912 = vpack.c.b16 %v2634, %v2633
    %v2913 = vpack.c.b16 %v2649, %v2648
    %v2914 = vpack.c.b16 %v2636, %v2635
    %v2915 = vpack.c.b16 %v2651, %v2650
    %v2916 = vpack.c.b16 %v2638, %v2637
    %v2917 = vpack.c.b16 %v2653, %v2652
    %v2918 = vpack.c.b16 %v2640, %v2639
    %v2919 = vpack.c.b16 %v2655, %v2654
    %v2920 = vpack.c.b16 %v2642, %v2641
    %v2921 = vpack.c.b16 %v2657, %v2656
    %v2922 = vpack.c.b16 %v2644, %v2643
    %v2923 = vpack.c.b16 %v2659, %v2658
    %v2924 = vpack.c.b16 %v2646, %v2645
    %v2925 = vpack.c.b16 %v2661, %v2660
    %v2926 = vpack.c.b16 %v2648, %v2647
    %v2927 = vpack.c.b16 %v2663, %v2662
    %v2928 = vpack.c.b16 %v2650, %v2649
    %v2929 = vpack.c.b16 %v2665, %v2664
    %v2930 = vpack.c.b16 %v2652, %v2651
    %v2931 = vpack.c.b16 %v2667, %v2666
    %v2932 = vpack.c.b16 %v2654, %v2653
    %v2933 = vpack.c.b16 %v2669, %v2668
    %v2934 = vpack.c.b16 %v2656, %v2655
    %v2935 = vpack.c.b16 %v2671, %v2670
    %v2936 = vpack.c.b16 %v2658, %v2657
    %v2937 = vpack.c.b16 %v2673, %v2672
    %v2938 = vpack.c.b16 %v2660, %v2659
    %v2939 = vpack.c.b16 %v2675, %v2674
    %v2940 = vpack.c.b16 %v2662, %v2661
    %v2941 = vpack.c.b16 %v2677, %v2676
    %v2942 = vpack.c.b16 %v2664, %v2663
    %v2943 = vpack.c.b16 %v2679, %v2678
    %v2944 = vpack.c.b16 %v2666, %v2665
    %v2945 = vpack.c.b16 %v2681, %v2680
    %v2946 = vpack.c.b16 %v2668, %v2667
    %v2947 = vpack.c.b16 %v2683, %v2682
    %v2948 = vpack.c.b16 %v2670, %v2669
    %v2949 = vpack.c.b16 %v2685, %v2684
    %v2950 = vpack.c.b16 %v2672, %v2671
    %v2951 = vpack.c.b16 %v2687, %v2686
    %v2952 = vpack.c.b16 %v2674, %v2673
    %v2953 = vpack.c.b16 %v2689, %v2688
    %v2954 = vpack.c.b16 %v2676, %v2675
    %v2955 = vpack.c.b16 %v2691, %v2690
    %v2956 = vpack.c.b16 %v2678, %v2677
    %v2957 = vpack.c.b16 %v2693, %v2692
    %v2958 = vpack.c.b16 %v2680, %v2679
    %v2959 = vpack.c.b16 %v2695, %v2694
    %v2960 = vpack.c.b16 %v2682, %v2681
    %v2961 = vpack.c.b16 %v2697, %v2696
    %v2962 = vpack.c.b16 %v2684, %v2683
    %v2963 = vpack.c.b16 %v2699, %v2698
    %v2964 = vpack.c.b16 %v2686, %v2685
    %v2965 = vpack.c.b16 %v2701, %v2700
    %v2966 = vpack.c.b16 %v2688, %v2687
    %v2967 = vpack.c.b16 %v2703, %v2702
    %v2968 = vpack.c.b16 %v2690, %v2689
    %v2969 = vpack.c.b16 %v2705, %v2704
    %v2970 = vpack.c.b16 %v2692, %v2691
    %v2971 = vpack.c.b16 %v2707, %v2706
    %v2972 = vpack.c.b16 %v2693, %v2693
    %v2973 = vpack.c.b16 %v2708, %v2708
    %v3232 = vunpack.c.l.b16 %v2709
    %v3233 = vunpack.c.l.b16 %v2710
    %v3234 = vunpack.c.l.b16 %v2711
    %v3235 = vunpack.c.l.b16 %v2712
    %v3236 = vunpack.c.l.b16 %v2713
    %v3237 = vunpack.c.l.b16 %v2714
    %v3238 = vunpack.c.l.b16 %v2715
    %v3239 = vunpack.c.l.b16 %v2716
    %v3240 = vunpack.c.l.b16 %v2717
    %v3241 = vunpack.c.l.b16 %v2718
    %v3242 = vunpack.c.l.b16 %v2719
    %v3243 = vunpack.c.l.b16 %v2720
    %v3244 = vunpack.c.l.b16 %v2721
    %v3245 = vunpack.c.l.b16 %v2722
    %v3246 = vunpack.c.l.b16 %v2723
    %v3247 = vunpack.c.l.b16 %v2724
    %v3248 = vunpack.c.l.b16 %v2725
    %v3249 = vunpack.c.l.b16 %v2726
    %v3250 = vunpack.c.l.b16 %v2727
    %v3251 = vunpack.c.l.b16 %v2728
    %v3252 = vunpack.c.l.b16 %v2729
    %v3253 = vunpack.c.l.b16 %v2730
    %v3254 = vunpack.c.l.b16 %v2731
    %v3255 = vunpack.c.l.b16 %v2732
    %v3256 = vunpack.c.l.b16 %v2733
    %v3257 = vunpack.c.l.b16 %v2734
    %v3258 = vunpack.c.l.b16 %v2735
    %v3259 = vunpack.c.l.b16 %v2736
    %v3260 = vunpack.c.l.b16 %v2737
    %v3261 = vunpack.c.l.b16 %v2738
    %v3262 = vunpack.c.l.b16 %v2739
    %v3263 = vunpack.c.l.b16 %v2740
    %v3264 = vpack.c.b16 %v3233, %v3232
    %v3265 = vpack.c.b16 %v3235, %v3234
    %v3266 = vpack.c.b16 %v3237, %v3236
    %v3267 = vpack.c.b16 %v3239, %v3238
    %v3268 = vpack.c.b16 %v3241, %v3240
    %v3269 = vpack.c.b16 %v3243, %v3242
    %v3270 = vpack.c.b16 %v3245, %v3244
    %v3271 = vpack.c.b16 %v3247, %v3246
    %v3272 = vpack.c.b16 %v3249, %v3248
    %v3273 = vpack.c.b16 %v3251, %v3250
    %v3274 = vpack.c.b16 %v3253, %v3252
    %v3275 = vpack.c.b16 %v3255, %v3254
    %v3276 = vpack.c.b16 %v3257, %v3256
    %v3277 = vpack.c.b16 %v3259, %v3258
    %v3278 = vpack.c.b16 %v3261, %v3260
    %v3279 = vpack.c.b16 %v3263, %v3262
    %3296 = vmatprep.subr.bf16.mxu0 0
    %3297 = vmatpush1.bf16.msra.mxu0 %v3271
    %3298 = vmatprep.subr.bf16.mxu0 0
    %3299 = vmatpush1.bf16.msra.mxu0 %v3270
    %3300 = vmatprep.subr.bf16.mxu0 0
    %3301 = vmatpush1.bf16.msra.mxu0 %v3269
    %3302 = vmatprep.subr.bf16.mxu0 0
    %3303 = vmatpush1.bf16.msra.mxu0 %v3268
    %3304 = vmatprep.subr.bf16.mxu0 0
    %3305 = vmatpush1.bf16.msra.mxu0 %v3267
    %3306 = vmatprep.subr.bf16.mxu0 0
    %3307 = vmatpush1.bf16.msra.mxu0 %v3266
    %3308 = vmatprep.subr.bf16.mxu0 0
    %3309 = vmatpush1.bf16.msra.mxu0 %v3265
    %3310 = vmatprep.subr.bf16.mxu0 0
    %3311 = vmatpush1.bf16.msra.mxu0 %v3264
    %3312 = vmatprep.subr.bf16.mxu0 0
    %3313 = vmatpush2.bf16.msra.mxu0 %v3279
    %3314 = vmatprep.subr.bf16.mxu0 0
    %3315 = vmatpush2.bf16.msra.mxu0 %v3278
    %3316 = vmatprep.subr.bf16.mxu0 0
    %3317 = vmatpush2.bf16.msra.mxu0 %v3277
    %3318 = vmatprep.subr.bf16.mxu0 0
    %3319 = vmatpush2.bf16.msra.mxu0 %v3276
    %3320 = vmatprep.subr.bf16.mxu0 0
    %3321 = vmatpush2.bf16.msra.mxu0 %v3275
    %3322 = vmatprep.subr.bf16.mxu0 0
    %3323 = vmatpush2.bf16.msra.mxu0 %v3274
    %3324 = vmatprep.subr.bf16.mxu0 0
    %3325 = vmatpush2.bf16.msra.mxu0 %v3273
    %3326 = vmatprep.subr.bf16.mxu0 0
    %3327 = vmatpush2.bf16.msra.mxu0 %v3272
    %3328 = vmatprep.mubr.bf16.mxu0 %v2749
    %3329 = vmatmul.mubr.bf16.gmra.mxu0 %v2748
    %v3330 = vpop.f32.mrf.mxu0
    %v3331 = vadd.f32 %v2746, %v3330
    %v3332 = vpop.f32.mrf.mxu0
    %v3333 = vpop.f32.mrf.mxu0
    %v3334 = vadd.f32 %v2746, %v3333
    %v3335 = vpop.f32.mrf.mxu0
    %3336 = vmatprep.mubr.bf16.mxu0 %v2751
    %3337 = vmatmul.mubr.bf16.gmra.mxu0 %v2750
    %v3338 = vpop.f32.mrf.mxu0
    %v3339 = vadd.f32 %v2746, %v3338
    %v3340 = vpop.f32.mrf.mxu0
    %v3341 = vpop.f32.mrf.mxu0
    %v3342 = vadd.f32 %v2746, %v3341
    %v3343 = vpop.f32.mrf.mxu0
    %3344 = vmatprep.mubr.bf16.mxu0 %v2753
    %3345 = vmatmul.mubr.bf16.gmra.mxu0 %v2752
    %v3346 = vpop.f32.mrf.mxu0
    %v3347 = vadd.f32 %v2746, %v3346
    %v3348 = vpop.f32.mrf.mxu0
    %v3349 = vpop.f32.mrf.mxu0
    %v3350 = vadd.f32 %v2746, %v3349
    %v3351 = vpop.f32.mrf.mxu0
    %3352 = vmatprep.mubr.bf16.mxu0 %v2755
    %3353 = vmatmul.mubr.bf16.gmra.mxu0 %v2754
    %v3354 = vpop.f32.mrf.mxu0
    %v3355 = vadd.f32 %v2746, %v3354
    %v3356 = vpop.f32.mrf.mxu0
    %v3357 = vpop.f32.mrf.mxu0
    %v3358 = vadd.f32 %v2746, %v3357
    %v3359 = vpop.f32.mrf.mxu0
    %3360 = vmatprep.mubr.bf16.mxu0 %v2757
    %3361 = vmatmul.mubr.bf16.gmra.mxu0 %v2756
    %v3362 = vpop.f32.mrf.mxu0
    %v3363 = vadd.f32 %v2746, %v3362
    %v3364 = vpop.f32.mrf.mxu0
    %v3365 = vpop.f32.mrf.mxu0
    %v3366 = vadd.f32 %v2746, %v3365
    %v3367 = vpop.f32.mrf.mxu0
    %3368 = vmatprep.mubr.bf16.mxu0 %v2759
    %3369 = vmatmul.mubr.bf16.gmra.mxu0 %v2758
    %v3370 = vpop.f32.mrf.mxu0
    %v3371 = vadd.f32 %v2746, %v3370
    %v3372 = vpop.f32.mrf.mxu0
    %v3373 = vpop.f32.mrf.mxu0
    %v3374 = vadd.f32 %v2746, %v3373
    %v3375 = vpop.f32.mrf.mxu0
    %3376 = vmatprep.mubr.bf16.mxu0 %v2761
    %3377 = vmatmul.mubr.bf16.gmra.mxu0 %v2760
    %v3378 = vpop.f32.mrf.mxu0
    %v3379 = vadd.f32 %v2746, %v3378
    %v3380 = vpop.f32.mrf.mxu0
    %v3381 = vpop.f32.mrf.mxu0
    %v3382 = vadd.f32 %v2746, %v3381
    %v3383 = vpop.f32.mrf.mxu0
    %3384 = vmatprep.mubr.bf16.mxu0 %v2763
    %3385 = vmatmul.mubr.bf16.gmra.mxu0 %v2762
    %v3386 = vpop.f32.mrf.mxu0
    %v3387 = vpop.f32.mrf.mxu0
    %v3388 = vpop.f32.mrf.mxu0
    %v3389 = vadd.f32 %v2746, %v3388
    %v3390 = vpop.f32.mrf.mxu0
    %3391 = vmatprep.mubr.bf16.mxu0 %v2765
    %3392 = vmatmul.mubr.bf16.gmra.mxu0 %v2764
    %v3393 = vpop.f32.mrf.mxu0
    %v3394 = vadd.f32 %v2746, %v3393
    %v3395 = vpop.f32.mrf.mxu0
    %v3396 = vpop.f32.mrf.mxu0
    %v3397 = vadd.f32 %v2746, %v3396
    %v3398 = vpop.f32.mrf.mxu0
    %3399 = vmatprep.mubr.bf16.mxu0 %v2767
    %3400 = vmatmul.mubr.bf16.gmra.mxu0 %v2766
    %v3401 = vpop.f32.mrf.mxu0
    %v3402 = vadd.f32 %v2746, %v3401
    %v3403 = vpop.f32.mrf.mxu0
    %v3404 = vpop.f32.mrf.mxu0
    %v3405 = vadd.f32 %v2746, %v3404
    %v3406 = vpop.f32.mrf.mxu0
    %3407 = vmatprep.mubr.bf16.mxu0 %v2769
    %3408 = vmatmul.mubr.bf16.gmra.mxu0 %v2768
    %v3409 = vpop.f32.mrf.mxu0
    %v3410 = vadd.f32 %v2746, %v3409
    %v3411 = vpop.f32.mrf.mxu0
    %v3412 = vpop.f32.mrf.mxu0
    %v3413 = vadd.f32 %v2746, %v3412
    %v3414 = vpop.f32.mrf.mxu0
    %3415 = vmatprep.mubr.bf16.mxu0 %v2771
    %3416 = vmatmul.mubr.bf16.gmra.mxu0 %v2770
    %v3417 = vpop.f32.mrf.mxu0
    %v3418 = vadd.f32 %v2746, %v3417
    %v3419 = vpop.f32.mrf.mxu0
    %v3420 = vpop.f32.mrf.mxu0
    %v3421 = vadd.f32 %v2746, %v3420
    %v3422 = vpop.f32.mrf.mxu0
    %3423 = vmatprep.mubr.bf16.mxu0 %v2773
    %3424 = vmatmul.mubr.bf16.gmra.mxu0 %v2772
    %v3425 = vpop.f32.mrf.mxu0
    %v3426 = vadd.f32 %v2746, %v3425
    %v3427 = vpop.f32.mrf.mxu0
    %v3428 = vpop.f32.mrf.mxu0
    %v3429 = vadd.f32 %v2746, %v3428
    %v3430 = vpop.f32.mrf.mxu0
    %3431 = vmatprep.mubr.bf16.mxu0 %v2775
    %3432 = vmatmul.mubr.bf16.gmra.mxu0 %v2774
    %v3433 = vpop.f32.mrf.mxu0
    %v3434 = vadd.f32 %v2746, %v3433
    %v3435 = vpop.f32.mrf.mxu0
    %v3436 = vpop.f32.mrf.mxu0
    %v3437 = vadd.f32 %v2746, %v3436
    %v3438 = vpop.f32.mrf.mxu0
    %3439 = vmatprep.mubr.bf16.mxu0 %v2777
    %3440 = vmatmul.mubr.bf16.gmra.mxu0 %v2776
    %v3441 = vpop.f32.mrf.mxu0
    %v3442 = vadd.f32 %v2746, %v3441
    %v3443 = vpop.f32.mrf.mxu0
    %v3444 = vpop.f32.mrf.mxu0
    %v3445 = vpop.f32.mrf.mxu0
    %3446 = vmatprep.mubr.bf16.mxu0 %v2779
    %3447 = vmatmul.mubr.bf16.gmra.mxu0 %v2778
    %v3448 = vpop.f32.mrf.mxu0
    %v3449 = vadd.f32 %v2746, %v3448
    %v3450 = vpop.f32.mrf.mxu0
    %v3451 = vpop.f32.mrf.mxu0
    %v3452 = vadd.f32 %v2746, %v3451
    %v3453 = vpop.f32.mrf.mxu0
    %3454 = vmatprep.mubr.bf16.mxu0 %v2781
    %3455 = vmatmul.mubr.bf16.gmra.mxu0 %v2780
    %v3456 = vpop.f32.mrf.mxu0
    %v3457 = vadd.f32 %v2746, %v3456
    %v3458 = vpop.f32.mrf.mxu0
    %v3459 = vpop.f32.mrf.mxu0
    %v3460 = vadd.f32 %v2746, %v3459
    %v3461 = vpop.f32.mrf.mxu0
    %3462 = vmatprep.mubr.bf16.mxu0 %v2783
    %3463 = vmatmul.mubr.bf16.gmra.mxu0 %v2782
    %v3464 = vpop.f32.mrf.mxu0
    %v3465 = vadd.f32 %v2746, %v3464
    %v3466 = vpop.f32.mrf.mxu0
    %v3467 = vpop.f32.mrf.mxu0
    %v3468 = vadd.f32 %v2746, %v3467
    %v3469 = vpop.f32.mrf.mxu0
    %3470 = vmatprep.mubr.bf16.mxu0 %v2785
    %3471 = vmatmul.mubr.bf16.gmra.mxu0 %v2784
    %v3472 = vpop.f32.mrf.mxu0
    %v3473 = vadd.f32 %v2746, %v3472
    %v3474 = vpop.f32.mrf.mxu0
    %v3475 = vpop.f32.mrf.mxu0
    %v3476 = vadd.f32 %v2746, %v3475
    %v3477 = vpop.f32.mrf.mxu0
    %3478 = vmatprep.mubr.bf16.mxu0 %v2787
    %3479 = vmatmul.mubr.bf16.gmra.mxu0 %v2786
    %v3480 = vpop.f32.mrf.mxu0
    %v3481 = vadd.f32 %v2746, %v3480
    %v3482 = vpop.f32.mrf.mxu0
    %v3483 = vpop.f32.mrf.mxu0
    %v3484 = vadd.f32 %v2746, %v3483
    %v3485 = vpop.f32.mrf.mxu0
    %3486 = vmatprep.mubr.bf16.mxu0 %v2789
    %3487 = vmatmul.mubr.bf16.gmra.mxu0 %v2788
    %v3488 = vpop.f32.mrf.mxu0
    %v3489 = vadd.f32 %v2746, %v3488
    %v3490 = vpop.f32.mrf.mxu0
    %v3491 = vpop.f32.mrf.mxu0
    %v3492 = vadd.f32 %v2746, %v3491
    %v3493 = vpop.f32.mrf.mxu0
    %3494 = vmatprep.mubr.bf16.mxu0 %v2791
    %3495 = vmatmul.mubr.bf16.gmra.mxu0 %v2790
    %v3496 = vpop.f32.mrf.mxu0
    %v3497 = vadd.f32 %v2746, %v3496
    %v3498 = vpop.f32.mrf.mxu0
    %v3499 = vpop.f32.mrf.mxu0
    %v3500 = vadd.f32 %v2746, %v3499
    %v3501 = vpop.f32.mrf.mxu0
    %3502 = vmatprep.mubr.bf16.mxu0 %v2793
    %3503 = vmatmul.mubr.bf16.gmra.mxu0 %v2792
    %v3504 = vpop.f32.mrf.mxu0
    %v3505 = vpop.f32.mrf.mxu0
    %v3506 = vpop.f32.mrf.mxu0
    %v3507 = vadd.f32 %v2746, %v3506
    %v3508 = vpop.f32.mrf.mxu0
    %3509 = vmatprep.mubr.bf16.mxu0 %v2795
    %3510 = vmatmul.mubr.bf16.gmra.mxu0 %v2794
    %v3511 = vpop.f32.mrf.mxu0
    %v3512 = vadd.f32 %v2746, %v3511
    %v3513 = vpop.f32.mrf.mxu0
    %v3514 = vpop.f32.mrf.mxu0
    %v3515 = vadd.f32 %v2746, %v3514
    %v3516 = vpop.f32.mrf.mxu0
    %3517 = vmatprep.mubr.bf16.mxu0 %v2797
    %3518 = vmatmul.mubr.bf16.gmra.mxu0 %v2796
    %v3519 = vpop.f32.mrf.mxu0
    %v3520 = vadd.f32 %v2746, %v3519
    %v3521 = vpop.f32.mrf.mxu0
    %v3522 = vpop.f32.mrf.mxu0
    %v3523 = vadd.f32 %v2746, %v3522
    %v3524 = vpop.f32.mrf.mxu0
    %3525 = vmatprep.mubr.bf16.mxu0 %v2799
    %3526 = vmatmul.mubr.bf16.gmra.mxu0 %v2798
    %v3527 = vpop.f32.mrf.mxu0
    %v3528 = vadd.f32 %v2746, %v3527
    %v3529 = vpop.f32.mrf.mxu0
    %v3530 = vpop.f32.mrf.mxu0
    %v3531 = vadd.f32 %v2746, %v3530
    %v3532 = vpop.f32.mrf.mxu0
    %3533 = vmatprep.mubr.bf16.mxu0 %v2801
    %3534 = vmatmul.mubr.bf16.gmra.mxu0 %v2800
    %v3535 = vpop.f32.mrf.mxu0
    %v3536 = vadd.f32 %v2746, %v3535
    %v3537 = vpop.f32.mrf.mxu0
    %v3538 = vpop.f32.mrf.mxu0
    %v3539 = vadd.f32 %v2746, %v3538
    %v3540 = vpop.f32.mrf.mxu0
    %3541 = vmatprep.mubr.bf16.mxu0 %v2803
    %3542 = vmatmul.mubr.bf16.gmra.mxu0 %v2802
    %v3543 = vpop.f32.mrf.mxu0
    %v3544 = vadd.f32 %v2746, %v3543
    %v3545 = vpop.f32.mrf.mxu0
    %v3546 = vpop.f32.mrf.mxu0
    %v3547 = vadd.f32 %v2746, %v3546
    %v3548 = vpop.f32.mrf.mxu0
    %3549 = vmatprep.mubr.bf16.mxu0 %v2805
    %3550 = vmatmul.mubr.bf16.gmra.mxu0 %v2804
    %v3551 = vpop.f32.mrf.mxu0
    %v3552 = vadd.f32 %v2746, %v3551
    %v3553 = vpop.f32.mrf.mxu0
    %v3554 = vpop.f32.mrf.mxu0
    %v3555 = vadd.f32 %v2746, %v3554
    %v3556 = vpop.f32.mrf.mxu0
    %3557 = vmatprep.mubr.bf16.mxu0 %v2807
    %3558 = vmatmul.mubr.bf16.gmra.mxu0 %v2806
    %v3559 = vpop.f32.mrf.mxu0
    %v3560 = vadd.f32 %v2746, %v3559
    %v3561 = vpop.f32.mrf.mxu0
    %v3562 = vpop.f32.mrf.mxu0
    %v3563 = vpop.f32.mrf.mxu0
    %3564 = vmatprep.mubr.bf16.mxu0 %v2809
    %3565 = vmatmul.mubr.bf16.gmra.mxu0 %v2808
    %v3566 = vpop.f32.mrf.mxu0
    %v3567 = vadd.f32 %v2746, %v3566
    %v3568 = vpop.f32.mrf.mxu0
    %v3569 = vpop.f32.mrf.mxu0
    %v3570 = vadd.f32 %v2746, %v3569
    %v3571 = vpop.f32.mrf.mxu0
    %3572 = vmatprep.mubr.bf16.mxu0 %v2811
    %3573 = vmatmul.mubr.bf16.gmra.mxu0 %v2810
    %v3574 = vpop.f32.mrf.mxu0
    %v3575 = vadd.f32 %v2746, %v3574
    %v3576 = vpop.f32.mrf.mxu0
    %v3577 = vpop.f32.mrf.mxu0
    %v3578 = vadd.f32 %v2746, %v3577
    %v3579 = vpop.f32.mrf.mxu0
    %3580 = vmatprep.mubr.bf16.mxu0 %v2813
    %3581 = vmatmul.mubr.bf16.gmra.mxu0 %v2812
    %v3582 = vpop.f32.mrf.mxu0
    %v3583 = vadd.f32 %v2746, %v3582
    %v3584 = vpop.f32.mrf.mxu0
    %v3585 = vpop.f32.mrf.mxu0
    %v3586 = vadd.f32 %v2746, %v3585
    %v3587 = vpop.f32.mrf.mxu0
    %3588 = vmatprep.mubr.bf16.mxu0 %v2815
    %3589 = vmatmul.mubr.bf16.gmra.mxu0 %v2814
    %v3590 = vpop.f32.mrf.mxu0
    %v3591 = vadd.f32 %v2746, %v3590
    %v3592 = vpop.f32.mrf.mxu0
    %v3593 = vpop.f32.mrf.mxu0
    %v3594 = vadd.f32 %v2746, %v3593
    %v3595 = vpop.f32.mrf.mxu0
    %3596 = vmatprep.mubr.bf16.mxu0 %v2817
    %3597 = vmatmul.mubr.bf16.gmra.mxu0 %v2816
    %v3598 = vpop.f32.mrf.mxu0
    %v3599 = vadd.f32 %v2746, %v3598
    %v3600 = vpop.f32.mrf.mxu0
    %v3601 = vpop.f32.mrf.mxu0
    %v3602 = vadd.f32 %v2746, %v3601
    %v3603 = vpop.f32.mrf.mxu0
    %3604 = vmatprep.mubr.bf16.mxu0 %v2819
    %3605 = vmatmul.mubr.bf16.gmra.mxu0 %v2818
    %v3606 = vpop.f32.mrf.mxu0
    %v3607 = vadd.f32 %v2746, %v3606
    %v3608 = vpop.f32.mrf.mxu0
    %v3609 = vpop.f32.mrf.mxu0
    %v3610 = vadd.f32 %v2746, %v3609
    %v3611 = vpop.f32.mrf.mxu0
    %3612 = vmatprep.mubr.bf16.mxu0 %v2821
    %3613 = vmatmul.mubr.bf16.gmra.mxu0 %v2820
    %v3614 = vpop.f32.mrf.mxu0
    %v3615 = vadd.f32 %v2746, %v3614
    %v3616 = vpop.f32.mrf.mxu0
    %v3617 = vpop.f32.mrf.mxu0
    %v3618 = vadd.f32 %v2746, %v3617
    %v3619 = vpop.f32.mrf.mxu0
    %3620 = vmatprep.mubr.bf16.mxu0 %v2823
    %3621 = vmatmul.mubr.bf16.gmra.mxu0 %v2822
    %v3622 = vpop.f32.mrf.mxu0
    %v3623 = vpop.f32.mrf.mxu0
    %v3624 = vpop.f32.mrf.mxu0
    %v3625 = vadd.f32 %v2746, %v3624
    %v3626 = vpop.f32.mrf.mxu0
    %3627 = vmatprep.mubr.bf16.mxu0 %v2825
    %3628 = vmatmul.mubr.bf16.gmra.mxu0 %v2824
    %v3629 = vpop.f32.mrf.mxu0
    %v3630 = vadd.f32 %v2746, %v3629
    %v3631 = vpop.f32.mrf.mxu0
    %v3632 = vpop.f32.mrf.mxu0
    %v3633 = vadd.f32 %v2746, %v3632
    %v3634 = vpop.f32.mrf.mxu0
    %3635 = vmatprep.mubr.bf16.mxu0 %v2827
    %3636 = vmatmul.mubr.bf16.gmra.mxu0 %v2826
    %v3637 = vpop.f32.mrf.mxu0
    %v3638 = vadd.f32 %v2746, %v3637
    %v3639 = vpop.f32.mrf.mxu0
    %v3640 = vpop.f32.mrf.mxu0
    %v3641 = vadd.f32 %v2746, %v3640
    %v3642 = vpop.f32.mrf.mxu0
    %3643 = vmatprep.mubr.bf16.mxu0 %v2829
    %3644 = vmatmul.mubr.bf16.gmra.mxu0 %v2828
    %v3645 = vpop.f32.mrf.mxu0
    %v3646 = vadd.f32 %v2746, %v3645
    %v3647 = vpop.f32.mrf.mxu0
    %v3648 = vpop.f32.mrf.mxu0
    %v3649 = vadd.f32 %v2746, %v3648
    %v3650 = vpop.f32.mrf.mxu0
    %3651 = vmatprep.mubr.bf16.mxu0 %v2831
    %3652 = vmatmul.mubr.bf16.gmra.mxu0 %v2830
    %v3653 = vpop.f32.mrf.mxu0
    %v3654 = vadd.f32 %v2746, %v3653
    %v3655 = vpop.f32.mrf.mxu0
    %v3656 = vpop.f32.mrf.mxu0
    %v3657 = vadd.f32 %v2746, %v3656
    %v3658 = vpop.f32.mrf.mxu0
    %3659 = vmatprep.mubr.bf16.mxu0 %v2833
    %3660 = vmatmul.mubr.bf16.gmra.mxu0 %v2832
    %v3661 = vpop.f32.mrf.mxu0
    %v3662 = vadd.f32 %v2746, %v3661
    %v3663 = vpop.f32.mrf.mxu0
    %v3664 = vpop.f32.mrf.mxu0
    %v3665 = vadd.f32 %v2746, %v3664
    %v3666 = vpop.f32.mrf.mxu0
    %3667 = vmatprep.mubr.bf16.mxu0 %v2835
    %3668 = vmatmul.mubr.bf16.gmra.mxu0 %v2834
    %v3669 = vpop.f32.mrf.mxu0
    %v3670 = vadd.f32 %v2746, %v3669
    %v3671 = vpop.f32.mrf.mxu0
    %v3672 = vpop.f32.mrf.mxu0
    %v3673 = vadd.f32 %v2746, %v3672
    %v3674 = vpop.f32.mrf.mxu0
    %3675 = vmatprep.mubr.bf16.mxu0 %v2837
    %3676 = vmatmul.mubr.bf16.gmra.mxu0 %v2836
    %v3677 = vpop.f32.mrf.mxu0
    %v3678 = vadd.f32 %v2746, %v3677
    %v3679 = vpop.f32.mrf.mxu0
    %v3680 = vpop.f32.mrf.mxu0
    %v3681 = vpop.f32.mrf.mxu0
    %3682 = vmatprep.mubr.bf16.mxu0 %v2839
    %3683 = vmatmul.mubr.bf16.gmra.mxu0 %v2838
    %v3684 = vpop.f32.mrf.mxu0
    %v3685 = vadd.f32 %v2746, %v3684
    %v3686 = vpop.f32.mrf.mxu0
    %v3687 = vpop.f32.mrf.mxu0
    %v3688 = vadd.f32 %v2746, %v3687
    %v3689 = vpop.f32.mrf.mxu0
    %3690 = vmatprep.mubr.bf16.mxu0 %v2841
    %3691 = vmatmul.mubr.bf16.gmra.mxu0 %v2840
    %v3692 = vpop.f32.mrf.mxu0
    %v3693 = vadd.f32 %v2746, %v3692
    %v3694 = vpop.f32.mrf.mxu0
    %v3695 = vpop.f32.mrf.mxu0
    %v3696 = vadd.f32 %v2746, %v3695
    %v3697 = vpop.f32.mrf.mxu0
    %3698 = vmatprep.mubr.bf16.mxu0 %v2843
    %3699 = vmatmul.mubr.bf16.gmra.mxu0 %v2842
    %v3700 = vpop.f32.mrf.mxu0
    %v3701 = vadd.f32 %v2746, %v3700
    %v3702 = vpop.f32.mrf.mxu0
    %v3703 = vpop.f32.mrf.mxu0
    %v3704 = vadd.f32 %v2746, %v3703
    %v3705 = vpop.f32.mrf.mxu0
    %3706 = vmatprep.mubr.bf16.mxu0 %v2845
    %3707 = vmatmul.mubr.bf16.gmra.mxu0 %v2844
    %v3708 = vpop.f32.mrf.mxu0
    %v3709 = vadd.f32 %v2746, %v3708
    %v3710 = vpop.f32.mrf.mxu0
    %v3711 = vpop.f32.mrf.mxu0
    %v3712 = vadd.f32 %v2746, %v3711
    %v3713 = vpop.f32.mrf.mxu0
    %3714 = vmatprep.mubr.bf16.mxu0 %v2847
    %3715 = vmatmul.mubr.bf16.gmra.mxu0 %v2846
    %v3716 = vpop.f32.mrf.mxu0
    %v3717 = vadd.f32 %v2746, %v3716
    %v3718 = vpop.f32.mrf.mxu0
    %v3719 = vpop.f32.mrf.mxu0
    %v3720 = vadd.f32 %v2746, %v3719
    %v3721 = vpop.f32.mrf.mxu0
    %3722 = vmatprep.mubr.bf16.mxu0 %v2849
    %3723 = vmatmul.mubr.bf16.gmra.mxu0 %v2848
    %v3724 = vpop.f32.mrf.mxu0
    %v3725 = vadd.f32 %v2746, %v3724
    %v3726 = vpop.f32.mrf.mxu0
    %v3727 = vpop.f32.mrf.mxu0
    %v3728 = vadd.f32 %v2746, %v3727
    %v3729 = vpop.f32.mrf.mxu0
    %3730 = vmatprep.mubr.bf16.mxu0 %v2851
    %3731 = vmatmul.mubr.bf16.gmra.mxu0 %v2850
    %v3732 = vpop.f32.mrf.mxu0
    %v3733 = vadd.f32 %v2746, %v3732
    %v3734 = vpop.f32.mrf.mxu0
    %v3735 = vpop.f32.mrf.mxu0
    %v3736 = vadd.f32 %v2746, %v3735
    %v3737 = vpop.f32.mrf.mxu0
    %3738 = vmatprep.mubr.bf16.mxu0 %v2853
    %3739 = vmatmul.mubr.bf16.gmra.mxu0 %v2852
    %v3740 = vpop.f32.mrf.mxu0
    %v3741 = vpop.f32.mrf.mxu0
    %v3742 = vpop.f32.mrf.mxu0
    %v3743 = vadd.f32 %v2746, %v3742
    %v3744 = vpop.f32.mrf.mxu0
    %3745 = vmatprep.mubr.bf16.mxu0 %v2855
    %3746 = vmatmul.mubr.bf16.gmra.mxu0 %v2854
    %v3747 = vpop.f32.mrf.mxu0
    %v3748 = vadd.f32 %v2746, %v3747
    %v3749 = vpop.f32.mrf.mxu0
    %v3750 = vpop.f32.mrf.mxu0
    %v3751 = vadd.f32 %v2746, %v3750
    %v3752 = vpop.f32.mrf.mxu0
    %3753 = vmatprep.mubr.bf16.mxu0 %v2857
    %3754 = vmatmul.mubr.bf16.gmra.mxu0 %v2856
    %v3755 = vpop.f32.mrf.mxu0
    %v3756 = vadd.f32 %v2746, %v3755
    %v3757 = vpop.f32.mrf.mxu0
    %v3758 = vpop.f32.mrf.mxu0
    %v3759 = vadd.f32 %v2746, %v3758
    %v3760 = vpop.f32.mrf.mxu0
    %3761 = vmatprep.mubr.bf16.mxu0 %v2859
    %3762 = vmatmul.mubr.bf16.gmra.mxu0 %v2858
    %v3763 = vpop.f32.mrf.mxu0
    %v3764 = vadd.f32 %v2746, %v3763
    %v3765 = vpop.f32.mrf.mxu0
    %v3766 = vpop.f32.mrf.mxu0
    %v3767 = vadd.f32 %v2746, %v3766
    %v3768 = vpop.f32.mrf.mxu0
    %3769 = vmatprep.mubr.bf16.mxu0 %v2861
    %3770 = vmatmul.mubr.bf16.gmra.mxu0 %v2860
    %v3771 = vpop.f32.mrf.mxu0
    %v3772 = vadd.f32 %v2746, %v3771
    %v3773 = vpop.f32.mrf.mxu0
    %v3774 = vpop.f32.mrf.mxu0
    %v3775 = vadd.f32 %v2746, %v3774
    %v3776 = vpop.f32.mrf.mxu0
    %3777 = vmatprep.mubr.bf16.mxu0 %v2863
    %3778 = vmatmul.mubr.bf16.gmra.mxu0 %v2862
    %v3779 = vpop.f32.mrf.mxu0
    %v3780 = vadd.f32 %v2746, %v3779
    %v3781 = vpop.f32.mrf.mxu0
    %v3782 = vpop.f32.mrf.mxu0
    %v3783 = vadd.f32 %v2746, %v3782
    %v3784 = vpop.f32.mrf.mxu0
    %3785 = vmatprep.mubr.bf16.mxu0 %v2865
    %3786 = vmatmul.mubr.bf16.gmra.mxu0 %v2864
    %v3787 = vpop.f32.mrf.mxu0
    %v3788 = vadd.f32 %v2746, %v3787
    %v3789 = vpop.f32.mrf.mxu0
    %v3790 = vpop.f32.mrf.mxu0
    %v3791 = vadd.f32 %v2746, %v3790
    %v3792 = vpop.f32.mrf.mxu0
    %3793 = vmatprep.mubr.bf16.mxu0 %v2867
    %3794 = vmatmul.mubr.bf16.gmra.mxu0 %v2866
    %v3795 = vpop.f32.mrf.mxu0
    %v3796 = vadd.f32 %v2746, %v3795
    %v3797 = vpop.f32.mrf.mxu0
    %v3798 = vpop.f32.mrf.mxu0
    %v3799 = vpop.f32.mrf.mxu0
    %3800 = vmatprep.mubr.bf16.mxu0 %v2869
    %3801 = vmatmul.mubr.bf16.gmra.mxu0 %v2868
    %v3802 = vpop.f32.mrf.mxu0
    %v3803 = vadd.f32 %v2746, %v3802
    %v3804 = vpop.f32.mrf.mxu0
    %v3805 = vpop.f32.mrf.mxu0
    %v3806 = vadd.f32 %v2746, %v3805
    %v3807 = vpop.f32.mrf.mxu0
    %3808 = vmatprep.mubr.bf16.mxu0 %v2871
    %3809 = vmatmul.mubr.bf16.gmra.mxu0 %v2870
    %v3810 = vpop.f32.mrf.mxu0
    %v3811 = vadd.f32 %v2746, %v3810
    %v3812 = vpop.f32.mrf.mxu0
    %v3813 = vpop.f32.mrf.mxu0
    %v3814 = vadd.f32 %v2746, %v3813
    %v3815 = vpop.f32.mrf.mxu0
    %3816 = vmatprep.mubr.bf16.mxu0 %v2873
    %3817 = vmatmul.mubr.bf16.gmra.mxu0 %v2872
    %v3818 = vpop.f32.mrf.mxu0
    %v3819 = vadd.f32 %v2746, %v3818
    %v3820 = vpop.f32.mrf.mxu0
    %v3821 = vpop.f32.mrf.mxu0
    %v3822 = vadd.f32 %v2746, %v3821
    %v3823 = vpop.f32.mrf.mxu0
    %3824 = vmatprep.mubr.bf16.mxu0 %v2875
    %3825 = vmatmul.mubr.bf16.gmra.mxu0 %v2874
    %v3826 = vpop.f32.mrf.mxu0
    %v3827 = vadd.f32 %v2746, %v3826
    %v3828 = vpop.f32.mrf.mxu0
    %v3829 = vpop.f32.mrf.mxu0
    %v3830 = vadd.f32 %v2746, %v3829
    %v3831 = vpop.f32.mrf.mxu0
    %3832 = vmatprep.mubr.bf16.mxu0 %v2877
    %3833 = vmatmul.mubr.bf16.gmra.mxu0 %v2876
    %v3834 = vpop.f32.mrf.mxu0
    %v3835 = vadd.f32 %v2746, %v3834
    %v3836 = vpop.f32.mrf.mxu0
    %v3837 = vpop.f32.mrf.mxu0
    %v3838 = vadd.f32 %v2746, %v3837
    %v3839 = vpop.f32.mrf.mxu0
    %3840 = vmatprep.mubr.bf16.mxu0 %v2879
    %3841 = vmatmul.mubr.bf16.gmra.mxu0 %v2878
    %v3842 = vpop.f32.mrf.mxu0
    %v3843 = vadd.f32 %v2746, %v3842
    %v3844 = vpop.f32.mrf.mxu0
    %v3845 = vpop.f32.mrf.mxu0
    %v3846 = vadd.f32 %v2746, %v3845
    %v3847 = vpop.f32.mrf.mxu0
    %3848 = vmatprep.mubr.bf16.mxu0 %v2881
    %3849 = vmatmul.mubr.bf16.gmra.mxu0 %v2880
    %v3850 = vpop.f32.mrf.mxu0
    %v3851 = vadd.f32 %v2746, %v3850
    %v3852 = vpop.f32.mrf.mxu0
    %v3853 = vpop.f32.mrf.mxu0
    %v3854 = vadd.f32 %v2746, %v3853
    %v3855 = vpop.f32.mrf.mxu0
    %3856 = vmatprep.mubr.bf16.mxu0 %v2883
    %3857 = vmatmul.mubr.bf16.gmra.mxu0 %v2882
    %v3858 = vpop.f32.mrf.mxu0
    %v3859 = vpop.f32.mrf.mxu0
    %v3860 = vpop.f32.mrf.mxu0
    %v3861 = vadd.f32 %v2746, %v3860
    %v3862 = vpop.f32.mrf.mxu0
    %3863 = vmatprep.mubr.bf16.mxu0 %v2885
    %3864 = vmatmul.mubr.bf16.gmra.mxu0 %v2884
    %v3865 = vpop.f32.mrf.mxu0
    %v3866 = vadd.f32 %v2746, %v3865
    %v3867 = vpop.f32.mrf.mxu0
    %v3868 = vpop.f32.mrf.mxu0
    %v3869 = vadd.f32 %v2746, %v3868
    %v3870 = vpop.f32.mrf.mxu0
    %3871 = vmatprep.mubr.bf16.mxu0 %v2887
    %3872 = vmatmul.mubr.bf16.gmra.mxu0 %v2886
    %v3873 = vpop.f32.mrf.mxu0
    %v3874 = vadd.f32 %v2746, %v3873
    %v3875 = vpop.f32.mrf.mxu0
    %v3876 = vpop.f32.mrf.mxu0
    %v3877 = vadd.f32 %v2746, %v3876
    %v3878 = vpop.f32.mrf.mxu0
    %3879 = vmatprep.mubr.bf16.mxu0 %v2889
    %3880 = vmatmul.mubr.bf16.gmra.mxu0 %v2888
    %v3881 = vpop.f32.mrf.mxu0
    %v3882 = vadd.f32 %v2746, %v3881
    %v3883 = vpop.f32.mrf.mxu0
    %v3884 = vpop.f32.mrf.mxu0
    %v3885 = vadd.f32 %v2746, %v3884
    %v3886 = vpop.f32.mrf.mxu0
    %3887 = vmatprep.mubr.bf16.mxu0 %v2891
    %3888 = vmatmul.mubr.bf16.gmra.mxu0 %v2890
    %v3889 = vpop.f32.mrf.mxu0
    %v3890 = vadd.f32 %v2746, %v3889
    %v3891 = vpop.f32.mrf.mxu0
    %v3892 = vpop.f32.mrf.mxu0
    %v3893 = vadd.f32 %v2746, %v3892
    %v3894 = vpop.f32.mrf.mxu0
    %3895 = vmatprep.mubr.bf16.mxu0 %v2893
    %3896 = vmatmul.mubr.bf16.gmra.mxu0 %v2892
    %v3897 = vpop.f32.mrf.mxu0
    %v3898 = vadd.f32 %v2746, %v3897
    %v3899 = vpop.f32.mrf.mxu0
    %v3900 = vpop.f32.mrf.mxu0
    %v3901 = vadd.f32 %v2746, %v3900
    %v3902 = vpop.f32.mrf.mxu0
    %3903 = vmatprep.mubr.bf16.mxu0 %v2895
    %3904 = vmatmul.mubr.bf16.gmra.mxu0 %v2894
    %v3905 = vpop.f32.mrf.mxu0
    %v3906 = vadd.f32 %v2746, %v3905
    %v3907 = vpop.f32.mrf.mxu0
    %v3908 = vpop.f32.mrf.mxu0
    %v3909 = vadd.f32 %v2746, %v3908
    %v3910 = vpop.f32.mrf.mxu0
    %3911 = vmatprep.mubr.bf16.mxu0 %v2897
    %3912 = vmatmul.mubr.bf16.gmra.mxu0 %v2896
    %v3913 = vpop.f32.mrf.mxu0
    %v3914 = vadd.f32 %v2746, %v3913
    %v3915 = vpop.f32.mrf.mxu0
    %v3916 = vpop.f32.mrf.mxu0
    %v3917 = vpop.f32.mrf.mxu0
    %3918 = vmatprep.mubr.bf16.mxu0 %v2899
    %3919 = vmatmul.mubr.bf16.gmra.mxu0 %v2898
    %v3920 = vpop.f32.mrf.mxu0
    %v3921 = vadd.f32 %v2746, %v3920
    %v3922 = vpop.f32.mrf.mxu0
    %v3923 = vpop.f32.mrf.mxu0
    %v3924 = vadd.f32 %v2746, %v3923
    %v3925 = vpop.f32.mrf.mxu0
    %3926 = vmatprep.mubr.bf16.mxu0 %v2901
    %3927 = vmatmul.mubr.bf16.gmra.mxu0 %v2900
    %v3928 = vpop.f32.mrf.mxu0
    %v3929 = vadd.f32 %v2746, %v3928
    %v3930 = vpop.f32.mrf.mxu0
    %v3931 = vpop.f32.mrf.mxu0
    %v3932 = vadd.f32 %v2746, %v3931
    %v3933 = vpop.f32.mrf.mxu0
    %3934 = vmatprep.mubr.bf16.mxu0 %v2903
    %3935 = vmatmul.mubr.bf16.gmra.mxu0 %v2902
    %v3936 = vpop.f32.mrf.mxu0
    %v3937 = vadd.f32 %v2746, %v3936
    %v3938 = vpop.f32.mrf.mxu0
    %v3939 = vpop.f32.mrf.mxu0
    %v3940 = vadd.f32 %v2746, %v3939
    %v3941 = vpop.f32.mrf.mxu0
    %3942 = vmatprep.mubr.bf16.mxu0 %v2905
    %3943 = vmatmul.mubr.bf16.gmra.mxu0 %v2904
    %v3944 = vpop.f32.mrf.mxu0
    %v3945 = vadd.f32 %v2746, %v3944
    %v3946 = vpop.f32.mrf.mxu0
    %v3947 = vpop.f32.mrf.mxu0
    %v3948 = vadd.f32 %v2746, %v3947
    %v3949 = vpop.f32.mrf.mxu0
    %3950 = vmatprep.mubr.bf16.mxu0 %v2907
    %3951 = vmatmul.mubr.bf16.gmra.mxu0 %v2906
    %v3952 = vpop.f32.mrf.mxu0
    %v3953 = vadd.f32 %v2746, %v3952
    %v3954 = vpop.f32.mrf.mxu0
    %v3955 = vpop.f32.mrf.mxu0
    %v3956 = vadd.f32 %v2746, %v3955
    %v3957 = vpop.f32.mrf.mxu0
    %3958 = vmatprep.mubr.bf16.mxu0 %v2909
    %3959 = vmatmul.mubr.bf16.gmra.mxu0 %v2908
    %v3960 = vpop.f32.mrf.mxu0
    %v3961 = vadd.f32 %v2746, %v3960
    %v3962 = vpop.f32.mrf.mxu0
    %v3963 = vpop.f32.mrf.mxu0
    %v3964 = vadd.f32 %v2746, %v3963
    %v3965 = vpop.f32.mrf.mxu0
    %3966 = vmatprep.mubr.bf16.mxu0 %v2911
    %3967 = vmatmul.mubr.bf16.gmra.mxu0 %v2910
    %v3968 = vpop.f32.mrf.mxu0
    %v3969 = vadd.f32 %v2746, %v3968
    %v3970 = vpop.f32.mrf.mxu0
    %v3971 = vpop.f32.mrf.mxu0
    %v3972 = vadd.f32 %v2746, %v3971
    %v3973 = vpop.f32.mrf.mxu0
    %3974 = vmatprep.mubr.bf16.mxu0 %v2913
    %3975 = vmatmul.mubr.bf16.gmra.mxu0 %v2912
    %v3976 = vpop.f32.mrf.mxu0
    %v3977 = vpop.f32.mrf.mxu0
    %v3978 = vpop.f32.mrf.mxu0
    %v3979 = vadd.f32 %v2746, %v3978
    %v3980 = vpop.f32.mrf.mxu0
    %3981 = vmatprep.mubr.bf16.mxu0 %v2915
    %3982 = vmatmul.mubr.bf16.gmra.mxu0 %v2914
    %v3983 = vpop.f32.mrf.mxu0
    %v3984 = vadd.f32 %v2746, %v3983
    %v3985 = vpop.f32.mrf.mxu0
    %v3986 = vpop.f32.mrf.mxu0
    %v3987 = vadd.f32 %v2746, %v3986
    %v3988 = vpop.f32.mrf.mxu0
    %3989 = vmatprep.mubr.bf16.mxu0 %v2917
    %3990 = vmatmul.mubr.bf16.gmra.mxu0 %v2916
    %v3991 = vpop.f32.mrf.mxu0
    %v3992 = vadd.f32 %v2746, %v3991
    %v3993 = vpop.f32.mrf.mxu0
    %v3994 = vpop.f32.mrf.mxu0
    %v3995 = vadd.f32 %v2746, %v3994
    %v3996 = vpop.f32.mrf.mxu0
    %3997 = vmatprep.mubr.bf16.mxu0 %v2919
    %3998 = vmatmul.mubr.bf16.gmra.mxu0 %v2918
    %v3999 = vpop.f32.mrf.mxu0
    %v4000 = vadd.f32 %v2746, %v3999
    %v4001 = vpop.f32.mrf.mxu0
    %v4002 = vpop.f32.mrf.mxu0
    %v4003 = vadd.f32 %v2746, %v4002
    %v4004 = vpop.f32.mrf.mxu0
    %4005 = vmatprep.mubr.bf16.mxu0 %v2921
    %4006 = vmatmul.mubr.bf16.gmra.mxu0 %v2920
    %v4007 = vpop.f32.mrf.mxu0
    %v4008 = vadd.f32 %v2746, %v4007
    %v4009 = vpop.f32.mrf.mxu0
    %v4010 = vpop.f32.mrf.mxu0
    %v4011 = vadd.f32 %v2746, %v4010
    %v4012 = vpop.f32.mrf.mxu0
    %4013 = vmatprep.mubr.bf16.mxu0 %v2923
    %4014 = vmatmul.mubr.bf16.gmra.mxu0 %v2922
    %v4015 = vpop.f32.mrf.mxu0
    %v4016 = vadd.f32 %v2746, %v4015
    %v4017 = vpop.f32.mrf.mxu0
    %v4018 = vpop.f32.mrf.mxu0
    %v4019 = vadd.f32 %v2746, %v4018
    %v4020 = vpop.f32.mrf.mxu0
    %4021 = vmatprep.mubr.bf16.mxu0 %v2925
    %4022 = vmatmul.mubr.bf16.gmra.mxu0 %v2924
    %v4023 = vpop.f32.mrf.mxu0
    %v4024 = vadd.f32 %v2746, %v4023
    %v4025 = vpop.f32.mrf.mxu0
    %v4026 = vpop.f32.mrf.mxu0
    %v4027 = vadd.f32 %v2746, %v4026
    %v4028 = vpop.f32.mrf.mxu0
    %4029 = vmatprep.mubr.bf16.mxu0 %v2927
    %4030 = vmatmul.mubr.bf16.gmra.mxu0 %v2926
    %v4031 = vpop.f32.mrf.mxu0
    %v4032 = vadd.f32 %v2746, %v4031
    %v4033 = vpop.f32.mrf.mxu0
    %v4034 = vpop.f32.mrf.mxu0
    %v4035 = vpop.f32.mrf.mxu0
    %4036 = vmatprep.mubr.bf16.mxu0 %v2929
    %4037 = vmatmul.mubr.bf16.gmra.mxu0 %v2928
    %v4038 = vpop.f32.mrf.mxu0
    %v4039 = vadd.f32 %v2746, %v4038
    %v4040 = vpop.f32.mrf.mxu0
    %v4041 = vpop.f32.mrf.mxu0
    %v4042 = vadd.f32 %v2746, %v4041
    %v4043 = vpop.f32.mrf.mxu0
    %4044 = vmatprep.mubr.bf16.mxu0 %v2931
    %4045 = vmatmul.mubr.bf16.gmra.mxu0 %v2930
    %v4046 = vpop.f32.mrf.mxu0
    %v4047 = vadd.f32 %v2746, %v4046
    %v4048 = vpop.f32.mrf.mxu0
    %v4049 = vpop.f32.mrf.mxu0
    %v4050 = vadd.f32 %v2746, %v4049
    %v4051 = vpop.f32.mrf.mxu0
    %4052 = vmatprep.mubr.bf16.mxu0 %v2933
    %4053 = vmatmul.mubr.bf16.gmra.mxu0 %v2932
    %v4054 = vpop.f32.mrf.mxu0
    %v4055 = vadd.f32 %v2746, %v4054
    %v4056 = vpop.f32.mrf.mxu0
    %v4057 = vpop.f32.mrf.mxu0
    %v4058 = vadd.f32 %v2746, %v4057
    %v4059 = vpop.f32.mrf.mxu0
    %4060 = vmatprep.mubr.bf16.mxu0 %v2935
    %4061 = vmatmul.mubr.bf16.gmra.mxu0 %v2934
    %v4062 = vpop.f32.mrf.mxu0
    %v4063 = vadd.f32 %v2746, %v4062
    %v4064 = vpop.f32.mrf.mxu0
    %v4065 = vpop.f32.mrf.mxu0
    %v4066 = vadd.f32 %v2746, %v4065
    %v4067 = vpop.f32.mrf.mxu0
    %4068 = vmatprep.mubr.bf16.mxu0 %v2937
    %4069 = vmatmul.mubr.bf16.gmra.mxu0 %v2936
    %v4070 = vpop.f32.mrf.mxu0
    %v4071 = vadd.f32 %v2746, %v4070
    %v4072 = vpop.f32.mrf.mxu0
    %v4073 = vpop.f32.mrf.mxu0
    %v4074 = vadd.f32 %v2746, %v4073
    %v4075 = vpop.f32.mrf.mxu0
    %4076 = vmatprep.mubr.bf16.mxu0 %v2939
    %4077 = vmatmul.mubr.bf16.gmra.mxu0 %v2938
    %v4078 = vpop.f32.mrf.mxu0
    %v4079 = vadd.f32 %v2746, %v4078
    %v4080 = vpop.f32.mrf.mxu0
    %v4081 = vpop.f32.mrf.mxu0
    %v4082 = vadd.f32 %v2746, %v4081
    %v4083 = vpop.f32.mrf.mxu0
    %4084 = vmatprep.mubr.bf16.mxu0 %v2941
    %4085 = vmatmul.mubr.bf16.gmra.mxu0 %v2940
    %v4086 = vpop.f32.mrf.mxu0
    %v4087 = vadd.f32 %v2746, %v4086
    %v4088 = vpop.f32.mrf.mxu0
    %v4089 = vpop.f32.mrf.mxu0
    %v4090 = vadd.f32 %v2746, %v4089
    %v4091 = vpop.f32.mrf.mxu0
    %4092 = vmatprep.mubr.bf16.mxu0 %v2943
    %4093 = vmatmul.mubr.bf16.gmra.mxu0 %v2942
    %v4094 = vpop.f32.mrf.mxu0
    %v4095 = vpop.f32.mrf.mxu0
    %v4096 = vpop.f32.mrf.mxu0
    %v4097 = vadd.f32 %v2746, %v4096
    %v4098 = vpop.f32.mrf.mxu0
    %4099 = vmatprep.mubr.bf16.mxu0 %v2945
    %4100 = vmatmul.mubr.bf16.gmra.mxu0 %v2944
    %v4101 = vpop.f32.mrf.mxu0
    %v4102 = vadd.f32 %v2746, %v4101
    %v4103 = vpop.f32.mrf.mxu0
    %v4104 = vpop.f32.mrf.mxu0
    %v4105 = vadd.f32 %v2746, %v4104
    %v4106 = vpop.f32.mrf.mxu0
    %4107 = vmatprep.mubr.bf16.mxu0 %v2947
    %4108 = vmatmul.mubr.bf16.gmra.mxu0 %v2946
    %v4109 = vpop.f32.mrf.mxu0
    %v4110 = vadd.f32 %v2746, %v4109
    %v4111 = vpop.f32.mrf.mxu0
    %v4112 = vpop.f32.mrf.mxu0
    %v4113 = vadd.f32 %v2746, %v4112
    %v4114 = vpop.f32.mrf.mxu0
    %4115 = vmatprep.mubr.bf16.mxu0 %v2949
    %4116 = vmatmul.mubr.bf16.gmra.mxu0 %v2948
    %v4117 = vpop.f32.mrf.mxu0
    %v4118 = vadd.f32 %v2746, %v4117
    %v4119 = vpop.f32.mrf.mxu0
    %v4120 = vpop.f32.mrf.mxu0
    %v4121 = vadd.f32 %v2746, %v4120
    %v4122 = vpop.f32.mrf.mxu0
    %4123 = vmatprep.mubr.bf16.mxu0 %v2951
    %4124 = vmatmul.mubr.bf16.gmra.mxu0 %v2950
    %v4125 = vpop.f32.mrf.mxu0
    %v4126 = vadd.f32 %v2746, %v4125
    %v4127 = vpop.f32.mrf.mxu0
    %v4128 = vpop.f32.mrf.mxu0
    %v4129 = vadd.f32 %v2746, %v4128
    %v4130 = vpop.f32.mrf.mxu0
    %4131 = vmatprep.mubr.bf16.mxu0 %v2953
    %4132 = vmatmul.mubr.bf16.gmra.mxu0 %v2952
    %v4133 = vpop.f32.mrf.mxu0
    %v4134 = vadd.f32 %v2746, %v4133
    %v4135 = vpop.f32.mrf.mxu0
    %v4136 = vpop.f32.mrf.mxu0
    %v4137 = vadd.f32 %v2746, %v4136
    %v4138 = vpop.f32.mrf.mxu0
    %4139 = vmatprep.mubr.bf16.mxu0 %v2955
    %4140 = vmatmul.mubr.bf16.gmra.mxu0 %v2954
    %v4141 = vpop.f32.mrf.mxu0
    %v4142 = vadd.f32 %v2746, %v4141
    %v4143 = vpop.f32.mrf.mxu0
    %v4144 = vpop.f32.mrf.mxu0
    %v4145 = vadd.f32 %v2746, %v4144
    %v4146 = vpop.f32.mrf.mxu0
    %4147 = vmatprep.mubr.bf16.mxu0 %v2957
    %4148 = vmatmul.mubr.bf16.gmra.mxu0 %v2956
    %v4149 = vpop.f32.mrf.mxu0
    %v4150 = vadd.f32 %v2746, %v4149
    %v4151 = vpop.f32.mrf.mxu0
    %v4152 = vpop.f32.mrf.mxu0
    %v4153 = vpop.f32.mrf.mxu0
    %4154 = vmatprep.mubr.bf16.mxu0 %v2959
    %4155 = vmatmul.mubr.bf16.gmra.mxu0 %v2958
    %v4156 = vpop.f32.mrf.mxu0
    %v4157 = vpop.f32.mrf.mxu0
    %v4158 = vpop.f32.mrf.mxu0
    %v4159 = vpop.f32.mrf.mxu0
    %4160 = vmatprep.mubr.bf16.mxu0 %v2961
    %4161 = vmatmul.mubr.bf16.gmra.mxu0 %v2960
    %v4162 = vpop.f32.mrf.mxu0
    %v4163 = vpop.f32.mrf.mxu0
    %v4164 = vpop.f32.mrf.mxu0
    %v4165 = vpop.f32.mrf.mxu0
    %4166 = vmatprep.mubr.bf16.mxu0 %v2963
    %4167 = vmatmul.mubr.bf16.gmra.mxu0 %v2962
    %v4168 = vpop.f32.mrf.mxu0
    %v4169 = vpop.f32.mrf.mxu0
    %v4170 = vpop.f32.mrf.mxu0
    %v4171 = vpop.f32.mrf.mxu0
    %4172 = vmatprep.mubr.bf16.mxu0 %v2965
    %4173 = vmatmul.mubr.bf16.gmra.mxu0 %v2964
    %v4174 = vpop.f32.mrf.mxu0
    %v4175 = vpop.f32.mrf.mxu0
    %v4176 = vpop.f32.mrf.mxu0
    %v4177 = vpop.f32.mrf.mxu0
    %4178 = vmatprep.mubr.bf16.mxu0 %v2967
    %4179 = vmatmul.mubr.bf16.gmra.mxu0 %v2966
    %v4180 = vpop.f32.mrf.mxu0
    %v4181 = vpop.f32.mrf.mxu0
    %v4182 = vpop.f32.mrf.mxu0
    %v4183 = vpop.f32.mrf.mxu0
    %4184 = vmatprep.mubr.bf16.mxu0 %v2969
    %4185 = vmatmul.mubr.bf16.gmra.mxu0 %v2968
    %v4186 = vpop.f32.mrf.mxu0
    %v4187 = vpop.f32.mrf.mxu0
    %v4188 = vpop.f32.mrf.mxu0
    %v4189 = vpop.f32.mrf.mxu0
    %4190 = vmatprep.mubr.bf16.mxu0 %v2971
    %4191 = vmatmul.mubr.bf16.gmra.mxu0 %v2970
    %v4192 = vpop.f32.mrf.mxu0
    %v4193 = vpop.f32.mrf.mxu0
    %v4194 = vpop.f32.mrf.mxu0
    %v4195 = vpop.f32.mrf.mxu0
    %4196 = vmatprep.mubr.bf16.mxu0 %v2973
    %4197 = vmatmul.mubr.bf16.gmra.mxu0 %v2972
    %v4198 = vpop.f32.mrf.mxu0
    %v4199 = vpop.f32.mrf.mxu0
    %v4200 = vpop.f32.mrf.mxu0
    %v4201 = vpop.f32.mrf.mxu0
    %4202 = vdwg.mxu0
    %v4203 = vmax.f32 %v3331, 0.0
    %v4204 = vmax.f32 %v3334, 0.0
    %v4205 = vmax.f32 %v3339, 0.0
    %v4206 = vmax.f32 %v3342, 0.0
    %v4207 = vmax.f32 %v3347, 0.0
    %v4208 = vmax.f32 %v3350, 0.0
    %v4209 = vmax.f32 %v3355, 0.0
    %v4210 = vmax.f32 %v3358, 0.0
    %v4211 = vmax.f32 %v3363, 0.0
    %v4212 = vmax.f32 %v3366, 0.0
    %v4213 = vmax.f32 %v3371, 0.0
    %v4214 = vmax.f32 %v3374, 0.0
    %v4215 = vmax.f32 %v3379, 0.0
    %v4216 = vmax.f32 %v3382, 0.0
    %v4217 = vmax.f32 %v3389, 0.0
    %v4218 = vmax.f32 %v3394, 0.0
    %v4219 = vmax.f32 %v3397, 0.0
    %v4220 = vmax.f32 %v3402, 0.0
    %v4221 = vmax.f32 %v3405, 0.0
    %v4222 = vmax.f32 %v3410, 0.0
    %v4223 = vmax.f32 %v3413, 0.0
    %v4224 = vmax.f32 %v3418, 0.0
    %v4225 = vmax.f32 %v3421, 0.0
    %v4226 = vmax.f32 %v3426, 0.0
    %v4227 = vmax.f32 %v3429, 0.0
    %v4228 = vmax.f32 %v3434, 0.0
    %v4229 = vmax.f32 %v3437, 0.0
    %v4230 = vmax.f32 %v3442, 0.0
    %v4231 = vmax.f32 %v3449, 0.0
    %v4232 = vmax.f32 %v3452, 0.0
    %v4233 = vmax.f32 %v3457, 0.0
    %v4234 = vmax.f32 %v3460, 0.0
    %v4235 = vmax.f32 %v3465, 0.0
    %v4236 = vmax.f32 %v3468, 0.0
    %v4237 = vmax.f32 %v3473, 0.0
    %v4238 = vmax.f32 %v3476, 0.0
    %v4239 = vmax.f32 %v3481, 0.0
    %v4240 = vmax.f32 %v3484, 0.0
    %v4241 = vmax.f32 %v3489, 0.0
    %v4242 = vmax.f32 %v3492, 0.0
    %v4243 = vmax.f32 %v3497, 0.0
    %v4244 = vmax.f32 %v3500, 0.0
    %v4245 = vmax.f32 %v3507, 0.0
    %v4246 = vmax.f32 %v3512, 0.0
    %v4247 = vmax.f32 %v3515, 0.0
    %v4248 = vmax.f32 %v3520, 0.0
    %v4249 = vmax.f32 %v3523, 0.0
    %v4250 = vmax.f32 %v3528, 0.0
    %v4251 = vmax.f32 %v3531, 0.0
    %v4252 = vmax.f32 %v3536, 0.0
    %v4253 = vmax.f32 %v3539, 0.0
    %v4254 = vmax.f32 %v3544, 0.0
    %v4255 = vmax.f32 %v3547, 0.0
    %v4256 = vmax.f32 %v3552, 0.0
    %v4257 = vmax.f32 %v3555, 0.0
    %v4258 = vmax.f32 %v3560, 0.0
    %v4259 = vmax.f32 %v3567, 0.0
    %v4260 = vmax.f32 %v3570, 0.0
    %v4261 = vmax.f32 %v3575, 0.0
    %v4262 = vmax.f32 %v3578, 0.0
    %v4263 = vmax.f32 %v3583, 0.0
    %v4264 = vmax.f32 %v3586, 0.0
    %v4265 = vmax.f32 %v3591, 0.0
    %v4266 = vmax.f32 %v3594, 0.0
    %v4267 = vmax.f32 %v3599, 0.0
    %v4268 = vmax.f32 %v3602, 0.0
    %v4269 = vmax.f32 %v3607, 0.0
    %v4270 = vmax.f32 %v3610, 0.0
    %v4271 = vmax.f32 %v3615, 0.0
    %v4272 = vmax.f32 %v3618, 0.0
    %v4273 = vmax.f32 %v3625, 0.0
    %v4274 = vmax.f32 %v3630, 0.0
    %v4275 = vmax.f32 %v3633, 0.0
    %v4276 = vmax.f32 %v3638, 0.0
    %v4277 = vmax.f32 %v3641, 0.0
    %v4278 = vmax.f32 %v3646, 0.0
    %v4279 = vmax.f32 %v3649, 0.0
    %v4280 = vmax.f32 %v3654, 0.0
    %v4281 = vmax.f32 %v3657, 0.0
    %v4282 = vmax.f32 %v3662, 0.0
    %v4283 = vmax.f32 %v3665, 0.0
    %v4284 = vmax.f32 %v3670, 0.0
    %v4285 = vmax.f32 %v3673, 0.0
    %v4286 = vmax.f32 %v3678, 0.0
    %v4287 = vmax.f32 %v3685, 0.0
    %v4288 = vmax.f32 %v3688, 0.0
    %v4289 = vmax.f32 %v3693, 0.0
    %v4290 = vmax.f32 %v3696, 0.0
    %v4291 = vmax.f32 %v3701, 0.0
    %v4292 = vmax.f32 %v3704, 0.0
    %v4293 = vmax.f32 %v3709, 0.0
    %v4294 = vmax.f32 %v3712, 0.0
    %v4295 = vmax.f32 %v3717, 0.0
    %v4296 = vmax.f32 %v3720, 0.0
    %v4297 = vmax.f32 %v3725, 0.0
    %v4298 = vmax.f32 %v3728, 0.0
    %v4299 = vmax.f32 %v3733, 0.0
    %v4300 = vmax.f32 %v3736, 0.0
    %v4301 = vmax.f32 %v3743, 0.0
    %v4302 = vmax.f32 %v3748, 0.0
    %v4303 = vmax.f32 %v3751, 0.0
    %v4304 = vmax.f32 %v3756, 0.0
    %v4305 = vmax.f32 %v3759, 0.0
    %v4306 = vmax.f32 %v3764, 0.0
    %v4307 = vmax.f32 %v3767, 0.0
    %v4308 = vmax.f32 %v3772, 0.0
    %v4309 = vmax.f32 %v3775, 0.0
    %v4310 = vmax.f32 %v3780, 0.0
    %v4311 = vmax.f32 %v3783, 0.0
    %v4312 = vmax.f32 %v3788, 0.0
    %v4313 = vmax.f32 %v3791, 0.0
    %v4314 = vmax.f32 %v3796, 0.0
    %v4315 = vmax.f32 %v3803, 0.0
    %v4316 = vmax.f32 %v3806, 0.0
    %v4317 = vmax.f32 %v3811, 0.0
    %v4318 = vmax.f32 %v3814, 0.0
    %v4319 = vmax.f32 %v3819, 0.0
    %v4320 = vmax.f32 %v3822, 0.0
    %v4321 = vmax.f32 %v3827, 0.0
    %v4322 = vmax.f32 %v3830, 0.0
    %v4323 = vmax.f32 %v3835, 0.0
    %v4324 = vmax.f32 %v3838, 0.0
    %v4325 = vmax.f32 %v3843, 0.0
    %v4326 = vmax.f32 %v3846, 0.0
    %v4327 = vmax.f32 %v3851, 0.0
    %v4328 = vmax.f32 %v3854, 0.0
    %v4329 = vmax.f32 %v3861, 0.0
    %v4330 = vmax.f32 %v3866, 0.0
    %v4331 = vmax.f32 %v3869, 0.0
    %v4332 = vmax.f32 %v3874, 0.0
    %v4333 = vmax.f32 %v3877, 0.0
    %v4334 = vmax.f32 %v3882, 0.0
    %v4335 = vmax.f32 %v3885, 0.0
    %v4336 = vmax.f32 %v3890, 0.0
    %v4337 = vmax.f32 %v3893, 0.0
    %v4338 = vmax.f32 %v3898, 0.0
    %v4339 = vmax.f32 %v3901, 0.0
    %v4340 = vmax.f32 %v3906, 0.0
    %v4341 = vmax.f32 %v3909, 0.0
    %v4342 = vmax.f32 %v3914, 0.0
    %v4343 = vmax.f32 %v3921, 0.0
    %v4344 = vmax.f32 %v3924, 0.0
    %v4345 = vmax.f32 %v3929, 0.0
    %v4346 = vmax.f32 %v3932, 0.0
    %v4347 = vmax.f32 %v3937, 0.0
    %v4348 = vmax.f32 %v3940, 0.0
    %v4349 = vmax.f32 %v3945, 0.0
    %v4350 = vmax.f32 %v3948, 0.0
    %v4351 = vmax.f32 %v3953, 0.0
    %v4352 = vmax.f32 %v3956, 0.0
    %v4353 = vmax.f32 %v3961, 0.0
    %v4354 = vmax.f32 %v3964, 0.0
    %v4355 = vmax.f32 %v3969, 0.0
    %v4356 = vmax.f32 %v3972, 0.0
    %v4357 = vmax.f32 %v3979, 0.0
    %v4358 = vmax.f32 %v3984, 0.0
    %v4359 = vmax.f32 %v3987, 0.0
    %v4360 = vmax.f32 %v3992, 0.0
    %v4361 = vmax.f32 %v3995, 0.0
    %v4362 = vmax.f32 %v4000, 0.0
    %v4363 = vmax.f32 %v4003, 0.0
    %v4364 = vmax.f32 %v4008, 0.0
    %v4365 = vmax.f32 %v4011, 0.0
    %v4366 = vmax.f32 %v4016, 0.0
    %v4367 = vmax.f32 %v4019, 0.0
    %v4368 = vmax.f32 %v4024, 0.0
    %v4369 = vmax.f32 %v4027, 0.0
    %v4370 = vmax.f32 %v4032, 0.0
    %v4371 = vmax.f32 %v4039, 0.0
    %v4372 = vmax.f32 %v4042, 0.0
    %v4373 = vmax.f32 %v4047, 0.0
    %v4374 = vmax.f32 %v4050, 0.0
    %v4375 = vmax.f32 %v4055, 0.0
    %v4376 = vmax.f32 %v4058, 0.0
    %v4377 = vmax.f32 %v4063, 0.0
    %v4378 = vmax.f32 %v4066, 0.0
    %v4379 = vmax.f32 %v4071, 0.0
    %v4380 = vmax.f32 %v4074, 0.0
    %v4381 = vmax.f32 %v4079, 0.0
    %v4382 = vmax.f32 %v4082, 0.0
    %v4383 = vmax.f32 %v4087, 0.0
    %v4384 = vmax.f32 %v4090, 0.0
    %v4385 = vmax.f32 %v4097, 0.0
    %v4386 = vmax.f32 %v4102, 0.0
    %v4387 = vmax.f32 %v4105, 0.0
    %v4388 = vmax.f32 %v4110, 0.0
    %v4389 = vmax.f32 %v4113, 0.0
    %v4390 = vmax.f32 %v4118, 0.0
    %v4391 = vmax.f32 %v4121, 0.0
    %v4392 = vmax.f32 %v4126, 0.0
    %v4393 = vmax.f32 %v4129, 0.0
    %v4394 = vmax.f32 %v4134, 0.0
    %v4395 = vmax.f32 %v4137, 0.0
    %v4396 = vmax.f32 %v4142, 0.0
    %v4397 = vmax.f32 %v4145, 0.0
    %v4398 = vmax.f32 %v4150, 0.0
    %v4399 = vpack.c.bf16 %v4203, %v4203
    %v4400 = vpack.c.bf16 %v4204, %v4204
    %v4401 = vpack.c.bf16 %v4205, %v4205
    %v4402 = vpack.c.bf16 %v4206, %v4206
    %v4403 = vpack.c.bf16 %v4207, %v4207
    %v4404 = vpack.c.bf16 %v4208, %v4208
    %v4405 = vpack.c.bf16 %v4209, %v4209
    %v4406 = vpack.c.bf16 %v4210, %v4210
    %v4407 = vpack.c.bf16 %v4211, %v4211
    %v4408 = vpack.c.bf16 %v4212, %v4212
    %v4409 = vpack.c.bf16 %v4213, %v4213
    %v4410 = vpack.c.bf16 %v4214, %v4214
    %v4411 = vpack.c.bf16 %v4215, %v4215
    %v4412 = vpack.c.bf16 %v4216, %v4216
    %v4413 = vpack.c.bf16 %v4217, %v4217
    %v4414 = vpack.c.bf16 %v4218, %v4218
    %v4415 = vpack.c.bf16 %v4219, %v4219
    %v4416 = vpack.c.bf16 %v4220, %v4220
    %v4417 = vpack.c.bf16 %v4221, %v4221
    %v4418 = vpack.c.bf16 %v4222, %v4222
    %v4419 = vpack.c.bf16 %v4223, %v4223
    %v4420 = vpack.c.bf16 %v4224, %v4224
    %v4421 = vpack.c.bf16 %v4225, %v4225
    %v4422 = vpack.c.bf16 %v4226, %v4226
    %v4423 = vpack.c.bf16 %v4227, %v4227
    %v4424 = vpack.c.bf16 %v4228, %v4228
    %v4425 = vpack.c.bf16 %v4229, %v4229
    %v4426 = vpack.c.bf16 %v4230, %v4230
    %v4427 = vpack.c.bf16 %v4231, %v4231
    %v4428 = vpack.c.bf16 %v4232, %v4232
    %v4429 = vpack.c.bf16 %v4233, %v4233
    %v4430 = vpack.c.bf16 %v4234, %v4234
    %v4431 = vpack.c.bf16 %v4235, %v4235
    %v4432 = vpack.c.bf16 %v4236, %v4236
    %v4433 = vpack.c.bf16 %v4237, %v4237
    %v4434 = vpack.c.bf16 %v4238, %v4238
    %v4435 = vpack.c.bf16 %v4239, %v4239
    %v4436 = vpack.c.bf16 %v4240, %v4240
    %v4437 = vpack.c.bf16 %v4241, %v4241
    %v4438 = vpack.c.bf16 %v4242, %v4242
    %v4439 = vpack.c.bf16 %v4243, %v4243
    %v4440 = vpack.c.bf16 %v4244, %v4244
    %v4441 = vpack.c.bf16 %v4245, %v4245
    %v4442 = vpack.c.bf16 %v4246, %v4246
    %v4443 = vpack.c.bf16 %v4247, %v4247
    %v4444 = vpack.c.bf16 %v4248, %v4248
    %v4445 = vpack.c.bf16 %v4249, %v4249
    %v4446 = vpack.c.bf16 %v4250, %v4250
    %v4447 = vpack.c.bf16 %v4251, %v4251
    %v4448 = vpack.c.bf16 %v4252, %v4252
    %v4449 = vpack.c.bf16 %v4253, %v4253
    %v4450 = vpack.c.bf16 %v4254, %v4254
    %v4451 = vpack.c.bf16 %v4255, %v4255
    %v4452 = vpack.c.bf16 %v4256, %v4256
    %v4453 = vpack.c.bf16 %v4257, %v4257
    %v4454 = vpack.c.bf16 %v4258, %v4258
    %v4455 = vpack.c.bf16 %v4259, %v4259
    %v4456 = vpack.c.bf16 %v4260, %v4260
    %v4457 = vpack.c.bf16 %v4261, %v4261
    %v4458 = vpack.c.bf16 %v4262, %v4262
    %v4459 = vpack.c.bf16 %v4263, %v4263
    %v4460 = vpack.c.bf16 %v4264, %v4264
    %v4461 = vpack.c.bf16 %v4265, %v4265
    %v4462 = vpack.c.bf16 %v4266, %v4266
    %v4463 = vpack.c.bf16 %v4267, %v4267
    %v4464 = vpack.c.bf16 %v4268, %v4268
    %v4465 = vpack.c.bf16 %v4269, %v4269
    %v4466 = vpack.c.bf16 %v4270, %v4270
    %v4467 = vpack.c.bf16 %v4271, %v4271
    %v4468 = vpack.c.bf16 %v4272, %v4272
    %v4469 = vpack.c.bf16 %v4273, %v4273
    %v4470 = vpack.c.bf16 %v4274, %v4274
    %v4471 = vpack.c.bf16 %v4275, %v4275
    %v4472 = vpack.c.bf16 %v4276, %v4276
    %v4473 = vpack.c.bf16 %v4277, %v4277
    %v4474 = vpack.c.bf16 %v4278, %v4278
    %v4475 = vpack.c.bf16 %v4279, %v4279
    %v4476 = vpack.c.bf16 %v4280, %v4280
    %v4477 = vpack.c.bf16 %v4281, %v4281
    %v4478 = vpack.c.bf16 %v4282, %v4282
    %v4479 = vpack.c.bf16 %v4283, %v4283
    %v4480 = vpack.c.bf16 %v4284, %v4284
    %v4481 = vpack.c.bf16 %v4285, %v4285
    %v4482 = vpack.c.bf16 %v4286, %v4286
    %v4483 = vpack.c.bf16 %v4287, %v4287
    %v4484 = vpack.c.bf16 %v4288, %v4288
    %v4485 = vpack.c.bf16 %v4289, %v4289
    %v4486 = vpack.c.bf16 %v4290, %v4290
    %v4487 = vpack.c.bf16 %v4291, %v4291
    %v4488 = vpack.c.bf16 %v4292, %v4292
    %v4489 = vpack.c.bf16 %v4293, %v4293
    %v4490 = vpack.c.bf16 %v4294, %v4294
    %v4491 = vpack.c.bf16 %v4295, %v4295
    %v4492 = vpack.c.bf16 %v4296, %v4296
    %v4493 = vpack.c.bf16 %v4297, %v4297
    %v4494 = vpack.c.bf16 %v4298, %v4298
    %v4495 = vpack.c.bf16 %v4299, %v4299
    %v4496 = vpack.c.bf16 %v4300, %v4300
    %v4497 = vpack.c.bf16 %v4301, %v4301
    %v4498 = vpack.c.bf16 %v4302, %v4302
    %v4499 = vpack.c.bf16 %v4303, %v4303
    %v4500 = vpack.c.bf16 %v4304, %v4304
    %v4501 = vpack.c.bf16 %v4305, %v4305
    %v4502 = vpack.c.bf16 %v4306, %v4306
    %v4503 = vpack.c.bf16 %v4307, %v4307
    %v4504 = vpack.c.bf16 %v4308, %v4308
    %v4505 = vpack.c.bf16 %v4309, %v4309
    %v4506 = vpack.c.bf16 %v4310, %v4310
    %v4507 = vpack.c.bf16 %v4311, %v4311
    %v4508 = vpack.c.bf16 %v4312, %v4312
    %v4509 = vpack.c.bf16 %v4313, %v4313
    %v4510 = vpack.c.bf16 %v4314, %v4314
    %v4511 = vpack.c.bf16 %v4315, %v4315
    %v4512 = vpack.c.bf16 %v4316, %v4316
    %v4513 = vpack.c.bf16 %v4317, %v4317
    %v4514 = vpack.c.bf16 %v4318, %v4318
    %v4515 = vpack.c.bf16 %v4319, %v4319
    %v4516 = vpack.c.bf16 %v4320, %v4320
    %v4517 = vpack.c.bf16 %v4321, %v4321
    %v4518 = vpack.c.bf16 %v4322, %v4322
    %v4519 = vpack.c.bf16 %v4323, %v4323
    %v4520 = vpack.c.bf16 %v4324, %v4324
    %v4521 = vpack.c.bf16 %v4325, %v4325
    %v4522 = vpack.c.bf16 %v4326, %v4326
    %v4523 = vpack.c.bf16 %v4327, %v4327
    %v4524 = vpack.c.bf16 %v4328, %v4328
    %v4525 = vpack.c.bf16 %v4329, %v4329
    %v4526 = vpack.c.bf16 %v4330, %v4330
    %v4527 = vpack.c.bf16 %v4331, %v4331
    %v4528 = vpack.c.bf16 %v4332, %v4332
    %v4529 = vpack.c.bf16 %v4333, %v4333
    %v4530 = vpack.c.bf16 %v4334, %v4334
    %v4531 = vpack.c.bf16 %v4335, %v4335
    %v4532 = vpack.c.bf16 %v4336, %v4336
    %v4533 = vpack.c.bf16 %v4337, %v4337
    %v4534 = vpack.c.bf16 %v4338, %v4338
    %v4535 = vpack.c.bf16 %v4339, %v4339
    %v4536 = vpack.c.bf16 %v4340, %v4340
    %v4537 = vpack.c.bf16 %v4341, %v4341
    %v4538 = vpack.c.bf16 %v4342, %v4342
    %v4539 = vpack.c.bf16 %v4343, %v4343
    %v4540 = vpack.c.bf16 %v4344, %v4344
    %v4541 = vpack.c.bf16 %v4345, %v4345
    %v4542 = vpack.c.bf16 %v4346, %v4346
    %v4543 = vpack.c.bf16 %v4347, %v4347
    %v4544 = vpack.c.bf16 %v4348, %v4348
    %v4545 = vpack.c.bf16 %v4349, %v4349
    %v4546 = vpack.c.bf16 %v4350, %v4350
    %v4547 = vpack.c.bf16 %v4351, %v4351
    %v4548 = vpack.c.bf16 %v4352, %v4352
    %v4549 = vpack.c.bf16 %v4353, %v4353
    %v4550 = vpack.c.bf16 %v4354, %v4354
    %v4551 = vpack.c.bf16 %v4355, %v4355
    %v4552 = vpack.c.bf16 %v4356, %v4356
    %v4553 = vpack.c.bf16 %v4357, %v4357
    %v4554 = vpack.c.bf16 %v4358, %v4358
    %v4555 = vpack.c.bf16 %v4359, %v4359
    %v4556 = vpack.c.bf16 %v4360, %v4360
    %v4557 = vpack.c.bf16 %v4361, %v4361
    %v4558 = vpack.c.bf16 %v4362, %v4362
    %v4559 = vpack.c.bf16 %v4363, %v4363
    %v4560 = vpack.c.bf16 %v4364, %v4364
    %v4561 = vpack.c.bf16 %v4365, %v4365
    %v4562 = vpack.c.bf16 %v4366, %v4366
    %v4563 = vpack.c.bf16 %v4367, %v4367
    %v4564 = vpack.c.bf16 %v4368, %v4368
    %v4565 = vpack.c.bf16 %v4369, %v4369
    %v4566 = vpack.c.bf16 %v4370, %v4370
    %v4567 = vpack.c.bf16 %v4371, %v4371
    %v4568 = vpack.c.bf16 %v4372, %v4372
    %v4569 = vpack.c.bf16 %v4373, %v4373
    %v4570 = vpack.c.bf16 %v4374, %v4374
    %v4571 = vpack.c.bf16 %v4375, %v4375
    %v4572 = vpack.c.bf16 %v4376, %v4376
    %v4573 = vpack.c.bf16 %v4377, %v4377
    %v4574 = vpack.c.bf16 %v4378, %v4378
    %v4575 = vpack.c.bf16 %v4379, %v4379
    %v4576 = vpack.c.bf16 %v4380, %v4380
    %v4577 = vpack.c.bf16 %v4381, %v4381
    %v4578 = vpack.c.bf16 %v4382, %v4382
    %v4579 = vpack.c.bf16 %v4383, %v4383
    %v4580 = vpack.c.bf16 %v4384, %v4384
    %v4581 = vpack.c.bf16 %v4385, %v4385
    %v4582 = vpack.c.bf16 %v4386, %v4386
    %v4583 = vpack.c.bf16 %v4387, %v4387
    %v4584 = vpack.c.bf16 %v4388, %v4388
    %v4585 = vpack.c.bf16 %v4389, %v4389
    %v4586 = vpack.c.bf16 %v4390, %v4390
    %v4587 = vpack.c.bf16 %v4391, %v4391
    %v4588 = vpack.c.bf16 %v4392, %v4392
    %v4589 = vpack.c.bf16 %v4393, %v4393
    %v4590 = vpack.c.bf16 %v4394, %v4394
    %v4591 = vpack.c.bf16 %v4395, %v4395
    %v4592 = vpack.c.bf16 %v4396, %v4396
    %v4593 = vpack.c.bf16 %v4397, %v4397
    %v4594 = vpack.c.bf16 %v4398, %v4398
    %4631 = vrot.lane.b32.xlu0 %v4400, 32
    %v4632 = vpop.permute.xlu0 %4631
    %4633 = vrot.lane.b32.xlu0 %v4402, 32
    %v4634 = vpop.permute.xlu0 %4633
    %4635 = vrot.lane.b32.xlu0 %v4404, 32
    %v4636 = vpop.permute.xlu0 %4635
    %4637 = vrot.lane.b32.xlu0 %v4406, 32
    %v4638 = vpop.permute.xlu0 %4637
    %4639 = vrot.lane.b32.xlu0 %v4408, 32
    %v4640 = vpop.permute.xlu0 %4639
    %4641 = vrot.lane.b32.xlu0 %v4410, 32
    %v4642 = vpop.permute.xlu0 %4641
    %4643 = vrot.lane.b32.xlu0 %v4428, 32
    %v4644 = vpop.permute.xlu0 %4643
    %4645 = vrot.lane.b32.xlu0 %v4430, 32
    %v4646 = vpop.permute.xlu0 %4645
    %4647 = vrot.lane.b32.xlu0 %v4432, 32
    %v4648 = vpop.permute.xlu0 %4647
    %4649 = vrot.lane.b32.xlu0 %v4434, 32
    %v4650 = vpop.permute.xlu0 %4649
    %4651 = vrot.lane.b32.xlu0 %v4436, 32
    %v4652 = vpop.permute.xlu0 %4651
    %4653 = vrot.lane.b32.xlu0 %v4438, 32
    %v4654 = vpop.permute.xlu0 %4653
    %4655 = vrot.lane.b32.xlu0 %v4456, 32
    %v4656 = vpop.permute.xlu0 %4655
    %4657 = vrot.lane.b32.xlu0 %v4458, 32
    %v4658 = vpop.permute.xlu0 %4657
    %4659 = vrot.lane.b32.xlu0 %v4460, 32
    %v4660 = vpop.permute.xlu0 %4659
    %4661 = vrot.lane.b32.xlu0 %v4462, 32
    %v4662 = vpop.permute.xlu0 %4661
    %4663 = vrot.lane.b32.xlu0 %v4464, 32
    %v4664 = vpop.permute.xlu0 %4663
    %4665 = vrot.lane.b32.xlu0 %v4466, 32
    %v4666 = vpop.permute.xlu0 %4665
    %4667 = vrot.lane.b32.xlu0 %v4484, 32
    %v4668 = vpop.permute.xlu0 %4667
    %4669 = vrot.lane.b32.xlu0 %v4486, 32
    %v4670 = vpop.permute.xlu0 %4669
    %4671 = vrot.lane.b32.xlu0 %v4488, 32
    %v4672 = vpop.permute.xlu0 %4671
    %4673 = vrot.lane.b32.xlu0 %v4490, 32
    %v4674 = vpop.permute.xlu0 %4673
    %4675 = vrot.lane.b32.xlu0 %v4492, 32
    %v4676 = vpop.permute.xlu0 %4675
    %4677 = vrot.lane.b32.xlu0 %v4494, 32
    %v4678 = vpop.permute.xlu0 %4677
    %4679 = vrot.lane.b32.xlu0 %v4512, 32
    %v4680 = vpop.permute.xlu0 %4679
    %4681 = vrot.lane.b32.xlu0 %v4514, 32
    %v4682 = vpop.permute.xlu0 %4681
    %4683 = vrot.lane.b32.xlu0 %v4516, 32
    %v4684 = vpop.permute.xlu0 %4683
    %4685 = vrot.lane.b32.xlu0 %v4518, 32
    %v4686 = vpop.permute.xlu0 %4685
    %4687 = vrot.lane.b32.xlu0 %v4520, 32
    %v4688 = vpop.permute.xlu0 %4687
    %4689 = vrot.lane.b32.xlu0 %v4522, 32
    %v4690 = vpop.permute.xlu0 %4689
    %4691 = vrot.lane.b32.xlu0 %v4540, 32
    %v4692 = vpop.permute.xlu0 %4691
    %4693 = vrot.lane.b32.xlu0 %v4542, 32
    %v4694 = vpop.permute.xlu0 %4693
    %4695 = vrot.lane.b32.xlu0 %v4544, 32
    %v4696 = vpop.permute.xlu0 %4695
    %4697 = vrot.lane.b32.xlu0 %v4546, 32
    %v4698 = vpop.permute.xlu0 %4697
    %4699 = vrot.lane.b32.xlu0 %v4548, 32
    %v4700 = vpop.permute.xlu0 %4699
    %4701 = vrot.lane.b32.xlu0 %v4550, 32
    %v4702 = vpop.permute.xlu0 %4701
    %4739 = vrot.lane.b32.xlu0 %v4401, 64
    %v4740 = vpop.permute.xlu0 %4739
    %4741 = vrot.lane.b32.xlu0 %v4403, 64
    %v4742 = vpop.permute.xlu0 %4741
    %4743 = vrot.lane.b32.xlu0 %v4405, 64
    %v4744 = vpop.permute.xlu0 %4743
    %4745 = vrot.lane.b32.xlu0 %v4407, 64
    %v4746 = vpop.permute.xlu0 %4745
    %4747 = vrot.lane.b32.xlu0 %v4409, 64
    %v4748 = vpop.permute.xlu0 %4747
    %4749 = vrot.lane.b32.xlu0 %v4411, 64
    %v4750 = vpop.permute.xlu0 %4749
    %4751 = vrot.lane.b32.xlu0 %v4429, 64
    %v4752 = vpop.permute.xlu0 %4751
    %4753 = vrot.lane.b32.xlu0 %v4431, 64
    %v4754 = vpop.permute.xlu0 %4753
    %4755 = vrot.lane.b32.xlu0 %v4433, 64
    %v4756 = vpop.permute.xlu0 %4755
    %4757 = vrot.lane.b32.xlu0 %v4435, 64
    %v4758 = vpop.permute.xlu0 %4757
    %4759 = vrot.lane.b32.xlu0 %v4437, 64
    %v4760 = vpop.permute.xlu0 %4759
    %4761 = vrot.lane.b32.xlu0 %v4439, 64
    %v4762 = vpop.permute.xlu0 %4761
    %4763 = vrot.lane.b32.xlu0 %v4457, 64
    %v4764 = vpop.permute.xlu0 %4763
    %4765 = vrot.lane.b32.xlu0 %v4459, 64
    %v4766 = vpop.permute.xlu0 %4765
    %4767 = vrot.lane.b32.xlu0 %v4461, 64
    %v4768 = vpop.permute.xlu0 %4767
    %4769 = vrot.lane.b32.xlu0 %v4463, 64
    %v4770 = vpop.permute.xlu0 %4769
    %4771 = vrot.lane.b32.xlu0 %v4465, 64
    %v4772 = vpop.permute.xlu0 %4771
    %4773 = vrot.lane.b32.xlu0 %v4467, 64
    %v4774 = vpop.permute.xlu0 %4773
    %4775 = vrot.lane.b32.xlu0 %v4485, 64
    %v4776 = vpop.permute.xlu0 %4775
    %4777 = vrot.lane.b32.xlu0 %v4487, 64
    %v4778 = vpop.permute.xlu0 %4777
    %4779 = vrot.lane.b32.xlu0 %v4489, 64
    %v4780 = vpop.permute.xlu0 %4779
    %4781 = vrot.lane.b32.xlu0 %v4491, 64
    %v4782 = vpop.permute.xlu0 %4781
    %4783 = vrot.lane.b32.xlu0 %v4493, 64
    %v4784 = vpop.permute.xlu0 %4783
    %4785 = vrot.lane.b32.xlu0 %v4495, 64
    %v4786 = vpop.permute.xlu0 %4785
    %4787 = vrot.lane.b32.xlu0 %v4513, 64
    %v4788 = vpop.permute.xlu0 %4787
    %4789 = vrot.lane.b32.xlu0 %v4515, 64
    %v4790 = vpop.permute.xlu0 %4789
    %4791 = vrot.lane.b32.xlu0 %v4517, 64
    %v4792 = vpop.permute.xlu0 %4791
    %4793 = vrot.lane.b32.xlu0 %v4519, 64
    %v4794 = vpop.permute.xlu0 %4793
    %4795 = vrot.lane.b32.xlu0 %v4521, 64
    %v4796 = vpop.permute.xlu0 %4795
    %4797 = vrot.lane.b32.xlu0 %v4523, 64
    %v4798 = vpop.permute.xlu0 %4797
    %4799 = vrot.lane.b32.xlu0 %v4541, 64
    %v4800 = vpop.permute.xlu0 %4799
    %4801 = vrot.lane.b32.xlu0 %v4543, 64
    %v4802 = vpop.permute.xlu0 %4801
    %4803 = vrot.lane.b32.xlu0 %v4545, 64
    %v4804 = vpop.permute.xlu0 %4803
    %4805 = vrot.lane.b32.xlu0 %v4547, 64
    %v4806 = vpop.permute.xlu0 %4805
    %4807 = vrot.lane.b32.xlu0 %v4549, 64
    %v4808 = vpop.permute.xlu0 %4807
    %4809 = vrot.lane.b32.xlu0 %v4551, 64
    %v4810 = vpop.permute.xlu0 %4809
    %4817 = vrot.lane.b32.xlu0 %v4402, 96
    %v4818 = vpop.permute.xlu0 %4817
    %4819 = vrot.lane.b32.xlu0 %v4404, 96
    %v4820 = vpop.permute.xlu0 %4819
    %4821 = vrot.lane.b32.xlu0 %v4406, 96
    %v4822 = vpop.permute.xlu0 %4821
    %4823 = vrot.lane.b32.xlu0 %v4408, 96
    %v4824 = vpop.permute.xlu0 %4823
    %4825 = vrot.lane.b32.xlu0 %v4410, 96
    %v4826 = vpop.permute.xlu0 %4825
    %4827 = vrot.lane.b32.xlu0 %v4412, 96
    %v4828 = vpop.permute.xlu0 %4827
    %4829 = vrot.lane.b32.xlu0 %v4430, 96
    %v4830 = vpop.permute.xlu0 %4829
    %4831 = vrot.lane.b32.xlu0 %v4432, 96
    %v4832 = vpop.permute.xlu0 %4831
    %4833 = vrot.lane.b32.xlu0 %v4434, 96
    %v4834 = vpop.permute.xlu0 %4833
    %4835 = vrot.lane.b32.xlu0 %v4436, 96
    %v4836 = vpop.permute.xlu0 %4835
    %4837 = vrot.lane.b32.xlu0 %v4438, 96
    %v4838 = vpop.permute.xlu0 %4837
    %4839 = vrot.lane.b32.xlu0 %v4440, 96
    %v4840 = vpop.permute.xlu0 %4839
    %4841 = vrot.lane.b32.xlu0 %v4458, 96
    %v4842 = vpop.permute.xlu0 %4841
    %4843 = vrot.lane.b32.xlu0 %v4460, 96
    %v4844 = vpop.permute.xlu0 %4843
    %4845 = vrot.lane.b32.xlu0 %v4462, 96
    %v4846 = vpop.permute.xlu0 %4845
    %4847 = vrot.lane.b32.xlu0 %v4464, 96
    %v4848 = vpop.permute.xlu0 %4847
    %4849 = vrot.lane.b32.xlu0 %v4466, 96
    %v4850 = vpop.permute.xlu0 %4849
    %4851 = vrot.lane.b32.xlu0 %v4468, 96
    %v4852 = vpop.permute.xlu0 %4851
    %4853 = vrot.lane.b32.xlu0 %v4486, 96
    %v4854 = vpop.permute.xlu0 %4853
    %4855 = vrot.lane.b32.xlu0 %v4488, 96
    %v4856 = vpop.permute.xlu0 %4855
    %4857 = vrot.lane.b32.xlu0 %v4490, 96
    %v4858 = vpop.permute.xlu0 %4857
    %4859 = vrot.lane.b32.xlu0 %v4492, 96
    %v4860 = vpop.permute.xlu0 %4859
    %4861 = vrot.lane.b32.xlu0 %v4494, 96
    %v4862 = vpop.permute.xlu0 %4861
    %4863 = vrot.lane.b32.xlu0 %v4496, 96
    %v4864 = vpop.permute.xlu0 %4863
    %4865 = vrot.lane.b32.xlu0 %v4514, 96
    %v4866 = vpop.permute.xlu0 %4865
    %4867 = vrot.lane.b32.xlu0 %v4516, 96
    %v4868 = vpop.permute.xlu0 %4867
    %4869 = vrot.lane.b32.xlu0 %v4518, 96
    %v4870 = vpop.permute.xlu0 %4869
    %4871 = vrot.lane.b32.xlu0 %v4520, 96
    %v4872 = vpop.permute.xlu0 %4871
    %4873 = vrot.lane.b32.xlu0 %v4522, 96
    %v4874 = vpop.permute.xlu0 %4873
    %4875 = vrot.lane.b32.xlu0 %v4524, 96
    %v4876 = vpop.permute.xlu0 %4875
    %4877 = vrot.lane.b32.xlu0 %v4542, 96
    %v4878 = vpop.permute.xlu0 %4877
    %4879 = vrot.lane.b32.xlu0 %v4544, 96
    %v4880 = vpop.permute.xlu0 %4879
    %4881 = vrot.lane.b32.xlu0 %v4546, 96
    %v4882 = vpop.permute.xlu0 %4881
    %4883 = vrot.lane.b32.xlu0 %v4548, 96
    %v4884 = vpop.permute.xlu0 %4883
    %4885 = vrot.lane.b32.xlu0 %v4550, 96
    %v4886 = vpop.permute.xlu0 %4885
    %4887 = vrot.lane.b32.xlu0 %v4552, 96
    %v4888 = vpop.permute.xlu0 %4887
    %4925 = vrot.lane.b32.xlu0 %v4414, 32
    %v4926 = vpop.permute.xlu0 %4925
    %4927 = vrot.lane.b32.xlu0 %v4416, 32
    %v4928 = vpop.permute.xlu0 %4927
    %4929 = vrot.lane.b32.xlu0 %v4418, 32
    %v4930 = vpop.permute.xlu0 %4929
    %4931 = vrot.lane.b32.xlu0 %v4420, 32
    %v4932 = vpop.permute.xlu0 %4931
    %4933 = vrot.lane.b32.xlu0 %v4422, 32
    %v4934 = vpop.permute.xlu0 %4933
    %4935 = vrot.lane.b32.xlu0 %v4424, 32
    %v4936 = vpop.permute.xlu0 %4935
    %4937 = vrot.lane.b32.xlu0 %v4442, 32
    %v4938 = vpop.permute.xlu0 %4937
    %4939 = vrot.lane.b32.xlu0 %v4444, 32
    %v4940 = vpop.permute.xlu0 %4939
    %4941 = vrot.lane.b32.xlu0 %v4446, 32
    %v4942 = vpop.permute.xlu0 %4941
    %4943 = vrot.lane.b32.xlu0 %v4448, 32
    %v4944 = vpop.permute.xlu0 %4943
    %4945 = vrot.lane.b32.xlu0 %v4450, 32
    %v4946 = vpop.permute.xlu0 %4945
    %4947 = vrot.lane.b32.xlu0 %v4452, 32
    %v4948 = vpop.permute.xlu0 %4947
    %4949 = vrot.lane.b32.xlu0 %v4470, 32
    %v4950 = vpop.permute.xlu0 %4949
    %4951 = vrot.lane.b32.xlu0 %v4472, 32
    %v4952 = vpop.permute.xlu0 %4951
    %4953 = vrot.lane.b32.xlu0 %v4474, 32
    %v4954 = vpop.permute.xlu0 %4953
    %4955 = vrot.lane.b32.xlu0 %v4476, 32
    %v4956 = vpop.permute.xlu0 %4955
    %4957 = vrot.lane.b32.xlu0 %v4478, 32
    %v4958 = vpop.permute.xlu0 %4957
    %4959 = vrot.lane.b32.xlu0 %v4480, 32
    %v4960 = vpop.permute.xlu0 %4959
    %4961 = vrot.lane.b32.xlu0 %v4498, 32
    %v4962 = vpop.permute.xlu0 %4961
    %4963 = vrot.lane.b32.xlu0 %v4500, 32
    %v4964 = vpop.permute.xlu0 %4963
    %4965 = vrot.lane.b32.xlu0 %v4502, 32
    %v4966 = vpop.permute.xlu0 %4965
    %4967 = vrot.lane.b32.xlu0 %v4504, 32
    %v4968 = vpop.permute.xlu0 %4967
    %4969 = vrot.lane.b32.xlu0 %v4506, 32
    %v4970 = vpop.permute.xlu0 %4969
    %4971 = vrot.lane.b32.xlu0 %v4508, 32
    %v4972 = vpop.permute.xlu0 %4971
    %4973 = vrot.lane.b32.xlu0 %v4526, 32
    %v4974 = vpop.permute.xlu0 %4973
    %4975 = vrot.lane.b32.xlu0 %v4528, 32
    %v4976 = vpop.permute.xlu0 %4975
    %4977 = vrot.lane.b32.xlu0 %v4530, 32
    %v4978 = vpop.permute.xlu0 %4977
    %4979 = vrot.lane.b32.xlu0 %v4532, 32
    %v4980 = vpop.permute.xlu0 %4979
    %4981 = vrot.lane.b32.xlu0 %v4534, 32
    %v4982 = vpop.permute.xlu0 %4981
    %4983 = vrot.lane.b32.xlu0 %v4536, 32
    %v4984 = vpop.permute.xlu0 %4983
    %4985 = vrot.lane.b32.xlu0 %v4554, 32
    %v4986 = vpop.permute.xlu0 %4985
    %4987 = vrot.lane.b32.xlu0 %v4556, 32
    %v4988 = vpop.permute.xlu0 %4987
    %4989 = vrot.lane.b32.xlu0 %v4558, 32
    %v4990 = vpop.permute.xlu0 %4989
    %4991 = vrot.lane.b32.xlu0 %v4560, 32
    %v4992 = vpop.permute.xlu0 %4991
    %4993 = vrot.lane.b32.xlu0 %v4562, 32
    %v4994 = vpop.permute.xlu0 %4993
    %4995 = vrot.lane.b32.xlu0 %v4564, 32
    %v4996 = vpop.permute.xlu0 %4995
    %5033 = vrot.lane.b32.xlu0 %v4415, 64
    %v5034 = vpop.permute.xlu0 %5033
    %5035 = vrot.lane.b32.xlu0 %v4417, 64
    %v5036 = vpop.permute.xlu0 %5035
    %5037 = vrot.lane.b32.xlu0 %v4419, 64
    %v5038 = vpop.permute.xlu0 %5037
    %5039 = vrot.lane.b32.xlu0 %v4421, 64
    %v5040 = vpop.permute.xlu0 %5039
    %5041 = vrot.lane.b32.xlu0 %v4423, 64
    %v5042 = vpop.permute.xlu0 %5041
    %5043 = vrot.lane.b32.xlu0 %v4425, 64
    %v5044 = vpop.permute.xlu0 %5043
    %5045 = vrot.lane.b32.xlu0 %v4443, 64
    %v5046 = vpop.permute.xlu0 %5045
    %5047 = vrot.lane.b32.xlu0 %v4445, 64
    %v5048 = vpop.permute.xlu0 %5047
    %5049 = vrot.lane.b32.xlu0 %v4447, 64
    %v5050 = vpop.permute.xlu0 %5049
    %5051 = vrot.lane.b32.xlu0 %v4449, 64
    %v5052 = vpop.permute.xlu0 %5051
    %5053 = vrot.lane.b32.xlu0 %v4451, 64
    %v5054 = vpop.permute.xlu0 %5053
    %5055 = vrot.lane.b32.xlu0 %v4453, 64
    %v5056 = vpop.permute.xlu0 %5055
    %5057 = vrot.lane.b32.xlu0 %v4471, 64
    %v5058 = vpop.permute.xlu0 %5057
    %5059 = vrot.lane.b32.xlu0 %v4473, 64
    %v5060 = vpop.permute.xlu0 %5059
    %5061 = vrot.lane.b32.xlu0 %v4475, 64
    %v5062 = vpop.permute.xlu0 %5061
    %5063 = vrot.lane.b32.xlu0 %v4477, 64
    %v5064 = vpop.permute.xlu0 %5063
    %5065 = vrot.lane.b32.xlu0 %v4479, 64
    %v5066 = vpop.permute.xlu0 %5065
    %5067 = vrot.lane.b32.xlu0 %v4481, 64
    %v5068 = vpop.permute.xlu0 %5067
    %5069 = vrot.lane.b32.xlu0 %v4499, 64
    %v5070 = vpop.permute.xlu0 %5069
    %5071 = vrot.lane.b32.xlu0 %v4501, 64
    %v5072 = vpop.permute.xlu0 %5071
    %5073 = vrot.lane.b32.xlu0 %v4503, 64
    %v5074 = vpop.permute.xlu0 %5073
    %5075 = vrot.lane.b32.xlu0 %v4505, 64
    %v5076 = vpop.permute.xlu0 %5075
    %5077 = vrot.lane.b32.xlu0 %v4507, 64
    %v5078 = vpop.permute.xlu0 %5077
    %5079 = vrot.lane.b32.xlu0 %v4509, 64
    %v5080 = vpop.permute.xlu0 %5079
    %5081 = vrot.lane.b32.xlu0 %v4527, 64
    %v5082 = vpop.permute.xlu0 %5081
    %5083 = vrot.lane.b32.xlu0 %v4529, 64
    %v5084 = vpop.permute.xlu0 %5083
    %5085 = vrot.lane.b32.xlu0 %v4531, 64
    %v5086 = vpop.permute.xlu0 %5085
    %5087 = vrot.lane.b32.xlu0 %v4533, 64
    %v5088 = vpop.permute.xlu0 %5087
    %5089 = vrot.lane.b32.xlu0 %v4535, 64
    %v5090 = vpop.permute.xlu0 %5089
    %5091 = vrot.lane.b32.xlu0 %v4537, 64
    %v5092 = vpop.permute.xlu0 %5091
    %5093 = vrot.lane.b32.xlu0 %v4555, 64
    %v5094 = vpop.permute.xlu0 %5093
    %5095 = vrot.lane.b32.xlu0 %v4557, 64
    %v5096 = vpop.permute.xlu0 %5095
    %5097 = vrot.lane.b32.xlu0 %v4559, 64
    %v5098 = vpop.permute.xlu0 %5097
    %5099 = vrot.lane.b32.xlu0 %v4561, 64
    %v5100 = vpop.permute.xlu0 %5099
    %5101 = vrot.lane.b32.xlu0 %v4563, 64
    %v5102 = vpop.permute.xlu0 %5101
    %5103 = vrot.lane.b32.xlu0 %v4565, 64
    %v5104 = vpop.permute.xlu0 %5103
    %5111 = vrot.lane.b32.xlu0 %v4416, 96
    %v5112 = vpop.permute.xlu0 %5111
    %5113 = vrot.lane.b32.xlu0 %v4418, 96
    %v5114 = vpop.permute.xlu0 %5113
    %5115 = vrot.lane.b32.xlu0 %v4420, 96
    %v5116 = vpop.permute.xlu0 %5115
    %5117 = vrot.lane.b32.xlu0 %v4422, 96
    %v5118 = vpop.permute.xlu0 %5117
    %5119 = vrot.lane.b32.xlu0 %v4424, 96
    %v5120 = vpop.permute.xlu0 %5119
    %5121 = vrot.lane.b32.xlu0 %v4426, 96
    %v5122 = vpop.permute.xlu0 %5121
    %5123 = vrot.lane.b32.xlu0 %v4444, 96
    %v5124 = vpop.permute.xlu0 %5123
    %5125 = vrot.lane.b32.xlu0 %v4446, 96
    %v5126 = vpop.permute.xlu0 %5125
    %5127 = vrot.lane.b32.xlu0 %v4448, 96
    %v5128 = vpop.permute.xlu0 %5127
    %5129 = vrot.lane.b32.xlu0 %v4450, 96
    %v5130 = vpop.permute.xlu0 %5129
    %5131 = vrot.lane.b32.xlu0 %v4452, 96
    %v5132 = vpop.permute.xlu0 %5131
    %5133 = vrot.lane.b32.xlu0 %v4454, 96
    %v5134 = vpop.permute.xlu0 %5133
    %5135 = vrot.lane.b32.xlu0 %v4472, 96
    %v5136 = vpop.permute.xlu0 %5135
    %5137 = vrot.lane.b32.xlu0 %v4474, 96
    %v5138 = vpop.permute.xlu0 %5137
    %5139 = vrot.lane.b32.xlu0 %v4476, 96
    %v5140 = vpop.permute.xlu0 %5139
    %5141 = vrot.lane.b32.xlu0 %v4478, 96
    %v5142 = vpop.permute.xlu0 %5141
    %5143 = vrot.lane.b32.xlu0 %v4480, 96
    %v5144 = vpop.permute.xlu0 %5143
    %5145 = vrot.lane.b32.xlu0 %v4482, 96
    %v5146 = vpop.permute.xlu0 %5145
    %5147 = vrot.lane.b32.xlu0 %v4500, 96
    %v5148 = vpop.permute.xlu0 %5147
    %5149 = vrot.lane.b32.xlu0 %v4502, 96
    %v5150 = vpop.permute.xlu0 %5149
    %5151 = vrot.lane.b32.xlu0 %v4504, 96
    %v5152 = vpop.permute.xlu0 %5151
    %5153 = vrot.lane.b32.xlu0 %v4506, 96
    %v5154 = vpop.permute.xlu0 %5153
    %5155 = vrot.lane.b32.xlu0 %v4508, 96
    %v5156 = vpop.permute.xlu0 %5155
    %5157 = vrot.lane.b32.xlu0 %v4510, 96
    %v5158 = vpop.permute.xlu0 %5157
    %5159 = vrot.lane.b32.xlu0 %v4528, 96
    %v5160 = vpop.permute.xlu0 %5159
    %5161 = vrot.lane.b32.xlu0 %v4530, 96
    %v5162 = vpop.permute.xlu0 %5161
    %5163 = vrot.lane.b32.xlu0 %v4532, 96
    %v5164 = vpop.permute.xlu0 %5163
    %5165 = vrot.lane.b32.xlu0 %v4534, 96
    %v5166 = vpop.permute.xlu0 %5165
    %5167 = vrot.lane.b32.xlu0 %v4536, 96
    %v5168 = vpop.permute.xlu0 %5167
    %5169 = vrot.lane.b32.xlu0 %v4538, 96
    %v5170 = vpop.permute.xlu0 %5169
    %5171 = vrot.lane.b32.xlu0 %v4556, 96
    %v5172 = vpop.permute.xlu0 %5171
    %5173 = vrot.lane.b32.xlu0 %v4558, 96
    %v5174 = vpop.permute.xlu0 %5173
    %5175 = vrot.lane.b32.xlu0 %v4560, 96
    %v5176 = vpop.permute.xlu0 %5175
    %5177 = vrot.lane.b32.xlu0 %v4562, 96
    %v5178 = vpop.permute.xlu0 %5177
    %5179 = vrot.lane.b32.xlu0 %v4564, 96
    %v5180 = vpop.permute.xlu0 %5179
    %5181 = vrot.lane.b32.xlu0 %v4566, 96
    %v5182 = vpop.permute.xlu0 %5181
    %5189 = vrot.lane.b32.xlu0 %v4568, 32
    %v5190 = vpop.permute.xlu0 %5189
    %5191 = vrot.lane.b32.xlu0 %v4570, 32
    %v5192 = vpop.permute.xlu0 %5191
    %5193 = vrot.lane.b32.xlu0 %v4572, 32
    %v5194 = vpop.permute.xlu0 %5193
    %5195 = vrot.lane.b32.xlu0 %v4574, 32
    %v5196 = vpop.permute.xlu0 %5195
    %5197 = vrot.lane.b32.xlu0 %v4576, 32
    %v5198 = vpop.permute.xlu0 %5197
    %5199 = vrot.lane.b32.xlu0 %v4578, 32
    %v5200 = vpop.permute.xlu0 %5199
    %5207 = vrot.lane.b32.xlu0 %v4569, 64
    %v5208 = vpop.permute.xlu0 %5207
    %5209 = vrot.lane.b32.xlu0 %v4571, 64
    %v5210 = vpop.permute.xlu0 %5209
    %5211 = vrot.lane.b32.xlu0 %v4573, 64
    %v5212 = vpop.permute.xlu0 %5211
    %5213 = vrot.lane.b32.xlu0 %v4575, 64
    %v5214 = vpop.permute.xlu0 %5213
    %5215 = vrot.lane.b32.xlu0 %v4577, 64
    %v5216 = vpop.permute.xlu0 %5215
    %5217 = vrot.lane.b32.xlu0 %v4579, 64
    %v5218 = vpop.permute.xlu0 %5217
    %5220 = vrot.lane.b32.xlu0 %v4570, 96
    %v5221 = vpop.permute.xlu0 %5220
    %5222 = vrot.lane.b32.xlu0 %v4572, 96
    %v5223 = vpop.permute.xlu0 %5222
    %5224 = vrot.lane.b32.xlu0 %v4574, 96
    %v5225 = vpop.permute.xlu0 %5224
    %5226 = vrot.lane.b32.xlu0 %v4576, 96
    %v5227 = vpop.permute.xlu0 %5226
    %5228 = vrot.lane.b32.xlu0 %v4578, 96
    %v5229 = vpop.permute.xlu0 %5228
    %5230 = vrot.lane.b32.xlu0 %v4580, 96
    %v5231 = vpop.permute.xlu0 %5230
    %5238 = vrot.lane.b32.xlu0 %v4582, 32
    %v5239 = vpop.permute.xlu0 %5238
    %5240 = vrot.lane.b32.xlu0 %v4584, 32
    %v5241 = vpop.permute.xlu0 %5240
    %5242 = vrot.lane.b32.xlu0 %v4586, 32
    %v5243 = vpop.permute.xlu0 %5242
    %5244 = vrot.lane.b32.xlu0 %v4588, 32
    %v5245 = vpop.permute.xlu0 %5244
    %5246 = vrot.lane.b32.xlu0 %v4590, 32
    %v5247 = vpop.permute.xlu0 %5246
    %5248 = vrot.lane.b32.xlu0 %v4592, 32
    %v5249 = vpop.permute.xlu0 %5248
    %5256 = vrot.lane.b32.xlu0 %v4583, 64
    %v5257 = vpop.permute.xlu0 %5256
    %5258 = vrot.lane.b32.xlu0 %v4585, 64
    %v5259 = vpop.permute.xlu0 %5258
    %5260 = vrot.lane.b32.xlu0 %v4587, 64
    %v5261 = vpop.permute.xlu0 %5260
    %5262 = vrot.lane.b32.xlu0 %v4589, 64
    %v5263 = vpop.permute.xlu0 %5262
    %5264 = vrot.lane.b32.xlu0 %v4591, 64
    %v5265 = vpop.permute.xlu0 %5264
    %5266 = vrot.lane.b32.xlu0 %v4593, 64
    %v5267 = vpop.permute.xlu0 %5266
    %5269 = vrot.lane.b32.xlu0 %v4584, 96
    %v5270 = vpop.permute.xlu0 %5269
    %5271 = vrot.lane.b32.xlu0 %v4586, 96
    %v5272 = vpop.permute.xlu0 %5271
    %5273 = vrot.lane.b32.xlu0 %v4588, 96
    %v5274 = vpop.permute.xlu0 %5273
    %5275 = vrot.lane.b32.xlu0 %v4590, 96
    %v5276 = vpop.permute.xlu0 %5275
    %5277 = vrot.lane.b32.xlu0 %v4592, 96
    %v5278 = vpop.permute.xlu0 %5277
    %5279 = vrot.lane.b32.xlu0 %v4594, 96
    %v5280 = vpop.permute.xlu0 %5279
    %vm5281 = vcmask 261120
    %v5284 = vsel %vm5281, %v4399, %v4632
    %v5287 = vsel %vm5281, %v4401, %v4634
    %v5290 = vsel %vm5281, %v4403, %v4636
    %v5293 = vsel %vm5281, %v4405, %v4638
    %v5296 = vsel %vm5281, %v4407, %v4640
    %v5299 = vsel %vm5281, %v4409, %v4642
    %v5302 = vsel %vm5281, %v4427, %v4644
    %v5305 = vsel %vm5281, %v4429, %v4646
    %v5308 = vsel %vm5281, %v4431, %v4648
    %v5311 = vsel %vm5281, %v4433, %v4650
    %v5314 = vsel %vm5281, %v4435, %v4652
    %v5317 = vsel %vm5281, %v4437, %v4654
    %v5320 = vsel %vm5281, %v4455, %v4656
    %v5323 = vsel %vm5281, %v4457, %v4658
    %v5326 = vsel %vm5281, %v4459, %v4660
    %v5329 = vsel %vm5281, %v4461, %v4662
    %v5332 = vsel %vm5281, %v4463, %v4664
    %v5335 = vsel %vm5281, %v4465, %v4666
    %v5338 = vsel %vm5281, %v4483, %v4668
    %v5341 = vsel %vm5281, %v4485, %v4670
    %v5344 = vsel %vm5281, %v4487, %v4672
    %v5347 = vsel %vm5281, %v4489, %v4674
    %v5350 = vsel %vm5281, %v4491, %v4676
    %v5353 = vsel %vm5281, %v4493, %v4678
    %v5356 = vsel %vm5281, %v4511, %v4680
    %v5359 = vsel %vm5281, %v4513, %v4682
    %v5362 = vsel %vm5281, %v4515, %v4684
    %v5365 = vsel %vm5281, %v4517, %v4686
    %v5368 = vsel %vm5281, %v4519, %v4688
    %v5371 = vsel %vm5281, %v4521, %v4690
    %v5374 = vsel %vm5281, %v4539, %v4692
    %v5377 = vsel %vm5281, %v4541, %v4694
    %v5380 = vsel %vm5281, %v4543, %v4696
    %v5383 = vsel %vm5281, %v4545, %v4698
    %v5386 = vsel %vm5281, %v4547, %v4700
    %v5389 = vsel %vm5281, %v4549, %v4702
    %v5391 = vsel %vm1508, %v5284, %v4740
    %v5393 = vsel %vm1508, %v5287, %v4742
    %v5395 = vsel %vm1508, %v5290, %v4744
    %v5397 = vsel %vm1508, %v5293, %v4746
    %v5399 = vsel %vm1508, %v5296, %v4748
    %v5401 = vsel %vm1508, %v5299, %v4750
    %v5403 = vsel %vm1508, %v5302, %v4752
    %v5405 = vsel %vm1508, %v5305, %v4754
    %v5407 = vsel %vm1508, %v5308, %v4756
    %v5409 = vsel %vm1508, %v5311, %v4758
    %v5411 = vsel %vm1508, %v5314, %v4760
    %v5413 = vsel %vm1508, %v5317, %v4762
    %v5415 = vsel %vm1508, %v5320, %v4764
    %v5417 = vsel %vm1508, %v5323, %v4766
    %v5419 = vsel %vm1508, %v5326, %v4768
    %v5421 = vsel %vm1508, %v5329, %v4770
    %v5423 = vsel %vm1508, %v5332, %v4772
    %v5425 = vsel %vm1508, %v5335, %v4774
    %v5427 = vsel %vm1508, %v5338, %v4776
    %v5429 = vsel %vm1508, %v5341, %v4778
    %v5431 = vsel %vm1508, %v5344, %v4780
    %v5433 = vsel %vm1508, %v5347, %v4782
    %v5435 = vsel %vm1508, %v5350, %v4784
    %v5437 = vsel %vm1508, %v5353, %v4786
    %v5439 = vsel %vm1508, %v5356, %v4788
    %v5441 = vsel %vm1508, %v5359, %v4790
    %v5443 = vsel %vm1508, %v5362, %v4792
    %v5445 = vsel %vm1508, %v5365, %v4794
    %v5447 = vsel %vm1508, %v5368, %v4796
    %v5449 = vsel %vm1508, %v5371, %v4798
    %v5451 = vsel %vm1508, %v5374, %v4800
    %v5453 = vsel %vm1508, %v5377, %v4802
    %v5455 = vsel %vm1508, %v5380, %v4804
    %v5457 = vsel %vm1508, %v5383, %v4806
    %v5459 = vsel %vm1508, %v5386, %v4808
    %v5461 = vsel %vm1508, %v5389, %v4810
    %vm5462 = vcmask 785408
    %v5464 = vsel %vm5462, %v5391, %v4818
    %v5466 = vsel %vm5462, %v5393, %v4820
    %v5468 = vsel %vm5462, %v5395, %v4822
    %v5470 = vsel %vm5462, %v5397, %v4824
    %v5472 = vsel %vm5462, %v5399, %v4826
    %v5474 = vsel %vm5462, %v5401, %v4828
    %v5476 = vsel %vm5462, %v5403, %v4830
    %v5478 = vsel %vm5462, %v5405, %v4832
    %v5480 = vsel %vm5462, %v5407, %v4834
    %v5482 = vsel %vm5462, %v5409, %v4836
    %v5484 = vsel %vm5462, %v5411, %v4838
    %v5486 = vsel %vm5462, %v5413, %v4840
    %v5488 = vsel %vm5462, %v5415, %v4842
    %v5490 = vsel %vm5462, %v5417, %v4844
    %v5492 = vsel %vm5462, %v5419, %v4846
    %v5494 = vsel %vm5462, %v5421, %v4848
    %v5496 = vsel %vm5462, %v5423, %v4850
    %v5498 = vsel %vm5462, %v5425, %v4852
    %v5500 = vsel %vm5462, %v5427, %v4854
    %v5502 = vsel %vm5462, %v5429, %v4856
    %v5504 = vsel %vm5462, %v5431, %v4858
    %v5506 = vsel %vm5462, %v5433, %v4860
    %v5508 = vsel %vm5462, %v5435, %v4862
    %v5510 = vsel %vm5462, %v5437, %v4864
    %v5512 = vsel %vm5462, %v5439, %v4866
    %v5514 = vsel %vm5462, %v5441, %v4868
    %v5516 = vsel %vm5462, %v5443, %v4870
    %v5518 = vsel %vm5462, %v5445, %v4872
    %v5520 = vsel %vm5462, %v5447, %v4874
    %v5522 = vsel %vm5462, %v5449, %v4876
    %v5524 = vsel %vm5462, %v5451, %v4878
    %v5526 = vsel %vm5462, %v5453, %v4880
    %v5528 = vsel %vm5462, %v5455, %v4882
    %v5530 = vsel %vm5462, %v5457, %v4884
    %v5532 = vsel %vm5462, %v5459, %v4886
    %v5534 = vsel %vm5462, %v5461, %v4888
    %v5537 = vsel %vm5281, %v4413, %v4926
    %v5540 = vsel %vm5281, %v4415, %v4928
    %v5543 = vsel %vm5281, %v4417, %v4930
    %v5546 = vsel %vm5281, %v4419, %v4932
    %v5549 = vsel %vm5281, %v4421, %v4934
    %v5552 = vsel %vm5281, %v4423, %v4936
    %v5555 = vsel %vm5281, %v4441, %v4938
    %v5558 = vsel %vm5281, %v4443, %v4940
    %v5561 = vsel %vm5281, %v4445, %v4942
    %v5564 = vsel %vm5281, %v4447, %v4944
    %v5567 = vsel %vm5281, %v4449, %v4946
    %v5570 = vsel %vm5281, %v4451, %v4948
    %v5573 = vsel %vm5281, %v4469, %v4950
    %v5576 = vsel %vm5281, %v4471, %v4952
    %v5579 = vsel %vm5281, %v4473, %v4954
    %v5582 = vsel %vm5281, %v4475, %v4956
    %v5585 = vsel %vm5281, %v4477, %v4958
    %v5588 = vsel %vm5281, %v4479, %v4960
    %v5591 = vsel %vm5281, %v4497, %v4962
    %v5594 = vsel %vm5281, %v4499, %v4964
    %v5597 = vsel %vm5281, %v4501, %v4966
    %v5600 = vsel %vm5281, %v4503, %v4968
    %v5603 = vsel %vm5281, %v4505, %v4970
    %v5606 = vsel %vm5281, %v4507, %v4972
    %v5609 = vsel %vm5281, %v4525, %v4974
    %v5612 = vsel %vm5281, %v4527, %v4976
    %v5615 = vsel %vm5281, %v4529, %v4978
    %v5618 = vsel %vm5281, %v4531, %v4980
    %v5621 = vsel %vm5281, %v4533, %v4982
    %v5624 = vsel %vm5281, %v4535, %v4984
    %v5627 = vsel %vm5281, %v4553, %v4986
    %v5630 = vsel %vm5281, %v4555, %v4988
    %v5633 = vsel %vm5281, %v4557, %v4990
    %v5636 = vsel %vm5281, %v4559, %v4992
    %v5639 = vsel %vm5281, %v4561, %v4994
    %v5642 = vsel %vm5281, %v4563, %v4996
    %v5644 = vsel %vm1508, %v5537, %v5034
    %v5646 = vsel %vm1508, %v5540, %v5036
    %v5648 = vsel %vm1508, %v5543, %v5038
    %v5650 = vsel %vm1508, %v5546, %v5040
    %v5652 = vsel %vm1508, %v5549, %v5042
    %v5654 = vsel %vm1508, %v5552, %v5044
    %v5656 = vsel %vm1508, %v5555, %v5046
    %v5658 = vsel %vm1508, %v5558, %v5048
    %v5660 = vsel %vm1508, %v5561, %v5050
    %v5662 = vsel %vm1508, %v5564, %v5052
    %v5664 = vsel %vm1508, %v5567, %v5054
    %v5666 = vsel %vm1508, %v5570, %v5056
    %v5668 = vsel %vm1508, %v5573, %v5058
    %v5670 = vsel %vm1508, %v5576, %v5060
    %v5672 = vsel %vm1508, %v5579, %v5062
    %v5674 = vsel %vm1508, %v5582, %v5064
    %v5676 = vsel %vm1508, %v5585, %v5066
    %v5678 = vsel %vm1508, %v5588, %v5068
    %v5680 = vsel %vm1508, %v5591, %v5070
    %v5682 = vsel %vm1508, %v5594, %v5072
    %v5684 = vsel %vm1508, %v5597, %v5074
    %v5686 = vsel %vm1508, %v5600, %v5076
    %v5688 = vsel %vm1508, %v5603, %v5078
    %v5690 = vsel %vm1508, %v5606, %v5080
    %v5692 = vsel %vm1508, %v5609, %v5082
    %v5694 = vsel %vm1508, %v5612, %v5084
    %v5696 = vsel %vm1508, %v5615, %v5086
    %v5698 = vsel %vm1508, %v5618, %v5088
    %v5700 = vsel %vm1508, %v5621, %v5090
    %v5702 = vsel %vm1508, %v5624, %v5092
    %v5704 = vsel %vm1508, %v5627, %v5094
    %v5706 = vsel %vm1508, %v5630, %v5096
    %v5708 = vsel %vm1508, %v5633, %v5098
    %v5710 = vsel %vm1508, %v5636, %v5100
    %v5712 = vsel %vm1508, %v5639, %v5102
    %v5714 = vsel %vm1508, %v5642, %v5104
    %v5716 = vsel %vm5462, %v5644, %v5112
    %v5718 = vsel %vm5462, %v5646, %v5114
    %v5720 = vsel %vm5462, %v5648, %v5116
    %v5722 = vsel %vm5462, %v5650, %v5118
    %v5724 = vsel %vm5462, %v5652, %v5120
    %v5726 = vsel %vm5462, %v5654, %v5122
    %v5728 = vsel %vm5462, %v5656, %v5124
    %v5730 = vsel %vm5462, %v5658, %v5126
    %v5732 = vsel %vm5462, %v5660, %v5128
    %v5734 = vsel %vm5462, %v5662, %v5130
    %v5736 = vsel %vm5462, %v5664, %v5132
    %v5738 = vsel %vm5462, %v5666, %v5134
    %v5740 = vsel %vm5462, %v5668, %v5136
    %v5742 = vsel %vm5462, %v5670, %v5138
    %v5744 = vsel %vm5462, %v5672, %v5140
    %v5746 = vsel %vm5462, %v5674, %v5142
    %v5748 = vsel %vm5462, %v5676, %v5144
    %v5750 = vsel %vm5462, %v5678, %v5146
    %v5752 = vsel %vm5462, %v5680, %v5148
    %v5754 = vsel %vm5462, %v5682, %v5150
    %v5756 = vsel %vm5462, %v5684, %v5152
    %v5758 = vsel %vm5462, %v5686, %v5154
    %v5760 = vsel %vm5462, %v5688, %v5156
    %v5762 = vsel %vm5462, %v5690, %v5158
    %v5764 = vsel %vm5462, %v5692, %v5160
    %v5766 = vsel %vm5462, %v5694, %v5162
    %v5768 = vsel %vm5462, %v5696, %v5164
    %v5770 = vsel %vm5462, %v5698, %v5166
    %v5772 = vsel %vm5462, %v5700, %v5168
    %v5774 = vsel %vm5462, %v5702, %v5170
    %v5776 = vsel %vm5462, %v5704, %v5172
    %v5778 = vsel %vm5462, %v5706, %v5174
    %v5780 = vsel %vm5462, %v5708, %v5176
    %v5782 = vsel %vm5462, %v5710, %v5178
    %v5784 = vsel %vm5462, %v5712, %v5180
    %v5786 = vsel %vm5462, %v5714, %v5182
    %v5789 = vsel %vm5281, %v4567, %v5190
    %v5792 = vsel %vm5281, %v4569, %v5192
    %v5795 = vsel %vm5281, %v4571, %v5194
    %v5798 = vsel %vm5281, %v4573, %v5196
    %v5801 = vsel %vm5281, %v4575, %v5198
    %v5804 = vsel %vm5281, %v4577, %v5200
    %v5806 = vsel %vm1508, %v5789, %v5208
    %v5808 = vsel %vm1508, %v5792, %v5210
    %v5810 = vsel %vm1508, %v5795, %v5212
    %v5812 = vsel %vm1508, %v5798, %v5214
    %v5814 = vsel %vm1508, %v5801, %v5216
    %v5816 = vsel %vm1508, %v5804, %v5218
    %v5818 = vsel %vm5462, %v5806, %v5221
    %v5820 = vsel %vm5462, %v5808, %v5223
    %v5822 = vsel %vm5462, %v5810, %v5225
    %v5824 = vsel %vm5462, %v5812, %v5227
    %v5826 = vsel %vm5462, %v5814, %v5229
    %v5828 = vsel %vm5462, %v5816, %v5231
    %v5831 = vsel %vm5281, %v4581, %v5239
    %v5834 = vsel %vm5281, %v4583, %v5241
    %v5837 = vsel %vm5281, %v4585, %v5243
    %v5840 = vsel %vm5281, %v4587, %v5245
    %v5843 = vsel %vm5281, %v4589, %v5247
    %v5846 = vsel %vm5281, %v4591, %v5249
    %v5848 = vsel %vm1508, %v5831, %v5257
    %v5850 = vsel %vm1508, %v5834, %v5259
    %v5852 = vsel %vm1508, %v5837, %v5261
    %v5854 = vsel %vm1508, %v5840, %v5263
    %v5856 = vsel %vm1508, %v5843, %v5265
    %v5858 = vsel %vm1508, %v5846, %v5267
    %v5860 = vsel %vm5462, %v5848, %v5270
    %v5862 = vsel %vm5462, %v5850, %v5272
    %v5864 = vsel %vm5462, %v5852, %v5274
    %v5866 = vsel %vm5462, %v5854, %v5276
    %v5868 = vsel %vm5462, %v5856, %v5278
    %v5870 = vsel %vm5462, %v5858, %v5280
    %v5955 = vunpack.c.l.b16 %v5464
    %v5956 = vunpack.c.l.b16 %v5716
    %v5957 = vunpack.c.l.b16 %v5476
    %v5958 = vunpack.c.l.b16 %v5728
    %v5959 = vunpack.c.l.b16 %v5466
    %v5960 = vunpack.c.l.b16 %v5718
    %v5961 = vunpack.c.l.b16 %v5478
    %v5962 = vunpack.c.l.b16 %v5730
    %v5963 = vunpack.c.l.b16 %v5468
    %v5964 = vunpack.c.l.b16 %v5720
    %v5965 = vunpack.c.l.b16 %v5480
    %v5966 = vunpack.c.l.b16 %v5732
    %v5967 = vunpack.c.l.b16 %v5470
    %v5968 = vunpack.c.l.b16 %v5722
    %v5969 = vunpack.c.l.b16 %v5482
    %v5970 = vunpack.c.l.b16 %v5734
    %v5971 = vunpack.c.l.b16 %v5472
    %v5972 = vunpack.c.l.b16 %v5724
    %v5973 = vunpack.c.l.b16 %v5484
    %v5974 = vunpack.c.l.b16 %v5736
    %v5975 = vunpack.c.l.b16 %v5474
    %v5976 = vunpack.c.l.b16 %v5726
    %v5977 = vunpack.c.l.b16 %v5486
    %v5978 = vunpack.c.l.b16 %v5738
    %v5979 = vunpack.c.l.b16 %v5488
    %v5980 = vunpack.c.l.b16 %v5740
    %v5981 = vunpack.c.l.b16 %v5490
    %v5982 = vunpack.c.l.b16 %v5742
    %v5983 = vunpack.c.l.b16 %v5492
    %v5984 = vunpack.c.l.b16 %v5744
    %v5985 = vunpack.c.l.b16 %v5494
    %v5986 = vunpack.c.l.b16 %v5746
    %v5987 = vunpack.c.l.b16 %v5496
    %v5988 = vunpack.c.l.b16 %v5748
    %v5989 = vunpack.c.l.b16 %v5498
    %v5990 = vunpack.c.l.b16 %v5750
    %v5991 = vunpack.c.l.b16 %v5500
    %v5992 = vunpack.c.l.b16 %v5752
    %v5993 = vunpack.c.l.b16 %v5502
    %v5994 = vunpack.c.l.b16 %v5754
    %v5995 = vunpack.c.l.b16 %v5504
    %v5996 = vunpack.c.l.b16 %v5756
    %v5997 = vunpack.c.l.b16 %v5506
    %v5998 = vunpack.c.l.b16 %v5758
    %v5999 = vunpack.c.l.b16 %v5508
    %v6000 = vunpack.c.l.b16 %v5760
    %v6001 = vunpack.c.l.b16 %v5510
    %v6002 = vunpack.c.l.b16 %v5762
    %v6003 = vunpack.c.l.b16 %v5512
    %v6004 = vunpack.c.l.b16 %v5764
    %v6005 = vunpack.c.l.b16 %v5514
    %v6006 = vunpack.c.l.b16 %v5766
    %v6007 = vunpack.c.l.b16 %v5516
    %v6008 = vunpack.c.l.b16 %v5768
    %v6009 = vunpack.c.l.b16 %v5518
    %v6010 = vunpack.c.l.b16 %v5770
    %v6011 = vunpack.c.l.b16 %v5520
    %v6012 = vunpack.c.l.b16 %v5772
    %v6013 = vunpack.c.l.b16 %v5522
    %v6014 = vunpack.c.l.b16 %v5774
    %v6015 = vunpack.c.l.b16 %v5524
    %v6016 = vunpack.c.l.b16 %v5776
    %v6017 = vunpack.c.l.b16 %v5526
    %v6018 = vunpack.c.l.b16 %v5778
    %v6019 = vunpack.c.l.b16 %v5528
    %v6020 = vunpack.c.l.b16 %v5780
    %v6021 = vunpack.c.l.b16 %v5530
    %v6022 = vunpack.c.l.b16 %v5782
    %v6023 = vunpack.c.l.b16 %v5532
    %v6024 = vunpack.c.l.b16 %v5784
    %v6025 = vunpack.c.l.b16 %v5534
    %v6026 = vunpack.c.l.b16 %v5786
    %v6027 = vunpack.c.l.b16 %v5818
    %v6028 = vunpack.c.l.b16 %v5860
    %v6029 = vunpack.c.l.b16 %v5820
    %v6030 = vunpack.c.l.b16 %v5862
    %v6031 = vunpack.c.l.b16 %v5822
    %v6032 = vunpack.c.l.b16 %v5864
    %v6033 = vunpack.c.l.b16 %v5824
    %v6034 = vunpack.c.l.b16 %v5866
    %v6035 = vunpack.c.l.b16 %v5826
    %v6036 = vunpack.c.l.b16 %v5868
    %v6037 = vunpack.c.l.b16 %v5828
    %v6038 = vunpack.c.l.b16 %v5870
    %v6039 = vld [vmem:[%s4] sm:$0xf]
    %v6040 = vld [vmem:[%s4 + $0x4] sm:$0xf]
    %v6041 = vld [vmem:[%s4 + $0x8] sm:$0xf]
    %v6042 = vld [vmem:[%s4 + $0xc] sm:$0xf]
    %v6043 = vld [vmem:[%s4 + $0x10] sm:$0xf]
    %v6044 = vld [vmem:[%s4 + $0x14] sm:$0xf]
    %v6045 = vld [vmem:[%s4 + $0x18] sm:$0xf]
    %v6046 = vld [vmem:[%s4 + $0x1c] sm:$0xf]
    %v6047 = vld [vmem:[%s4 + $0x20] sm:$0xf]
    %v6048 = vld [vmem:[%s4 + $0x24] sm:$0xf]
    %v6049 = vld [vmem:[%s4 + $0x28] sm:$0xf]
    %v6050 = vld [vmem:[%s4 + $0x2c] sm:$0xf]
    %v6051 = vld [vmem:[%s4 + $0x30] sm:$0xf]
    %v6052 = vld [vmem:[%s4 + $0x34] sm:$0xf]
    %v6053 = vld [vmem:[%s4 + $0x38] sm:$0xf]
    %v6054 = vld [vmem:[%s4 + $0x3c] sm:$0xf]
    %v6055 = vld [vmem:[%s4 + $0x40] sm:$0xf]
    %v6056 = vld [vmem:[%s4 + $0x44] sm:$0xf]
    %v6057 = vld [vmem:[%s4 + $0x48] sm:$0xf]
    %v6058 = vld [vmem:[%s4 + $0x4c] sm:$0xf]
    %v6059 = vld [vmem:[%s4 + $0x50] sm:$0xf]
    %v6060 = vld [vmem:[%s4 + $0x54] sm:$0xf]
    %v6061 = vld [vmem:[%s4 + $0x58] sm:$0xf]
    %v6062 = vld [vmem:[%s4 + $0x5c] sm:$0xf]
    %v6063 = vld [vmem:[%s4 + $0x60] sm:$0xf]
    %v6064 = vld [vmem:[%s4 + $0x64] sm:$0xf]
    %v6065 = vld [vmem:[%s4 + $0x68] sm:$0xf]
    %v6066 = vld [vmem:[%s4 + $0x6c] sm:$0xf]
    %v6067 = vld [vmem:[%s4 + $0x70] sm:$0xf]
    %v6068 = vld [vmem:[%s4 + $0x74] sm:$0xf]
    %v6069 = vld [vmem:[%s4 + $0x78] sm:$0xf]
    %v6070 = vld [vmem:[%s4 + $0x7c] sm:$0xf]
    %v6071 = vld [vmem:[%s4 + $0x80] sm:$0xf]
    %v6072 = vld [vmem:[%s4 + $0x84] sm:$0xf]
    %v6073 = vld [vmem:[%s4 + $0x88] sm:$0xf]
    %v6074 = vld [vmem:[%s4 + $0x8c] sm:$0xf]
    %v6075 = vld [vmem:[%s4 + $0x90] sm:$0xf]
    %v6076 = vld [vmem:[%s4 + $0x94] sm:$0xf]
    %v6077 = vld [vmem:[%s4 + $0x98] sm:$0xf]
    %v6078 = vld [vmem:[%s4 + $0x9c] sm:$0xf]
    %v6079 = vld [vmem:[%s4 + $0xa0] sm:$0xf]
    %v6080 = vld [vmem:[%s4 + $0xa4] sm:$0xf]
    %v6081 = vld [vmem:[%s4 + $0xa8] sm:$0xf]
    %v6082 = vld [vmem:[%s4 + $0xac] sm:$0xf]
    %v6083 = vld [vmem:[%s4 + $0xb0] sm:$0xf]
    %v6084 = vld [vmem:[%s4 + $0xb4] sm:$0xf]
    %v6085 = vld [vmem:[%s4 + $0xb8] sm:$0xf]
    %v6086 = vld [vmem:[%s4 + $0xbc] sm:$0xf]
    %v6087 = vld [vmem:[%s4 + $0xc0] sm:$0xf]
    %v6088 = vld [vmem:[%s4 + $0xc4] sm:$0xf]
    %v6089 = vld [vmem:[%s4 + $0xc8] sm:$0xf]
    %v6090 = vld [vmem:[%s4 + $0xcc] sm:$0xf]
    %v6091 = vld [vmem:[%s4 + $0xd0] sm:$0xf]
    %v6092 = vld [vmem:[%s4 + $0xd4] sm:$0xf]
    %v6093 = vld [vmem:[%s4 + $0xd8] sm:$0xf]
    %v6094 = vld [vmem:[%s4 + $0xdc] sm:$0xf]
    %v6095 = vld [vmem:[%s4 + $0xe0] sm:$0xf]
    %v6096 = vld [vmem:[%s4 + $0xe4] sm:$0xf]
    %v6097 = vld [vmem:[%s4 + $0xe8] sm:$0xf]
    %v6098 = vld [vmem:[%s4 + $0xec] sm:$0xf]
    %v6099 = vld [vmem:[%s4 + $0xf0] sm:$0xf]
    %v6100 = vld [vmem:[%s4 + $0xf4] sm:$0xf]
    %v6101 = vld [vmem:[%s4 + $0xf8] sm:$0xf]
    %v6102 = vld [vmem:[%s4 + $0xfc] sm:$0xf]
    %v6103 = vld [vmem:[%s5] sm:$0x1]
    %v6105 = vlaneseq
    %v6106 = vshrl.u32 %v6105, 7
    %v6107 = vsub.s32 0, %v6106
    %v6108 = vrot.slane %v6103, %v6107
    %v6110 = vpack.c.b16 %v5959, %v5955
    %v6111 = vpack.c.b16 %v5960, %v5956
    %v6112 = vpack.c.b16 %v5961, %v5957
    %v6113 = vpack.c.b16 %v5962, %v5958
    %v6114 = vpack.c.b16 %v5967, %v5963
    %v6115 = vpack.c.b16 %v5968, %v5964
    %v6116 = vpack.c.b16 %v5969, %v5965
    %v6117 = vpack.c.b16 %v5970, %v5966
    %v6118 = vpack.c.b16 %v5975, %v5971
    %v6119 = vpack.c.b16 %v5976, %v5972
    %v6120 = vpack.c.b16 %v5977, %v5973
    %v6121 = vpack.c.b16 %v5978, %v5974
    %v6122 = vpack.c.b16 %v5981, %v5979
    %v6123 = vpack.c.b16 %v5982, %v5980
    %v6124 = vpack.c.b16 %v5985, %v5983
    %v6125 = vpack.c.b16 %v5986, %v5984
    %v6126 = vpack.c.b16 %v5989, %v5987
    %v6127 = vpack.c.b16 %v5990, %v5988
    %v6128 = vpack.c.b16 %v5993, %v5991
    %v6129 = vpack.c.b16 %v5994, %v5992
    %v6130 = vpack.c.b16 %v5997, %v5995
    %v6131 = vpack.c.b16 %v5998, %v5996
    %v6132 = vpack.c.b16 %v6001, %v5999
    %v6133 = vpack.c.b16 %v6002, %v6000
    %v6134 = vpack.c.b16 %v6005, %v6003
    %v6135 = vpack.c.b16 %v6006, %v6004
    %v6136 = vpack.c.b16 %v6009, %v6007
    %v6137 = vpack.c.b16 %v6010, %v6008
    %v6138 = vpack.c.b16 %v6013, %v6011
    %v6139 = vpack.c.b16 %v6014, %v6012
    %v6140 = vpack.c.b16 %v6017, %v6015
    %v6141 = vpack.c.b16 %v6018, %v6016
    %v6142 = vpack.c.b16 %v6021, %v6019
    %v6143 = vpack.c.b16 %v6022, %v6020
    %v6144 = vpack.c.b16 %v6025, %v6023
    %v6145 = vpack.c.b16 %v6026, %v6024
    %v6146 = vpack.c.b16 %v6029, %v6027
    %v6147 = vpack.c.b16 %v6030, %v6028
    %v6148 = vpack.c.b16 %v6033, %v6031
    %v6149 = vpack.c.b16 %v6034, %v6032
    %v6150 = vpack.c.b16 %v6037, %v6035
    %v6151 = vpack.c.b16 %v6038, %v6036
    %v6258 = vunpack.c.l.b16 %v6039
    %v6259 = vunpack.c.l.b16 %v6040
    %v6260 = vunpack.c.l.b16 %v6041
    %v6261 = vunpack.c.l.b16 %v6042
    %v6262 = vunpack.c.l.b16 %v6043
    %v6263 = vunpack.c.l.b16 %v6044
    %v6264 = vunpack.c.l.b16 %v6045
    %v6265 = vunpack.c.l.b16 %v6046
    %v6266 = vunpack.c.l.b16 %v6047
    %v6267 = vunpack.c.l.b16 %v6048
    %v6268 = vunpack.c.l.b16 %v6049
    %v6269 = vunpack.c.l.b16 %v6050
    %v6270 = vunpack.c.l.b16 %v6051
    %v6271 = vunpack.c.l.b16 %v6052
    %v6272 = vunpack.c.l.b16 %v6053
    %v6273 = vunpack.c.l.b16 %v6054
    %v6274 = vunpack.c.l.b16 %v6055
    %v6275 = vunpack.c.l.b16 %v6056
    %v6276 = vunpack.c.l.b16 %v6057
    %v6277 = vunpack.c.l.b16 %v6058
    %v6278 = vunpack.c.l.b16 %v6059
    %v6279 = vunpack.c.l.b16 %v6060
    %v6280 = vunpack.c.l.b16 %v6061
    %v6281 = vunpack.c.l.b16 %v6062
    %v6282 = vunpack.c.l.b16 %v6063
    %v6283 = vunpack.c.l.b16 %v6064
    %v6284 = vunpack.c.l.b16 %v6065
    %v6285 = vunpack.c.l.b16 %v6066
    %v6286 = vunpack.c.l.b16 %v6067
    %v6287 = vunpack.c.l.b16 %v6068
    %v6288 = vunpack.c.l.b16 %v6069
    %v6289 = vunpack.c.l.b16 %v6070
    %v6290 = vunpack.c.l.b16 %v6071
    %v6291 = vunpack.c.l.b16 %v6072
    %v6292 = vunpack.c.l.b16 %v6073
    %v6293 = vunpack.c.l.b16 %v6074
    %v6294 = vunpack.c.l.b16 %v6075
    %v6295 = vunpack.c.l.b16 %v6076
    %v6296 = vunpack.c.l.b16 %v6077
    %v6297 = vunpack.c.l.b16 %v6078
    %v6298 = vunpack.c.l.b16 %v6079
    %v6299 = vunpack.c.l.b16 %v6080
    %v6300 = vunpack.c.l.b16 %v6081
    %v6301 = vunpack.c.l.b16 %v6082
    %v6302 = vunpack.c.l.b16 %v6083
    %v6303 = vunpack.c.l.b16 %v6084
    %v6304 = vunpack.c.l.b16 %v6085
    %v6305 = vunpack.c.l.b16 %v6086
    %v6306 = vunpack.c.l.b16 %v6087
    %v6307 = vunpack.c.l.b16 %v6088
    %v6308 = vunpack.c.l.b16 %v6089
    %v6309 = vunpack.c.l.b16 %v6090
    %v6310 = vunpack.c.l.b16 %v6091
    %v6311 = vunpack.c.l.b16 %v6092
    %v6312 = vunpack.c.l.b16 %v6093
    %v6313 = vunpack.c.l.b16 %v6094
    %v6314 = vunpack.c.l.b16 %v6095
    %v6315 = vunpack.c.l.b16 %v6096
    %v6316 = vunpack.c.l.b16 %v6097
    %v6317 = vunpack.c.l.b16 %v6098
    %v6318 = vunpack.c.l.b16 %v6099
    %v6319 = vunpack.c.l.b16 %v6100
    %v6320 = vunpack.c.l.b16 %v6101
    %v6321 = vunpack.c.l.b16 %v6102
    %v6322 = vpack.c.b16 %v6259, %v6258
    %v6323 = vpack.c.b16 %v6261, %v6260
    %v6324 = vpack.c.b16 %v6263, %v6262
    %v6325 = vpack.c.b16 %v6265, %v6264
    %v6326 = vpack.c.b16 %v6267, %v6266
    %v6327 = vpack.c.b16 %v6269, %v6268
    %v6328 = vpack.c.b16 %v6271, %v6270
    %v6329 = vpack.c.b16 %v6273, %v6272
    %v6330 = vpack.c.b16 %v6275, %v6274
    %v6331 = vpack.c.b16 %v6277, %v6276
    %v6332 = vpack.c.b16 %v6279, %v6278
    %v6333 = vpack.c.b16 %v6281, %v6280
    %v6334 = vpack.c.b16 %v6283, %v6282
    %v6335 = vpack.c.b16 %v6285, %v6284
    %v6336 = vpack.c.b16 %v6287, %v6286
    %v6337 = vpack.c.b16 %v6289, %v6288
    %v6338 = vpack.c.b16 %v6291, %v6290
    %v6339 = vpack.c.b16 %v6293, %v6292
    %v6340 = vpack.c.b16 %v6295, %v6294
    %v6341 = vpack.c.b16 %v6297, %v6296
    %v6342 = vpack.c.b16 %v6299, %v6298
    %v6343 = vpack.c.b16 %v6301, %v6300
    %v6344 = vpack.c.b16 %v6303, %v6302
    %v6345 = vpack.c.b16 %v6305, %v6304
    %v6346 = vpack.c.b16 %v6307, %v6306
    %v6347 = vpack.c.b16 %v6309, %v6308
    %v6348 = vpack.c.b16 %v6311, %v6310
    %v6349 = vpack.c.b16 %v6313, %v6312
    %v6350 = vpack.c.b16 %v6315, %v6314
    %v6351 = vpack.c.b16 %v6317, %v6316
    %v6352 = vpack.c.b16 %v6319, %v6318
    %v6353 = vpack.c.b16 %v6321, %v6320
    %6386 = vmatprep.subr.bf16.mxu0 0
    %6387 = vmatpush1.bf16.msra.mxu0 %v6329
    %6388 = vmatprep.subr.bf16.mxu0 0
    %6389 = vmatpush1.bf16.msra.mxu0 %v6328
    %6390 = vmatprep.subr.bf16.mxu0 0
    %6391 = vmatpush1.bf16.msra.mxu0 %v6327
    %6392 = vmatprep.subr.bf16.mxu0 0
    %6393 = vmatpush1.bf16.msra.mxu0 %v6326
    %6394 = vmatprep.subr.bf16.mxu0 0
    %6395 = vmatpush1.bf16.msra.mxu0 %v6325
    %6396 = vmatprep.subr.bf16.mxu0 0
    %6397 = vmatpush1.bf16.msra.mxu0 %v6324
    %6398 = vmatprep.subr.bf16.mxu0 0
    %6399 = vmatpush1.bf16.msra.mxu0 %v6323
    %6400 = vmatprep.subr.bf16.mxu0 0
    %6401 = vmatpush1.bf16.msra.mxu0 %v6322
    %6402 = vmatprep.subr.bf16.mxu0 0
    %6403 = vmatpush2.bf16.msra.mxu0 %v6337
    %6404 = vmatprep.subr.bf16.mxu0 0
    %6405 = vmatpush2.bf16.msra.mxu0 %v6336
    %6406 = vmatprep.subr.bf16.mxu0 0
    %6407 = vmatpush2.bf16.msra.mxu0 %v6335
    %6408 = vmatprep.subr.bf16.mxu0 0
    %6409 = vmatpush2.bf16.msra.mxu0 %v6334
    %6410 = vmatprep.subr.bf16.mxu0 0
    %6411 = vmatpush2.bf16.msra.mxu0 %v6333
    %6412 = vmatprep.subr.bf16.mxu0 0
    %6413 = vmatpush2.bf16.msra.mxu0 %v6332
    %6414 = vmatprep.subr.bf16.mxu0 0
    %6415 = vmatpush2.bf16.msra.mxu0 %v6331
    %6416 = vmatprep.subr.bf16.mxu0 0
    %6417 = vmatpush2.bf16.msra.mxu0 %v6330
    %6418 = vmatprep.mubr.bf16.mxu0 %v6111
    %6419 = vmatmul.mubr.bf16.gmra.mxu0 %v6110
    %v6420 = vpop.f32.mrf.mxu0
    %v6421 = vadd.f32 %v6108, %v6420
    %v6422 = vpop.f32.mrf.mxu0
    %v6423 = vpop.f32.mrf.mxu0
    %v6424 = vadd.f32 %v6108, %v6423
    %v6425 = vpop.f32.mrf.mxu0
    %6426 = vmatprep.mubr.bf16.mxu0 %v6115
    %6427 = vmatmul.mubr.bf16.gmra.mxu0 %v6114
    %v6428 = vpop.f32.mrf.mxu0
    %v6429 = vadd.f32 %v6108, %v6428
    %v6430 = vpop.f32.mrf.mxu0
    %v6431 = vpop.f32.mrf.mxu0
    %v6432 = vadd.f32 %v6108, %v6431
    %v6433 = vpop.f32.mrf.mxu0
    %6434 = vmatprep.mubr.bf16.mxu0 %v6119
    %6435 = vmatmul.mubr.bf16.gmra.mxu0 %v6118
    %v6436 = vpop.f32.mrf.mxu0
    %v6437 = vadd.f32 %v6108, %v6436
    %v6438 = vpop.f32.mrf.mxu0
    %v6439 = vpop.f32.mrf.mxu0
    %v6440 = vadd.f32 %v6108, %v6439
    %v6441 = vpop.f32.mrf.mxu0
    %6442 = vmatprep.mubr.bf16.mxu0 %v6113
    %6443 = vmatmul.mubr.bf16.gmra.mxu0 %v6112
    %v6444 = vpop.f32.mrf.mxu0
    %v6445 = vadd.f32 %v6108, %v6444
    %v6446 = vpop.f32.mrf.mxu0
    %v6447 = vpop.f32.mrf.mxu0
    %v6448 = vadd.f32 %v6108, %v6447
    %v6449 = vpop.f32.mrf.mxu0
    %6450 = vmatprep.mubr.bf16.mxu0 %v6117
    %6451 = vmatmul.mubr.bf16.gmra.mxu0 %v6116
    %v6452 = vpop.f32.mrf.mxu0
    %v6453 = vadd.f32 %v6108, %v6452
    %v6454 = vpop.f32.mrf.mxu0
    %v6455 = vpop.f32.mrf.mxu0
    %v6456 = vadd.f32 %v6108, %v6455
    %v6457 = vpop.f32.mrf.mxu0
    %6458 = vmatprep.mubr.bf16.mxu0 %v6121
    %6459 = vmatmul.mubr.bf16.gmra.mxu0 %v6120
    %v6460 = vpop.f32.mrf.mxu0
    %v6461 = vadd.f32 %v6108, %v6460
    %v6462 = vpop.f32.mrf.mxu0
    %v6463 = vpop.f32.mrf.mxu0
    %v6464 = vadd.f32 %v6108, %v6463
    %v6465 = vpop.f32.mrf.mxu0
    %6466 = vmatprep.mubr.bf16.mxu0 %v6123
    %6467 = vmatmul.mubr.bf16.gmra.mxu0 %v6122
    %v6468 = vpop.f32.mrf.mxu0
    %v6469 = vadd.f32 %v6108, %v6468
    %v6470 = vpop.f32.mrf.mxu0
    %v6471 = vpop.f32.mrf.mxu0
    %v6472 = vadd.f32 %v6108, %v6471
    %v6473 = vpop.f32.mrf.mxu0
    %6474 = vmatprep.mubr.bf16.mxu0 %v6125
    %6475 = vmatmul.mubr.bf16.gmra.mxu0 %v6124
    %v6476 = vpop.f32.mrf.mxu0
    %v6477 = vadd.f32 %v6108, %v6476
    %v6478 = vpop.f32.mrf.mxu0
    %v6479 = vpop.f32.mrf.mxu0
    %v6480 = vadd.f32 %v6108, %v6479
    %v6481 = vpop.f32.mrf.mxu0
    %6482 = vmatprep.mubr.bf16.mxu0 %v6127
    %6483 = vmatmul.mubr.bf16.gmra.mxu0 %v6126
    %v6484 = vpop.f32.mrf.mxu0
    %v6485 = vadd.f32 %v6108, %v6484
    %v6486 = vpop.f32.mrf.mxu0
    %v6487 = vpop.f32.mrf.mxu0
    %v6488 = vadd.f32 %v6108, %v6487
    %v6489 = vpop.f32.mrf.mxu0
    %6490 = vmatprep.mubr.bf16.mxu0 %v6129
    %6491 = vmatmul.mubr.bf16.gmra.mxu0 %v6128
    %v6492 = vpop.f32.mrf.mxu0
    %v6493 = vadd.f32 %v6108, %v6492
    %v6494 = vpop.f32.mrf.mxu0
    %v6495 = vpop.f32.mrf.mxu0
    %v6496 = vadd.f32 %v6108, %v6495
    %v6497 = vpop.f32.mrf.mxu0
    %6498 = vmatprep.mubr.bf16.mxu0 %v6131
    %6499 = vmatmul.mubr.bf16.gmra.mxu0 %v6130
    %v6500 = vpop.f32.mrf.mxu0
    %v6501 = vadd.f32 %v6108, %v6500
    %v6502 = vpop.f32.mrf.mxu0
    %v6503 = vpop.f32.mrf.mxu0
    %v6504 = vadd.f32 %v6108, %v6503
    %v6505 = vpop.f32.mrf.mxu0
    %6506 = vmatprep.mubr.bf16.mxu0 %v6133
    %6507 = vmatmul.mubr.bf16.gmra.mxu0 %v6132
    %v6508 = vpop.f32.mrf.mxu0
    %v6509 = vadd.f32 %v6108, %v6508
    %v6510 = vpop.f32.mrf.mxu0
    %v6511 = vpop.f32.mrf.mxu0
    %v6512 = vadd.f32 %v6108, %v6511
    %v6513 = vpop.f32.mrf.mxu0
    %6514 = vmatprep.mubr.bf16.mxu0 %v6135
    %6515 = vmatmul.mubr.bf16.gmra.mxu0 %v6134
    %v6516 = vpop.f32.mrf.mxu0
    %v6517 = vadd.f32 %v6108, %v6516
    %v6518 = vpop.f32.mrf.mxu0
    %v6519 = vpop.f32.mrf.mxu0
    %v6520 = vadd.f32 %v6108, %v6519
    %v6521 = vpop.f32.mrf.mxu0
    %6522 = vmatprep.mubr.bf16.mxu0 %v6137
    %6523 = vmatmul.mubr.bf16.gmra.mxu0 %v6136
    %v6524 = vpop.f32.mrf.mxu0
    %v6525 = vadd.f32 %v6108, %v6524
    %v6526 = vpop.f32.mrf.mxu0
    %v6527 = vpop.f32.mrf.mxu0
    %v6528 = vadd.f32 %v6108, %v6527
    %v6529 = vpop.f32.mrf.mxu0
    %6530 = vmatprep.mubr.bf16.mxu0 %v6139
    %6531 = vmatmul.mubr.bf16.gmra.mxu0 %v6138
    %v6532 = vpop.f32.mrf.mxu0
    %v6533 = vadd.f32 %v6108, %v6532
    %v6534 = vpop.f32.mrf.mxu0
    %v6535 = vpop.f32.mrf.mxu0
    %v6536 = vadd.f32 %v6108, %v6535
    %v6537 = vpop.f32.mrf.mxu0
    %6538 = vmatprep.mubr.bf16.mxu0 %v6141
    %6539 = vmatmul.mubr.bf16.gmra.mxu0 %v6140
    %v6540 = vpop.f32.mrf.mxu0
    %v6541 = vadd.f32 %v6108, %v6540
    %v6542 = vpop.f32.mrf.mxu0
    %v6543 = vpop.f32.mrf.mxu0
    %v6544 = vadd.f32 %v6108, %v6543
    %v6545 = vpop.f32.mrf.mxu0
    %6546 = vmatprep.mubr.bf16.mxu0 %v6143
    %6547 = vmatmul.mubr.bf16.gmra.mxu0 %v6142
    %v6548 = vpop.f32.mrf.mxu0
    %v6549 = vadd.f32 %v6108, %v6548
    %v6550 = vpop.f32.mrf.mxu0
    %v6551 = vpop.f32.mrf.mxu0
    %v6552 = vadd.f32 %v6108, %v6551
    %v6553 = vpop.f32.mrf.mxu0
    %6554 = vmatprep.mubr.bf16.mxu0 %v6145
    %6555 = vmatmul.mubr.bf16.gmra.mxu0 %v6144
    %v6556 = vpop.f32.mrf.mxu0
    %v6557 = vadd.f32 %v6108, %v6556
    %v6558 = vpop.f32.mrf.mxu0
    %v6559 = vpop.f32.mrf.mxu0
    %v6560 = vadd.f32 %v6108, %v6559
    %v6561 = vpop.f32.mrf.mxu0
    %6562 = vdwg.mxu0
    %6563 = vmatprep.subr.bf16.mxu0 0
    %6564 = vmatpush1.bf16.msra.mxu0 %v6345
    %6565 = vmatprep.subr.bf16.mxu0 0
    %6566 = vmatpush1.bf16.msra.mxu0 %v6344
    %6567 = vmatprep.subr.bf16.mxu0 0
    %6568 = vmatpush1.bf16.msra.mxu0 %v6343
    %6569 = vmatprep.subr.bf16.mxu0 0
    %6570 = vmatpush1.bf16.msra.mxu0 %v6342
    %6571 = vmatprep.subr.bf16.mxu0 0
    %6572 = vmatpush1.bf16.msra.mxu0 %v6341
    %6573 = vmatprep.subr.bf16.mxu0 0
    %6574 = vmatpush1.bf16.msra.mxu0 %v6340
    %6575 = vmatprep.subr.bf16.mxu0 0
    %6576 = vmatpush1.bf16.msra.mxu0 %v6339
    %6577 = vmatprep.subr.bf16.mxu0 0
    %6578 = vmatpush1.bf16.msra.mxu0 %v6338
    %6579 = vmatprep.subr.bf16.mxu0 0
    %6580 = vmatpush2.bf16.msra.mxu0 %v6353
    %6581 = vmatprep.subr.bf16.mxu0 0
    %6582 = vmatpush2.bf16.msra.mxu0 %v6352
    %6583 = vmatprep.subr.bf16.mxu0 0
    %6584 = vmatpush2.bf16.msra.mxu0 %v6351
    %6585 = vmatprep.subr.bf16.mxu0 0
    %6586 = vmatpush2.bf16.msra.mxu0 %v6350
    %6587 = vmatprep.subr.bf16.mxu0 0
    %6588 = vmatpush2.bf16.msra.mxu0 %v6349
    %6589 = vmatprep.subr.bf16.mxu0 0
    %6590 = vmatpush2.bf16.msra.mxu0 %v6348
    %6591 = vmatprep.subr.bf16.mxu0 0
    %6592 = vmatpush2.bf16.msra.mxu0 %v6347
    %6593 = vmatprep.subr.bf16.mxu0 0
    %6594 = vmatpush2.bf16.msra.mxu0 %v6346
    %6595 = vmatprep.mubr.bf16.mxu0 %v6113
    %6596 = vmatmul.mubr.bf16.gmra.mxu0 %v6112
    %v6597 = vpop.f32.mrf.mxu0
    %v6598 = vadd.f32 %v6421, %v6597
    %v6599 = vpop.f32.mrf.mxu0
    %v6600 = vpop.f32.mrf.mxu0
    %v6601 = vadd.f32 %v6424, %v6600
    %v6602 = vpop.f32.mrf.mxu0
    %6603 = vmatprep.mubr.bf16.mxu0 %v6117
    %6604 = vmatmul.mubr.bf16.gmra.mxu0 %v6116
    %v6605 = vpop.f32.mrf.mxu0
    %v6606 = vadd.f32 %v6429, %v6605
    %v6607 = vpop.f32.mrf.mxu0
    %v6608 = vpop.f32.mrf.mxu0
    %v6609 = vadd.f32 %v6432, %v6608
    %v6610 = vpop.f32.mrf.mxu0
    %6611 = vmatprep.mubr.bf16.mxu0 %v6121
    %6612 = vmatmul.mubr.bf16.gmra.mxu0 %v6120
    %v6613 = vpop.f32.mrf.mxu0
    %v6614 = vadd.f32 %v6437, %v6613
    %v6615 = vpop.f32.mrf.mxu0
    %v6616 = vpop.f32.mrf.mxu0
    %v6617 = vadd.f32 %v6440, %v6616
    %v6618 = vpop.f32.mrf.mxu0
    %6619 = vmatprep.mubr.bf16.mxu0 %v6123
    %6620 = vmatmul.mubr.bf16.gmra.mxu0 %v6122
    %v6621 = vpop.f32.mrf.mxu0
    %v6622 = vadd.f32 %v6445, %v6621
    %v6623 = vpop.f32.mrf.mxu0
    %v6624 = vpop.f32.mrf.mxu0
    %v6625 = vadd.f32 %v6448, %v6624
    %v6626 = vpop.f32.mrf.mxu0
    %6627 = vmatprep.mubr.bf16.mxu0 %v6125
    %6628 = vmatmul.mubr.bf16.gmra.mxu0 %v6124
    %v6629 = vpop.f32.mrf.mxu0
    %v6630 = vadd.f32 %v6453, %v6629
    %v6631 = vpop.f32.mrf.mxu0
    %v6632 = vpop.f32.mrf.mxu0
    %v6633 = vadd.f32 %v6456, %v6632
    %v6634 = vpop.f32.mrf.mxu0
    %6635 = vmatprep.mubr.bf16.mxu0 %v6127
    %6636 = vmatmul.mubr.bf16.gmra.mxu0 %v6126
    %v6637 = vpop.f32.mrf.mxu0
    %v6638 = vadd.f32 %v6461, %v6637
    %v6639 = vpop.f32.mrf.mxu0
    %v6640 = vpop.f32.mrf.mxu0
    %v6641 = vadd.f32 %v6464, %v6640
    %v6642 = vpop.f32.mrf.mxu0
    %6643 = vmatprep.mubr.bf16.mxu0 %v6129
    %6644 = vmatmul.mubr.bf16.gmra.mxu0 %v6128
    %v6645 = vpop.f32.mrf.mxu0
    %v6646 = vadd.f32 %v6469, %v6645
    %v6647 = vpop.f32.mrf.mxu0
    %v6648 = vpop.f32.mrf.mxu0
    %v6649 = vadd.f32 %v6472, %v6648
    %v6650 = vpop.f32.mrf.mxu0
    %6651 = vmatprep.mubr.bf16.mxu0 %v6131
    %6652 = vmatmul.mubr.bf16.gmra.mxu0 %v6130
    %v6653 = vpop.f32.mrf.mxu0
    %v6654 = vadd.f32 %v6477, %v6653
    %v6655 = vpop.f32.mrf.mxu0
    %v6656 = vpop.f32.mrf.mxu0
    %v6657 = vadd.f32 %v6480, %v6656
    %v6658 = vpop.f32.mrf.mxu0
    %6659 = vmatprep.mubr.bf16.mxu0 %v6133
    %6660 = vmatmul.mubr.bf16.gmra.mxu0 %v6132
    %v6661 = vpop.f32.mrf.mxu0
    %v6662 = vadd.f32 %v6485, %v6661
    %v6663 = vpop.f32.mrf.mxu0
    %v6664 = vpop.f32.mrf.mxu0
    %v6665 = vadd.f32 %v6488, %v6664
    %v6666 = vpop.f32.mrf.mxu0
    %6667 = vmatprep.mubr.bf16.mxu0 %v6135
    %6668 = vmatmul.mubr.bf16.gmra.mxu0 %v6134
    %v6669 = vpop.f32.mrf.mxu0
    %v6670 = vadd.f32 %v6493, %v6669
    %v6671 = vpop.f32.mrf.mxu0
    %v6672 = vpop.f32.mrf.mxu0
    %v6673 = vadd.f32 %v6496, %v6672
    %v6674 = vpop.f32.mrf.mxu0
    %6675 = vmatprep.mubr.bf16.mxu0 %v6137
    %6676 = vmatmul.mubr.bf16.gmra.mxu0 %v6136
    %v6677 = vpop.f32.mrf.mxu0
    %v6678 = vadd.f32 %v6501, %v6677
    %v6679 = vpop.f32.mrf.mxu0
    %v6680 = vpop.f32.mrf.mxu0
    %v6681 = vadd.f32 %v6504, %v6680
    %v6682 = vpop.f32.mrf.mxu0
    %6683 = vmatprep.mubr.bf16.mxu0 %v6139
    %6684 = vmatmul.mubr.bf16.gmra.mxu0 %v6138
    %v6685 = vpop.f32.mrf.mxu0
    %v6686 = vadd.f32 %v6509, %v6685
    %v6687 = vpop.f32.mrf.mxu0
    %v6688 = vpop.f32.mrf.mxu0
    %v6689 = vadd.f32 %v6512, %v6688
    %v6690 = vpop.f32.mrf.mxu0
    %6691 = vmatprep.mubr.bf16.mxu0 %v6141
    %6692 = vmatmul.mubr.bf16.gmra.mxu0 %v6140
    %v6693 = vpop.f32.mrf.mxu0
    %v6694 = vadd.f32 %v6517, %v6693
    %v6695 = vpop.f32.mrf.mxu0
    %v6696 = vpop.f32.mrf.mxu0
    %v6697 = vadd.f32 %v6520, %v6696
    %v6698 = vpop.f32.mrf.mxu0
    %6699 = vmatprep.mubr.bf16.mxu0 %v6143
    %6700 = vmatmul.mubr.bf16.gmra.mxu0 %v6142
    %v6701 = vpop.f32.mrf.mxu0
    %v6702 = vadd.f32 %v6525, %v6701
    %v6703 = vpop.f32.mrf.mxu0
    %v6704 = vpop.f32.mrf.mxu0
    %v6705 = vadd.f32 %v6528, %v6704
    %v6706 = vpop.f32.mrf.mxu0
    %6707 = vmatprep.mubr.bf16.mxu0 %v6145
    %6708 = vmatmul.mubr.bf16.gmra.mxu0 %v6144
    %v6709 = vpop.f32.mrf.mxu0
    %v6710 = vadd.f32 %v6533, %v6709
    %v6711 = vpop.f32.mrf.mxu0
    %v6712 = vpop.f32.mrf.mxu0
    %v6713 = vadd.f32 %v6536, %v6712
    %v6714 = vpop.f32.mrf.mxu0
    %6715 = vmatprep.mubr.bf16.mxu0 %v6147
    %6716 = vmatmul.mubr.bf16.gmra.mxu0 %v6146
    %v6717 = vpop.f32.mrf.mxu0
    %v6718 = vadd.f32 %v6541, %v6717
    %v6719 = vpop.f32.mrf.mxu0
    %v6720 = vpop.f32.mrf.mxu0
    %v6721 = vadd.f32 %v6544, %v6720
    %v6722 = vpop.f32.mrf.mxu0
    %6723 = vmatprep.mubr.bf16.mxu0 %v6149
    %6724 = vmatmul.mubr.bf16.gmra.mxu0 %v6148
    %v6725 = vpop.f32.mrf.mxu0
    %v6726 = vadd.f32 %v6549, %v6725
    %v6727 = vpop.f32.mrf.mxu0
    %v6728 = vpop.f32.mrf.mxu0
    %v6729 = vadd.f32 %v6552, %v6728
    %v6730 = vpop.f32.mrf.mxu0
    %6731 = vmatprep.mubr.bf16.mxu0 %v6151
    %6732 = vmatmul.mubr.bf16.gmra.mxu0 %v6150
    %v6733 = vpop.f32.mrf.mxu0
    %v6734 = vadd.f32 %v6557, %v6733
    %v6735 = vpop.f32.mrf.mxu0
    %v6736 = vpop.f32.mrf.mxu0
    %v6737 = vadd.f32 %v6560, %v6736
    %v6738 = vpop.f32.mrf.mxu0
    %6739 = vdwg.mxu0
    %v6740 = vmax.f32 %v6598, 0.0
    %v6741 = vmax.f32 %v6601, 0.0
    %v6742 = vmax.f32 %v6606, 0.0
    %v6743 = vmax.f32 %v6609, 0.0
    %v6744 = vmax.f32 %v6614, 0.0
    %v6745 = vmax.f32 %v6617, 0.0
    %v6746 = vmax.f32 %v6622, 0.0
    %v6747 = vmax.f32 %v6625, 0.0
    %v6748 = vmax.f32 %v6630, 0.0
    %v6749 = vmax.f32 %v6633, 0.0
    %v6750 = vmax.f32 %v6638, 0.0
    %v6751 = vmax.f32 %v6641, 0.0
    %v6752 = vmax.f32 %v6646, 0.0
    %v6753 = vmax.f32 %v6649, 0.0
    %v6754 = vmax.f32 %v6654, 0.0
    %v6755 = vmax.f32 %v6657, 0.0
    %v6756 = vmax.f32 %v6662, 0.0
    %v6757 = vmax.f32 %v6665, 0.0
    %v6758 = vmax.f32 %v6670, 0.0
    %v6759 = vmax.f32 %v6673, 0.0
    %v6760 = vmax.f32 %v6678, 0.0
    %v6761 = vmax.f32 %v6681, 0.0
    %v6762 = vmax.f32 %v6686, 0.0
    %v6763 = vmax.f32 %v6689, 0.0
    %v6764 = vmax.f32 %v6694, 0.0
    %v6765 = vmax.f32 %v6697, 0.0
    %v6766 = vmax.f32 %v6702, 0.0
    %v6767 = vmax.f32 %v6705, 0.0
    %v6768 = vmax.f32 %v6710, 0.0
    %v6769 = vmax.f32 %v6713, 0.0
    %v6770 = vmax.f32 %v6718, 0.0
    %v6771 = vmax.f32 %v6721, 0.0
    %v6772 = vmax.f32 %v6726, 0.0
    %v6773 = vmax.f32 %v6729, 0.0
    %v6774 = vmax.f32 %v6734, 0.0
    %v6775 = vmax.f32 %v6737, 0.0
    %v6776 = vpack.c.bf16 %v6740, %v6740
    %v6777 = vpack.c.bf16 %v6741, %v6741
    %v6778 = vpack.c.bf16 %v6742, %v6742
    %v6779 = vpack.c.bf16 %v6743, %v6743
    %v6780 = vpack.c.bf16 %v6744, %v6744
    %v6781 = vpack.c.bf16 %v6745, %v6745
    %v6782 = vpack.c.bf16 %v6746, %v6746
    %v6783 = vpack.c.bf16 %v6747, %v6747
    %v6784 = vpack.c.bf16 %v6748, %v6748
    %v6785 = vpack.c.bf16 %v6749, %v6749
    %v6786 = vpack.c.bf16 %v6750, %v6750
    %v6787 = vpack.c.bf16 %v6751, %v6751
    %v6788 = vpack.c.bf16 %v6752, %v6752
    %v6789 = vpack.c.bf16 %v6753, %v6753
    %v6790 = vpack.c.bf16 %v6754, %v6754
    %v6791 = vpack.c.bf16 %v6755, %v6755
    %v6792 = vpack.c.bf16 %v6756, %v6756
    %v6793 = vpack.c.bf16 %v6757, %v6757
    %v6794 = vpack.c.bf16 %v6758, %v6758
    %v6795 = vpack.c.bf16 %v6759, %v6759
    %v6796 = vpack.c.bf16 %v6760, %v6760
    %v6797 = vpack.c.bf16 %v6761, %v6761
    %v6798 = vpack.c.bf16 %v6762, %v6762
    %v6799 = vpack.c.bf16 %v6763, %v6763
    %v6800 = vpack.c.bf16 %v6764, %v6764
    %v6801 = vpack.c.bf16 %v6765, %v6765
    %v6802 = vpack.c.bf16 %v6766, %v6766
    %v6803 = vpack.c.bf16 %v6767, %v6767
    %v6804 = vpack.c.bf16 %v6768, %v6768
    %v6805 = vpack.c.bf16 %v6769, %v6769
    %v6806 = vpack.c.bf16 %v6770, %v6770
    %v6807 = vpack.c.bf16 %v6771, %v6771
    %v6808 = vpack.c.bf16 %v6772, %v6772
    %v6809 = vpack.c.bf16 %v6773, %v6773
    %v6810 = vpack.c.bf16 %v6774, %v6774
    %v6811 = vpack.c.bf16 %v6775, %v6775
    %6828 = vrot.lane.b32.xlu0 %v6777, 64
    %v6829 = vpop.permute.xlu0 %6828
    %6830 = vrot.lane.b32.xlu0 %v6778, 64
    %v6831 = vpop.permute.xlu0 %6830
    %6832 = vrot.lane.b32.xlu0 %v6779, 64
    %v6833 = vpop.permute.xlu0 %6832
    %6834 = vrot.lane.b32.xlu0 %v6780, 64
    %v6835 = vpop.permute.xlu0 %6834
    %6836 = vrot.lane.b32.xlu0 %v6783, 64
    %v6837 = vpop.permute.xlu0 %6836
    %6838 = vrot.lane.b32.xlu0 %v6784, 64
    %v6839 = vpop.permute.xlu0 %6838
    %6840 = vrot.lane.b32.xlu0 %v6785, 64
    %v6841 = vpop.permute.xlu0 %6840
    %6842 = vrot.lane.b32.xlu0 %v6786, 64
    %v6843 = vpop.permute.xlu0 %6842
    %6844 = vrot.lane.b32.xlu0 %v6789, 64
    %v6845 = vpop.permute.xlu0 %6844
    %6846 = vrot.lane.b32.xlu0 %v6790, 64
    %v6847 = vpop.permute.xlu0 %6846
    %6848 = vrot.lane.b32.xlu0 %v6791, 64
    %v6849 = vpop.permute.xlu0 %6848
    %6850 = vrot.lane.b32.xlu0 %v6792, 64
    %v6851 = vpop.permute.xlu0 %6850
    %6852 = vrot.lane.b32.xlu0 %v6795, 64
    %v6853 = vpop.permute.xlu0 %6852
    %6854 = vrot.lane.b32.xlu0 %v6796, 64
    %v6855 = vpop.permute.xlu0 %6854
    %6856 = vrot.lane.b32.xlu0 %v6797, 64
    %v6857 = vpop.permute.xlu0 %6856
    %6858 = vrot.lane.b32.xlu0 %v6798, 64
    %v6859 = vpop.permute.xlu0 %6858
    %6867 = vrot.lane.b32.xlu0 %v6782, 64
    %v6868 = vpop.permute.xlu0 %6867
    %6869 = vrot.lane.b32.xlu0 %v6788, 64
    %v6870 = vpop.permute.xlu0 %6869
    %6871 = vrot.lane.b32.xlu0 %v6794, 64
    %v6872 = vpop.permute.xlu0 %6871
    %6873 = vrot.lane.b32.xlu0 %v6800, 64
    %v6874 = vpop.permute.xlu0 %6873
    %6875 = vrot.lane.b32.xlu0 %v6801, 64
    %v6876 = vpop.permute.xlu0 %6875
    %6877 = vrot.lane.b32.xlu0 %v6802, 64
    %v6878 = vpop.permute.xlu0 %6877
    %6879 = vrot.lane.b32.xlu0 %v6803, 64
    %v6880 = vpop.permute.xlu0 %6879
    %6886 = vrot.lane.b32.xlu0 %v6787, 64
    %v6887 = vpop.permute.xlu0 %6886
    %6888 = vrot.lane.b32.xlu0 %v6793, 64
    %v6889 = vpop.permute.xlu0 %6888
    %6890 = vrot.lane.b32.xlu0 %v6799, 64
    %v6891 = vpop.permute.xlu0 %6890
    %6892 = vrot.lane.b32.xlu0 %v6804, 64
    %v6893 = vpop.permute.xlu0 %6892
    %6894 = vrot.lane.b32.xlu0 %v6805, 64
    %v6895 = vpop.permute.xlu0 %6894
    %6900 = vrot.lane.b32.xlu0 %v6807, 64
    %v6901 = vpop.permute.xlu0 %6900
    %6902 = vrot.lane.b32.xlu0 %v6808, 64
    %v6903 = vpop.permute.xlu0 %6902
    %6904 = vrot.lane.b32.xlu0 %v6809, 64
    %v6905 = vpop.permute.xlu0 %6904
    %6906 = vrot.lane.b32.xlu0 %v6810, 64
    %v6907 = vpop.permute.xlu0 %6906
    %v6910 = vsel %vm1508, %v6776, %v6829
    %v6913 = vsel %vm1508, %v6777, %v6831
    %v6916 = vsel %vm1508, %v6778, %v6833
    %v6919 = vsel %vm1508, %v6779, %v6835
    %v6922 = vsel %vm1508, %v6782, %v6837
    %v6925 = vsel %vm1508, %v6783, %v6839
    %v6928 = vsel %vm1508, %v6784, %v6841
    %v6931 = vsel %vm1508, %v6785, %v6843
    %v6934 = vsel %vm1508, %v6788, %v6845
    %v6937 = vsel %vm1508, %v6789, %v6847
    %v6940 = vsel %vm1508, %v6790, %v6849
    %v6943 = vsel %vm1508, %v6791, %v6851
    %v6946 = vsel %vm1508, %v6794, %v6853
    %v6949 = vsel %vm1508, %v6795, %v6855
    %v6952 = vsel %vm1508, %v6796, %v6857
    %v6955 = vsel %vm1508, %v6797, %v6859
    %v6957 = vsel %vm1508, %v6778, %v6868
    %v6958 = vsel %vm1508, %v6779, %v6837
    %v6960 = vsel %vm1508, %v6780, %v6839
    %v6962 = vsel %vm1508, %v6781, %v6841
    %v6964 = vsel %vm1508, %v6784, %v6870
    %v6965 = vsel %vm1508, %v6785, %v6845
    %v6967 = vsel %vm1508, %v6786, %v6847
    %v6969 = vsel %vm1508, %v6787, %v6849
    %v6971 = vsel %vm1508, %v6790, %v6872
    %v6972 = vsel %vm1508, %v6791, %v6853
    %v6974 = vsel %vm1508, %v6792, %v6855
    %v6976 = vsel %vm1508, %v6793, %v6857
    %v6978 = vsel %vm1508, %v6796, %v6874
    %v6980 = vsel %vm1508, %v6797, %v6876
    %v6983 = vsel %vm1508, %v6798, %v6878
    %v6986 = vsel %vm1508, %v6799, %v6880
    %v6988 = vsel %vm1508, %v6786, %v6887
    %v6990 = vsel %vm1508, %v6792, %v6889
    %v6992 = vsel %vm1508, %v6798, %v6891
    %v6994 = vsel %vm1508, %v6801, %v6878
    %v6996 = vsel %vm1508, %v6802, %v6880
    %v6999 = vsel %vm1508, %v6803, %v6893
    %v7002 = vsel %vm1508, %v6804, %v6895
    %v7004 = vsel %vm1508, %v6800, %v6876
    %v7007 = vsel %vm1508, %v6806, %v6901
    %v7010 = vsel %vm1508, %v6807, %v6903
    %v7013 = vsel %vm1508, %v6808, %v6905
    %v7016 = vsel %vm1508, %v6809, %v6907
    %v7062 = vunpack.c.l.b16 %v6910
    %v7063 = vunpack.c.l.b16 %v6957
    %v7064 = vunpack.c.l.b16 %v6925
    %v7065 = vunpack.c.l.b16 %v6934
    %v7066 = vunpack.c.l.b16 %v6790
    %v7067 = vunpack.c.l.b16 %v6913
    %v7068 = vunpack.c.l.b16 %v6958
    %v7069 = vunpack.c.l.b16 %v6928
    %v7070 = vunpack.c.l.b16 %v6937
    %v7071 = vunpack.c.l.b16 %v6791
    %v7072 = vunpack.c.l.b16 %v6916
    %v7073 = vunpack.c.l.b16 %v6960
    %v7074 = vunpack.c.l.b16 %v6931
    %v7075 = vunpack.c.l.b16 %v6940
    %v7076 = vunpack.c.l.b16 %v6792
    %v7077 = vunpack.c.l.b16 %v6919
    %v7078 = vunpack.c.l.b16 %v6962
    %v7079 = vunpack.c.l.b16 %v6988
    %v7080 = vunpack.c.l.b16 %v6943
    %v7081 = vunpack.c.l.b16 %v6793
    %v7082 = vunpack.c.l.b16 %v6922
    %v7083 = vunpack.c.l.b16 %v6964
    %v7084 = vunpack.c.l.b16 %v6946
    %v7085 = vunpack.c.l.b16 %v6796
    %v7086 = vunpack.c.l.b16 %v6965
    %v7087 = vunpack.c.l.b16 %v6949
    %v7088 = vunpack.c.l.b16 %v6797
    %v7089 = vunpack.c.l.b16 %v6967
    %v7090 = vunpack.c.l.b16 %v6952
    %v7091 = vunpack.c.l.b16 %v6798
    %v7092 = vunpack.c.l.b16 %v6969
    %v7093 = vunpack.c.l.b16 %v6990
    %v7094 = vunpack.c.l.b16 %v6955
    %v7095 = vunpack.c.l.b16 %v6799
    %v7096 = vunpack.c.l.b16 %v6971
    %v7097 = vunpack.c.l.b16 %v7004
    %v7098 = vunpack.c.l.b16 %v6802
    %v7099 = vunpack.c.l.b16 %v6972
    %v7100 = vunpack.c.l.b16 %v6994
    %v7101 = vunpack.c.l.b16 %v6803
    %v7102 = vunpack.c.l.b16 %v6974
    %v7103 = vunpack.c.l.b16 %v6996
    %v7104 = vunpack.c.l.b16 %v6804
    %v7105 = vunpack.c.l.b16 %v6976
    %v7106 = vunpack.c.l.b16 %v6992
    %v7107 = vunpack.c.l.b16 %v6999
    %v7108 = vunpack.c.l.b16 %v6805
    %v7109 = vunpack.c.l.b16 %v6978
    %v7110 = vunpack.c.l.b16 %v7007
    %v7111 = vunpack.c.l.b16 %v6808
    %v7112 = vunpack.c.l.b16 %v6980
    %v7113 = vunpack.c.l.b16 %v7010
    %v7114 = vunpack.c.l.b16 %v6809
    %v7115 = vunpack.c.l.b16 %v6983
    %v7116 = vunpack.c.l.b16 %v7013
    %v7117 = vunpack.c.l.b16 %v6810
    %v7118 = vunpack.c.l.b16 %v6986
    %v7119 = vunpack.c.l.b16 %v7002
    %v7120 = vunpack.c.l.b16 %v7016
    %v7121 = vunpack.c.l.b16 %v6811
    %v7122 = vld [vmem:[%s6] sm:$0xf]
    %v7123 = vld [vmem:[%s6 + $0x4] sm:$0xf]
    %v7124 = vld [vmem:[%s6 + $0x8] sm:$0xf]
    %v7125 = vld [vmem:[%s6 + $0xc] sm:$0xf]
    %v7126 = vld [vmem:[%s6 + $0x10] sm:$0xf]
    %v7127 = vld [vmem:[%s6 + $0x14] sm:$0xf]
    %v7128 = vld [vmem:[%s6 + $0x18] sm:$0xf]
    %v7129 = vld [vmem:[%s6 + $0x1c] sm:$0xf]
    %v7130 = vld [vmem:[%s6 + $0x20] sm:$0xf]
    %v7131 = vld [vmem:[%s6 + $0x24] sm:$0xf]
    %v7132 = vld [vmem:[%s6 + $0x28] sm:$0xf]
    %v7133 = vld [vmem:[%s6 + $0x2c] sm:$0xf]
    %v7134 = vld [vmem:[%s6 + $0x30] sm:$0xf]
    %v7135 = vld [vmem:[%s6 + $0x34] sm:$0xf]
    %v7136 = vld [vmem:[%s6 + $0x38] sm:$0xf]
    %v7137 = vld [vmem:[%s6 + $0x3c] sm:$0xf]
    %v7138 = vld [vmem:[%s6 + $0x40] sm:$0xf]
    %v7139 = vld [vmem:[%s6 + $0x44] sm:$0xf]
    %v7140 = vld [vmem:[%s6 + $0x48] sm:$0xf]
    %v7141 = vld [vmem:[%s6 + $0x4c] sm:$0xf]
    %v7142 = vld [vmem:[%s6 + $0x50] sm:$0xf]
    %v7143 = vld [vmem:[%s6 + $0x54] sm:$0xf]
    %v7144 = vld [vmem:[%s6 + $0x58] sm:$0xf]
    %v7145 = vld [vmem:[%s6 + $0x5c] sm:$0xf]
    %v7146 = vld [vmem:[%s6 + $0x60] sm:$0xf]
    %v7147 = vld [vmem:[%s6 + $0x64] sm:$0xf]
    %v7148 = vld [vmem:[%s6 + $0x68] sm:$0xf]
    %v7149 = vld [vmem:[%s6 + $0x6c] sm:$0xf]
    %v7150 = vld [vmem:[%s6 + $0x70] sm:$0xf]
    %v7151 = vld [vmem:[%s6 + $0x74] sm:$0xf]
    %v7152 = vld [vmem:[%s6 + $0x78] sm:$0xf]
    %v7153 = vld [vmem:[%s6 + $0x7c] sm:$0xf]
    %v7154 = vld [vmem:[%s6 + $0x80] sm:$0xf]
    %v7155 = vld [vmem:[%s6 + $0x84] sm:$0xf]
    %v7156 = vld [vmem:[%s6 + $0x88] sm:$0xf]
    %v7157 = vld [vmem:[%s6 + $0x8c] sm:$0xf]
    %v7158 = vld [vmem:[%s6 + $0x90] sm:$0xf]
    %v7159 = vld [vmem:[%s6 + $0x94] sm:$0xf]
    %v7160 = vld [vmem:[%s6 + $0x98] sm:$0xf]
    %v7161 = vld [vmem:[%s6 + $0x9c] sm:$0xf]
    %v7162 = vld [vmem:[%s6 + $0xa0] sm:$0xf]
    %v7163 = vld [vmem:[%s6 + $0xa4] sm:$0xf]
    %v7164 = vld [vmem:[%s6 + $0xa8] sm:$0xf]
    %v7165 = vld [vmem:[%s6 + $0xac] sm:$0xf]
    %v7166 = vld [vmem:[%s6 + $0xb0] sm:$0xf]
    %v7167 = vld [vmem:[%s6 + $0xb4] sm:$0xf]
    %v7168 = vld [vmem:[%s6 + $0xb8] sm:$0xf]
    %v7169 = vld [vmem:[%s6 + $0xbc] sm:$0xf]
    %v7170 = vld [vmem:[%s6 + $0xc0] sm:$0xf]
    %v7171 = vld [vmem:[%s6 + $0xc4] sm:$0xf]
    %v7172 = vld [vmem:[%s6 + $0xc8] sm:$0xf]
    %v7173 = vld [vmem:[%s6 + $0xcc] sm:$0xf]
    %v7174 = vld [vmem:[%s6 + $0xd0] sm:$0xf]
    %v7175 = vld [vmem:[%s6 + $0xd4] sm:$0xf]
    %v7176 = vld [vmem:[%s6 + $0xd8] sm:$0xf]
    %v7177 = vld [vmem:[%s6 + $0xdc] sm:$0xf]
    %v7178 = vld [vmem:[%s6 + $0xe0] sm:$0xf]
    %v7179 = vld [vmem:[%s6 + $0xe4] sm:$0xf]
    %v7180 = vld [vmem:[%s6 + $0xe8] sm:$0xf]
    %v7181 = vld [vmem:[%s6 + $0xec] sm:$0xf]
    %v7182 = vld [vmem:[%s6 + $0xf0] sm:$0xf]
    %v7183 = vld [vmem:[%s6 + $0xf4] sm:$0xf]
    %v7184 = vld [vmem:[%s6 + $0xf8] sm:$0xf]
    %v7185 = vld [vmem:[%s6 + $0xfc] sm:$0xf]
    %v7186 = vld [vmem:[%s6 + $0x100] sm:$0xf]
    %v7187 = vld [vmem:[%s6 + $0x104] sm:$0xf]
    %v7188 = vld [vmem:[%s6 + $0x108] sm:$0xf]
    %v7189 = vld [vmem:[%s6 + $0x10c] sm:$0xf]
    %v7190 = vld [vmem:[%s6 + $0x110] sm:$0xf]
    %v7191 = vld [vmem:[%s6 + $0x114] sm:$0xf]
    %v7192 = vld [vmem:[%s6 + $0x118] sm:$0xf]
    %v7193 = vld [vmem:[%s6 + $0x11c] sm:$0xf]
    %v7194 = vld [vmem:[%s7] sm:$0x1]
    %v7196 = vlaneseq
    %v7197 = vshrl.u32 %v7196, 7
    %v7198 = vsub.s32 0, %v7197
    %v7199 = vrot.slane %v7194, %v7198
    %v7201 = vpack.c.b16 %v7067, %v7062
    %v7202 = vpack.c.b16 %v7068, %v7063
    %v7203 = vpack.c.b16 %v7069, %v7064
    %v7204 = vpack.c.b16 %v7070, %v7065
    %v7205 = vpack.c.b16 %v7071, %v7066
    %v7206 = vpack.c.b16 %v7077, %v7072
    %v7207 = vpack.c.b16 %v7078, %v7073
    %v7208 = vpack.c.b16 %v7079, %v7074
    %v7209 = vpack.c.b16 %v7080, %v7075
    %v7210 = vpack.c.b16 %v7081, %v7076
    %v7211 = vpack.c.b16 %v7064, %v7082
    %v7212 = vpack.c.b16 %v7086, %v7083
    %v7213 = vpack.c.b16 %v7075, %v7070
    %v7214 = vpack.c.b16 %v7087, %v7084
    %v7215 = vpack.c.b16 %v7088, %v7085
    %v7216 = vpack.c.b16 %v7074, %v7069
    %v7217 = vpack.c.b16 %v7092, %v7089
    %v7218 = vpack.c.b16 %v7093, %v7080
    %v7219 = vpack.c.b16 %v7094, %v7090
    %v7220 = vpack.c.b16 %v7095, %v7091
    %v7221 = vpack.c.b16 %v7099, %v7096
    %v7222 = vpack.c.b16 %v7090, %v7087
    %v7223 = vpack.c.b16 %v7100, %v7097
    %v7224 = vpack.c.b16 %v7101, %v7098
    %v7225 = vpack.c.b16 %v7105, %v7102
    %v7226 = vpack.c.b16 %v7106, %v7094
    %v7227 = vpack.c.b16 %v7107, %v7103
    %v7228 = vpack.c.b16 %v7108, %v7104
    %v7229 = vpack.c.b16 %v7112, %v7109
    %v7230 = vpack.c.b16 %v7103, %v7100
    %v7231 = vpack.c.b16 %v7113, %v7110
    %v7232 = vpack.c.b16 %v7114, %v7111
    %v7233 = vpack.c.b16 %v7118, %v7115
    %v7234 = vpack.c.b16 %v7119, %v7107
    %v7235 = vpack.c.b16 %v7120, %v7116
    %v7236 = vpack.c.b16 %v7121, %v7117
    %v7337 = vunpack.c.l.b16 %v7122
    %v7338 = vunpack.c.l.b16 %v7123
    %v7339 = vunpack.c.l.b16 %v7124
    %v7340 = vunpack.c.l.b16 %v7125
    %v7341 = vunpack.c.l.b16 %v7126
    %v7342 = vunpack.c.l.b16 %v7127
    %v7343 = vunpack.c.l.b16 %v7128
    %v7344 = vunpack.c.l.b16 %v7129
    %v7345 = vunpack.c.l.b16 %v7130
    %v7346 = vunpack.c.l.b16 %v7131
    %v7347 = vunpack.c.l.b16 %v7132
    %v7348 = vunpack.c.l.b16 %v7133
    %v7349 = vunpack.c.l.b16 %v7134
    %v7350 = vunpack.c.l.b16 %v7135
    %v7351 = vunpack.c.l.b16 %v7136
    %v7352 = vunpack.c.l.b16 %v7137
    %v7353 = vunpack.c.l.b16 %v7138
    %v7354 = vunpack.c.l.b16 %v7139
    %v7355 = vunpack.c.l.b16 %v7140
    %v7356 = vunpack.c.l.b16 %v7141
    %v7357 = vunpack.c.l.b16 %v7142
    %v7358 = vunpack.c.l.b16 %v7143
    %v7359 = vunpack.c.l.b16 %v7144
    %v7360 = vunpack.c.l.b16 %v7145
    %v7361 = vunpack.c.l.b16 %v7146
    %v7362 = vunpack.c.l.b16 %v7147
    %v7363 = vunpack.c.l.b16 %v7148
    %v7364 = vunpack.c.l.b16 %v7149
    %v7365 = vunpack.c.l.b16 %v7150
    %v7366 = vunpack.c.l.b16 %v7151
    %v7367 = vunpack.c.l.b16 %v7152
    %v7368 = vunpack.c.l.b16 %v7153
    %v7369 = vunpack.c.l.b16 %v7154
    %v7370 = vunpack.c.l.b16 %v7155
    %v7371 = vunpack.c.l.b16 %v7156
    %v7372 = vunpack.c.l.b16 %v7157
    %v7373 = vunpack.c.l.b16 %v7158
    %v7374 = vunpack.c.l.b16 %v7159
    %v7375 = vunpack.c.l.b16 %v7160
    %v7376 = vunpack.c.l.b16 %v7161
    %v7377 = vunpack.c.l.b16 %v7162
    %v7378 = vunpack.c.l.b16 %v7163
    %v7379 = vunpack.c.l.b16 %v7164
    %v7380 = vunpack.c.l.b16 %v7165
    %v7381 = vunpack.c.l.b16 %v7166
    %v7382 = vunpack.c.l.b16 %v7167
    %v7383 = vunpack.c.l.b16 %v7168
    %v7384 = vunpack.c.l.b16 %v7169
    %v7385 = vunpack.c.l.b16 %v7170
    %v7386 = vunpack.c.l.b16 %v7171
    %v7387 = vunpack.c.l.b16 %v7172
    %v7388 = vunpack.c.l.b16 %v7173
    %v7389 = vunpack.c.l.b16 %v7174
    %v7390 = vunpack.c.l.b16 %v7175
    %v7391 = vunpack.c.l.b16 %v7176
    %v7392 = vunpack.c.l.b16 %v7177
    %v7393 = vunpack.c.l.b16 %v7178
    %v7394 = vunpack.c.l.b16 %v7179
    %v7395 = vunpack.c.l.b16 %v7180
    %v7396 = vunpack.c.l.b16 %v7181
    %v7397 = vunpack.c.l.b16 %v7182
    %v7398 = vunpack.c.l.b16 %v7183
    %v7399 = vunpack.c.l.b16 %v7184
    %v7400 = vunpack.c.l.b16 %v7185
    %v7401 = vunpack.c.l.b16 %v7186
    %v7402 = vunpack.c.l.b16 %v7187
    %v7403 = vunpack.c.l.b16 %v7188
    %v7404 = vunpack.c.l.b16 %v7189
    %v7405 = vunpack.c.l.b16 %v7190
    %v7406 = vunpack.c.l.b16 %v7191
    %v7407 = vunpack.c.l.b16 %v7192
    %v7408 = vunpack.c.l.b16 %v7193
    %v7409 = vpack.c.b16 %v7338, %v7337
    %v7410 = vpack.c.b16 %v7340, %v7339
    %v7411 = vpack.c.b16 %v7342, %v7341
    %v7412 = vpack.c.b16 %v7344, %v7343
    %v7413 = vpack.c.b16 %v7346, %v7345
    %v7414 = vpack.c.b16 %v7348, %v7347
    %v7415 = vpack.c.b16 %v7350, %v7349
    %v7416 = vpack.c.b16 %v7352, %v7351
    %v7417 = vpack.c.b16 %v7354, %v7353
    %v7418 = vpack.c.b16 %v7356, %v7355
    %v7419 = vpack.c.b16 %v7358, %v7357
    %v7420 = vpack.c.b16 %v7360, %v7359
    %v7421 = vpack.c.b16 %v7362, %v7361
    %v7422 = vpack.c.b16 %v7364, %v7363
    %v7423 = vpack.c.b16 %v7366, %v7365
    %v7424 = vpack.c.b16 %v7368, %v7367
    %v7425 = vpack.c.b16 %v7370, %v7369
    %v7426 = vpack.c.b16 %v7372, %v7371
    %v7427 = vpack.c.b16 %v7374, %v7373
    %v7428 = vpack.c.b16 %v7376, %v7375
    %v7429 = vpack.c.b16 %v7378, %v7377
    %v7430 = vpack.c.b16 %v7380, %v7379
    %v7431 = vpack.c.b16 %v7382, %v7381
    %v7432 = vpack.c.b16 %v7384, %v7383
    %v7433 = vpack.c.b16 %v7386, %v7385
    %v7434 = vpack.c.b16 %v7388, %v7387
    %v7435 = vpack.c.b16 %v7390, %v7389
    %v7436 = vpack.c.b16 %v7392, %v7391
    %v7437 = vpack.c.b16 %v7394, %v7393
    %v7438 = vpack.c.b16 %v7396, %v7395
    %v7439 = vpack.c.b16 %v7398, %v7397
    %v7440 = vpack.c.b16 %v7400, %v7399
    %v7441 = vpack.c.b16 %v7402, %v7401
    %v7442 = vpack.c.b16 %v7404, %v7403
    %v7443 = vpack.c.b16 %v7406, %v7405
    %v7444 = vpack.c.b16 %v7408, %v7407
    %v7482 = vsel %vm1508, %v7205, 0
    %v7485 = vsel %vm1508, %v7210, 0
    %v7488 = vsel %vm1508, %v7215, 0
    %v7491 = vsel %vm1508, %v7220, 0
    %v7494 = vsel %vm1508, %v7224, 0
    %v7497 = vsel %vm1508, %v7228, 0
    %v7500 = vsel %vm1508, %v7232, 0
    %v7503 = vsel %vm1508, %v7236, 0
    %7505 = vmatprep.subr.bf16.mxu0 0
    %7506 = vmatpush1.bf16.msra.mxu0 %v7416
    %7507 = vmatprep.subr.bf16.mxu0 0
    %7508 = vmatpush1.bf16.msra.mxu0 %v7415
    %7509 = vmatprep.subr.bf16.mxu0 0
    %7510 = vmatpush1.bf16.msra.mxu0 %v7414
    %7511 = vmatprep.subr.bf16.mxu0 0
    %7512 = vmatpush1.bf16.msra.mxu0 %v7413
    %7513 = vmatprep.subr.bf16.mxu0 0
    %7514 = vmatpush1.bf16.msra.mxu0 %v7412
    %7515 = vmatprep.subr.bf16.mxu0 0
    %7516 = vmatpush1.bf16.msra.mxu0 %v7411
    %7517 = vmatprep.subr.bf16.mxu0 0
    %7518 = vmatpush1.bf16.msra.mxu0 %v7410
    %7519 = vmatprep.subr.bf16.mxu0 0
    %7520 = vmatpush1.bf16.msra.mxu0 %v7409
    %7521 = vmatprep.subr.bf16.mxu0 0
    %7522 = vmatpush2.bf16.msra.mxu0 %v7424
    %7523 = vmatprep.subr.bf16.mxu0 0
    %7524 = vmatpush2.bf16.msra.mxu0 %v7423
    %7525 = vmatprep.subr.bf16.mxu0 0
    %7526 = vmatpush2.bf16.msra.mxu0 %v7422
    %7527 = vmatprep.subr.bf16.mxu0 0
    %7528 = vmatpush2.bf16.msra.mxu0 %v7421
    %7529 = vmatprep.subr.bf16.mxu0 0
    %7530 = vmatpush2.bf16.msra.mxu0 %v7420
    %7531 = vmatprep.subr.bf16.mxu0 0
    %7532 = vmatpush2.bf16.msra.mxu0 %v7419
    %7533 = vmatprep.subr.bf16.mxu0 0
    %7534 = vmatpush2.bf16.msra.mxu0 %v7418
    %7535 = vmatprep.subr.bf16.mxu0 0
    %7536 = vmatpush2.bf16.msra.mxu0 %v7417
    %7537 = vmatprep.mubr.bf16.mxu0 %v7202
    %7538 = vmatmul.mubr.bf16.gmra.mxu0 %v7201
    %v7539 = vpop.f32.mrf.mxu0
    %v7540 = vadd.f32 %v7199, %v7539
    %v7541 = vpop.f32.mrf.mxu0
    %v7542 = vpop.f32.mrf.mxu0
    %v7543 = vadd.f32 %v7199, %v7542
    %v7544 = vpop.f32.mrf.mxu0
    %7545 = vmatprep.mubr.bf16.mxu0 %v7207
    %7546 = vmatmul.mubr.bf16.gmra.mxu0 %v7206
    %v7547 = vpop.f32.mrf.mxu0
    %v7548 = vadd.f32 %v7199, %v7547
    %v7549 = vpop.f32.mrf.mxu0
    %v7550 = vpop.f32.mrf.mxu0
    %v7551 = vadd.f32 %v7199, %v7550
    %v7552 = vpop.f32.mrf.mxu0
    %7553 = vmatprep.mubr.bf16.mxu0 %v7212
    %7554 = vmatmul.mubr.bf16.gmra.mxu0 %v7211
    %v7555 = vpop.f32.mrf.mxu0
    %v7556 = vadd.f32 %v7199, %v7555
    %v7557 = vpop.f32.mrf.mxu0
    %v7558 = vpop.f32.mrf.mxu0
    %v7559 = vadd.f32 %v7199, %v7558
    %v7560 = vpop.f32.mrf.mxu0
    %7561 = vmatprep.mubr.bf16.mxu0 %v7217
    %7562 = vmatmul.mubr.bf16.gmra.mxu0 %v7216
    %v7563 = vpop.f32.mrf.mxu0
    %v7564 = vadd.f32 %v7199, %v7563
    %v7565 = vpop.f32.mrf.mxu0
    %v7566 = vpop.f32.mrf.mxu0
    %v7567 = vadd.f32 %v7199, %v7566
    %v7568 = vpop.f32.mrf.mxu0
    %7569 = vmatprep.mubr.bf16.mxu0 %v7221
    %7570 = vmatmul.mubr.bf16.gmra.mxu0 %v7204
    %v7571 = vpop.f32.mrf.mxu0
    %v7572 = vadd.f32 %v7199, %v7571
    %v7573 = vpop.f32.mrf.mxu0
    %v7574 = vpop.f32.mrf.mxu0
    %v7575 = vadd.f32 %v7199, %v7574
    %v7576 = vpop.f32.mrf.mxu0
    %7577 = vmatprep.mubr.bf16.mxu0 %v7225
    %7578 = vmatmul.mubr.bf16.gmra.mxu0 %v7209
    %v7579 = vpop.f32.mrf.mxu0
    %v7580 = vadd.f32 %v7199, %v7579
    %v7581 = vpop.f32.mrf.mxu0
    %v7582 = vpop.f32.mrf.mxu0
    %v7583 = vadd.f32 %v7199, %v7582
    %v7584 = vpop.f32.mrf.mxu0
    %7585 = vmatprep.mubr.bf16.mxu0 %v7229
    %7586 = vmatmul.mubr.bf16.gmra.mxu0 %v7214
    %v7587 = vpop.f32.mrf.mxu0
    %v7588 = vadd.f32 %v7199, %v7587
    %v7589 = vpop.f32.mrf.mxu0
    %v7590 = vpop.f32.mrf.mxu0
    %v7591 = vadd.f32 %v7199, %v7590
    %v7592 = vpop.f32.mrf.mxu0
    %7593 = vmatprep.mubr.bf16.mxu0 %v7233
    %7594 = vmatmul.mubr.bf16.gmra.mxu0 %v7219
    %v7595 = vpop.f32.mrf.mxu0
    %v7596 = vadd.f32 %v7199, %v7595
    %v7597 = vpop.f32.mrf.mxu0
    %v7598 = vpop.f32.mrf.mxu0
    %v7599 = vadd.f32 %v7199, %v7598
    %v7600 = vpop.f32.mrf.mxu0
    %7601 = vdwg.mxu0
    %7602 = vmatprep.subr.bf16.mxu0 0
    %7603 = vmatpush1.bf16.msra.mxu0 %v7432
    %7604 = vmatprep.subr.bf16.mxu0 0
    %7605 = vmatpush1.bf16.msra.mxu0 %v7431
    %7606 = vmatprep.subr.bf16.mxu0 0
    %7607 = vmatpush1.bf16.msra.mxu0 %v7430
    %7608 = vmatprep.subr.bf16.mxu0 0
    %7609 = vmatpush1.bf16.msra.mxu0 %v7429
    %7610 = vmatprep.subr.bf16.mxu0 0
    %7611 = vmatpush1.bf16.msra.mxu0 %v7428
    %7612 = vmatprep.subr.bf16.mxu0 0
    %7613 = vmatpush1.bf16.msra.mxu0 %v7427
    %7614 = vmatprep.subr.bf16.mxu0 0
    %7615 = vmatpush1.bf16.msra.mxu0 %v7426
    %7616 = vmatprep.subr.bf16.mxu0 0
    %7617 = vmatpush1.bf16.msra.mxu0 %v7425
    %7618 = vmatprep.subr.bf16.mxu0 0
    %7619 = vmatpush2.bf16.msra.mxu0 %v7440
    %7620 = vmatprep.subr.bf16.mxu0 0
    %7621 = vmatpush2.bf16.msra.mxu0 %v7439
    %7622 = vmatprep.subr.bf16.mxu0 0
    %7623 = vmatpush2.bf16.msra.mxu0 %v7438
    %7624 = vmatprep.subr.bf16.mxu0 0
    %7625 = vmatpush2.bf16.msra.mxu0 %v7437
    %7626 = vmatprep.subr.bf16.mxu0 0
    %7627 = vmatpush2.bf16.msra.mxu0 %v7436
    %7628 = vmatprep.subr.bf16.mxu0 0
    %7629 = vmatpush2.bf16.msra.mxu0 %v7435
    %7630 = vmatprep.subr.bf16.mxu0 0
    %7631 = vmatpush2.bf16.msra.mxu0 %v7434
    %7632 = vmatprep.subr.bf16.mxu0 0
    %7633 = vmatpush2.bf16.msra.mxu0 %v7433
    %7634 = vmatprep.mubr.bf16.mxu0 %v7204
    %7635 = vmatmul.mubr.bf16.gmra.mxu0 %v7203
    %v7636 = vpop.f32.mrf.mxu0
    %v7637 = vadd.f32 %v7540, %v7636
    %v7638 = vpop.f32.mrf.mxu0
    %v7639 = vpop.f32.mrf.mxu0
    %v7640 = vadd.f32 %v7543, %v7639
    %v7641 = vpop.f32.mrf.mxu0
    %7642 = vmatprep.mubr.bf16.mxu0 %v7209
    %7643 = vmatmul.mubr.bf16.gmra.mxu0 %v7208
    %v7644 = vpop.f32.mrf.mxu0
    %v7645 = vadd.f32 %v7548, %v7644
    %v7646 = vpop.f32.mrf.mxu0
    %v7647 = vpop.f32.mrf.mxu0
    %v7648 = vadd.f32 %v7551, %v7647
    %v7649 = vpop.f32.mrf.mxu0
    %7650 = vmatprep.mubr.bf16.mxu0 %v7214
    %7651 = vmatmul.mubr.bf16.gmra.mxu0 %v7213
    %v7652 = vpop.f32.mrf.mxu0
    %v7653 = vadd.f32 %v7556, %v7652
    %v7654 = vpop.f32.mrf.mxu0
    %v7655 = vpop.f32.mrf.mxu0
    %v7656 = vadd.f32 %v7559, %v7655
    %v7657 = vpop.f32.mrf.mxu0
    %7658 = vmatprep.mubr.bf16.mxu0 %v7219
    %7659 = vmatmul.mubr.bf16.gmra.mxu0 %v7218
    %v7660 = vpop.f32.mrf.mxu0
    %v7661 = vadd.f32 %v7564, %v7660
    %v7662 = vpop.f32.mrf.mxu0
    %v7663 = vpop.f32.mrf.mxu0
    %v7664 = vadd.f32 %v7567, %v7663
    %v7665 = vpop.f32.mrf.mxu0
    %7666 = vmatprep.mubr.bf16.mxu0 %v7223
    %7667 = vmatmul.mubr.bf16.gmra.mxu0 %v7222
    %v7668 = vpop.f32.mrf.mxu0
    %v7669 = vadd.f32 %v7572, %v7668
    %v7670 = vpop.f32.mrf.mxu0
    %v7671 = vpop.f32.mrf.mxu0
    %v7672 = vadd.f32 %v7575, %v7671
    %v7673 = vpop.f32.mrf.mxu0
    %7674 = vmatprep.mubr.bf16.mxu0 %v7227
    %7675 = vmatmul.mubr.bf16.gmra.mxu0 %v7226
    %v7676 = vpop.f32.mrf.mxu0
    %v7677 = vadd.f32 %v7580, %v7676
    %v7678 = vpop.f32.mrf.mxu0
    %v7679 = vpop.f32.mrf.mxu0
    %v7680 = vadd.f32 %v7583, %v7679
    %v7681 = vpop.f32.mrf.mxu0
    %7682 = vmatprep.mubr.bf16.mxu0 %v7231
    %7683 = vmatmul.mubr.bf16.gmra.mxu0 %v7230
    %v7684 = vpop.f32.mrf.mxu0
    %v7685 = vadd.f32 %v7588, %v7684
    %v7686 = vpop.f32.mrf.mxu0
    %v7687 = vpop.f32.mrf.mxu0
    %v7688 = vadd.f32 %v7591, %v7687
    %v7689 = vpop.f32.mrf.mxu0
    %7690 = vmatprep.mubr.bf16.mxu0 %v7235
    %7691 = vmatmul.mubr.bf16.gmra.mxu0 %v7234
    %v7692 = vpop.f32.mrf.mxu0
    %v7693 = vadd.f32 %v7596, %v7692
    %v7694 = vpop.f32.mrf.mxu0
    %v7695 = vpop.f32.mrf.mxu0
    %v7696 = vadd.f32 %v7599, %v7695
    %v7697 = vpop.f32.mrf.mxu0
    %7698 = vdwg.mxu0
    %7699 = vmatprep.subr.bf16.mxu0 0
    %7700 = vmatpush1.bf16.msra.mxu0 0
    %7701 = vmatprep.subr.bf16.mxu0 0
    %7702 = vmatpush1.bf16.msra.mxu0 0
    %7703 = vmatprep.subr.bf16.mxu0 0
    %7704 = vmatpush1.bf16.msra.mxu0 0
    %7705 = vmatprep.subr.bf16.mxu0 0
    %7706 = vmatpush1.bf16.msra.mxu0 0
    %7707 = vmatprep.subr.bf16.mxu0 0
    %7708 = vmatpush1.bf16.msra.mxu0 %v7444
    %7709 = vmatprep.subr.bf16.mxu0 0
    %7710 = vmatpush1.bf16.msra.mxu0 %v7443
    %7711 = vmatprep.subr.bf16.mxu0 0
    %7712 = vmatpush1.bf16.msra.mxu0 %v7442
    %7713 = vmatprep.subr.bf16.mxu0 0
    %7714 = vmatpush1.bf16.msra.mxu0 %v7441
    %7715 = vmatprep.subr.bf16.mxu0 0
    %7716 = vmatpush2.bf16.msra.mxu0 0
    %7717 = vmatprep.subr.bf16.mxu0 0
    %7718 = vmatpush2.bf16.msra.mxu0 0
    %7719 = vmatprep.subr.bf16.mxu0 0
    %7720 = vmatpush2.bf16.msra.mxu0 0
    %7721 = vmatprep.subr.bf16.mxu0 0
    %7722 = vmatpush2.bf16.msra.mxu0 0
    %7723 = vmatprep.subr.bf16.mxu0 0
    %7724 = vmatpush2.bf16.msra.mxu0 0
    %7725 = vmatprep.subr.bf16.mxu0 0
    %7726 = vmatpush2.bf16.msra.mxu0 0
    %7727 = vmatprep.subr.bf16.mxu0 0
    %7728 = vmatpush2.bf16.msra.mxu0 0
    %7729 = vmatprep.subr.bf16.mxu0 0
    %7730 = vmatpush2.bf16.msra.mxu0 0
    %7731 = vmatprep.mubr.bf16.mxu0 0
    %7732 = vmatmul.mubr.bf16.gmra.mxu0 %v7482
    %v7733 = vpop.f32.mrf.mxu0
    %v7734 = vadd.f32 %v7637, %v7733
    %v7735 = vpop.f32.mrf.mxu0
    %v7736 = vpop.f32.mrf.mxu0
    %v7737 = vadd.f32 %v7640, %v7736
    %v7738 = vpop.f32.mrf.mxu0
    %7739 = vmatprep.mubr.bf16.mxu0 0
    %7740 = vmatmul.mubr.bf16.gmra.mxu0 %v7485
    %v7741 = vpop.f32.mrf.mxu0
    %v7742 = vadd.f32 %v7645, %v7741
    %v7743 = vpop.f32.mrf.mxu0
    %v7744 = vpop.f32.mrf.mxu0
    %v7745 = vadd.f32 %v7648, %v7744
    %v7746 = vpop.f32.mrf.mxu0
    %7747 = vmatprep.mubr.bf16.mxu0 0
    %7748 = vmatmul.mubr.bf16.gmra.mxu0 %v7488
    %v7749 = vpop.f32.mrf.mxu0
    %v7750 = vadd.f32 %v7653, %v7749
    %v7751 = vpop.f32.mrf.mxu0
    %v7752 = vpop.f32.mrf.mxu0
    %v7753 = vadd.f32 %v7656, %v7752
    %v7754 = vpop.f32.mrf.mxu0
    %7755 = vmatprep.mubr.bf16.mxu0 0
    %7756 = vmatmul.mubr.bf16.gmra.mxu0 %v7491
    %v7757 = vpop.f32.mrf.mxu0
    %v7758 = vadd.f32 %v7661, %v7757
    %v7759 = vpop.f32.mrf.mxu0
    %v7760 = vpop.f32.mrf.mxu0
    %v7761 = vadd.f32 %v7664, %v7760
    %v7762 = vpop.f32.mrf.mxu0
    %7763 = vmatprep.mubr.bf16.mxu0 0
    %7764 = vmatmul.mubr.bf16.gmra.mxu0 %v7494
    %v7765 = vpop.f32.mrf.mxu0
    %v7766 = vadd.f32 %v7669, %v7765
    %v7767 = vpop.f32.mrf.mxu0
    %v7768 = vpop.f32.mrf.mxu0
    %v7769 = vadd.f32 %v7672, %v7768
    %v7770 = vpop.f32.mrf.mxu0
    %7771 = vmatprep.mubr.bf16.mxu0 0
    %7772 = vmatmul.mubr.bf16.gmra.mxu0 %v7497
    %v7773 = vpop.f32.mrf.mxu0
    %v7774 = vadd.f32 %v7677, %v7773
    %v7775 = vpop.f32.mrf.mxu0
    %v7776 = vpop.f32.mrf.mxu0
    %v7777 = vadd.f32 %v7680, %v7776
    %v7778 = vpop.f32.mrf.mxu0
    %7779 = vmatprep.mubr.bf16.mxu0 0
    %7780 = vmatmul.mubr.bf16.gmra.mxu0 %v7500
    %v7781 = vpop.f32.mrf.mxu0
    %v7782 = vadd.f32 %v7685, %v7781
    %v7783 = vpop.f32.mrf.mxu0
    %v7784 = vpop.f32.mrf.mxu0
    %v7785 = vadd.f32 %v7688, %v7784
    %v7786 = vpop.f32.mrf.mxu0
    %7787 = vmatprep.mubr.bf16.mxu0 0
    %7788 = vmatmul.mubr.bf16.gmra.mxu0 %v7503
    %v7789 = vpop.f32.mrf.mxu0
    %v7790 = vadd.f32 %v7693, %v7789
    %v7791 = vpop.f32.mrf.mxu0
    %v7792 = vpop.f32.mrf.mxu0
    %v7793 = vadd.f32 %v7696, %v7792
    %v7794 = vpop.f32.mrf.mxu0
    %7795 = vdwg.mxu0
    %v7796 = vmax.f32 %v7734, 0.0
    %v7797 = vmax.f32 %v7737, 0.0
    %v7798 = vmax.f32 %v7742, 0.0
    %v7799 = vmax.f32 %v7745, 0.0
    %v7800 = vmax.f32 %v7750, 0.0
    %v7801 = vmax.f32 %v7753, 0.0
    %v7802 = vmax.f32 %v7758, 0.0
    %v7803 = vmax.f32 %v7761, 0.0
    %v7804 = vmax.f32 %v7766, 0.0
    %v7805 = vmax.f32 %v7769, 0.0
    %v7806 = vmax.f32 %v7774, 0.0
    %v7807 = vmax.f32 %v7777, 0.0
    %v7808 = vmax.f32 %v7782, 0.0
    %v7809 = vmax.f32 %v7785, 0.0
    %v7810 = vmax.f32 %v7790, 0.0
    %v7811 = vmax.f32 %v7793, 0.0
    %v7812 = vpack.c.bf16 %v7796, %v7796
    %v7813 = vpack.c.bf16 %v7797, %v7797
    %v7814 = vpack.c.bf16 %v7798, %v7798
    %v7815 = vpack.c.bf16 %v7799, %v7799
    %v7816 = vpack.c.bf16 %v7800, %v7800
    %v7817 = vpack.c.bf16 %v7801, %v7801
    %v7818 = vpack.c.bf16 %v7802, %v7802
    %v7819 = vpack.c.bf16 %v7803, %v7803
    %v7820 = vpack.c.bf16 %v7804, %v7804
    %v7821 = vpack.c.bf16 %v7805, %v7805
    %v7822 = vpack.c.bf16 %v7806, %v7806
    %v7823 = vpack.c.bf16 %v7807, %v7807
    %v7824 = vpack.c.bf16 %v7808, %v7808
    %v7825 = vpack.c.bf16 %v7809, %v7809
    %v7826 = vpack.c.bf16 %v7810, %v7810
    %v7827 = vpack.c.bf16 %v7811, %v7811
    %v7828 = vld [vmem:[%s8] sm:$0xf]
    %v7829 = vld [vmem:[%s8 + $0x4] sm:$0xf]
    %v7830 = vld [vmem:[%s8 + $0x8] sm:$0xf]
    %v7831 = vld [vmem:[%s8 + $0xc] sm:$0xf]
    %v7832 = vld [vmem:[%s8 + $0x10] sm:$0xf]
    %v7833 = vld [vmem:[%s8 + $0x14] sm:$0xf]
    %v7834 = vld [vmem:[%s8 + $0x18] sm:$0xf]
    %v7835 = vld [vmem:[%s8 + $0x1c] sm:$0xf]
    %v7836 = vld [vmem:[%s8 + $0x20] sm:$0xf]
    %v7837 = vld [vmem:[%s8 + $0x24] sm:$0xf]
    %v7838 = vld [vmem:[%s8 + $0x28] sm:$0xf]
    %v7839 = vld [vmem:[%s8 + $0x2c] sm:$0xf]
    %v7840 = vld [vmem:[%s8 + $0x30] sm:$0xf]
    %v7841 = vld [vmem:[%s8 + $0x34] sm:$0xf]
    %v7842 = vld [vmem:[%s8 + $0x38] sm:$0xf]
    %v7843 = vld [vmem:[%s8 + $0x3c] sm:$0xf]
    %v7844 = vld [vmem:[%s8 + $0x40] sm:$0xf]
    %v7845 = vld [vmem:[%s8 + $0x44] sm:$0xf]
    %v7846 = vld [vmem:[%s8 + $0x48] sm:$0xf]
    %v7847 = vld [vmem:[%s8 + $0x4c] sm:$0xf]
    %v7848 = vld [vmem:[%s8 + $0x50] sm:$0xf]
    %v7849 = vld [vmem:[%s8 + $0x54] sm:$0xf]
    %v7850 = vld [vmem:[%s8 + $0x58] sm:$0xf]
    %v7851 = vld [vmem:[%s8 + $0x5c] sm:$0xf]
    %v7852 = vld [vmem:[%s8 + $0x60] sm:$0xf]
    %v7853 = vld [vmem:[%s8 + $0x64] sm:$0xf]
    %v7854 = vld [vmem:[%s8 + $0x68] sm:$0xf]
    %v7855 = vld [vmem:[%s8 + $0x6c] sm:$0xf]
    %v7856 = vld [vmem:[%s8 + $0x70] sm:$0xf]
    %v7857 = vld [vmem:[%s8 + $0x74] sm:$0xf]
    %v7858 = vld [vmem:[%s8 + $0x78] sm:$0xf]
    %v7859 = vld [vmem:[%s8 + $0x7c] sm:$0xf]
    %v7860 = vld [vmem:[%s8 + $0x80] sm:$0xf]
    %v7861 = vld [vmem:[%s8 + $0x84] sm:$0xf]
    %v7862 = vld [vmem:[%s8 + $0x88] sm:$0xf]
    %v7863 = vld [vmem:[%s8 + $0x8c] sm:$0xf]
    %v7864 = vld [vmem:[%s8 + $0x90] sm:$0xf]
    %v7865 = vld [vmem:[%s8 + $0x94] sm:$0xf]
    %v7866 = vld [vmem:[%s8 + $0x98] sm:$0xf]
    %v7867 = vld [vmem:[%s8 + $0x9c] sm:$0xf]
    %v7868 = vld [vmem:[%s8 + $0xa0] sm:$0xf]
    %v7869 = vld [vmem:[%s8 + $0xa4] sm:$0xf]
    %v7870 = vld [vmem:[%s8 + $0xa8] sm:$0xf]
    %v7871 = vld [vmem:[%s8 + $0xac] sm:$0xf]
    %v7872 = vld [vmem:[%s8 + $0xb0] sm:$0xf]
    %v7873 = vld [vmem:[%s8 + $0xb4] sm:$0xf]
    %v7874 = vld [vmem:[%s8 + $0xb8] sm:$0xf]
    %v7875 = vld [vmem:[%s8 + $0xbc] sm:$0xf]
    %v7876 = vld [vmem:[%s8 + $0xc0] sm:$0xf]
    %v7877 = vld [vmem:[%s8 + $0xc4] sm:$0xf]
    %v7878 = vld [vmem:[%s8 + $0xc8] sm:$0xf]
    %v7879 = vld [vmem:[%s8 + $0xcc] sm:$0xf]
    %v7880 = vld [vmem:[%s8 + $0xd0] sm:$0xf]
    %v7881 = vld [vmem:[%s8 + $0xd4] sm:$0xf]
    %v7882 = vld [vmem:[%s8 + $0xd8] sm:$0xf]
    %v7883 = vld [vmem:[%s8 + $0xdc] sm:$0xf]
    %v7884 = vld [vmem:[%s8 + $0xe0] sm:$0xf]
    %v7885 = vld [vmem:[%s8 + $0xe4] sm:$0xf]
    %v7886 = vld [vmem:[%s8 + $0xe8] sm:$0xf]
    %v7887 = vld [vmem:[%s8 + $0xec] sm:$0xf]
    %v7888 = vld [vmem:[%s8 + $0xf0] sm:$0xf]
    %v7889 = vld [vmem:[%s8 + $0xf4] sm:$0xf]
    %v7890 = vld [vmem:[%s8 + $0xf8] sm:$0xf]
    %v7891 = vld [vmem:[%s8 + $0xfc] sm:$0xf]
    %v7892 = vld [vmem:[%s8 + $0x100] sm:$0xf]
    %v7893 = vld [vmem:[%s8 + $0x104] sm:$0xf]
    %v7894 = vld [vmem:[%s8 + $0x108] sm:$0xf]
    %v7895 = vld [vmem:[%s8 + $0x10c] sm:$0xf]
    %v7896 = vld [vmem:[%s8 + $0x110] sm:$0xf]
    %v7897 = vld [vmem:[%s8 + $0x114] sm:$0xf]
    %v7898 = vld [vmem:[%s8 + $0x118] sm:$0xf]
    %v7899 = vld [vmem:[%s8 + $0x11c] sm:$0xf]
    %v7900 = vld [vmem:[%s8 + $0x120] sm:$0xf]
    %v7901 = vld [vmem:[%s8 + $0x124] sm:$0xf]
    %v7902 = vld [vmem:[%s8 + $0x128] sm:$0xf]
    %v7903 = vld [vmem:[%s8 + $0x12c] sm:$0xf]
    %v7904 = vld [vmem:[%s8 + $0x130] sm:$0xf]
    %v7905 = vld [vmem:[%s8 + $0x134] sm:$0xf]
    %v7906 = vld [vmem:[%s8 + $0x138] sm:$0xf]
    %v7907 = vld [vmem:[%s8 + $0x13c] sm:$0xf]
    %v7908 = vld [vmem:[%s8 + $0x140] sm:$0xf]
    %v7909 = vld [vmem:[%s8 + $0x144] sm:$0xf]
    %v7910 = vld [vmem:[%s8 + $0x148] sm:$0xf]
    %v7911 = vld [vmem:[%s8 + $0x14c] sm:$0xf]
    %v7912 = vld [vmem:[%s8 + $0x150] sm:$0xf]
    %v7913 = vld [vmem:[%s8 + $0x154] sm:$0xf]
    %v7914 = vld [vmem:[%s8 + $0x158] sm:$0xf]
    %v7915 = vld [vmem:[%s8 + $0x15c] sm:$0xf]
    %v7916 = vld [vmem:[%s8 + $0x160] sm:$0xf]
    %v7917 = vld [vmem:[%s8 + $0x164] sm:$0xf]
    %v7918 = vld [vmem:[%s8 + $0x168] sm:$0xf]
    %v7919 = vld [vmem:[%s8 + $0x16c] sm:$0xf]
    %v7920 = vld [vmem:[%s8 + $0x170] sm:$0xf]
    %v7921 = vld [vmem:[%s8 + $0x174] sm:$0xf]
    %v7922 = vld [vmem:[%s8 + $0x178] sm:$0xf]
    %v7923 = vld [vmem:[%s8 + $0x17c] sm:$0xf]
    %v7924 = vld [vmem:[%s8 + $0x180] sm:$0xf]
    %v7925 = vld [vmem:[%s8 + $0x184] sm:$0xf]
    %v7926 = vld [vmem:[%s8 + $0x188] sm:$0xf]
    %v7927 = vld [vmem:[%s8 + $0x18c] sm:$0xf]
    %v7928 = vld [vmem:[%s8 + $0x190] sm:$0xf]
    %v7929 = vld [vmem:[%s8 + $0x194] sm:$0xf]
    %v7930 = vld [vmem:[%s8 + $0x198] sm:$0xf]
    %v7931 = vld [vmem:[%s8 + $0x19c] sm:$0xf]
    %v7932 = vld [vmem:[%s8 + $0x1a0] sm:$0xf]
    %v7933 = vld [vmem:[%s8 + $0x1a4] sm:$0xf]
    %v7934 = vld [vmem:[%s8 + $0x1a8] sm:$0xf]
    %v7935 = vld [vmem:[%s8 + $0x1ac] sm:$0xf]
    %v7936 = vld [vmem:[%s8 + $0x1b0] sm:$0xf]
    %v7937 = vld [vmem:[%s8 + $0x1b4] sm:$0xf]
    %v7938 = vld [vmem:[%s8 + $0x1b8] sm:$0xf]
    %v7939 = vld [vmem:[%s8 + $0x1bc] sm:$0xf]
    %v7940 = vld [vmem:[%s8 + $0x1c0] sm:$0xf]
    %v7941 = vld [vmem:[%s8 + $0x1c4] sm:$0xf]
    %v7942 = vld [vmem:[%s8 + $0x1c8] sm:$0xf]
    %v7943 = vld [vmem:[%s8 + $0x1cc] sm:$0xf]
    %v7944 = vld [vmem:[%s8 + $0x1d0] sm:$0xf]
    %v7945 = vld [vmem:[%s8 + $0x1d4] sm:$0xf]
    %v7946 = vld [vmem:[%s8 + $0x1d8] sm:$0xf]
    %v7947 = vld [vmem:[%s8 + $0x1dc] sm:$0xf]
    %v7948 = vld [vmem:[%s8 + $0x1e0] sm:$0xf]
    %v7949 = vld [vmem:[%s8 + $0x1e4] sm:$0xf]
    %v7950 = vld [vmem:[%s8 + $0x1e8] sm:$0xf]
    %v7951 = vld [vmem:[%s8 + $0x1ec] sm:$0xf]
    %v7952 = vld [vmem:[%s8 + $0x1f0] sm:$0xf]
    %v7953 = vld [vmem:[%s8 + $0x1f4] sm:$0xf]
    %v7954 = vld [vmem:[%s8 + $0x1f8] sm:$0xf]
    %v7955 = vld [vmem:[%s8 + $0x1fc] sm:$0xf]
    %v7964 = vunpack.c.l.b16 %v7828
    %v7965 = vunpack.c.l.b16 %v7829
    %v7966 = vunpack.c.l.b16 %v7830
    %v7967 = vunpack.c.l.b16 %v7831
    %v7968 = vunpack.c.l.b16 %v7832
    %v7969 = vunpack.c.l.b16 %v7833
    %v7970 = vunpack.c.l.b16 %v7834
    %v7971 = vunpack.c.l.b16 %v7835
    %v7972 = vpack.c.b16 %v7965, %v7964
    %v7973 = vpack.c.b16 %v7967, %v7966
    %v7974 = vpack.c.b16 %v7969, %v7968
    %v7975 = vpack.c.b16 %v7971, %v7970
    %v7981 = vsel %vm1508, %v7812, 0
    %7983 = vmatprep.subr.bf16.mxu0 0
    %7984 = vmatpush1.bf16.msra.mxu0 0
    %7985 = vmatprep.subr.bf16.mxu0 0
    %7986 = vmatpush1.bf16.msra.mxu0 0
    %7987 = vmatprep.subr.bf16.mxu0 0
    %7988 = vmatpush1.bf16.msra.mxu0 0
    %7989 = vmatprep.subr.bf16.mxu0 0
    %7990 = vmatpush1.bf16.msra.mxu0 0
    %7991 = vmatprep.subr.bf16.mxu0 0
    %7992 = vmatpush1.bf16.msra.mxu0 %v7975
    %7993 = vmatprep.subr.bf16.mxu0 0
    %7994 = vmatpush1.bf16.msra.mxu0 %v7974
    %7995 = vmatprep.subr.bf16.mxu0 0
    %7996 = vmatpush1.bf16.msra.mxu0 %v7973
    %7997 = vmatprep.subr.bf16.mxu0 0
    %7998 = vmatpush1.bf16.msra.mxu0 %v7972
    %7999 = vmatprep.subr.bf16.mxu0 0
    %8000 = vmatpush2.bf16.msra.mxu0 0
    %8001 = vmatprep.subr.bf16.mxu0 0
    %8002 = vmatpush2.bf16.msra.mxu0 0
    %8003 = vmatprep.subr.bf16.mxu0 0
    %8004 = vmatpush2.bf16.msra.mxu0 0
    %8005 = vmatprep.subr.bf16.mxu0 0
    %8006 = vmatpush2.bf16.msra.mxu0 0
    %8007 = vmatprep.subr.bf16.mxu0 0
    %8008 = vmatpush2.bf16.msra.mxu0 0
    %8009 = vmatprep.subr.bf16.mxu0 0
    %8010 = vmatpush2.bf16.msra.mxu0 0
    %8011 = vmatprep.subr.bf16.mxu0 0
    %8012 = vmatpush2.bf16.msra.mxu0 0
    %8013 = vmatprep.subr.bf16.mxu0 0
    %8014 = vmatpush2.bf16.msra.mxu0 0
    %8015 = vmatprep.mubr.bf16.mxu0 0
    %8016 = vmatmul.mubr.bf16.gmra.mxu0 %v7981
    %v8017 = vpop.f32.mrf.mxu0
    %v8018 = vadd.f32 0.0, %v8017
    %v8019 = vpop.f32.mrf.mxu0
    %v8020 = vpop.f32.mrf.mxu0
    %v8021 = vpop.f32.mrf.mxu0
    %8022 = vdwg.mxu0
    %v8031 = vunpack.c.l.b16 %v7836
    %v8032 = vunpack.c.l.b16 %v7837
    %v8033 = vunpack.c.l.b16 %v7838
    %v8034 = vunpack.c.l.b16 %v7839
    %v8035 = vunpack.c.l.b16 %v7840
    %v8036 = vunpack.c.l.b16 %v7841
    %v8037 = vunpack.c.l.b16 %v7842
    %v8038 = vunpack.c.l.b16 %v7843
    %v8039 = vpack.c.b16 %v8032, %v8031
    %v8040 = vpack.c.b16 %v8034, %v8033
    %v8041 = vpack.c.b16 %v8036, %v8035
    %v8042 = vpack.c.b16 %v8038, %v8037
    %v8048 = vsel %vm1508, %v7813, 0
    %8050 = vmatprep.subr.bf16.mxu0 0
    %8051 = vmatpush1.bf16.msra.mxu0 0
    %8052 = vmatprep.subr.bf16.mxu0 0
    %8053 = vmatpush1.bf16.msra.mxu0 0
    %8054 = vmatprep.subr.bf16.mxu0 0
    %8055 = vmatpush1.bf16.msra.mxu0 0
    %8056 = vmatprep.subr.bf16.mxu0 0
    %8057 = vmatpush1.bf16.msra.mxu0 0
    %8058 = vmatprep.subr.bf16.mxu0 0
    %8059 = vmatpush1.bf16.msra.mxu0 %v8042
    %8060 = vmatprep.subr.bf16.mxu0 0
    %8061 = vmatpush1.bf16.msra.mxu0 %v8041
    %8062 = vmatprep.subr.bf16.mxu0 0
    %8063 = vmatpush1.bf16.msra.mxu0 %v8040
    %8064 = vmatprep.subr.bf16.mxu0 0
    %8065 = vmatpush1.bf16.msra.mxu0 %v8039
    %8066 = vmatprep.subr.bf16.mxu0 0
    %8067 = vmatpush2.bf16.msra.mxu0 0
    %8068 = vmatprep.subr.bf16.mxu0 0
    %8069 = vmatpush2.bf16.msra.mxu0 0
    %8070 = vmatprep.subr.bf16.mxu0 0
    %8071 = vmatpush2.bf16.msra.mxu0 0
    %8072 = vmatprep.subr.bf16.mxu0 0
    %8073 = vmatpush2.bf16.msra.mxu0 0
    %8074 = vmatprep.subr.bf16.mxu0 0
    %8075 = vmatpush2.bf16.msra.mxu0 0
    %8076 = vmatprep.subr.bf16.mxu0 0
    %8077 = vmatpush2.bf16.msra.mxu0 0
    %8078 = vmatprep.subr.bf16.mxu0 0
    %8079 = vmatpush2.bf16.msra.mxu0 0
    %8080 = vmatprep.subr.bf16.mxu0 0
    %8081 = vmatpush2.bf16.msra.mxu0 0
    %8082 = vmatprep.mubr.bf16.mxu0 0
    %8083 = vmatmul.mubr.bf16.gmra.mxu0 %v8048
    %v8084 = vpop.f32.mrf.mxu0
    %v8085 = vadd.f32 0.0, %v8084
    %v8086 = vpop.f32.mrf.mxu0
    %v8087 = vpop.f32.mrf.mxu0
    %v8088 = vpop.f32.mrf.mxu0
    %8089 = vdwg.mxu0
    %v8098 = vunpack.c.l.b16 %v7844
    %v8099 = vunpack.c.l.b16 %v7845
    %v8100 = vunpack.c.l.b16 %v7846
    %v8101 = vunpack.c.l.b16 %v7847
    %v8102 = vunpack.c.l.b16 %v7848
    %v8103 = vunpack.c.l.b16 %v7849
    %v8104 = vunpack.c.l.b16 %v7850
    %v8105 = vunpack.c.l.b16 %v7851
    %v8106 = vpack.c.b16 %v8099, %v8098
    %v8107 = vpack.c.b16 %v8101, %v8100
    %v8108 = vpack.c.b16 %v8103, %v8102
    %v8109 = vpack.c.b16 %v8105, %v8104
    %v8115 = vsel %vm1508, %v7814, 0
    %8117 = vmatprep.subr.bf16.mxu0 0
    %8118 = vmatpush1.bf16.msra.mxu0 0
    %8119 = vmatprep.subr.bf16.mxu0 0
    %8120 = vmatpush1.bf16.msra.mxu0 0
    %8121 = vmatprep.subr.bf16.mxu0 0
    %8122 = vmatpush1.bf16.msra.mxu0 0
    %8123 = vmatprep.subr.bf16.mxu0 0
    %8124 = vmatpush1.bf16.msra.mxu0 0
    %8125 = vmatprep.subr.bf16.mxu0 0
    %8126 = vmatpush1.bf16.msra.mxu0 %v8109
    %8127 = vmatprep.subr.bf16.mxu0 0
    %8128 = vmatpush1.bf16.msra.mxu0 %v8108
    %8129 = vmatprep.subr.bf16.mxu0 0
    %8130 = vmatpush1.bf16.msra.mxu0 %v8107
    %8131 = vmatprep.subr.bf16.mxu0 0
    %8132 = vmatpush1.bf16.msra.mxu0 %v8106
    %8133 = vmatprep.subr.bf16.mxu0 0
    %8134 = vmatpush2.bf16.msra.mxu0 0
    %8135 = vmatprep.subr.bf16.mxu0 0
    %8136 = vmatpush2.bf16.msra.mxu0 0
    %8137 = vmatprep.subr.bf16.mxu0 0
    %8138 = vmatpush2.bf16.msra.mxu0 0
    %8139 = vmatprep.subr.bf16.mxu0 0
    %8140 = vmatpush2.bf16.msra.mxu0 0
    %8141 = vmatprep.subr.bf16.mxu0 0
    %8142 = vmatpush2.bf16.msra.mxu0 0
    %8143 = vmatprep.subr.bf16.mxu0 0
    %8144 = vmatpush2.bf16.msra.mxu0 0
    %8145 = vmatprep.subr.bf16.mxu0 0
    %8146 = vmatpush2.bf16.msra.mxu0 0
    %8147 = vmatprep.subr.bf16.mxu0 0
    %8148 = vmatpush2.bf16.msra.mxu0 0
    %8149 = vmatprep.mubr.bf16.mxu0 0
    %8150 = vmatmul.mubr.bf16.gmra.mxu0 %v8115
    %v8151 = vpop.f32.mrf.mxu0
    %v8152 = vadd.f32 0.0, %v8151
    %v8153 = vpop.f32.mrf.mxu0
    %v8154 = vpop.f32.mrf.mxu0
    %v8155 = vpop.f32.mrf.mxu0
    %8156 = vdwg.mxu0
    %v8165 = vunpack.c.l.b16 %v7852
    %v8166 = vunpack.c.l.b16 %v7853
    %v8167 = vunpack.c.l.b16 %v7854
    %v8168 = vunpack.c.l.b16 %v7855
    %v8169 = vunpack.c.l.b16 %v7856
    %v8170 = vunpack.c.l.b16 %v7857
    %v8171 = vunpack.c.l.b16 %v7858
    %v8172 = vunpack.c.l.b16 %v7859
    %v8173 = vpack.c.b16 %v8166, %v8165
    %v8174 = vpack.c.b16 %v8168, %v8167
    %v8175 = vpack.c.b16 %v8170, %v8169
    %v8176 = vpack.c.b16 %v8172, %v8171
    %v8182 = vsel %vm1508, %v7815, 0
    %8184 = vmatprep.subr.bf16.mxu0 0
    %8185 = vmatpush1.bf16.msra.mxu0 0
    %8186 = vmatprep.subr.bf16.mxu0 0
    %8187 = vmatpush1.bf16.msra.mxu0 0
    %8188 = vmatprep.subr.bf16.mxu0 0
    %8189 = vmatpush1.bf16.msra.mxu0 0
    %8190 = vmatprep.subr.bf16.mxu0 0
    %8191 = vmatpush1.bf16.msra.mxu0 0
    %8192 = vmatprep.subr.bf16.mxu0 0
    %8193 = vmatpush1.bf16.msra.mxu0 %v8176
    %8194 = vmatprep.subr.bf16.mxu0 0
    %8195 = vmatpush1.bf16.msra.mxu0 %v8175
    %8196 = vmatprep.subr.bf16.mxu0 0
    %8197 = vmatpush1.bf16.msra.mxu0 %v8174
    %8198 = vmatprep.subr.bf16.mxu0 0
    %8199 = vmatpush1.bf16.msra.mxu0 %v8173
    %8200 = vmatprep.subr.bf16.mxu0 0
    %8201 = vmatpush2.bf16.msra.mxu0 0
    %8202 = vmatprep.subr.bf16.mxu0 0
    %8203 = vmatpush2.bf16.msra.mxu0 0
    %8204 = vmatprep.subr.bf16.mxu0 0
    %8205 = vmatpush2.bf16.msra.mxu0 0
    %8206 = vmatprep.subr.bf16.mxu0 0
    %8207 = vmatpush2.bf16.msra.mxu0 0
    %8208 = vmatprep.subr.bf16.mxu0 0
    %8209 = vmatpush2.bf16.msra.mxu0 0
    %8210 = vmatprep.subr.bf16.mxu0 0
    %8211 = vmatpush2.bf16.msra.mxu0 0
    %8212 = vmatprep.subr.bf16.mxu0 0
    %8213 = vmatpush2.bf16.msra.mxu0 0
    %8214 = vmatprep.subr.bf16.mxu0 0
    %8215 = vmatpush2.bf16.msra.mxu0 0
    %8216 = vmatprep.mubr.bf16.mxu0 0
    %8217 = vmatmul.mubr.bf16.gmra.mxu0 %v8182
    %v8218 = vpop.f32.mrf.mxu0
    %v8219 = vadd.f32 0.0, %v8218
    %v8220 = vpop.f32.mrf.mxu0
    %v8221 = vpop.f32.mrf.mxu0
    %v8222 = vpop.f32.mrf.mxu0
    %8223 = vdwg.mxu0
    %v8232 = vunpack.c.l.b16 %v7860
    %v8233 = vunpack.c.l.b16 %v7861
    %v8234 = vunpack.c.l.b16 %v7862
    %v8235 = vunpack.c.l.b16 %v7863
    %v8236 = vunpack.c.l.b16 %v7864
    %v8237 = vunpack.c.l.b16 %v7865
    %v8238 = vunpack.c.l.b16 %v7866
    %v8239 = vunpack.c.l.b16 %v7867
    %v8240 = vpack.c.b16 %v8233, %v8232
    %v8241 = vpack.c.b16 %v8235, %v8234
    %v8242 = vpack.c.b16 %v8237, %v8236
    %v8243 = vpack.c.b16 %v8239, %v8238
    %v8249 = vsel %vm1508, %v7816, 0
    %8251 = vmatprep.subr.bf16.mxu0 0
    %8252 = vmatpush1.bf16.msra.mxu0 0
    %8253 = vmatprep.subr.bf16.mxu0 0
    %8254 = vmatpush1.bf16.msra.mxu0 0
    %8255 = vmatprep.subr.bf16.mxu0 0
    %8256 = vmatpush1.bf16.msra.mxu0 0
    %8257 = vmatprep.subr.bf16.mxu0 0
    %8258 = vmatpush1.bf16.msra.mxu0 0
    %8259 = vmatprep.subr.bf16.mxu0 0
    %8260 = vmatpush1.bf16.msra.mxu0 %v8243
    %8261 = vmatprep.subr.bf16.mxu0 0
    %8262 = vmatpush1.bf16.msra.mxu0 %v8242
    %8263 = vmatprep.subr.bf16.mxu0 0
    %8264 = vmatpush1.bf16.msra.mxu0 %v8241
    %8265 = vmatprep.subr.bf16.mxu0 0
    %8266 = vmatpush1.bf16.msra.mxu0 %v8240
    %8267 = vmatprep.subr.bf16.mxu0 0
    %8268 = vmatpush2.bf16.msra.mxu0 0
    %8269 = vmatprep.subr.bf16.mxu0 0
    %8270 = vmatpush2.bf16.msra.mxu0 0
    %8271 = vmatprep.subr.bf16.mxu0 0
    %8272 = vmatpush2.bf16.msra.mxu0 0
    %8273 = vmatprep.subr.bf16.mxu0 0
    %8274 = vmatpush2.bf16.msra.mxu0 0
    %8275 = vmatprep.subr.bf16.mxu0 0
    %8276 = vmatpush2.bf16.msra.mxu0 0
    %8277 = vmatprep.subr.bf16.mxu0 0
    %8278 = vmatpush2.bf16.msra.mxu0 0
    %8279 = vmatprep.subr.bf16.mxu0 0
    %8280 = vmatpush2.bf16.msra.mxu0 0
    %8281 = vmatprep.subr.bf16.mxu0 0
    %8282 = vmatpush2.bf16.msra.mxu0 0
    %8283 = vmatprep.mubr.bf16.mxu0 0
    %8284 = vmatmul.mubr.bf16.gmra.mxu0 %v8249
    %v8285 = vpop.f32.mrf.mxu0
    %v8286 = vadd.f32 0.0, %v8285
    %v8287 = vpop.f32.mrf.mxu0
    %v8288 = vpop.f32.mrf.mxu0
    %v8289 = vpop.f32.mrf.mxu0
    %8290 = vdwg.mxu0
    %v8299 = vunpack.c.l.b16 %v7868
    %v8300 = vunpack.c.l.b16 %v7869
    %v8301 = vunpack.c.l.b16 %v7870
    %v8302 = vunpack.c.l.b16 %v7871
    %v8303 = vunpack.c.l.b16 %v7872
    %v8304 = vunpack.c.l.b16 %v7873
    %v8305 = vunpack.c.l.b16 %v7874
    %v8306 = vunpack.c.l.b16 %v7875
    %v8307 = vpack.c.b16 %v8300, %v8299
    %v8308 = vpack.c.b16 %v8302, %v8301
    %v8309 = vpack.c.b16 %v8304, %v8303
    %v8310 = vpack.c.b16 %v8306, %v8305
    %v8316 = vsel %vm1508, %v7817, 0
    %8318 = vmatprep.subr.bf16.mxu0 0
    %8319 = vmatpush1.bf16.msra.mxu0 0
    %8320 = vmatprep.subr.bf16.mxu0 0
    %8321 = vmatpush1.bf16.msra.mxu0 0
    %8322 = vmatprep.subr.bf16.mxu0 0
    %8323 = vmatpush1.bf16.msra.mxu0 0
    %8324 = vmatprep.subr.bf16.mxu0 0
    %8325 = vmatpush1.bf16.msra.mxu0 0
    %8326 = vmatprep.subr.bf16.mxu0 0
    %8327 = vmatpush1.bf16.msra.mxu0 %v8310
    %8328 = vmatprep.subr.bf16.mxu0 0
    %8329 = vmatpush1.bf16.msra.mxu0 %v8309
    %8330 = vmatprep.subr.bf16.mxu0 0
    %8331 = vmatpush1.bf16.msra.mxu0 %v8308
    %8332 = vmatprep.subr.bf16.mxu0 0
    %8333 = vmatpush1.bf16.msra.mxu0 %v8307
    %8334 = vmatprep.subr.bf16.mxu0 0
    %8335 = vmatpush2.bf16.msra.mxu0 0
    %8336 = vmatprep.subr.bf16.mxu0 0
    %8337 = vmatpush2.bf16.msra.mxu0 0
    %8338 = vmatprep.subr.bf16.mxu0 0
    %8339 = vmatpush2.bf16.msra.mxu0 0
    %8340 = vmatprep.subr.bf16.mxu0 0
    %8341 = vmatpush2.bf16.msra.mxu0 0
    %8342 = vmatprep.subr.bf16.mxu0 0
    %8343 = vmatpush2.bf16.msra.mxu0 0
    %8344 = vmatprep.subr.bf16.mxu0 0
    %8345 = vmatpush2.bf16.msra.mxu0 0
    %8346 = vmatprep.subr.bf16.mxu0 0
    %8347 = vmatpush2.bf16.msra.mxu0 0
    %8348 = vmatprep.subr.bf16.mxu0 0
    %8349 = vmatpush2.bf16.msra.mxu0 0
    %8350 = vmatprep.mubr.bf16.mxu0 0
    %8351 = vmatmul.mubr.bf16.gmra.mxu0 %v8316
    %v8352 = vpop.f32.mrf.mxu0
    %v8353 = vadd.f32 0.0, %v8352
    %v8354 = vpop.f32.mrf.mxu0
    %v8355 = vpop.f32.mrf.mxu0
    %v8356 = vpop.f32.mrf.mxu0
    %8357 = vdwg.mxu0
    %v8366 = vunpack.c.l.b16 %v7876
    %v8367 = vunpack.c.l.b16 %v7877
    %v8368 = vunpack.c.l.b16 %v7878
    %v8369 = vunpack.c.l.b16 %v7879
    %v8370 = vunpack.c.l.b16 %v7880
    %v8371 = vunpack.c.l.b16 %v7881
    %v8372 = vunpack.c.l.b16 %v7882
    %v8373 = vunpack.c.l.b16 %v7883
    %v8374 = vpack.c.b16 %v8367, %v8366
    %v8375 = vpack.c.b16 %v8369, %v8368
    %v8376 = vpack.c.b16 %v8371, %v8370
    %v8377 = vpack.c.b16 %v8373, %v8372
    %v8383 = vsel %vm1508, %v7818, 0
    %8385 = vmatprep.subr.bf16.mxu0 0
    %8386 = vmatpush1.bf16.msra.mxu0 0
    %8387 = vmatprep.subr.bf16.mxu0 0
    %8388 = vmatpush1.bf16.msra.mxu0 0
    %8389 = vmatprep.subr.bf16.mxu0 0
    %8390 = vmatpush1.bf16.msra.mxu0 0
    %8391 = vmatprep.subr.bf16.mxu0 0
    %8392 = vmatpush1.bf16.msra.mxu0 0
    %8393 = vmatprep.subr.bf16.mxu0 0
    %8394 = vmatpush1.bf16.msra.mxu0 %v8377
    %8395 = vmatprep.subr.bf16.mxu0 0
    %8396 = vmatpush1.bf16.msra.mxu0 %v8376
    %8397 = vmatprep.subr.bf16.mxu0 0
    %8398 = vmatpush1.bf16.msra.mxu0 %v8375
    %8399 = vmatprep.subr.bf16.mxu0 0
    %8400 = vmatpush1.bf16.msra.mxu0 %v8374
    %8401 = vmatprep.subr.bf16.mxu0 0
    %8402 = vmatpush2.bf16.msra.mxu0 0
    %8403 = vmatprep.subr.bf16.mxu0 0
    %8404 = vmatpush2.bf16.msra.mxu0 0
    %8405 = vmatprep.subr.bf16.mxu0 0
    %8406 = vmatpush2.bf16.msra.mxu0 0
    %8407 = vmatprep.subr.bf16.mxu0 0
    %8408 = vmatpush2.bf16.msra.mxu0 0
    %8409 = vmatprep.subr.bf16.mxu0 0
    %8410 = vmatpush2.bf16.msra.mxu0 0
    %8411 = vmatprep.subr.bf16.mxu0 0
    %8412 = vmatpush2.bf16.msra.mxu0 0
    %8413 = vmatprep.subr.bf16.mxu0 0
    %8414 = vmatpush2.bf16.msra.mxu0 0
    %8415 = vmatprep.subr.bf16.mxu0 0
    %8416 = vmatpush2.bf16.msra.mxu0 0
    %8417 = vmatprep.mubr.bf16.mxu0 0
    %8418 = vmatmul.mubr.bf16.gmra.mxu0 %v8383
    %v8419 = vpop.f32.mrf.mxu0
    %v8420 = vadd.f32 0.0, %v8419
    %v8421 = vpop.f32.mrf.mxu0
    %v8422 = vpop.f32.mrf.mxu0
    %v8423 = vpop.f32.mrf.mxu0
    %8424 = vdwg.mxu0
    %v8433 = vunpack.c.l.b16 %v7884
    %v8434 = vunpack.c.l.b16 %v7885
    %v8435 = vunpack.c.l.b16 %v7886
    %v8436 = vunpack.c.l.b16 %v7887
    %v8437 = vunpack.c.l.b16 %v7888
    %v8438 = vunpack.c.l.b16 %v7889
    %v8439 = vunpack.c.l.b16 %v7890
    %v8440 = vunpack.c.l.b16 %v7891
    %v8441 = vpack.c.b16 %v8434, %v8433
    %v8442 = vpack.c.b16 %v8436, %v8435
    %v8443 = vpack.c.b16 %v8438, %v8437
    %v8444 = vpack.c.b16 %v8440, %v8439
    %v8450 = vsel %vm1508, %v7819, 0
    %8452 = vmatprep.subr.bf16.mxu0 0
    %8453 = vmatpush1.bf16.msra.mxu0 0
    %8454 = vmatprep.subr.bf16.mxu0 0
    %8455 = vmatpush1.bf16.msra.mxu0 0
    %8456 = vmatprep.subr.bf16.mxu0 0
    %8457 = vmatpush1.bf16.msra.mxu0 0
    %8458 = vmatprep.subr.bf16.mxu0 0
    %8459 = vmatpush1.bf16.msra.mxu0 0
    %8460 = vmatprep.subr.bf16.mxu0 0
    %8461 = vmatpush1.bf16.msra.mxu0 %v8444
    %8462 = vmatprep.subr.bf16.mxu0 0
    %8463 = vmatpush1.bf16.msra.mxu0 %v8443
    %8464 = vmatprep.subr.bf16.mxu0 0
    %8465 = vmatpush1.bf16.msra.mxu0 %v8442
    %8466 = vmatprep.subr.bf16.mxu0 0
    %8467 = vmatpush1.bf16.msra.mxu0 %v8441
    %8468 = vmatprep.subr.bf16.mxu0 0
    %8469 = vmatpush2.bf16.msra.mxu0 0
    %8470 = vmatprep.subr.bf16.mxu0 0
    %8471 = vmatpush2.bf16.msra.mxu0 0
    %8472 = vmatprep.subr.bf16.mxu0 0
    %8473 = vmatpush2.bf16.msra.mxu0 0
    %8474 = vmatprep.subr.bf16.mxu0 0
    %8475 = vmatpush2.bf16.msra.mxu0 0
    %8476 = vmatprep.subr.bf16.mxu0 0
    %8477 = vmatpush2.bf16.msra.mxu0 0
    %8478 = vmatprep.subr.bf16.mxu0 0
    %8479 = vmatpush2.bf16.msra.mxu0 0
    %8480 = vmatprep.subr.bf16.mxu0 0
    %8481 = vmatpush2.bf16.msra.mxu0 0
    %8482 = vmatprep.subr.bf16.mxu0 0
    %8483 = vmatpush2.bf16.msra.mxu0 0
    %8484 = vmatprep.mubr.bf16.mxu0 0
    %8485 = vmatmul.mubr.bf16.gmra.mxu0 %v8450
    %v8486 = vpop.f32.mrf.mxu0
    %v8487 = vadd.f32 0.0, %v8486
    %v8488 = vpop.f32.mrf.mxu0
    %v8489 = vpop.f32.mrf.mxu0
    %v8490 = vpop.f32.mrf.mxu0
    %8491 = vdwg.mxu0
    %v8500 = vunpack.c.l.b16 %v7892
    %v8501 = vunpack.c.l.b16 %v7893
    %v8502 = vunpack.c.l.b16 %v7894
    %v8503 = vunpack.c.l.b16 %v7895
    %v8504 = vunpack.c.l.b16 %v7896
    %v8505 = vunpack.c.l.b16 %v7897
    %v8506 = vunpack.c.l.b16 %v7898
    %v8507 = vunpack.c.l.b16 %v7899
    %v8508 = vpack.c.b16 %v8501, %v8500
    %v8509 = vpack.c.b16 %v8503, %v8502
    %v8510 = vpack.c.b16 %v8505, %v8504
    %v8511 = vpack.c.b16 %v8507, %v8506
    %v8517 = vsel %vm1508, %v7820, 0
    %8519 = vmatprep.subr.bf16.mxu0 0
    %8520 = vmatpush1.bf16.msra.mxu0 0
    %8521 = vmatprep.subr.bf16.mxu0 0
    %8522 = vmatpush1.bf16.msra.mxu0 0
    %8523 = vmatprep.subr.bf16.mxu0 0
    %8524 = vmatpush1.bf16.msra.mxu0 0
    %8525 = vmatprep.subr.bf16.mxu0 0
    %8526 = vmatpush1.bf16.msra.mxu0 0
    %8527 = vmatprep.subr.bf16.mxu0 0
    %8528 = vmatpush1.bf16.msra.mxu0 %v8511
    %8529 = vmatprep.subr.bf16.mxu0 0
    %8530 = vmatpush1.bf16.msra.mxu0 %v8510
    %8531 = vmatprep.subr.bf16.mxu0 0
    %8532 = vmatpush1.bf16.msra.mxu0 %v8509
    %8533 = vmatprep.subr.bf16.mxu0 0
    %8534 = vmatpush1.bf16.msra.mxu0 %v8508
    %8535 = vmatprep.subr.bf16.mxu0 0
    %8536 = vmatpush2.bf16.msra.mxu0 0
    %8537 = vmatprep.subr.bf16.mxu0 0
    %8538 = vmatpush2.bf16.msra.mxu0 0
    %8539 = vmatprep.subr.bf16.mxu0 0
    %8540 = vmatpush2.bf16.msra.mxu0 0
    %8541 = vmatprep.subr.bf16.mxu0 0
    %8542 = vmatpush2.bf16.msra.mxu0 0
    %8543 = vmatprep.subr.bf16.mxu0 0
    %8544 = vmatpush2.bf16.msra.mxu0 0
    %8545 = vmatprep.subr.bf16.mxu0 0
    %8546 = vmatpush2.bf16.msra.mxu0 0
    %8547 = vmatprep.subr.bf16.mxu0 0
    %8548 = vmatpush2.bf16.msra.mxu0 0
    %8549 = vmatprep.subr.bf16.mxu0 0
    %8550 = vmatpush2.bf16.msra.mxu0 0
    %8551 = vmatprep.mubr.bf16.mxu0 0
    %8552 = vmatmul.mubr.bf16.gmra.mxu0 %v8517
    %v8553 = vpop.f32.mrf.mxu0
    %v8554 = vadd.f32 0.0, %v8553
    %v8555 = vpop.f32.mrf.mxu0
    %v8556 = vpop.f32.mrf.mxu0
    %v8557 = vpop.f32.mrf.mxu0
    %8558 = vdwg.mxu0
    %v8567 = vunpack.c.l.b16 %v7900
    %v8568 = vunpack.c.l.b16 %v7901
    %v8569 = vunpack.c.l.b16 %v7902
    %v8570 = vunpack.c.l.b16 %v7903
    %v8571 = vunpack.c.l.b16 %v7904
    %v8572 = vunpack.c.l.b16 %v7905
    %v8573 = vunpack.c.l.b16 %v7906
    %v8574 = vunpack.c.l.b16 %v7907
    %v8575 = vpack.c.b16 %v8568, %v8567
    %v8576 = vpack.c.b16 %v8570, %v8569
    %v8577 = vpack.c.b16 %v8572, %v8571
    %v8578 = vpack.c.b16 %v8574, %v8573
    %v8584 = vsel %vm1508, %v7821, 0
    %8586 = vmatprep.subr.bf16.mxu0 0
    %8587 = vmatpush1.bf16.msra.mxu0 0
    %8588 = vmatprep.subr.bf16.mxu0 0
    %8589 = vmatpush1.bf16.msra.mxu0 0
    %8590 = vmatprep.subr.bf16.mxu0 0
    %8591 = vmatpush1.bf16.msra.mxu0 0
    %8592 = vmatprep.subr.bf16.mxu0 0
    %8593 = vmatpush1.bf16.msra.mxu0 0
    %8594 = vmatprep.subr.bf16.mxu0 0
    %8595 = vmatpush1.bf16.msra.mxu0 %v8578
    %8596 = vmatprep.subr.bf16.mxu0 0
    %8597 = vmatpush1.bf16.msra.mxu0 %v8577
    %8598 = vmatprep.subr.bf16.mxu0 0
    %8599 = vmatpush1.bf16.msra.mxu0 %v8576
    %8600 = vmatprep.subr.bf16.mxu0 0
    %8601 = vmatpush1.bf16.msra.mxu0 %v8575
    %8602 = vmatprep.subr.bf16.mxu0 0
    %8603 = vmatpush2.bf16.msra.mxu0 0
    %8604 = vmatprep.subr.bf16.mxu0 0
    %8605 = vmatpush2.bf16.msra.mxu0 0
    %8606 = vmatprep.subr.bf16.mxu0 0
    %8607 = vmatpush2.bf16.msra.mxu0 0
    %8608 = vmatprep.subr.bf16.mxu0 0
    %8609 = vmatpush2.bf16.msra.mxu0 0
    %8610 = vmatprep.subr.bf16.mxu0 0
    %8611 = vmatpush2.bf16.msra.mxu0 0
    %8612 = vmatprep.subr.bf16.mxu0 0
    %8613 = vmatpush2.bf16.msra.mxu0 0
    %8614 = vmatprep.subr.bf16.mxu0 0
    %8615 = vmatpush2.bf16.msra.mxu0 0
    %8616 = vmatprep.subr.bf16.mxu0 0
    %8617 = vmatpush2.bf16.msra.mxu0 0
    %8618 = vmatprep.mubr.bf16.mxu0 0
    %8619 = vmatmul.mubr.bf16.gmra.mxu0 %v8584
    %v8620 = vpop.f32.mrf.mxu0
    %v8621 = vadd.f32 0.0, %v8620
    %v8622 = vpop.f32.mrf.mxu0
    %v8623 = vpop.f32.mrf.mxu0
    %v8624 = vpop.f32.mrf.mxu0
    %8625 = vdwg.mxu0
    %v8634 = vunpack.c.l.b16 %v7908
    %v8635 = vunpack.c.l.b16 %v7909
    %v8636 = vunpack.c.l.b16 %v7910
    %v8637 = vunpack.c.l.b16 %v7911
    %v8638 = vunpack.c.l.b16 %v7912
    %v8639 = vunpack.c.l.b16 %v7913
    %v8640 = vunpack.c.l.b16 %v7914
    %v8641 = vunpack.c.l.b16 %v7915
    %v8642 = vpack.c.b16 %v8635, %v8634
    %v8643 = vpack.c.b16 %v8637, %v8636
    %v8644 = vpack.c.b16 %v8639, %v8638
    %v8645 = vpack.c.b16 %v8641, %v8640
    %v8651 = vsel %vm1508, %v7822, 0
    %8653 = vmatprep.subr.bf16.mxu0 0
    %8654 = vmatpush1.bf16.msra.mxu0 0
    %8655 = vmatprep.subr.bf16.mxu0 0
    %8656 = vmatpush1.bf16.msra.mxu0 0
    %8657 = vmatprep.subr.bf16.mxu0 0
    %8658 = vmatpush1.bf16.msra.mxu0 0
    %8659 = vmatprep.subr.bf16.mxu0 0
    %8660 = vmatpush1.bf16.msra.mxu0 0
    %8661 = vmatprep.subr.bf16.mxu0 0
    %8662 = vmatpush1.bf16.msra.mxu0 %v8645
    %8663 = vmatprep.subr.bf16.mxu0 0
    %8664 = vmatpush1.bf16.msra.mxu0 %v8644
    %8665 = vmatprep.subr.bf16.mxu0 0
    %8666 = vmatpush1.bf16.msra.mxu0 %v8643
    %8667 = vmatprep.subr.bf16.mxu0 0
    %8668 = vmatpush1.bf16.msra.mxu0 %v8642
    %8669 = vmatprep.subr.bf16.mxu0 0
    %8670 = vmatpush2.bf16.msra.mxu0 0
    %8671 = vmatprep.subr.bf16.mxu0 0
    %8672 = vmatpush2.bf16.msra.mxu0 0
    %8673 = vmatprep.subr.bf16.mxu0 0
    %8674 = vmatpush2.bf16.msra.mxu0 0
    %8675 = vmatprep.subr.bf16.mxu0 0
    %8676 = vmatpush2.bf16.msra.mxu0 0
    %8677 = vmatprep.subr.bf16.mxu0 0
    %8678 = vmatpush2.bf16.msra.mxu0 0
    %8679 = vmatprep.subr.bf16.mxu0 0
    %8680 = vmatpush2.bf16.msra.mxu0 0
    %8681 = vmatprep.subr.bf16.mxu0 0
    %8682 = vmatpush2.bf16.msra.mxu0 0
    %8683 = vmatprep.subr.bf16.mxu0 0
    %8684 = vmatpush2.bf16.msra.mxu0 0
    %8685 = vmatprep.mubr.bf16.mxu0 0
    %8686 = vmatmul.mubr.bf16.gmra.mxu0 %v8651
    %v8687 = vpop.f32.mrf.mxu0
    %v8688 = vadd.f32 0.0, %v8687
    %v8689 = vpop.f32.mrf.mxu0
    %v8690 = vpop.f32.mrf.mxu0
    %v8691 = vpop.f32.mrf.mxu0
    %8692 = vdwg.mxu0
    %v8701 = vunpack.c.l.b16 %v7916
    %v8702 = vunpack.c.l.b16 %v7917
    %v8703 = vunpack.c.l.b16 %v7918
    %v8704 = vunpack.c.l.b16 %v7919
    %v8705 = vunpack.c.l.b16 %v7920
    %v8706 = vunpack.c.l.b16 %v7921
    %v8707 = vunpack.c.l.b16 %v7922
    %v8708 = vunpack.c.l.b16 %v7923
    %v8709 = vpack.c.b16 %v8702, %v8701
    %v8710 = vpack.c.b16 %v8704, %v8703
    %v8711 = vpack.c.b16 %v8706, %v8705
    %v8712 = vpack.c.b16 %v8708, %v8707
    %v8718 = vsel %vm1508, %v7823, 0
    %8720 = vmatprep.subr.bf16.mxu0 0
    %8721 = vmatpush1.bf16.msra.mxu0 0
    %8722 = vmatprep.subr.bf16.mxu0 0
    %8723 = vmatpush1.bf16.msra.mxu0 0
    %8724 = vmatprep.subr.bf16.mxu0 0
    %8725 = vmatpush1.bf16.msra.mxu0 0
    %8726 = vmatprep.subr.bf16.mxu0 0
    %8727 = vmatpush1.bf16.msra.mxu0 0
    %8728 = vmatprep.subr.bf16.mxu0 0
    %8729 = vmatpush1.bf16.msra.mxu0 %v8712
    %8730 = vmatprep.subr.bf16.mxu0 0
    %8731 = vmatpush1.bf16.msra.mxu0 %v8711
    %8732 = vmatprep.subr.bf16.mxu0 0
    %8733 = vmatpush1.bf16.msra.mxu0 %v8710
    %8734 = vmatprep.subr.bf16.mxu0 0
    %8735 = vmatpush1.bf16.msra.mxu0 %v8709
    %8736 = vmatprep.subr.bf16.mxu0 0
    %8737 = vmatpush2.bf16.msra.mxu0 0
    %8738 = vmatprep.subr.bf16.mxu0 0
    %8739 = vmatpush2.bf16.msra.mxu0 0
    %8740 = vmatprep.subr.bf16.mxu0 0
    %8741 = vmatpush2.bf16.msra.mxu0 0
    %8742 = vmatprep.subr.bf16.mxu0 0
    %8743 = vmatpush2.bf16.msra.mxu0 0
    %8744 = vmatprep.subr.bf16.mxu0 0
    %8745 = vmatpush2.bf16.msra.mxu0 0
    %8746 = vmatprep.subr.bf16.mxu0 0
    %8747 = vmatpush2.bf16.msra.mxu0 0
    %8748 = vmatprep.subr.bf16.mxu0 0
    %8749 = vmatpush2.bf16.msra.mxu0 0
    %8750 = vmatprep.subr.bf16.mxu0 0
    %8751 = vmatpush2.bf16.msra.mxu0 0
    %8752 = vmatprep.mubr.bf16.mxu0 0
    %8753 = vmatmul.mubr.bf16.gmra.mxu0 %v8718
    %v8754 = vpop.f32.mrf.mxu0
    %v8755 = vadd.f32 0.0, %v8754
    %v8756 = vpop.f32.mrf.mxu0
    %v8757 = vpop.f32.mrf.mxu0
    %v8758 = vpop.f32.mrf.mxu0
    %8759 = vdwg.mxu0
    %v8768 = vunpack.c.l.b16 %v7924
    %v8769 = vunpack.c.l.b16 %v7925
    %v8770 = vunpack.c.l.b16 %v7926
    %v8771 = vunpack.c.l.b16 %v7927
    %v8772 = vunpack.c.l.b16 %v7928
    %v8773 = vunpack.c.l.b16 %v7929
    %v8774 = vunpack.c.l.b16 %v7930
    %v8775 = vunpack.c.l.b16 %v7931
    %v8776 = vpack.c.b16 %v8769, %v8768
    %v8777 = vpack.c.b16 %v8771, %v8770
    %v8778 = vpack.c.b16 %v8773, %v8772
    %v8779 = vpack.c.b16 %v8775, %v8774
    %v8785 = vsel %vm1508, %v7824, 0
    %8787 = vmatprep.subr.bf16.mxu0 0
    %8788 = vmatpush1.bf16.msra.mxu0 0
    %8789 = vmatprep.subr.bf16.mxu0 0
    %8790 = vmatpush1.bf16.msra.mxu0 0
    %8791 = vmatprep.subr.bf16.mxu0 0
    %8792 = vmatpush1.bf16.msra.mxu0 0
    %8793 = vmatprep.subr.bf16.mxu0 0
    %8794 = vmatpush1.bf16.msra.mxu0 0
    %8795 = vmatprep.subr.bf16.mxu0 0
    %8796 = vmatpush1.bf16.msra.mxu0 %v8779
    %8797 = vmatprep.subr.bf16.mxu0 0
    %8798 = vmatpush1.bf16.msra.mxu0 %v8778
    %8799 = vmatprep.subr.bf16.mxu0 0
    %8800 = vmatpush1.bf16.msra.mxu0 %v8777
    %8801 = vmatprep.subr.bf16.mxu0 0
    %8802 = vmatpush1.bf16.msra.mxu0 %v8776
    %8803 = vmatprep.subr.bf16.mxu0 0
    %8804 = vmatpush2.bf16.msra.mxu0 0
    %8805 = vmatprep.subr.bf16.mxu0 0
    %8806 = vmatpush2.bf16.msra.mxu0 0
    %8807 = vmatprep.subr.bf16.mxu0 0
    %8808 = vmatpush2.bf16.msra.mxu0 0
    %8809 = vmatprep.subr.bf16.mxu0 0
    %8810 = vmatpush2.bf16.msra.mxu0 0
    %8811 = vmatprep.subr.bf16.mxu0 0
    %8812 = vmatpush2.bf16.msra.mxu0 0
    %8813 = vmatprep.subr.bf16.mxu0 0
    %8814 = vmatpush2.bf16.msra.mxu0 0
    %8815 = vmatprep.subr.bf16.mxu0 0
    %8816 = vmatpush2.bf16.msra.mxu0 0
    %8817 = vmatprep.subr.bf16.mxu0 0
    %8818 = vmatpush2.bf16.msra.mxu0 0
    %8819 = vmatprep.mubr.bf16.mxu0 0
    %8820 = vmatmul.mubr.bf16.gmra.mxu0 %v8785
    %v8821 = vpop.f32.mrf.mxu0
    %v8822 = vadd.f32 0.0, %v8821
    %v8823 = vpop.f32.mrf.mxu0
    %v8824 = vpop.f32.mrf.mxu0
    %v8825 = vpop.f32.mrf.mxu0
    %8826 = vdwg.mxu0
    %v8835 = vunpack.c.l.b16 %v7932
    %v8836 = vunpack.c.l.b16 %v7933
    %v8837 = vunpack.c.l.b16 %v7934
    %v8838 = vunpack.c.l.b16 %v7935
    %v8839 = vunpack.c.l.b16 %v7936
    %v8840 = vunpack.c.l.b16 %v7937
    %v8841 = vunpack.c.l.b16 %v7938
    %v8842 = vunpack.c.l.b16 %v7939
    %v8843 = vpack.c.b16 %v8836, %v8835
    %v8844 = vpack.c.b16 %v8838, %v8837
    %v8845 = vpack.c.b16 %v8840, %v8839
    %v8846 = vpack.c.b16 %v8842, %v8841
    %v8852 = vsel %vm1508, %v7825, 0
    %8854 = vmatprep.subr.bf16.mxu0 0
    %8855 = vmatpush1.bf16.msra.mxu0 0
    %8856 = vmatprep.subr.bf16.mxu0 0
    %8857 = vmatpush1.bf16.msra.mxu0 0
    %8858 = vmatprep.subr.bf16.mxu0 0
    %8859 = vmatpush1.bf16.msra.mxu0 0
    %8860 = vmatprep.subr.bf16.mxu0 0
    %8861 = vmatpush1.bf16.msra.mxu0 0
    %8862 = vmatprep.subr.bf16.mxu0 0
    %8863 = vmatpush1.bf16.msra.mxu0 %v8846
    %8864 = vmatprep.subr.bf16.mxu0 0
    %8865 = vmatpush1.bf16.msra.mxu0 %v8845
    %8866 = vmatprep.subr.bf16.mxu0 0
    %8867 = vmatpush1.bf16.msra.mxu0 %v8844
    %8868 = vmatprep.subr.bf16.mxu0 0
    %8869 = vmatpush1.bf16.msra.mxu0 %v8843
    %8870 = vmatprep.subr.bf16.mxu0 0
    %8871 = vmatpush2.bf16.msra.mxu0 0
    %8872 = vmatprep.subr.bf16.mxu0 0
    %8873 = vmatpush2.bf16.msra.mxu0 0
    %8874 = vmatprep.subr.bf16.mxu0 0
    %8875 = vmatpush2.bf16.msra.mxu0 0
    %8876 = vmatprep.subr.bf16.mxu0 0
    %8877 = vmatpush2.bf16.msra.mxu0 0
    %8878 = vmatprep.subr.bf16.mxu0 0
    %8879 = vmatpush2.bf16.msra.mxu0 0
    %8880 = vmatprep.subr.bf16.mxu0 0
    %8881 = vmatpush2.bf16.msra.mxu0 0
    %8882 = vmatprep.subr.bf16.mxu0 0
    %8883 = vmatpush2.bf16.msra.mxu0 0
    %8884 = vmatprep.subr.bf16.mxu0 0
    %8885 = vmatpush2.bf16.msra.mxu0 0
    %8886 = vmatprep.mubr.bf16.mxu0 0
    %8887 = vmatmul.mubr.bf16.gmra.mxu0 %v8852
    %v8888 = vpop.f32.mrf.mxu0
    %v8889 = vadd.f32 0.0, %v8888
    %v8890 = vpop.f32.mrf.mxu0
    %v8891 = vpop.f32.mrf.mxu0
    %v8892 = vpop.f32.mrf.mxu0
    %8893 = vdwg.mxu0
    %v8902 = vunpack.c.l.b16 %v7940
    %v8903 = vunpack.c.l.b16 %v7941
    %v8904 = vunpack.c.l.b16 %v7942
    %v8905 = vunpack.c.l.b16 %v7943
    %v8906 = vunpack.c.l.b16 %v7944
    %v8907 = vunpack.c.l.b16 %v7945
    %v8908 = vunpack.c.l.b16 %v7946
    %v8909 = vunpack.c.l.b16 %v7947
    %v8910 = vpack.c.b16 %v8903, %v8902
    %v8911 = vpack.c.b16 %v8905, %v8904
    %v8912 = vpack.c.b16 %v8907, %v8906
    %v8913 = vpack.c.b16 %v8909, %v8908
    %v8919 = vsel %vm1508, %v7826, 0
    %8921 = vmatprep.subr.bf16.mxu0 0
    %8922 = vmatpush1.bf16.msra.mxu0 0
    %8923 = vmatprep.subr.bf16.mxu0 0
    %8924 = vmatpush1.bf16.msra.mxu0 0
    %8925 = vmatprep.subr.bf16.mxu0 0
    %8926 = vmatpush1.bf16.msra.mxu0 0
    %8927 = vmatprep.subr.bf16.mxu0 0
    %8928 = vmatpush1.bf16.msra.mxu0 0
    %8929 = vmatprep.subr.bf16.mxu0 0
    %8930 = vmatpush1.bf16.msra.mxu0 %v8913
    %8931 = vmatprep.subr.bf16.mxu0 0
    %8932 = vmatpush1.bf16.msra.mxu0 %v8912
    %8933 = vmatprep.subr.bf16.mxu0 0
    %8934 = vmatpush1.bf16.msra.mxu0 %v8911
    %8935 = vmatprep.subr.bf16.mxu0 0
    %8936 = vmatpush1.bf16.msra.mxu0 %v8910
    %8937 = vmatprep.subr.bf16.mxu0 0
    %8938 = vmatpush2.bf16.msra.mxu0 0
    %8939 = vmatprep.subr.bf16.mxu0 0
    %8940 = vmatpush2.bf16.msra.mxu0 0
    %8941 = vmatprep.subr.bf16.mxu0 0
    %8942 = vmatpush2.bf16.msra.mxu0 0
    %8943 = vmatprep.subr.bf16.mxu0 0
    %8944 = vmatpush2.bf16.msra.mxu0 0
    %8945 = vmatprep.subr.bf16.mxu0 0
    %8946 = vmatpush2.bf16.msra.mxu0 0
    %8947 = vmatprep.subr.bf16.mxu0 0
    %8948 = vmatpush2.bf16.msra.mxu0 0
    %8949 = vmatprep.subr.bf16.mxu0 0
    %8950 = vmatpush2.bf16.msra.mxu0 0
    %8951 = vmatprep.subr.bf16.mxu0 0
    %8952 = vmatpush2.bf16.msra.mxu0 0
    %8953 = vmatprep.mubr.bf16.mxu0 0
    %8954 = vmatmul.mubr.bf16.gmra.mxu0 %v8919
    %v8955 = vpop.f32.mrf.mxu0
    %v8956 = vadd.f32 0.0, %v8955
    %v8957 = vpop.f32.mrf.mxu0
    %v8958 = vpop.f32.mrf.mxu0
    %v8959 = vpop.f32.mrf.mxu0
    %8960 = vdwg.mxu0
    %v8969 = vunpack.c.l.b16 %v7948
    %v8970 = vunpack.c.l.b16 %v7949
    %v8971 = vunpack.c.l.b16 %v7950
    %v8972 = vunpack.c.l.b16 %v7951
    %v8973 = vunpack.c.l.b16 %v7952
    %v8974 = vunpack.c.l.b16 %v7953
    %v8975 = vunpack.c.l.b16 %v7954
    %v8976 = vunpack.c.l.b16 %v7955
    %v8977 = vpack.c.b16 %v8970, %v8969
    %v8978 = vpack.c.b16 %v8972, %v8971
    %v8979 = vpack.c.b16 %v8974, %v8973
    %v8980 = vpack.c.b16 %v8976, %v8975
    %v8986 = vsel %vm1508, %v7827, 0
    %8988 = vmatprep.subr.bf16.mxu0 0
    %8989 = vmatpush1.bf16.msra.mxu0 0
    %8990 = vmatprep.subr.bf16.mxu0 0
    %8991 = vmatpush1.bf16.msra.mxu0 0
    %8992 = vmatprep.subr.bf16.mxu0 0
    %8993 = vmatpush1.bf16.msra.mxu0 0
    %8994 = vmatprep.subr.bf16.mxu0 0
    %8995 = vmatpush1.bf16.msra.mxu0 0
    %8996 = vmatprep.subr.bf16.mxu0 0
    %8997 = vmatpush1.bf16.msra.mxu0 %v8980
    %8998 = vmatprep.subr.bf16.mxu0 0
    %8999 = vmatpush1.bf16.msra.mxu0 %v8979
    %9000 = vmatprep.subr.bf16.mxu0 0
    %9001 = vmatpush1.bf16.msra.mxu0 %v8978
    %9002 = vmatprep.subr.bf16.mxu0 0
    %9003 = vmatpush1.bf16.msra.mxu0 %v8977
    %9004 = vmatprep.subr.bf16.mxu0 0
    %9005 = vmatpush2.bf16.msra.mxu0 0
    %9006 = vmatprep.subr.bf16.mxu0 0
    %9007 = vmatpush2.bf16.msra.mxu0 0
    %9008 = vmatprep.subr.bf16.mxu0 0
    %9009 = vmatpush2.bf16.msra.mxu0 0
    %9010 = vmatprep.subr.bf16.mxu0 0
    %9011 = vmatpush2.bf16.msra.mxu0 0
    %9012 = vmatprep.subr.bf16.mxu0 0
    %9013 = vmatpush2.bf16.msra.mxu0 0
    %9014 = vmatprep.subr.bf16.mxu0 0
    %9015 = vmatpush2.bf16.msra.mxu0 0
    %9016 = vmatprep.subr.bf16.mxu0 0
    %9017 = vmatpush2.bf16.msra.mxu0 0
    %9018 = vmatprep.subr.bf16.mxu0 0
    %9019 = vmatpush2.bf16.msra.mxu0 0
    %9020 = vmatprep.mubr.bf16.mxu0 0
    %9021 = vmatmul.mubr.bf16.gmra.mxu0 %v8986
    %v9022 = vpop.f32.mrf.mxu0
    %v9023 = vadd.f32 0.0, %v9022
    %v9024 = vpop.f32.mrf.mxu0
    %v9025 = vpop.f32.mrf.mxu0
    %v9026 = vpop.f32.mrf.mxu0
    %9027 = vdwg.mxu0
    %v9028 = vsel %vm5462, %v8018, 0.0
    %v9029 = vsel %vm5462, %v8085, 0.0
    %v9030 = vadd.f32 %v9028, %v9029
    %v9031 = vsel %vm5462, %v8152, 0.0
    %v9032 = vadd.f32 %v9030, %v9031
    %v9033 = vsel %vm5462, %v8219, 0.0
    %v9034 = vadd.f32 %v9032, %v9033
    %v9035 = vsel %vm5462, %v8286, 0.0
    %v9036 = vadd.f32 %v9034, %v9035
    %v9037 = vsel %vm5462, %v8353, 0.0
    %v9038 = vadd.f32 %v9036, %v9037
    %v9039 = vsel %vm5462, %v8420, 0.0
    %v9040 = vadd.f32 %v9038, %v9039
    %v9041 = vsel %vm5462, %v8487, 0.0
    %v9042 = vadd.f32 %v9040, %v9041
    %v9043 = vsel %vm5462, %v8554, 0.0
    %v9044 = vadd.f32 %v9042, %v9043
    %v9045 = vsel %vm5462, %v8621, 0.0
    %v9046 = vadd.f32 %v9044, %v9045
    %v9047 = vsel %vm5462, %v8688, 0.0
    %v9048 = vadd.f32 %v9046, %v9047
    %v9049 = vsel %vm5462, %v8755, 0.0
    %v9050 = vadd.f32 %v9048, %v9049
    %v9051 = vsel %vm5462, %v8822, 0.0
    %v9052 = vadd.f32 %v9050, %v9051
    %v9053 = vsel %vm5462, %v8889, 0.0
    %v9054 = vadd.f32 %v9052, %v9053
    %v9055 = vsel %vm5462, %v8956, 0.0
    %v9056 = vadd.f32 %v9054, %v9055
    %v9057 = vsel %vm5462, %v9023, 0.0
    %v9058 = vadd.f32 %v9056, %v9057
    %v9059 = vld [vmem:[%s10] sm:$0x1]
    %v9061 = vlaneseq
    %v9062 = vshrl.u32 %v9061, 7
    %v9063 = vsub.s32 0, %v9062
    %v9064 = vrot.slane %v9059, %v9063
    %v9066 = vadd.f32 %v9058, %v9064
    %v9067 = vld [vmem:[%s9] sm:$0xf]
    %v9068 = vld [vmem:[%s9 + $0x4] sm:$0xf]
    %v9069 = vld [vmem:[%s9 + $0x8] sm:$0xf]
    %v9070 = vld [vmem:[%s9 + $0xc] sm:$0xf]
    %v9071 = vld [vmem:[%s11] sm:$0x1]
    %v9072 = vld [vmem:[%s12] sm:$0xf]
    %v9073 = vld [vmem:[%s12 + $0x4] sm:$0xf]
    %v9074 = vld [vmem:[%s12 + $0x8] sm:$0xf]
    %v9075 = vld [vmem:[%s12 + $0xc] sm:$0xf]
    %v9076 = vld [vmem:[%s13] sm:$0x1]
    %v9077 = vld [vmem:[%s1] sm:$0x3]
    %v9078 = vpack.c.bf16 %v9077, %v9077
    %v9080 = vlaneseq
    %v9081 = vshrl.u32 %v9080, 7
    %v9082 = vsub.s32 0, %v9081
    %v9083 = vrot.slane %v9071, %v9082
    %v9089 = vunpack.c.l.b16 %v9067
    %v9090 = vunpack.c.l.b16 %v9068
    %v9091 = vunpack.c.l.b16 %v9069
    %v9092 = vunpack.c.l.b16 %v9070
    %v9093 = vpack.c.b16 %v9090, %v9089
    %v9094 = vpack.c.b16 %v9092, %v9091
    %v9098 = vsel %vm5281, %v9078, 0
    %9100 = vmatprep.subr.bf16.mxu0 0
    %9101 = vmatpush1.bf16.msra.mxu0 0
    %9102 = vmatprep.subr.bf16.mxu0 0
    %9103 = vmatpush1.bf16.msra.mxu0 0
    %9104 = vmatprep.subr.bf16.mxu0 0
    %9105 = vmatpush1.bf16.msra.mxu0 0
    %9106 = vmatprep.subr.bf16.mxu0 0
    %9107 = vmatpush1.bf16.msra.mxu0 0
    %9108 = vmatprep.subr.bf16.mxu0 0
    %9109 = vmatpush1.bf16.msra.mxu0 0
    %9110 = vmatprep.subr.bf16.mxu0 0
    %9111 = vmatpush1.bf16.msra.mxu0 0
    %9112 = vmatprep.subr.bf16.mxu0 0
    %9113 = vmatpush1.bf16.msra.mxu0 %v9094
    %9114 = vmatprep.subr.bf16.mxu0 0
    %9115 = vmatpush1.bf16.msra.mxu0 %v9093
    %9116 = vmatprep.subr.bf16.mxu0 0
    %9117 = vmatpush2.bf16.msra.mxu0 0
    %9118 = vmatprep.subr.bf16.mxu0 0
    %9119 = vmatpush2.bf16.msra.mxu0 0
    %9120 = vmatprep.subr.bf16.mxu0 0
    %9121 = vmatpush2.bf16.msra.mxu0 0
    %9122 = vmatprep.subr.bf16.mxu0 0
    %9123 = vmatpush2.bf16.msra.mxu0 0
    %9124 = vmatprep.subr.bf16.mxu0 0
    %9125 = vmatpush2.bf16.msra.mxu0 0
    %9126 = vmatprep.subr.bf16.mxu0 0
    %9127 = vmatpush2.bf16.msra.mxu0 0
    %9128 = vmatprep.subr.bf16.mxu0 0
    %9129 = vmatpush2.bf16.msra.mxu0 0
    %9130 = vmatprep.subr.bf16.mxu0 0
    %9131 = vmatpush2.bf16.msra.mxu0 0
    %9132 = vmatprep.mubr.bf16.mxu0 0
    %9133 = vmatmul.mubr.bf16.gmra.mxu0 %v9098
    %v9134 = vpop.f32.mrf.mxu0
    %v9135 = vadd.f32 %v9083, %v9134
    %v9136 = vpop.f32.mrf.mxu0
    %v9137 = vpop.f32.mrf.mxu0
    %v9138 = vpop.f32.mrf.mxu0
    %9139 = vdwg.mxu0
    %v9140 = vadd.f32 %v9066, %v9135
    %v9141 = vxor.u32 %v9140, 2147483648
    %v9142 = vmul.f32 %v9141, 1.442695
    %v9143 = vpow.pop %v9142
    %v9144 = vadd.f32 %v9143, 1.0
    %v9145 = vrcp.pop %v9144
    %v9146 = vmul.f32 1.0, %v9145
    %9148 = vrot.lane.b32.xlu0 %v9135, 64
    %v9149 = vpop.permute.xlu0 %9148
    %v9151 = vmul.f32 %v9146, %v9149
    %9153 = vrot.lane.b32.xlu0 %v9151, 64
    %v9154 = vpop.permute.xlu0 %9153
    %v9156 = vadd.f32 %v9066, %v9154
    %v9157 = vtanh.pop %v9156
    %v9158 = vsub.f32 1.0, %v9146
    %9160 = vrot.lane.b32.xlu0 %v9157, 96
    %v9161 = vpop.permute.xlu0 %9160
    %v9163 = vmul.f32 %v9158, %v9161
    %9165 = vrot.lane.b32.xlu0 %v9077, 32
    %v9166 = vpop.permute.xlu0 %9165
    %v9168 = vmul.f32 %v9146, %v9166
    %v9169 = vadd.f32 %v9163, %v9168
    %v9170 = vpack.c.bf16 %v9169, %v9169
    %v9172 = vlaneseq
    %v9173 = vshrl.u32 %v9172, 7
    %v9174 = vsub.s32 0, %v9173
    %v9175 = vrot.slane %v9076, %v9174
    %9178 = vrot.lane.b32.xlu0 %v9170, 96
    %v9179 = vpop.permute.xlu0 %9178
    %v9184 = vunpack.c.l.b16 %v9072
    %v9185 = vunpack.c.l.b16 %v9073
    %v9186 = vunpack.c.l.b16 %v9074
    %v9187 = vunpack.c.l.b16 %v9075
    %v9188 = vpack.c.b16 %v9185, %v9184
    %v9189 = vpack.c.b16 %v9187, %v9186
    %v9193 = vsel %vm5281, %v9179, 0
    %9195 = vmatprep.subr.bf16.mxu0 0
    %9196 = vmatpush1.bf16.msra.mxu0 0
    %9197 = vmatprep.subr.bf16.mxu0 0
    %9198 = vmatpush1.bf16.msra.mxu0 0
    %9199 = vmatprep.subr.bf16.mxu0 0
    %9200 = vmatpush1.bf16.msra.mxu0 0
    %9201 = vmatprep.subr.bf16.mxu0 0
    %9202 = vmatpush1.bf16.msra.mxu0 0
    %9203 = vmatprep.subr.bf16.mxu0 0
    %9204 = vmatpush1.bf16.msra.mxu0 0
    %9205 = vmatprep.subr.bf16.mxu0 0
    %9206 = vmatpush1.bf16.msra.mxu0 0
    %9207 = vmatprep.subr.bf16.mxu0 0
    %9208 = vmatpush1.bf16.msra.mxu0 %v9189
    %9209 = vmatprep.subr.bf16.mxu0 0
    %9210 = vmatpush1.bf16.msra.mxu0 %v9188
    %9211 = vmatprep.subr.bf16.mxu0 0
    %9212 = vmatpush2.bf16.msra.mxu0 0
    %9213 = vmatprep.subr.bf16.mxu0 0
    %9214 = vmatpush2.bf16.msra.mxu0 0
    %9215 = vmatprep.subr.bf16.mxu0 0
    %9216 = vmatpush2.bf16.msra.mxu0 0
    %9217 = vmatprep.subr.bf16.mxu0 0
    %9218 = vmatpush2.bf16.msra.mxu0 0
    %9219 = vmatprep.subr.bf16.mxu0 0
    %9220 = vmatpush2.bf16.msra.mxu0 0
    %9221 = vmatprep.subr.bf16.mxu0 0
    %9222 = vmatpush2.bf16.msra.mxu0 0
    %9223 = vmatprep.subr.bf16.mxu0 0
    %9224 = vmatpush2.bf16.msra.mxu0 0
    %9225 = vmatprep.subr.bf16.mxu0 0
    %9226 = vmatpush2.bf16.msra.mxu0 0
    %9227 = vmatprep.mubr.bf16.mxu0 0
    %9228 = vmatmul.mubr.bf16.gmra.mxu0 %v9193
    %v9229 = vpop.f32.mrf.mxu0
    %v9230 = vadd.f32 %v9175, %v9229
    %v9231 = vpop.f32.mrf.mxu0
    %v9232 = vpop.f32.mrf.mxu0
    %v9233 = vpop.f32.mrf.mxu0
    %9234 = vdwg.mxu0
    %v9237 = vunpack.c.l.s4 1966171168
    %v9238 = vunpack.c.0.s8 %v9237
    %v9239 = vlaneseq
    %v9240 = vshrl.u32 %v9239, 7
    %v9241 = vsub.s32 %v9238, %v9240
    %v9242 = vrot.slane %v9230, %v9241
    %v9243 = vcombine.high %v9242, %v9242
    %v9245 = vunpack.c.l.s4 1966171168
    %v9246 = vunpack.c.0.s8 %v9245
    %v9247 = vlaneseq
    %v9248 = vshrl.u32 %v9247, 7
    %v9249 = vsub.s32 %v9246, %v9248
    %v9250 = vrot.slane %v9242, %v9249
    %v9252 = vunpack.c.l.s4 1966171168
    %v9253 = vunpack.c.0.s8 %v9252
    %v9254 = vlaneseq
    %v9255 = vshrl.u32 %v9254, 7
    %v9256 = vsub.s32 %v9253, %v9255
    %v9257 = vrot.slane %v9243, %v9256
    %9260 = vst [vmem:[#allocation2] sm:$0x1] %v9250
    %9261 = vst [vmem:[#allocation2 + $0x4] sm:$0x1] %v9257
    %9262 = vmatprep.subr.bf16.mxu0 0
    %9263 = vmatpush1.bf16.msra.mxu0 0
    %9264 = vmatprep.subr.bf16.mxu0 0
    %9265 = vmatpush1.bf16.msra.mxu0 0
    %9266 = vmatprep.subr.bf16.mxu0 0
    %9267 = vmatpush1.bf16.msra.mxu0 0
    %9268 = vmatprep.subr.bf16.mxu0 0
    %9269 = vmatpush1.bf16.msra.mxu0 0
    %9270 = vmatprep.subr.bf16.mxu0 0
    %9271 = vmatpush1.bf16.msra.mxu0 0
    %9272 = vmatprep.subr.bf16.mxu0 0
    %9273 = vmatpush1.bf16.msra.mxu0 0
    %9274 = vmatprep.subr.bf16.mxu0 0
    %9275 = vmatpush1.bf16.msra.mxu0 %v9094
    %9276 = vmatprep.subr.bf16.mxu0 0
    %9277 = vmatpush1.bf16.msra.mxu0 %v9093
    %9278 = vmatprep.subr.bf16.mxu0 0
    %9279 = vmatpush2.bf16.msra.mxu0 0
    %9280 = vmatprep.subr.bf16.mxu0 0
    %9281 = vmatpush2.bf16.msra.mxu0 0
    %9282 = vmatprep.subr.bf16.mxu0 0
    %9283 = vmatpush2.bf16.msra.mxu0 0
    %9284 = vmatprep.subr.bf16.mxu0 0
    %9285 = vmatpush2.bf16.msra.mxu0 0
    %9286 = vmatprep.subr.bf16.mxu0 0
    %9287 = vmatpush2.bf16.msra.mxu0 0
    %9288 = vmatprep.subr.bf16.mxu0 0
    %9289 = vmatpush2.bf16.msra.mxu0 0
    %9290 = vmatprep.subr.bf16.mxu0 0
    %9291 = vmatpush2.bf16.msra.mxu0 0
    %9292 = vmatprep.subr.bf16.mxu0 0
    %9293 = vmatpush2.bf16.msra.mxu0 0
    %9294 = vmatprep.mubr.bf16.mxu0 0
    %9295 = vmatmul.mubr.bf16.gmra.mxu0 %v9193
    %v9296 = vpop.f32.mrf.mxu0
    %v9297 = vadd.f32 %v9083, %v9296
    %v9298 = vpop.f32.mrf.mxu0
    %v9299 = vpop.f32.mrf.mxu0
    %v9300 = vpop.f32.mrf.mxu0
    %9301 = vdwg.mxu0
    %v9303 = vrot.slane %v9297, 6
    %v9305 = vadd.f32 %v9066, %v9303
    %v9306 = vxor.u32 %v9305, 2147483648
    %v9307 = vmul.f32 %v9306, 1.442695
    %v9308 = vpow.pop %v9307
    %v9309 = vadd.f32 %v9308, 1.0
    %v9310 = vrcp.pop %v9309
    %v9311 = vmul.f32 1.0, %v9310
    %9312 = vrot.lane.b32.xlu0 %v9303, 64
    %v9313 = vpop.permute.xlu0 %9312
    %v9315 = vmul.f32 %v9311, %v9313
    %9317 = vrot.lane.b32.xlu0 %v9315, 64
    %v9318 = vpop.permute.xlu0 %9317
    %v9320 = vadd.f32 %v9066, %v9318
    %v9321 = vtanh.pop %v9320
    %v9322 = vsub.f32 1.0, %v9311
    %9324 = vrot.lane.b32.xlu0 %v9321, 96
    %v9325 = vpop.permute.xlu0 %9324
    %v9327 = vmul.f32 %v9322, %v9325
    %v9329 = vrot.slane %v9169, 6
    %v9331 = vmul.f32 %v9311, %v9329
    %v9332 = vadd.f32 %v9327, %v9331
    %v9333 = vpack.c.bf16 %v9332, %v9332
    %v9335 = vrot.slane %v9333, 1
    %9336 = vrot.lane.b32.xlu0 %v9335, 96
    %v9337 = vpop.permute.xlu0 %9336
    %v9339 = vsel %vm5281, %v9337, 0
    %9341 = vmatprep.subr.bf16.mxu0 0
    %9342 = vmatpush1.bf16.msra.mxu0 0
    %9343 = vmatprep.subr.bf16.mxu0 0
    %9344 = vmatpush1.bf16.msra.mxu0 0
    %9345 = vmatprep.subr.bf16.mxu0 0
    %9346 = vmatpush1.bf16.msra.mxu0 0
    %9347 = vmatprep.subr.bf16.mxu0 0
    %9348 = vmatpush1.bf16.msra.mxu0 0
    %9349 = vmatprep.subr.bf16.mxu0 0
    %9350 = vmatpush1.bf16.msra.mxu0 0
    %9351 = vmatprep.subr.bf16.mxu0 0
    %9352 = vmatpush1.bf16.msra.mxu0 0
    %9353 = vmatprep.subr.bf16.mxu0 0
    %9354 = vmatpush1.bf16.msra.mxu0 %v9189
    %9355 = vmatprep.subr.bf16.mxu0 0
    %9356 = vmatpush1.bf16.msra.mxu0 %v9188
    %9357 = vmatprep.subr.bf16.mxu0 0
    %9358 = vmatpush2.bf16.msra.mxu0 0
    %9359 = vmatprep.subr.bf16.mxu0 0
    %9360 = vmatpush2.bf16.msra.mxu0 0
    %9361 = vmatprep.subr.bf16.mxu0 0
    %9362 = vmatpush2.bf16.msra.mxu0 0
    %9363 = vmatprep.subr.bf16.mxu0 0
    %9364 = vmatpush2.bf16.msra.mxu0 0
    %9365 = vmatprep.subr.bf16.mxu0 0
    %9366 = vmatpush2.bf16.msra.mxu0 0
    %9367 = vmatprep.subr.bf16.mxu0 0
    %9368 = vmatpush2.bf16.msra.mxu0 0
    %9369 = vmatprep.subr.bf16.mxu0 0
    %9370 = vmatpush2.bf16.msra.mxu0 0
    %9371 = vmatprep.subr.bf16.mxu0 0
    %9372 = vmatpush2.bf16.msra.mxu0 0
    %9373 = vmatprep.mubr.bf16.mxu0 0
    %9374 = vmatmul.mubr.bf16.gmra.mxu0 %v9339
    %v9375 = vpop.f32.mrf.mxu0
    %v9376 = vadd.f32 %v9175, %v9375
    %v9377 = vpop.f32.mrf.mxu0
    %v9378 = vpop.f32.mrf.mxu0
    %v9379 = vpop.f32.mrf.mxu0
    %9380 = vdwg.mxu0
    %v9383 = vunpack.c.l.s4 1966171168
    %v9384 = vunpack.c.0.s8 %v9383
    %v9385 = vlaneseq
    %v9386 = vshrl.u32 %v9385, 7
    %v9387 = vsub.s32 %v9384, %v9386
    %v9388 = vrot.slane %v9376, %v9387
    %v9389 = vcombine.high %v9388, %v9388
    %v9391 = vunpack.c.l.s4 1966171168
    %v9392 = vunpack.c.0.s8 %v9391
    %v9393 = vlaneseq
    %v9394 = vshrl.u32 %v9393, 7
    %v9395 = vsub.s32 %v9392, %v9394
    %v9396 = vrot.slane %v9388, %v9395
    %v9398 = vunpack.c.l.s4 1966171168
    %v9399 = vunpack.c.0.s8 %v9398
    %v9400 = vlaneseq
    %v9401 = vshrl.u32 %v9400, 7
    %v9402 = vsub.s32 %v9399, %v9401
    %v9403 = vrot.slane %v9389, %v9402
    %9406 = vst [vmem:[#allocation2 + $0x1] sm:$0x1] %v9396
    %9407 = vst [vmem:[#allocation2 + $0x5] sm:$0x1] %v9403
    %9408 = vmatprep.subr.bf16.mxu0 0
    %9409 = vmatpush1.bf16.msra.mxu0 0
    %9410 = vmatprep.subr.bf16.mxu0 0
    %9411 = vmatpush1.bf16.msra.mxu0 0
    %9412 = vmatprep.subr.bf16.mxu0 0
    %9413 = vmatpush1.bf16.msra.mxu0 0
    %9414 = vmatprep.subr.bf16.mxu0 0
    %9415 = vmatpush1.bf16.msra.mxu0 0
    %9416 = vmatprep.subr.bf16.mxu0 0
    %9417 = vmatpush1.bf16.msra.mxu0 0
    %9418 = vmatprep.subr.bf16.mxu0 0
    %9419 = vmatpush1.bf16.msra.mxu0 0
    %9420 = vmatprep.subr.bf16.mxu0 0
    %9421 = vmatpush1.bf16.msra.mxu0 %v9094
    %9422 = vmatprep.subr.bf16.mxu0 0
    %9423 = vmatpush1.bf16.msra.mxu0 %v9093
    %9424 = vmatprep.subr.bf16.mxu0 0
    %9425 = vmatpush2.bf16.msra.mxu0 0
    %9426 = vmatprep.subr.bf16.mxu0 0
    %9427 = vmatpush2.bf16.msra.mxu0 0
    %9428 = vmatprep.subr.bf16.mxu0 0
    %9429 = vmatpush2.bf16.msra.mxu0 0
    %9430 = vmatprep.subr.bf16.mxu0 0
    %9431 = vmatpush2.bf16.msra.mxu0 0
    %9432 = vmatprep.subr.bf16.mxu0 0
    %9433 = vmatpush2.bf16.msra.mxu0 0
    %9434 = vmatprep.subr.bf16.mxu0 0
    %9435 = vmatpush2.bf16.msra.mxu0 0
    %9436 = vmatprep.subr.bf16.mxu0 0
    %9437 = vmatpush2.bf16.msra.mxu0 0
    %9438 = vmatprep.subr.bf16.mxu0 0
    %9439 = vmatpush2.bf16.msra.mxu0 0
    %9440 = vmatprep.mubr.bf16.mxu0 0
    %9441 = vmatmul.mubr.bf16.gmra.mxu0 %v9339
    %v9442 = vpop.f32.mrf.mxu0
    %v9443 = vadd.f32 %v9083, %v9442
    %v9444 = vpop.f32.mrf.mxu0
    %v9445 = vpop.f32.mrf.mxu0
    %v9446 = vpop.f32.mrf.mxu0
    %9447 = vdwg.mxu0
    %v9449 = vrot.slane %v9443, 4
    %v9451 = vadd.f32 %v9066, %v9449
    %v9452 = vxor.u32 %v9451, 2147483648
    %v9453 = vmul.f32 %v9452, 1.442695
    %v9454 = vpow.pop %v9453
    %v9455 = vadd.f32 %v9454, 1.0
    %v9456 = vrcp.pop %v9455
    %v9457 = vmul.f32 1.0, %v9456
    %9458 = vrot.lane.b32.xlu0 %v9449, 64
    %v9459 = vpop.permute.xlu0 %9458
    %v9461 = vmul.f32 %v9457, %v9459
    %9463 = vrot.lane.b32.xlu0 %v9461, 64
    %v9464 = vpop.permute.xlu0 %9463
    %v9466 = vadd.f32 %v9066, %v9464
    %v9467 = vtanh.pop %v9466
    %v9468 = vsub.f32 1.0, %v9457
    %9470 = vrot.lane.b32.xlu0 %v9467, 96
    %v9471 = vpop.permute.xlu0 %9470
    %v9473 = vmul.f32 %v9468, %v9471
    %v9475 = vrot.slane %v9332, 6
    %v9477 = vmul.f32 %v9457, %v9475
    %v9478 = vadd.f32 %v9473, %v9477
    %v9479 = vpack.c.bf16 %v9478, %v9478
    %v9481 = vrot.slane %v9479, 2
    %9482 = vrot.lane.b32.xlu0 %v9481, 96
    %v9483 = vpop.permute.xlu0 %9482
    %v9485 = vsel %vm5281, %v9483, 0
    %9487 = vmatprep.subr.bf16.mxu0 0
    %9488 = vmatpush1.bf16.msra.mxu0 0
    %9489 = vmatprep.subr.bf16.mxu0 0
    %9490 = vmatpush1.bf16.msra.mxu0 0
    %9491 = vmatprep.subr.bf16.mxu0 0
    %9492 = vmatpush1.bf16.msra.mxu0 0
    %9493 = vmatprep.subr.bf16.mxu0 0
    %9494 = vmatpush1.bf16.msra.mxu0 0
    %9495 = vmatprep.subr.bf16.mxu0 0
    %9496 = vmatpush1.bf16.msra.mxu0 0
    %9497 = vmatprep.subr.bf16.mxu0 0
    %9498 = vmatpush1.bf16.msra.mxu0 0
    %9499 = vmatprep.subr.bf16.mxu0 0
    %9500 = vmatpush1.bf16.msra.mxu0 %v9189
    %9501 = vmatprep.subr.bf16.mxu0 0
    %9502 = vmatpush1.bf16.msra.mxu0 %v9188
    %9503 = vmatprep.subr.bf16.mxu0 0
    %9504 = vmatpush2.bf16.msra.mxu0 0
    %9505 = vmatprep.subr.bf16.mxu0 0
    %9506 = vmatpush2.bf16.msra.mxu0 0
    %9507 = vmatprep.subr.bf16.mxu0 0
    %9508 = vmatpush2.bf16.msra.mxu0 0
    %9509 = vmatprep.subr.bf16.mxu0 0
    %9510 = vmatpush2.bf16.msra.mxu0 0
    %9511 = vmatprep.subr.bf16.mxu0 0
    %9512 = vmatpush2.bf16.msra.mxu0 0
    %9513 = vmatprep.subr.bf16.mxu0 0
    %9514 = vmatpush2.bf16.msra.mxu0 0
    %9515 = vmatprep.subr.bf16.mxu0 0
    %9516 = vmatpush2.bf16.msra.mxu0 0
    %9517 = vmatprep.subr.bf16.mxu0 0
    %9518 = vmatpush2.bf16.msra.mxu0 0
    %9519 = vmatprep.mubr.bf16.mxu0 0
    %9520 = vmatmul.mubr.bf16.gmra.mxu0 %v9485
    %v9521 = vpop.f32.mrf.mxu0
    %v9522 = vadd.f32 %v9175, %v9521
    %v9523 = vpop.f32.mrf.mxu0
    %v9524 = vpop.f32.mrf.mxu0
    %v9525 = vpop.f32.mrf.mxu0
    %9526 = vdwg.mxu0
    %v9529 = vunpack.c.l.s4 1966171168
    %v9530 = vunpack.c.0.s8 %v9529
    %v9531 = vlaneseq
    %v9532 = vshrl.u32 %v9531, 7
    %v9533 = vsub.s32 %v9530, %v9532
    %v9534 = vrot.slane %v9522, %v9533
    %v9535 = vcombine.high %v9534, %v9534
    %v9537 = vunpack.c.l.s4 1966171168
    %v9538 = vunpack.c.0.s8 %v9537
    %v9539 = vlaneseq
    %v9540 = vshrl.u32 %v9539, 7
    %v9541 = vsub.s32 %v9538, %v9540
    %v9542 = vrot.slane %v9534, %v9541
    %v9544 = vunpack.c.l.s4 1966171168
    %v9545 = vunpack.c.0.s8 %v9544
    %v9546 = vlaneseq
    %v9547 = vshrl.u32 %v9546, 7
    %v9548 = vsub.s32 %v9545, %v9547
    %v9549 = vrot.slane %v9535, %v9548
    %9552 = vst [vmem:[#allocation2 + $0x2] sm:$0x1] %v9542
    %9553 = vst [vmem:[#allocation2 + $0x6] sm:$0x1] %v9549
    %9554 = vmatprep.subr.bf16.mxu0 0
    %9555 = vmatpush1.bf16.msra.mxu0 0
    %9556 = vmatprep.subr.bf16.mxu0 0
    %9557 = vmatpush1.bf16.msra.mxu0 0
    %9558 = vmatprep.subr.bf16.mxu0 0
    %9559 = vmatpush1.bf16.msra.mxu0 0
    %9560 = vmatprep.subr.bf16.mxu0 0
    %9561 = vmatpush1.bf16.msra.mxu0 0
    %9562 = vmatprep.subr.bf16.mxu0 0
    %9563 = vmatpush1.bf16.msra.mxu0 0
    %9564 = vmatprep.subr.bf16.mxu0 0
    %9565 = vmatpush1.bf16.msra.mxu0 0
    %9566 = vmatprep.subr.bf16.mxu0 0
    %9567 = vmatpush1.bf16.msra.mxu0 %v9094
    %9568 = vmatprep.subr.bf16.mxu0 0
    %9569 = vmatpush1.bf16.msra.mxu0 %v9093
    %9570 = vmatprep.subr.bf16.mxu0 0
    %9571 = vmatpush2.bf16.msra.mxu0 0
    %9572 = vmatprep.subr.bf16.mxu0 0
    %9573 = vmatpush2.bf16.msra.mxu0 0
    %9574 = vmatprep.subr.bf16.mxu0 0
    %9575 = vmatpush2.bf16.msra.mxu0 0
    %9576 = vmatprep.subr.bf16.mxu0 0
    %9577 = vmatpush2.bf16.msra.mxu0 0
    %9578 = vmatprep.subr.bf16.mxu0 0
    %9579 = vmatpush2.bf16.msra.mxu0 0
    %9580 = vmatprep.subr.bf16.mxu0 0
    %9581 = vmatpush2.bf16.msra.mxu0 0
    %9582 = vmatprep.subr.bf16.mxu0 0
    %9583 = vmatpush2.bf16.msra.mxu0 0
    %9584 = vmatprep.subr.bf16.mxu0 0
    %9585 = vmatpush2.bf16.msra.mxu0 0
    %9586 = vmatprep.mubr.bf16.mxu0 0
    %9587 = vmatmul.mubr.bf16.gmra.mxu0 %v9485
    %v9588 = vpop.f32.mrf.mxu0
    %v9589 = vadd.f32 %v9083, %v9588
    %v9590 = vpop.f32.mrf.mxu0
    %v9591 = vpop.f32.mrf.mxu0
    %v9592 = vpop.f32.mrf.mxu0
    %9593 = vdwg.mxu0
    %v9595 = vrot.slane %v9589, 2
    %v9597 = vadd.f32 %v9066, %v9595
    %v9598 = vxor.u32 %v9597, 2147483648
    %v9599 = vmul.f32 %v9598, 1.442695
    %v9600 = vpow.pop %v9599
    %v9601 = vadd.f32 %v9600, 1.0
    %v9602 = vrcp.pop %v9601
    %v9603 = vmul.f32 1.0, %v9602
    %9604 = vrot.lane.b32.xlu0 %v9595, 64
    %v9605 = vpop.permute.xlu0 %9604
    %v9607 = vmul.f32 %v9603, %v9605
    %9609 = vrot.lane.b32.xlu0 %v9607, 64
    %v9610 = vpop.permute.xlu0 %9609
    %v9612 = vadd.f32 %v9066, %v9610
    %v9613 = vtanh.pop %v9612
    %v9614 = vsub.f32 1.0, %v9603
    %9616 = vrot.lane.b32.xlu0 %v9613, 96
    %v9617 = vpop.permute.xlu0 %9616
    %v9619 = vmul.f32 %v9614, %v9617
    %v9621 = vrot.slane %v9478, 6
    %v9623 = vmul.f32 %v9603, %v9621
    %v9624 = vadd.f32 %v9619, %v9623
    %v9625 = vpack.c.bf16 %v9624, %v9624
    %v9627 = vrot.slane %v9625, 3
    %9628 = vrot.lane.b32.xlu0 %v9627, 96
    %v9629 = vpop.permute.xlu0 %9628
    %v9631 = vsel %vm5281, %v9629, 0
    %9633 = vmatprep.subr.bf16.mxu0 0
    %9634 = vmatpush1.bf16.msra.mxu0 0
    %9635 = vmatprep.subr.bf16.mxu0 0
    %9636 = vmatpush1.bf16.msra.mxu0 0
    %9637 = vmatprep.subr.bf16.mxu0 0
    %9638 = vmatpush1.bf16.msra.mxu0 0
    %9639 = vmatprep.subr.bf16.mxu0 0
    %9640 = vmatpush1.bf16.msra.mxu0 0
    %9641 = vmatprep.subr.bf16.mxu0 0
    %9642 = vmatpush1.bf16.msra.mxu0 0
    %9643 = vmatprep.subr.bf16.mxu0 0
    %9644 = vmatpush1.bf16.msra.mxu0 0
    %9645 = vmatprep.subr.bf16.mxu0 0
    %9646 = vmatpush1.bf16.msra.mxu0 %v9189
    %9647 = vmatprep.subr.bf16.mxu0 0
    %9648 = vmatpush1.bf16.msra.mxu0 %v9188
    %9649 = vmatprep.subr.bf16.mxu0 0
    %9650 = vmatpush2.bf16.msra.mxu0 0
    %9651 = vmatprep.subr.bf16.mxu0 0
    %9652 = vmatpush2.bf16.msra.mxu0 0
    %9653 = vmatprep.subr.bf16.mxu0 0
    %9654 = vmatpush2.bf16.msra.mxu0 0
    %9655 = vmatprep.subr.bf16.mxu0 0
    %9656 = vmatpush2.bf16.msra.mxu0 0
    %9657 = vmatprep.subr.bf16.mxu0 0
    %9658 = vmatpush2.bf16.msra.mxu0 0
    %9659 = vmatprep.subr.bf16.mxu0 0
    %9660 = vmatpush2.bf16.msra.mxu0 0
    %9661 = vmatprep.subr.bf16.mxu0 0
    %9662 = vmatpush2.bf16.msra.mxu0 0
    %9663 = vmatprep.subr.bf16.mxu0 0
    %9664 = vmatpush2.bf16.msra.mxu0 0
    %9665 = vmatprep.mubr.bf16.mxu0 0
    %9666 = vmatmul.mubr.bf16.gmra.mxu0 %v9631
    %v9667 = vpop.f32.mrf.mxu0
    %v9668 = vadd.f32 %v9175, %v9667
    %v9669 = vpop.f32.mrf.mxu0
    %v9670 = vpop.f32.mrf.mxu0
    %v9671 = vpop.f32.mrf.mxu0
    %9672 = vdwg.mxu0
    %v9675 = vunpack.c.l.s4 1966171168
    %v9676 = vunpack.c.0.s8 %v9675
    %v9677 = vlaneseq
    %v9678 = vshrl.u32 %v9677, 7
    %v9679 = vsub.s32 %v9676, %v9678
    %v9680 = vrot.slane %v9668, %v9679
    %v9681 = vcombine.high %v9680, %v9680
    %v9683 = vunpack.c.l.s4 1966171168
    %v9684 = vunpack.c.0.s8 %v9683
    %v9685 = vlaneseq
    %v9686 = vshrl.u32 %v9685, 7
    %v9687 = vsub.s32 %v9684, %v9686
    %v9688 = vrot.slane %v9680, %v9687
    %v9690 = vunpack.c.l.s4 1966171168
    %v9691 = vunpack.c.0.s8 %v9690
    %v9692 = vlaneseq
    %v9693 = vshrl.u32 %v9692, 7
    %v9694 = vsub.s32 %v9691, %v9693
    %v9695 = vrot.slane %v9681, %v9694
    %9698 = vst [vmem:[#allocation2 + $0x3] sm:$0x1] %v9688
    %9699 = vst [vmem:[#allocation2 + $0x7] sm:$0x1] %v9695
    %9701 = vrot.lane.b32.xlu0 %v9624, 96
    %v9702 = vpop.permute.xlu0 %9701
    %vm9704 = vcmask 261126
    %9705 = vst.msk [vmem:[#allocation4 - $0x6] sm:$0xc0] %vm9704, %v9702
    // Predicated region
    $region58: #{categorical_drqn_forward.1} parent=1 // pred_check
      _
    $region59: #{categorical_drqn_forward.1} parent=1 // pred_check_branch
      %9707 = sbr.rel (0) target = $region61
    $region60: #{categorical_drqn_forward.1} parent=1 // pred_region
      %s9709 = ssub.s32 128, 128
      %9710 = vsyncadd [#allocation3], %s9709
      %s9711 = sshll.u32 [#allocation2], 4
      %s9712 = int_to_ptr.vmem [resolvable:$true] %s9711
      %9717 = dma.vmem_to_hbm [thread:$0]  %s9712, 128, %s14, [#allocation3], 64, 64, 4
    $region61: #{categorical_drqn_forward.1} parent=1 // pred_fallthru
      _
    // Predicated region
    $region62: #{categorical_drqn_forward.1} parent=1 // pred_check
      _
    $region63: #{categorical_drqn_forward.1} parent=1 // pred_check_branch
      %9719 = sbr.rel (0) target = $region65
    $region64: #{categorical_drqn_forward.1} parent=1 // pred_region
      %s9721 = ssub.s32 32, 32
      %9722 = vsyncadd [#allocation5], %s9721
      %s9724 = sshll.u32 [#allocation4], 4
      %s9725 = int_to_ptr.vmem [resolvable:$true] %s9724
      %9727 = dma.vmem_to_hbm [thread:$0]  %s9725, 32, %s15, [#allocation5]
    $region65: #{categorical_drqn_forward.1} parent=1 // pred_fallthru
      _
    // Predicated region
    $region66: #{categorical_drqn_forward.1} parent=1 // pred_check
      _
    $region67: #{categorical_drqn_forward.1} parent=1 // pred_check_branch
      %9729 = sbr.rel (0) target = $region69
    $region68: #{categorical_drqn_forward.1} parent=1 // pred_region
      %9730 = dma.done [#allocation3], 128
    $region69: #{categorical_drqn_forward.1} parent=1 // pred_fallthru
      _
    // Predicated region
    $region70: #{categorical_drqn_forward.1} parent=1 // pred_check
      _
    $region71: #{categorical_drqn_forward.1} parent=1 // pred_check_branch
      %9732 = sbr.rel (0) target = $region73
    $region72: #{categorical_drqn_forward.1} parent=1 // pred_region
      %9733 = dma.done [#allocation5], 32
    $region73: #{categorical_drqn_forward.1} parent=1 // pred_fallthru
      _
    %9734 = vsyncpa [#allocation3], 1
    %9735 = vsyncpa [#allocation5], 1

</llo_original>
